<compile_context>
chip_gen: v6e
topology: v6e:2x2x1
jax: 0.10.0
libtpu: 0.0.40
codegen_flags: <defaults>
</compile_context>

<pallas_src>
import jax
import jax.numpy as jnp
import numpy as np
from jax.experimental import pallas as pl
from jax.experimental.pallas import tpu as pltpu


# -----------------------------------------------------------------------------
# Kernel
# -----------------------------------------------------------------------------
def _tgn_memory_kernel(
    h_ref,        # [tn, D]      f32   memory[n_id]  (also GRU hidden state)
    xdr_ref,      # [tn, D+R]    bf16  cat([memory[dst_selected], raw_selected])
    trel_ref,     # [tn, 1]      f32   t_selected - last_update[n_id]
    tw_ref,       # [1, T]       f32   TimeEncoder weight
    tb_ref,       # [1, T]       f32   TimeEncoder bias
    w_h_ref,      # [D, 6D]      bf16  cat([W_ih_src^T, W_hh^T], axis=1)
    w_drt_ref,    # [D+R+T, 3D]  bf16  cat([W_ih_dst^T, W_ih_raw^T, W_ih_time^T], axis=0)
    b_ih_ref,     # [1, 3D]      f32
    b_hh_ref,     # [1, 3D]      f32
    mem_out_ref,  # [tn, D]      f32
):
    D = h_ref.shape[1]
    f32 = jnp.float32
    bf16 = jnp.bfloat16

    h = h_ref[...]                                                   # f32 [tn, D]

    # --- TimeEncoder: cos(Linear(1, T)(t_rel)) on the EUP (free bundle slot) -----
    tenc = jnp.cos(trel_ref[...] * tw_ref[...] + tb_ref[...])        # f32 [tn, T]

    # --- Single fused message operand: K = D+R+T (= 256) fills the MXU depth -----
    x = jnp.concatenate([xdr_ref[...], tenc.astype(bf16)], axis=1)   # bf16 [tn, D+R+T]

    # --- Fused projections (bf16 MXU, f32 accumulation) ---------------------------
    # hh = h @ [W_src^T | W_hh^T]  ->  [:, :3D] is the gi src-term, [:, 3D:] is gh
    hh = jnp.dot(h.astype(bf16), w_h_ref[...],
                 preferred_element_type=f32)                          # [tn, 6D]

    gi = (hh[:, : 3 * D]
          + jnp.dot(x, w_drt_ref[...], preferred_element_type=f32)
          + b_ih_ref[...])                                            # [tn, 3D]
    gh = hh[:, 3 * D:] + b_hh_ref[...]                                # [tn, 3D]

    # --- GRUCell (PyTorch gate ordering r, z, n), f32 gates ----------------------
    r = jax.nn.sigmoid(gi[:, 0:D] + gh[:, 0:D])
    z = jax.nn.sigmoid(gi[:, D:2 * D] + gh[:, D:2 * D])
    n = jnp.tanh(gi[:, 2 * D:3 * D] + r * gh[:, 2 * D:3 * D])
    mem_out_ref[...] = (1.0 - z) * n + z * h


# -----------------------------------------------------------------------------
# Parameter preparation (PyTorch-style GRUCell/TimeEncoder weights -> fused kernel weights)
# -----------------------------------------------------------------------------
def prepare_params(raw_params, memory_dim, raw_msg_dim):
    D, R = memory_dim, raw_msg_dim
    bf16 = jnp.bfloat16
    W_ihT = raw_params["W_ih"].T            # [msg_dim, 3D]; rows = [src | dst | raw | time]
    w_src = W_ihT[:D]                       # [D, 3D]
    w_drt = W_ihT[D:]                       # [D+R+T, 3D]  (dst | raw | time), already in order
    return {
        "w_h":   jnp.concatenate([w_src, raw_params["W_hh"].T], axis=1).astype(bf16),  # [D, 6D]
        "w_drt": w_drt.astype(bf16),                                                   # [D+R+T, 3D]
        "b_ih":  raw_params["b_ih"].astype(jnp.float32),                               # [1, 3D]
        "b_hh":  raw_params["b_hh"].astype(jnp.float32),                               # [1, 3D]
        "time_w": raw_params["time_w"].astype(jnp.float32),                            # [1, T]
        "time_b": raw_params["time_b"].astype(jnp.float32),                            # [1, T]
    }


# -----------------------------------------------------------------------------
# Tile selection: big tiles (overhead amortization) but keep the grid >= 2 steps
# where N allows (v7x megacore sharding + DMA/compute overlap).
# -----------------------------------------------------------------------------
def _pick_tile(N, tile_n):
    tile_n = max(128, (tile_n // 128) * 128)
    if N >= 2 * tile_n:
        return tile_n
    halved = max(128, ((N // 2) // 128) * 128)
    return min(tile_n, halved)


# -----------------------------------------------------------------------------
# Forward wrapper
# -----------------------------------------------------------------------------
def tgn_memory_forward(params, memory, last_update, n_id, store_s, store_d, *, tile_n=256):
    """Gathers / timestamp selection / padding in plain JAX; the kernel does the
    time encoding, fused message projection and GRU update, tiled over rows."""
    dst_s, t_s, raw_s = store_s
    dst_d, t_d, raw_d = store_d
    N = n_id.shape[0]
    D = memory.shape[1]
    R = raw_s.shape[1]
    T = params["time_w"].shape[1]
    bf16 = jnp.bfloat16

    lu = last_update[n_id]

    # --- LastAggregator over the two fixed-slot stores: keep the latest message --
    sel = t_d >= t_s                             # tie -> d-store (it is concatenated last)
    t_new = jnp.maximum(t_s, t_d)                # also the new last_update
    dst = jnp.where(sel, dst_d, dst_s)
    raw = jnp.where(sel[:, None], raw_d, raw_s)
    trel = (t_new - lu).astype(jnp.float32)[:, None]

    h = memory[n_id]                                                               # f32 [N, D]
    x_dr = jnp.concatenate([memory[dst].astype(bf16), raw.astype(bf16)], axis=1)   # bf16 [N, D+R]

    # --- row tiling; pad only when N is not already a tile multiple --------------
    tile_n = _pick_tile(N, tile_n)
    n_pad = (-N) % tile_n
    if n_pad:
        # NOTE: prefer N % tile_n == 0 at the call site; jnp.pad materializes an
        # extra HBM copy of the activations.
        h = jnp.pad(h, ((0, n_pad), (0, 0)))
        x_dr = jnp.pad(x_dr, ((0, n_pad), (0, 0)))
        trel = jnp.pad(trel, ((0, n_pad), (0, 0)))
    Np = N + n_pad

    row = lambda i: (i, 0)      # tiled over rows
    rep = lambda i: (0, 0)      # resident (same block every grid step -> no re-DMA)

    in_specs = [
        pl.BlockSpec((tile_n, D), row),          # h            f32
        pl.BlockSpec((tile_n, D + R), row),      # x_dr         bf16
        pl.BlockSpec((tile_n, 1), row),          # trel         f32
        pl.BlockSpec((1, T), rep),               # time_w
        pl.BlockSpec((1, T), rep),               # time_b
        pl.BlockSpec((D, 6 * D), rep),           # w_h          bf16
        pl.BlockSpec((D + R + T, 3 * D), rep),   # w_drt        bf16
        pl.BlockSpec((1, 3 * D), rep),           # b_ih
        pl.BlockSpec((1, 3 * D), rep),           # b_hh
    ]

    # --- per-step VMEM estimate; only override the scoped default if needed ------
    io_per_step = tile_n * (D * 4 + (D + R) * 2 + 4 + D * 4)          # h + x_dr + trel + out
    weight_bytes = (D * 6 * D + (D + R + T) * 3 * D) * 2 + (2 * 3 * D + 2 * T) * 4
    inter_bytes = tile_n * (6 * D + 3 * D + 3 * D + (D + R + T)) * 4  # hh + gi + gh + x (upper bound)
    vmem_est = 2 * io_per_step + weight_bytes + inter_bytes           # x2 for double-buffering
    vmem_limit = None
    if vmem_est > 12 * 1024 * 1024:                                   # above v5e's 16 MiB default soon
        vmem_limit = min(int(vmem_est * 2), 60 * 1024 * 1024)         # stay under v7x physical 64 MiB

    mem_new = pl.pallas_call(
        _tgn_memory_kernel,
        out_shape=jax.ShapeDtypeStruct((Np, D), jnp.float32),
        grid=(Np // tile_n,),
        in_specs=in_specs,
        out_specs=pl.BlockSpec((tile_n, D), row),
        compiler_params=pltpu.CompilerParams(
            dimension_semantics=("parallel",),
            vmem_limit_bytes=vmem_limit),
    )(h, x_dr, trel,
      params["time_w"], params["time_b"],
      params["w_h"], params["w_drt"],
      params["b_ih"], params["b_hh"])

    return mem_new[:N], t_new


# -----------------------------------------------------------------------------
# Pure-JAX reference (full message/aggregate/GRU path; matmul operands rounded to
# bf16 to mirror the kernel's MXU precision)
# -----------------------------------------------------------------------------
def tgn_memory_reference(raw_params, memory, last_update, n_id, store_s, store_d):
    dst_s, t_s, raw_s = store_s
    dst_d, t_d, raw_d = store_d
    D = memory.shape[1]
    lu = last_update[n_id]
    tw, tb = raw_params["time_w"], raw_params["time_b"]

    def make_msg(dst, t, raw):
        trel = (t - lu).astype(jnp.float32)[:, None]
        tenc = jnp.cos(trel * tw + tb)
        return jnp.concatenate([memory[n_id], memory[dst], raw, tenc], axis=1)

    m_s = make_msg(dst_s, t_s, raw_s)
    m_d = make_msg(dst_d, t_d, raw_d)
    sel = (t_d >= t_s)[:, None]
    aggr = jnp.where(sel, m_d, m_s)                              # LastAggregator

    bf = lambda x: x.astype(jnp.bfloat16)
    gi = jnp.dot(bf(aggr), bf(raw_params["W_ih"].T),
                 preferred_element_type=jnp.float32) + raw_params["b_ih"]
    h = memory[n_id]
    gh = jnp.dot(bf(h), bf(raw_params["W_hh"].T),
                 preferred_element_type=jnp.float32) + raw_params["b_hh"]
    r = jax.nn.sigmoid(gi[:, :D] + gh[:, :D])
    z = jax.nn.sigmoid(gi[:, D:2 * D] + gh[:, D:2 * D])
    n = jnp.tanh(gi[:, 2 * D:] + r * gh[:, 2 * D:])
    mem_new = (1.0 - z) * n + z * h
    return mem_new, jnp.maximum(t_s, t_d)


# -----------------------------------------------------------------------------
if __name__ == "__main__":
    # Shapes consistent with TGNMemory.__init__; N chosen as a tile multiple so no
    # wrapper-side padding copy is materialized and the grid has 2 parallel steps.
    num_nodes, memory_dim, raw_msg_dim, time_dim = 1024, 128, 64, 64
    N = 512                                               # len(n_id): 2 row-tiles of 256
    msg_dim = 2 * memory_dim + raw_msg_dim + time_dim     # IdentityMessage.out_channels

    key = jax.random.PRNGKey(0)
    ks = jax.random.split(key, 16)
    s = 0.1

    # PyTorch-style parameters (GRUCell weight_ih/weight_hh layouts, TimeEncoder Linear)
    raw_params = {
        "W_ih":   jax.random.normal(ks[0], (3 * memory_dim, msg_dim), jnp.float32) * s,
        "W_hh":   jax.random.normal(ks[1], (3 * memory_dim, memory_dim), jnp.float32) * s,
        "b_ih":   jax.random.normal(ks[2], (1, 3 * memory_dim), jnp.float32) * s,
        "b_hh":   jax.random.normal(ks[3], (1, 3 * memory_dim), jnp.float32) * s,
        "time_w": jax.random.normal(ks[4], (1, time_dim), jnp.float32) * s,
        "time_b": jax.random.normal(ks[5], (1, time_dim), jnp.float32) * s,
    }
    params = prepare_params(raw_params, memory_dim, raw_msg_dim)

    # State buffers (as if some interactions already happened)
    memory = jax.random.normal(ks[6], (num_nodes, memory_dim), jnp.float32)
    last_update = jax.random.randint(ks[7], (num_nodes,), 0, 10, jnp.int32)

    # Queried nodes and one stored message per node per store (fixed-shape store)
    n_id = jax.random.permutation(ks[8], num_nodes)[:N].astype(jnp.int32)
    store_s = (jax.random.randint(ks[9], (N,), 0, num_nodes, jnp.int32),
               jax.random.randint(ks[10], (N,), 10, 1000, jnp.int32),
               jax.random.normal(ks[11], (N, raw_msg_dim), jnp.float32))
    store_d = (jax.random.randint(ks[12], (N,), 0, num_nodes, jnp.int32),
               jax.random.randint(ks[13], (N,), 10, 1000, jnp.int32),
               jax.random.normal(ks[14], (N, raw_msg_dim), jnp.float32))

    mem_new, lu_new = tgn_memory_forward(params, memory, last_update, n_id,
                                         store_s, store_d, tile_n=256)
    jax.block_until_ready((mem_new, lu_new))

    mem_ref, lu_ref = tgn_memory_reference(raw_params, memory, last_update, n_id,
                                           store_s, store_d)
    np.testing.assert_allclose(np.asarray(mem_new), np.asarray(mem_ref),
                               rtol=5e-3, atol=5e-3)
    np.testing.assert_array_equal(np.asarray(lu_new), np.asarray(lu_ref))
    print("KERNEL_OK")
</pallas_src>

<mosaic_0001>
module attributes {stable_mosaic.version = 11 : i64} {
  func.func @_tgn_memory_kernel(%arg0: i32, %arg1: memref<256x128xf32, #tpu.memory_space<vmem>>, %arg2: memref<256x192xbf16, #tpu.memory_space<vmem>>, %arg3: memref<256x1xf32, #tpu.memory_space<vmem>>, %arg4: memref<1x64xf32, #tpu.memory_space<vmem>>, %arg5: memref<1x64xf32, #tpu.memory_space<vmem>>, %arg6: memref<128x768xbf16, #tpu.memory_space<vmem>>, %arg7: memref<256x384xbf16, #tpu.memory_space<vmem>>, %arg8: memref<1x384xf32, #tpu.memory_space<vmem>>, %arg9: memref<1x384xf32, #tpu.memory_space<vmem>>, %arg10: memref<256x128xf32, #tpu.memory_space<vmem>>) attributes {dimension_semantics = [#tpu.dimension_semantics<parallel>], iteration_bounds = array<i64: 2>, scalar_prefetch = 0 : i64, scratch_operands = 0 : i64, tpu.core_type = #tpu.core_type<tc>, window_params = [{transform_indices = @transform_0, window_bounds = array<i64: 256, 128>}, {transform_indices = @transform_1, window_bounds = array<i64: 256, 192>}, {transform_indices = @transform_2, window_bounds = array<i64: 256, 1>}, {pipeline_mode = #tpu.pipeline_mode<synchronous>, transform_indices = @transform_3, window_bounds = array<i64: 1, 64>}, {pipeline_mode = #tpu.pipeline_mode<synchronous>, transform_indices = @transform_4, window_bounds = array<i64: 1, 64>}, {pipeline_mode = #tpu.pipeline_mode<synchronous>, transform_indices = @transform_5, window_bounds = array<i64: 128, 768>}, {pipeline_mode = #tpu.pipeline_mode<synchronous>, transform_indices = @transform_6, window_bounds = array<i64: 256, 384>}, {pipeline_mode = #tpu.pipeline_mode<synchronous>, transform_indices = @transform_7, window_bounds = array<i64: 1, 384>}, {pipeline_mode = #tpu.pipeline_mode<synchronous>, transform_indices = @transform_8, window_bounds = array<i64: 1, 384>}, {transform_indices = @transform_9, window_bounds = array<i64: 256, 128>}]} {
    %c0 = arith.constant 0 : index
    %c0_0 = arith.constant 0 : index
    %0 = vector.load %arg1[%c0, %c0_0] : memref<256x128xf32, #tpu.memory_space<vmem>>, vector<256x128xf32>
    %c0_1 = arith.constant 0 : index
    %c0_2 = arith.constant 0 : index
    %1 = vector.load %arg3[%c0_1, %c0_2] : memref<256x1xf32, #tpu.memory_space<vmem>>, vector<256x1xf32>
    %c0_3 = arith.constant 0 : index
    %c0_4 = arith.constant 0 : index
    %2 = vector.load %arg4[%c0_3, %c0_4] : memref<1x64xf32, #tpu.memory_space<vmem>>, vector<1x64xf32>
    %3 = vector.broadcast %1 : vector<256x1xf32> to vector<256x64xf32>
    %4 = vector.broadcast %2 : vector<1x64xf32> to vector<256x64xf32>
    %5 = arith.mulf %3, %4 : vector<256x64xf32>
    %c0_5 = arith.constant 0 : index
    %c0_6 = arith.constant 0 : index
    %6 = vector.load %arg5[%c0_5, %c0_6] : memref<1x64xf32, #tpu.memory_space<vmem>>, vector<1x64xf32>
    %7 = vector.broadcast %6 : vector<1x64xf32> to vector<256x64xf32>
    %8 = arith.addf %5, %7 : vector<256x64xf32>
    %9 = math.cos %8 : vector<256x64xf32>
    %c0_7 = arith.constant 0 : index
    %c0_8 = arith.constant 0 : index
    %10 = vector.load %arg2[%c0_7, %c0_8] : memref<256x192xbf16, #tpu.memory_space<vmem>>, vector<256x192xbf16>
    %11 = arith.truncf %9 : vector<256x64xf32> to vector<256x64xbf16>
    %12 = tpu.concatenate %10, %11 in 1 : vector<256x192xbf16>, vector<256x64xbf16> -> vector<256x256xbf16>
    %13 = arith.truncf %0 : vector<256x128xf32> to vector<256x128xbf16>
    %c0_9 = arith.constant 0 : index
    %c0_10 = arith.constant 0 : index
    %14 = vector.load %arg6[%c0_9, %c0_10] : memref<128x768xbf16, #tpu.memory_space<vmem>>, vector<128x768xbf16>
    %cst = arith.constant dense<0.000000e+00> : vector<256x768xf32>
    %15 = tpu.matmul %13, %14, %cst {dimension_numbers = #tpu.dot_dimension_numbers<[1], [0], [0], [1], [0, 0, 1, 1], [], []>} : vector<256x128xbf16>, vector<128x768xbf16>, vector<256x768xf32> -> vector<256x768xf32>
    %16 = vector.extract_strided_slice %15 {offsets = [0, 0], sizes = [256, 384], strides = [1, 1]} : vector<256x768xf32> to vector<256x384xf32>
    %c0_11 = arith.constant 0 : index
    %c0_12 = arith.constant 0 : index
    %17 = vector.load %arg7[%c0_11, %c0_12] : memref<256x384xbf16, #tpu.memory_space<vmem>>, vector<256x384xbf16>
    %cst_13 = arith.constant dense<0.000000e+00> : vector<256x384xf32>
    %18 = tpu.matmul %12, %17, %cst_13 {dimension_numbers = #tpu.dot_dimension_numbers<[1], [0], [0], [1], [0, 0, 1, 1], [], []>} : vector<256x256xbf16>, vector<256x384xbf16>, vector<256x384xf32> -> vector<256x384xf32>
    %19 = arith.addf %16, %18 : vector<256x384xf32>
    %c0_14 = arith.constant 0 : index
    %c0_15 = arith.constant 0 : index
    %20 = vector.load %arg8[%c0_14, %c0_15] : memref<1x384xf32, #tpu.memory_space<vmem>>, vector<1x384xf32>
    %21 = vector.broadcast %20 : vector<1x384xf32> to vector<256x384xf32>
    %22 = arith.addf %19, %21 : vector<256x384xf32>
    %23 = vector.extract_strided_slice %15 {offsets = [0, 384], sizes = [256, 384], strides = [1, 1]} : vector<256x768xf32> to vector<256x384xf32>
    %c0_16 = arith.constant 0 : index
    %c0_17 = arith.constant 0 : index
    %24 = vector.load %arg9[%c0_16, %c0_17] : memref<1x384xf32, #tpu.memory_space<vmem>>, vector<1x384xf32>
    %25 = vector.broadcast %24 : vector<1x384xf32> to vector<256x384xf32>
    %26 = arith.addf %23, %25 : vector<256x384xf32>
    %27 = vector.extract_strided_slice %22 {offsets = [0, 0], sizes = [256, 128], strides = [1, 1]} : vector<256x384xf32> to vector<256x128xf32>
    %28 = vector.extract_strided_slice %26 {offsets = [0, 0], sizes = [256, 128], strides = [1, 1]} : vector<256x384xf32> to vector<256x128xf32>
    %29 = arith.addf %27, %28 : vector<256x128xf32>
    %30 = arith.negf %29 : vector<256x128xf32>
    %31 = math.exp %30 : vector<256x128xf32>
    %cst_18 = arith.constant 1.000000e+00 : f32
    %32 = vector.broadcast %cst_18 : f32 to vector<256x128xf32>
    %33 = arith.addf %32, %31 : vector<256x128xf32>
    %34 = arith.divf %32, %33 : vector<256x128xf32>
    %35 = vector.extract_strided_slice %22 {offsets = [0, 128], sizes = [256, 128], strides = [1, 1]} : vector<256x384xf32> to vector<256x128xf32>
    %36 = vector.extract_strided_slice %26 {offsets = [0, 128], sizes = [256, 128], strides = [1, 1]} : vector<256x384xf32> to vector<256x128xf32>
    %37 = arith.addf %35, %36 : vector<256x128xf32>
    %38 = arith.negf %37 : vector<256x128xf32>
    %39 = math.exp %38 : vector<256x128xf32>
    %cst_19 = arith.constant 1.000000e+00 : f32
    %40 = vector.broadcast %cst_19 : f32 to vector<256x128xf32>
    %41 = arith.addf %40, %39 : vector<256x128xf32>
    %42 = arith.divf %40, %41 : vector<256x128xf32>
    %43 = vector.extract_strided_slice %22 {offsets = [0, 256], sizes = [256, 128], strides = [1, 1]} : vector<256x384xf32> to vector<256x128xf32>
    %44 = vector.extract_strided_slice %26 {offsets = [0, 256], sizes = [256, 128], strides = [1, 1]} : vector<256x384xf32> to vector<256x128xf32>
    %45 = arith.mulf %34, %44 : vector<256x128xf32>
    %46 = arith.addf %43, %45 : vector<256x128xf32>
    %47 = math.tanh %46 : vector<256x128xf32>
    %cst_20 = arith.constant 1.000000e+00 : f32
    %48 = vector.broadcast %cst_20 : f32 to vector<256x128xf32>
    %49 = arith.subf %48, %42 : vector<256x128xf32>
    %50 = arith.mulf %49, %47 : vector<256x128xf32>
    %51 = arith.mulf %42, %0 : vector<256x128xf32>
    %52 = arith.addf %50, %51 : vector<256x128xf32>
    %c0_21 = arith.constant 0 : index
    %c0_22 = arith.constant 0 : index
    %53 = vector.load %arg10[%c0_21, %c0_22] : memref<256x128xf32, #tpu.memory_space<vmem>>, vector<256x128xf32>
    tpu.vector_store %arg10[%c0_21, %c0_22], %52 {strides = array<i32>} : memref<256x128xf32, #tpu.memory_space<vmem>>, vector<256x128xf32>,
    return
  }
  func.func @transform_0(%arg0: i32) -> (i32, i32) {
    %c0_i32 = arith.constant 0 : i32
    %c0_i32_0 = arith.constant 0 : i32
    return %arg0, %c0_i32 : i32, i32
  }
  func.func @transform_1(%arg0: i32) -> (i32, i32) {
    %c0_i32 = arith.constant 0 : i32
    %c0_i32_0 = arith.constant 0 : i32
    return %arg0, %c0_i32 : i32, i32
  }
  func.func @transform_2(%arg0: i32) -> (i32, i32) {
    %c0_i32 = arith.constant 0 : i32
    %c0_i32_0 = arith.constant 0 : i32
    return %arg0, %c0_i32 : i32, i32
  }
  func.func @transform_3(%arg0: i32) -> (i32, i32) {
    %c0_i32 = arith.constant 0 : i32
    %c0_i32_0 = arith.constant 0 : i32
    %c0_i32_1 = arith.constant 0 : i32
    return %c0_i32, %c0_i32_0 : i32, i32
  }
  func.func @transform_4(%arg0: i32) -> (i32, i32) {
    %c0_i32 = arith.constant 0 : i32
    %c0_i32_0 = arith.constant 0 : i32
    %c0_i32_1 = arith.constant 0 : i32
    return %c0_i32, %c0_i32_0 : i32, i32
  }
  func.func @transform_5(%arg0: i32) -> (i32, i32) {
    %c0_i32 = arith.constant 0 : i32
    %c0_i32_0 = arith.constant 0 : i32
    %c0_i32_1 = arith.constant 0 : i32
    return %c0_i32, %c0_i32_0 : i32, i32
  }
  func.func @transform_6(%arg0: i32) -> (i32, i32) {
    %c0_i32 = arith.constant 0 : i32
    %c0_i32_0 = arith.constant 0 : i32
    %c0_i32_1 = arith.constant 0 : i32
    return %c0_i32, %c0_i32_0 : i32, i32
  }
  func.func @transform_7(%arg0: i32) -> (i32, i32) {
    %c0_i32 = arith.constant 0 : i32
    %c0_i32_0 = arith.constant 0 : i32
    %c0_i32_1 = arith.constant 0 : i32
    return %c0_i32, %c0_i32_0 : i32, i32
  }
  func.func @transform_8(%arg0: i32) -> (i32, i32) {
    %c0_i32 = arith.constant 0 : i32
    %c0_i32_0 = arith.constant 0 : i32
    %c0_i32_1 = arith.constant 0 : i32
    return %c0_i32, %c0_i32_0 : i32, i32
  }
  func.func @transform_9(%arg0: i32) -> (i32, i32) {
    %c0_i32 = arith.constant 0 : i32
    %c0_i32_0 = arith.constant 0 : i32
    return %arg0, %c0_i32 : i32, i32
  }
}

</mosaic_0001>

<llo_original>
// kernel: tpu_custom_call.1
$region0: #{tpu_custom_call.1}
  #allocation0 [shape = 'u32[]', space=smem, size = 0x4, offset = 0x4, fixed_abs, tag = 'smem constant byte address 0x4 - core index']
  #allocation1 [shape = 'u32[144,128]{1,0:T(1,128)}', space=vmem, size = 0x12000, scoped, tag = 'internal scratch']
  %s0 = inlined_call_operand.vmem [shape: f32[512,128], index: 0, kind: input, shape index: {}]
  %s1 = inlined_call_operand.vmem [shape: bf16[512,192], index: 1, kind: input, shape index: {}]
  %s2 = inlined_call_operand.vmem [shape: f32[512,1], index: 2, kind: input, shape index: {}]
  %s3 = inlined_call_operand.vmem [shape: f32[1,64], index: 3, kind: input, shape index: {}]
  %s4 = inlined_call_operand.vmem [shape: f32[1,64], index: 4, kind: input, shape index: {}]
  %s5 = inlined_call_operand.vmem [shape: bf16[128,768], index: 5, kind: input, shape index: {}]
  %s6 = inlined_call_operand.vmem [shape: bf16[256,384], index: 6, kind: input, shape index: {}]
  %s7 = inlined_call_operand.vmem [shape: f32[1,384], index: 7, kind: input, shape index: {}]
  %s8 = inlined_call_operand.vmem [shape: f32[1,384], index: 8, kind: input, shape index: {}]
  %s9 = inlined_call_operand.hbm [shape: f32[512,128], index: 9, kind: output, shape index: {}]
  %s10 = sld [smem:[#allocation0]]
  $region69: #{tpu_custom_call.1} parent=0
    _
  %s12 = ssub.s32 1, %s10
  %s13 = scalar_select 0, %s12, %s10
  $region1: #{tpu_custom_call.1} parent=0
    #allocation2 [shape = 'u8[262144]{0}', space=vmem, size = 0x40000, scoped, tag = 'output window, operand 0']
    #allocation3 [shape = 's32[2]{0}', space=sflag, size = 0x8, scoped, tag = 'scoped memory for tpu_custom_call.1']
    %14 = vsyncpa [#allocation3], 0
    %s15 = scalar_lea.sflag [#allocation3], 1
    %16 = vsyncpa %s15, 0
    loop: start=0, step=1, limit=4
    $region2: #{tpu_custom_call.1} parent=1 // loop_pre_header
      _
    $region3: #{tpu_custom_call.1} parent=1 // loop_header
      %s18 = sphi 0, %s22
      %p19 = scmp.ge.s32.totalorder %s18, 4
      %s28 = sphi 0, %s30
      %s31 = sphi 0, %s28
      %s32 = sphi 0, %s31
      %s48 = sphi 0, %s32
      %s54 = sphi 0, %s56
      %s57 = sphi 0, %s54
      %s58 = sphi 0, %s57
      %s74 = sphi 0, %s58
      %s80 = sphi 0, %s82
      %s83 = sphi 0, %s80
      %s84 = sphi 0, %s83
      %s100 = sphi 0, %s84
      %s104 = sphi 0, %s104
      %s106 = sphi 0, %s104
      %s107 = sphi 0, %s106
      %s121 = sphi 0, %s107
      %s125 = sphi 0, %s125
      %s127 = sphi 0, %s125
      %s128 = sphi 0, %s127
      %s142 = sphi 0, %s128
      %s146 = sphi 0, %s146
      %s148 = sphi 0, %s146
      %s149 = sphi 0, %s148
      %s163 = sphi 0, %s149
      %s167 = sphi 0, %s167
      %s169 = sphi 0, %s167
      %s170 = sphi 0, %s169
      %s184 = sphi 0, %s170
      %s188 = sphi 0, %s188
      %s190 = sphi 0, %s188
      %s191 = sphi 0, %s190
      %s205 = sphi 0, %s191
      %s209 = sphi 0, %s209
      %s211 = sphi 0, %s209
      %s212 = sphi 0, %s211
      %s226 = sphi 0, %s212
      %s232 = sphi 0, %s234
      %s235 = sphi 0, %s232
      %s236 = sphi 0, %s235
      %s252 = sphi 0, %s236
    $region4: #{tpu_custom_call.1} parent=1 // loop_header_branch
      %21 = sbr.rel (%p19) target = $region8
    $region5: #{tpu_custom_call.1} parent=1 // loop_body
      %s23 = ssub.s32 %s18, 1
      %s24 = ssub.s32 %s18, 2
      %s25 = sadd.s32 %s18, 1
      %s26 = ssub.s32 %s18, %s25
      %p27 = scmp.eq.s32.totalorder %s26, 0
      %s29 = sadd.s32 %s28, 1
      %s30 = scalar_select %p27, %s28, %s29
      %p33 = pneg %p27
      %p34 = scmp.eq.s32.totalorder %s18, 1
      %p35 = por %p33, %p34
      %p36 = scmp.ne.s32.totalorder %s28, %s31
      %p37 = scmp.eq.s32.totalorder %s18, 0
      %p38 = por %p36, %p37
      %p39 = scmp.ne.s32.totalorder %s28, %s31
      %p40 = scmp.eq.s32.totalorder %s23, 1
      %p41 = por %p39, %p40
      %p42 = scmp.ne.s32.totalorder %s31, %s32
      %p43 = scmp.eq.s32.totalorder %s23, 0
      %p44 = por %p42, %p43
      %p45 = scmp.ne.s32.totalorder %s31, %s32
      %p46 = scmp.eq.s32.totalorder %s24, 1
      %p47 = por %p45, %p46
      %p49 = scmp.ne.s32.totalorder %s32, %s48
      %p50 = scmp.eq.s32.totalorder %s24, 0
      %p51 = por %p49, %p50
      %s52 = ssub.s32 %s18, %s25
      %p53 = scmp.eq.s32.totalorder %s52, 0
      %s55 = sadd.s32 %s54, 1
      %s56 = scalar_select %p53, %s54, %s55
      %p59 = pneg %p53
      %p60 = scmp.eq.s32.totalorder %s18, 1
      %p61 = por %p59, %p60
      %p62 = scmp.ne.s32.totalorder %s54, %s57
      %p63 = scmp.eq.s32.totalorder %s18, 0
      %p64 = por %p62, %p63
      %p65 = scmp.ne.s32.totalorder %s54, %s57
      %p66 = scmp.eq.s32.totalorder %s23, 1
      %p67 = por %p65, %p66
      %p68 = scmp.ne.s32.totalorder %s57, %s58
      %p69 = scmp.eq.s32.totalorder %s23, 0
      %p70 = por %p68, %p69
      %p71 = scmp.ne.s32.totalorder %s57, %s58
      %p72 = scmp.eq.s32.totalorder %s24, 1
      %p73 = por %p71, %p72
      %p75 = scmp.ne.s32.totalorder %s58, %s74
      %p76 = scmp.eq.s32.totalorder %s24, 0
      %p77 = por %p75, %p76
      %s78 = ssub.s32 %s18, %s25
      %p79 = scmp.eq.s32.totalorder %s78, 0
      %s81 = sadd.s32 %s80, 1
      %s82 = scalar_select %p79, %s80, %s81
      %p85 = pneg %p79
      %p86 = scmp.eq.s32.totalorder %s18, 1
      %p87 = por %p85, %p86
      %p88 = scmp.ne.s32.totalorder %s80, %s83
      %p89 = scmp.eq.s32.totalorder %s18, 0
      %p90 = por %p88, %p89
      %p91 = scmp.ne.s32.totalorder %s80, %s83
      %p92 = scmp.eq.s32.totalorder %s23, 1
      %p93 = por %p91, %p92
      %p94 = scmp.ne.s32.totalorder %s83, %s84
      %p95 = scmp.eq.s32.totalorder %s23, 0
      %p96 = por %p94, %p95
      %p97 = scmp.ne.s32.totalorder %s83, %s84
      %p98 = scmp.eq.s32.totalorder %s24, 1
      %p99 = por %p97, %p98
      %p101 = scmp.ne.s32.totalorder %s84, %s100
      %p102 = scmp.eq.s32.totalorder %s24, 0
      %p103 = por %p101, %p102
      %s105 = sadd.s32 %s104, 1
      %p108 = scmp.eq.s32.totalorder %s18, 1
      %p109 = scmp.ne.s32.totalorder %s104, %s106
      %p110 = scmp.eq.s32.totalorder %s18, 0
      %p111 = por %p109, %p110
      %p112 = scmp.ne.s32.totalorder %s104, %s106
      %p113 = scmp.eq.s32.totalorder %s23, 1
      %p114 = por %p112, %p113
      %p115 = scmp.ne.s32.totalorder %s106, %s107
      %p116 = scmp.eq.s32.totalorder %s23, 0
      %p117 = por %p115, %p116
      %p118 = scmp.ne.s32.totalorder %s106, %s107
      %p119 = scmp.eq.s32.totalorder %s24, 1
      %p120 = por %p118, %p119
      %p122 = scmp.ne.s32.totalorder %s107, %s121
      %p123 = scmp.eq.s32.totalorder %s24, 0
      %p124 = por %p122, %p123
      %s126 = sadd.s32 %s125, 1
      %p129 = scmp.eq.s32.totalorder %s18, 1
      %p130 = scmp.ne.s32.totalorder %s125, %s127
      %p131 = scmp.eq.s32.totalorder %s18, 0
      %p132 = por %p130, %p131
      %p133 = scmp.ne.s32.totalorder %s125, %s127
      %p134 = scmp.eq.s32.totalorder %s23, 1
      %p135 = por %p133, %p134
      %p136 = scmp.ne.s32.totalorder %s127, %s128
      %p137 = scmp.eq.s32.totalorder %s23, 0
      %p138 = por %p136, %p137
      %p139 = scmp.ne.s32.totalorder %s127, %s128
      %p140 = scmp.eq.s32.totalorder %s24, 1
      %p141 = por %p139, %p140
      %p143 = scmp.ne.s32.totalorder %s128, %s142
      %p144 = scmp.eq.s32.totalorder %s24, 0
      %p145 = por %p143, %p144
      %s147 = sadd.s32 %s146, 1
      %p150 = scmp.eq.s32.totalorder %s18, 1
      %p151 = scmp.ne.s32.totalorder %s146, %s148
      %p152 = scmp.eq.s32.totalorder %s18, 0
      %p153 = por %p151, %p152
      %p154 = scmp.ne.s32.totalorder %s146, %s148
      %p155 = scmp.eq.s32.totalorder %s23, 1
      %p156 = por %p154, %p155
      %p157 = scmp.ne.s32.totalorder %s148, %s149
      %p158 = scmp.eq.s32.totalorder %s23, 0
      %p159 = por %p157, %p158
      %p160 = scmp.ne.s32.totalorder %s148, %s149
      %p161 = scmp.eq.s32.totalorder %s24, 1
      %p162 = por %p160, %p161
      %p164 = scmp.ne.s32.totalorder %s149, %s163
      %p165 = scmp.eq.s32.totalorder %s24, 0
      %p166 = por %p164, %p165
      %s168 = sadd.s32 %s167, 1
      %p171 = scmp.eq.s32.totalorder %s18, 1
      %p172 = scmp.ne.s32.totalorder %s167, %s169
      %p173 = scmp.eq.s32.totalorder %s18, 0
      %p174 = por %p172, %p173
      %p175 = scmp.ne.s32.totalorder %s167, %s169
      %p176 = scmp.eq.s32.totalorder %s23, 1
      %p177 = por %p175, %p176
      %p178 = scmp.ne.s32.totalorder %s169, %s170
      %p179 = scmp.eq.s32.totalorder %s23, 0
      %p180 = por %p178, %p179
      %p181 = scmp.ne.s32.totalorder %s169, %s170
      %p182 = scmp.eq.s32.totalorder %s24, 1
      %p183 = por %p181, %p182
      %p185 = scmp.ne.s32.totalorder %s170, %s184
      %p186 = scmp.eq.s32.totalorder %s24, 0
      %p187 = por %p185, %p186
      %s189 = sadd.s32 %s188, 1
      %p192 = scmp.eq.s32.totalorder %s18, 1
      %p193 = scmp.ne.s32.totalorder %s188, %s190
      %p194 = scmp.eq.s32.totalorder %s18, 0
      %p195 = por %p193, %p194
      %p196 = scmp.ne.s32.totalorder %s188, %s190
      %p197 = scmp.eq.s32.totalorder %s23, 1
      %p198 = por %p196, %p197
      %p199 = scmp.ne.s32.totalorder %s190, %s191
      %p200 = scmp.eq.s32.totalorder %s23, 0
      %p201 = por %p199, %p200
      %p202 = scmp.ne.s32.totalorder %s190, %s191
      %p203 = scmp.eq.s32.totalorder %s24, 1
      %p204 = por %p202, %p203
      %p206 = scmp.ne.s32.totalorder %s191, %s205
      %p207 = scmp.eq.s32.totalorder %s24, 0
      %p208 = por %p206, %p207
      %s210 = sadd.s32 %s209, 1
      %p213 = scmp.eq.s32.totalorder %s18, 1
      %p214 = scmp.ne.s32.totalorder %s209, %s211
      %p215 = scmp.eq.s32.totalorder %s18, 0
      %p216 = por %p214, %p215
      %p217 = scmp.ne.s32.totalorder %s209, %s211
      %p218 = scmp.eq.s32.totalorder %s23, 1
      %p219 = por %p217, %p218
      %p220 = scmp.ne.s32.totalorder %s211, %s212
      %p221 = scmp.eq.s32.totalorder %s23, 0
      %p222 = por %p220, %p221
      %p223 = scmp.ne.s32.totalorder %s211, %s212
      %p224 = scmp.eq.s32.totalorder %s24, 1
      %p225 = por %p223, %p224
      %p227 = scmp.ne.s32.totalorder %s212, %s226
      %p228 = scmp.eq.s32.totalorder %s24, 0
      %p229 = por %p227, %p228
      %s230 = ssub.s32 %s18, %s25
      %p231 = scmp.eq.s32.totalorder %s230, 0
      %s233 = sadd.s32 %s232, 1
      %s234 = scalar_select %p231, %s232, %s233
      %p237 = pneg %p231
      %p238 = scmp.eq.s32.totalorder %s18, 1
      %p239 = por %p237, %p238
      %p240 = scmp.ne.s32.totalorder %s232, %s235
      %p241 = scmp.eq.s32.totalorder %s18, 0
      %p242 = por %p240, %p241
      %p243 = scmp.ne.s32.totalorder %s232, %s235
      %p244 = scmp.eq.s32.totalorder %s23, 1
      %p245 = por %p243, %p244
      %p246 = scmp.ne.s32.totalorder %s235, %s236
      %p247 = scmp.eq.s32.totalorder %s23, 0
      %p248 = por %p246, %p247
      %p249 = scmp.ne.s32.totalorder %s235, %s236
      %p250 = scmp.eq.s32.totalorder %s24, 1
      %p251 = por %p249, %p250
      %p253 = scmp.ne.s32.totalorder %s236, %s252
      %p254 = scmp.eq.s32.totalorder %s24, 0
      %p255 = por %p253, %p254
      %p256 = scmp.le.s32.totalorder 1, %s18
      %p257 = scmp.lt.s32.totalorder %s18, 3
      %p258 = pnand %p256, %p257
      %p259 = pneg %p258
      // Predicated region
      $region9: #{tpu_custom_call.1} parent=5 // pred_check
        _
      $region10: #{tpu_custom_call.1} parent=5 // pred_check_branch
        %261 = sbr.rel (%p258) target = $region12
      $region11: #{tpu_custom_call.1} parent=5 // pred_region
        %s262 = ssub.s32 %s18, 1
        // Predicated region
        $region13: #{tpu_custom_call.1} parent=11 // pred_check
          %p263 = pneg %p117
        $region14: #{tpu_custom_call.1} parent=11 // pred_check_branch
          %265 = sbr.rel (%p263) target = $region16
        $region15: #{tpu_custom_call.1} parent=11 // pred_region
          _
        $region16: #{tpu_custom_call.1} parent=11 // pred_fallthru
          _
        // Predicated region
        $region17: #{tpu_custom_call.1} parent=11 // pred_check
          %p266 = pneg %p138
        $region18: #{tpu_custom_call.1} parent=11 // pred_check_branch
          %268 = sbr.rel (%p266) target = $region20
        $region19: #{tpu_custom_call.1} parent=11 // pred_region
          _
        $region20: #{tpu_custom_call.1} parent=11 // pred_fallthru
          _
        // Predicated region
        $region21: #{tpu_custom_call.1} parent=11 // pred_check
          %p269 = pneg %p159
        $region22: #{tpu_custom_call.1} parent=11 // pred_check_branch
          %271 = sbr.rel (%p269) target = $region24
        $region23: #{tpu_custom_call.1} parent=11 // pred_region
          _
        $region24: #{tpu_custom_call.1} parent=11 // pred_fallthru
          _
        // Predicated region
        $region25: #{tpu_custom_call.1} parent=11 // pred_check
          %p272 = pneg %p180
        $region26: #{tpu_custom_call.1} parent=11 // pred_check_branch
          %274 = sbr.rel (%p272) target = $region28
        $region27: #{tpu_custom_call.1} parent=11 // pred_region
          _
        $region28: #{tpu_custom_call.1} parent=11 // pred_fallthru
          _
        // Predicated region
        $region29: #{tpu_custom_call.1} parent=11 // pred_check
          %p275 = pneg %p201
        $region30: #{tpu_custom_call.1} parent=11 // pred_check_branch
          %277 = sbr.rel (%p275) target = $region32
        $region31: #{tpu_custom_call.1} parent=11 // pred_region
          _
        $region32: #{tpu_custom_call.1} parent=11 // pred_fallthru
          _
        // Predicated region
        $region33: #{tpu_custom_call.1} parent=11 // pred_check
          %p278 = pneg %p222
        $region34: #{tpu_custom_call.1} parent=11 // pred_check_branch
          %280 = sbr.rel (%p278) target = $region36
        $region35: #{tpu_custom_call.1} parent=11 // pred_region
          _
        $region36: #{tpu_custom_call.1} parent=11 // pred_fallthru
          _
      $region12: #{tpu_custom_call.1} parent=5 // pred_fallthru
        _
      %p281 = scmp.lt.s32.totalorder %s18, 2
      // Predicated region
      $region37: #{tpu_custom_call.1} parent=5 // pred_check
        %p282 = pneg %p281
      $region38: #{tpu_custom_call.1} parent=5 // pred_check_branch
        %284 = sbr.rel (%p282) target = $region40
      $region39: #{tpu_custom_call.1} parent=5 // pred_region
        // Predicated region
        $region41: #{tpu_custom_call.1} parent=39 // pred_check
          %p285 = pneg %p38
        $region42: #{tpu_custom_call.1} parent=39 // pred_check_branch
          %287 = sbr.rel (%p285) target = $region44
        $region43: #{tpu_custom_call.1} parent=39 // pred_region
          %s288 = smul.u32 32, %s18
          %p289 = scmp.lt.s32.totalorder %s288, 63
          %s290 = scalar_select %p289, %s288, 63
          %s291 = smul.addr %s290, 8
          %s292 = scalar_lea.vmem %s0, %s291
          %s293 = smul.u32 32, %s18
        $region44: #{tpu_custom_call.1} parent=39 // pred_fallthru
          _
        // Predicated region
        $region45: #{tpu_custom_call.1} parent=39 // pred_check
          %p294 = pneg %p64
        $region46: #{tpu_custom_call.1} parent=39 // pred_check_branch
          %296 = sbr.rel (%p294) target = $region48
        $region47: #{tpu_custom_call.1} parent=39 // pred_region
          %s297 = smul.u32 32, %s18
          %p298 = scmp.lt.s32.totalorder %s297, 63
          %s299 = scalar_select %p298, %s297, 63
          %s300 = smul.addr %s299, 2
          %s301 = smul.addr %s300, 4
          %s302 = scalar_lea.vmem %s1, %s301
          %s303 = smul.u32 32, %s18
        $region48: #{tpu_custom_call.1} parent=39 // pred_fallthru
          _
        // Predicated region
        $region49: #{tpu_custom_call.1} parent=39 // pred_check
          %p304 = pneg %p90
        $region50: #{tpu_custom_call.1} parent=39 // pred_check_branch
          %306 = sbr.rel (%p304) target = $region52
        $region51: #{tpu_custom_call.1} parent=39 // pred_region
          %s307 = smul.u32 32, %s18
          %p308 = scmp.lt.s32.totalorder %s307, 63
          %s309 = scalar_select %p308, %s307, 63
          %s310 = smul.addr %s309, 8
          %s311 = scalar_lea.vmem %s2, %s310
          %s312 = smul.u32 32, %s18
        $region52: #{tpu_custom_call.1} parent=39 // pred_fallthru
          _
      $region40: #{tpu_custom_call.1} parent=5 // pred_fallthru
        _
      %p313 = scmp.le.s32.totalorder 1, %s18
      %p314 = scmp.lt.s32.totalorder %s18, 3
      %p315 = pnand %p313, %p314
      %p316 = pneg %p315
      // Predicated region
      $region53: #{tpu_custom_call.1} parent=5 // pred_check
        _
      $region54: #{tpu_custom_call.1} parent=5 // pred_check_branch
        %318 = sbr.rel (%p315) target = $region56
      $region55: #{tpu_custom_call.1} parent=5 // pred_region
        %s319 = ssub.s32 %s18, 1
        %s320 = smul.u32 32, %s23
        %p321 = scmp.lt.s32.totalorder %s320, 63
        %s322 = scalar_select %p321, %s320, 63
        %s323 = smul.addr %s322, 8
        %s324 = scalar_lea.vmem %s0, %s323
        %p325 = pneg %p44
        %p326 = pneg %p41
        %s327 = smul.u32 32, %s23
        %p328 = scmp.lt.s32.totalorder %s327, 63
        %s329 = scalar_select %p328, %s327, 63
        %s330 = smul.addr %s329, 2
        %s331 = smul.addr %s330, 4
        %s332 = scalar_lea.vmem %s1, %s331
        %p333 = pneg %p70
        %p334 = pneg %p67
        %s335 = smul.u32 32, %s23
        %p336 = scmp.lt.s32.totalorder %s335, 63
        %s337 = scalar_select %p336, %s335, 63
        %s338 = smul.addr %s337, 8
        %s339 = scalar_lea.vmem %s2, %s338
        %p340 = pneg %p96
        %p341 = pneg %p93
        %p342 = pneg %p117
        %p343 = pneg %p114
        %p344 = pneg %p138
        %p345 = pneg %p135
        %p346 = pneg %p159
        %p347 = pneg %p156
        %p348 = pneg %p180
        %p349 = pneg %p177
        %p350 = pneg %p201
        %p351 = pneg %p198
        %p352 = pneg %p222
        %p353 = pneg %p219
        %p354 = pneg %p248
        %p355 = pneg %p245
        %s356 = sand.u32 %s235, 1
        %s357 = scalar_lea.sflag [#allocation3], %s356
        %s358 = sand.u32 %s235, 1
        %s359 = smul.addr %s358, 256
        %s360 = scalar_lea.vmem [#allocation2], %s359
        %s361 = smul.u32 32, %s23
        %p362 = scmp.lt.s32.totalorder %s361, 63
        %s363 = scalar_select %p362, %s361, 63
        %s364 = smul.addr %s363, 8
        %s365 = scalar_lea.vmem %s0, %s364
        %s366 = smul.u32 32, %s23
        %s367 = smul.u32 32, %s23
        %p368 = scmp.lt.s32.totalorder %s367, 63
        %s369 = scalar_select %p368, %s367, 63
        %s370 = smul.addr %s369, 2
        %s371 = smul.addr %s370, 4
        %s372 = scalar_lea.vmem %s1, %s371
        %s373 = smul.u32 32, %s23
        %s374 = smul.u32 32, %s23
        %p375 = scmp.lt.s32.totalorder %s374, 63
        %s376 = scalar_select %p375, %s374, 63
        %s377 = smul.addr %s376, 8
        %s378 = scalar_lea.vmem %s2, %s377
        %s379 = smul.u32 32, %s23
        %s380 = smul.u32 32, %s23
        %v382 = vld [vmem:[%s365] sm:$0xff]
        %v383 = vld [vmem:[%s365 + $0x8] sm:$0xff]
        %v384 = vld [vmem:[%s365 + $0x10] sm:$0xff]
        %v385 = vld [vmem:[%s365 + $0x18] sm:$0xff]
        %v386 = vld [vmem:[%s365 + $0x20] sm:$0xff]
        %v387 = vld [vmem:[%s365 + $0x28] sm:$0xff]
        %v388 = vld [vmem:[%s365 + $0x30] sm:$0xff]
        %v389 = vld [vmem:[%s365 + $0x38] sm:$0xff]
        %v390 = vld [vmem:[%s365 + $0x40] sm:$0xff]
        %v391 = vld [vmem:[%s365 + $0x48] sm:$0xff]
        %v392 = vld [vmem:[%s365 + $0x50] sm:$0xff]
        %v393 = vld [vmem:[%s365 + $0x58] sm:$0xff]
        %v394 = vld [vmem:[%s365 + $0x60] sm:$0xff]
        %v395 = vld [vmem:[%s365 + $0x68] sm:$0xff]
        %v396 = vld [vmem:[%s365 + $0x70] sm:$0xff]
        %v397 = vld [vmem:[%s365 + $0x78] sm:$0xff]
        %v398 = vld [vmem:[%s365 + $0x80] sm:$0xff]
        %v399 = vld [vmem:[%s365 + $0x88] sm:$0xff]
        %v400 = vld [vmem:[%s365 + $0x90] sm:$0xff]
        %v401 = vld [vmem:[%s365 + $0x98] sm:$0xff]
        %v402 = vld [vmem:[%s365 + $0xa0] sm:$0xff]
        %v403 = vld [vmem:[%s365 + $0xa8] sm:$0xff]
        %v404 = vld [vmem:[%s365 + $0xb0] sm:$0xff]
        %v405 = vld [vmem:[%s365 + $0xb8] sm:$0xff]
        %v406 = vld [vmem:[%s365 + $0xc0] sm:$0xff]
        %v407 = vld [vmem:[%s365 + $0xc8] sm:$0xff]
        %v408 = vld [vmem:[%s365 + $0xd0] sm:$0xff]
        %v409 = vld [vmem:[%s365 + $0xd8] sm:$0xff]
        %v410 = vld [vmem:[%s365 + $0xe0] sm:$0xff]
        %v411 = vld [vmem:[%s365 + $0xe8] sm:$0xff]
        %v412 = vld [vmem:[%s365 + $0xf0] sm:$0xff]
        %v413 = vld [vmem:[%s365 + $0xf8] sm:$0xff]
        %v414 = vld [vmem:[%s378] sm:$0xff]
        %v415 = vld [vmem:[%s378 + $0x8] sm:$0xff]
        %v416 = vld [vmem:[%s378 + $0x10] sm:$0xff]
        %v417 = vld [vmem:[%s378 + $0x18] sm:$0xff]
        %v418 = vld [vmem:[%s378 + $0x20] sm:$0xff]
        %v419 = vld [vmem:[%s378 + $0x28] sm:$0xff]
        %v420 = vld [vmem:[%s378 + $0x30] sm:$0xff]
        %v421 = vld [vmem:[%s378 + $0x38] sm:$0xff]
        %v422 = vld [vmem:[%s378 + $0x40] sm:$0xff]
        %v423 = vld [vmem:[%s378 + $0x48] sm:$0xff]
        %v424 = vld [vmem:[%s378 + $0x50] sm:$0xff]
        %v425 = vld [vmem:[%s378 + $0x58] sm:$0xff]
        %v426 = vld [vmem:[%s378 + $0x60] sm:$0xff]
        %v427 = vld [vmem:[%s378 + $0x68] sm:$0xff]
        %v428 = vld [vmem:[%s378 + $0x70] sm:$0xff]
        %v429 = vld [vmem:[%s378 + $0x78] sm:$0xff]
        %v430 = vld [vmem:[%s378 + $0x80] sm:$0xff]
        %v431 = vld [vmem:[%s378 + $0x88] sm:$0xff]
        %v432 = vld [vmem:[%s378 + $0x90] sm:$0xff]
        %v433 = vld [vmem:[%s378 + $0x98] sm:$0xff]
        %v434 = vld [vmem:[%s378 + $0xa0] sm:$0xff]
        %v435 = vld [vmem:[%s378 + $0xa8] sm:$0xff]
        %v436 = vld [vmem:[%s378 + $0xb0] sm:$0xff]
        %v437 = vld [vmem:[%s378 + $0xb8] sm:$0xff]
        %v438 = vld [vmem:[%s378 + $0xc0] sm:$0xff]
        %v439 = vld [vmem:[%s378 + $0xc8] sm:$0xff]
        %v440 = vld [vmem:[%s378 + $0xd0] sm:$0xff]
        %v441 = vld [vmem:[%s378 + $0xd8] sm:$0xff]
        %v442 = vld [vmem:[%s378 + $0xe0] sm:$0xff]
        %v443 = vld [vmem:[%s378 + $0xe8] sm:$0xff]
        %v444 = vld [vmem:[%s378 + $0xf0] sm:$0xff]
        %v445 = vld [vmem:[%s378 + $0xf8] sm:$0xff]
        %v446 = vld [vmem:[%s3] sm:$0x1]
        %448 = vset.pattern.permute.xlu0 0
        %449 = vperm.xlu0 %448, %v414
        %v450 = vpop.permute.xlu0 %449
        %453 = vset.pattern.permute.xlu0 0
        %454 = vperm.xlu0 %453, %v415
        %v455 = vpop.permute.xlu0 %454
        %458 = vset.pattern.permute.xlu0 0
        %459 = vperm.xlu0 %458, %v416
        %v460 = vpop.permute.xlu0 %459
        %463 = vset.pattern.permute.xlu0 0
        %464 = vperm.xlu0 %463, %v417
        %v465 = vpop.permute.xlu0 %464
        %468 = vset.pattern.permute.xlu0 0
        %469 = vperm.xlu0 %468, %v418
        %v470 = vpop.permute.xlu0 %469
        %473 = vset.pattern.permute.xlu0 0
        %474 = vperm.xlu0 %473, %v419
        %v475 = vpop.permute.xlu0 %474
        %478 = vset.pattern.permute.xlu0 0
        %479 = vperm.xlu0 %478, %v420
        %v480 = vpop.permute.xlu0 %479
        %483 = vset.pattern.permute.xlu0 0
        %484 = vperm.xlu0 %483, %v421
        %v485 = vpop.permute.xlu0 %484
        %488 = vset.pattern.permute.xlu0 0
        %489 = vperm.xlu0 %488, %v422
        %v490 = vpop.permute.xlu0 %489
        %493 = vset.pattern.permute.xlu0 0
        %494 = vperm.xlu0 %493, %v423
        %v495 = vpop.permute.xlu0 %494
        %498 = vset.pattern.permute.xlu0 0
        %499 = vperm.xlu0 %498, %v424
        %v500 = vpop.permute.xlu0 %499
        %503 = vset.pattern.permute.xlu0 0
        %504 = vperm.xlu0 %503, %v425
        %v505 = vpop.permute.xlu0 %504
        %508 = vset.pattern.permute.xlu0 0
        %509 = vperm.xlu0 %508, %v426
        %v510 = vpop.permute.xlu0 %509
        %513 = vset.pattern.permute.xlu0 0
        %514 = vperm.xlu0 %513, %v427
        %v515 = vpop.permute.xlu0 %514
        %518 = vset.pattern.permute.xlu0 0
        %519 = vperm.xlu0 %518, %v428
        %v520 = vpop.permute.xlu0 %519
        %523 = vset.pattern.permute.xlu0 0
        %524 = vperm.xlu0 %523, %v429
        %v525 = vpop.permute.xlu0 %524
        %528 = vset.pattern.permute.xlu0 0
        %529 = vperm.xlu0 %528, %v430
        %v530 = vpop.permute.xlu0 %529
        %533 = vset.pattern.permute.xlu0 0
        %534 = vperm.xlu0 %533, %v431
        %v535 = vpop.permute.xlu0 %534
        %538 = vset.pattern.permute.xlu0 0
        %539 = vperm.xlu0 %538, %v432
        %v540 = vpop.permute.xlu0 %539
        %543 = vset.pattern.permute.xlu0 0
        %544 = vperm.xlu0 %543, %v433
        %v545 = vpop.permute.xlu0 %544
        %548 = vset.pattern.permute.xlu0 0
        %549 = vperm.xlu0 %548, %v434
        %v550 = vpop.permute.xlu0 %549
        %553 = vset.pattern.permute.xlu0 0
        %554 = vperm.xlu0 %553, %v435
        %v555 = vpop.permute.xlu0 %554
        %558 = vset.pattern.permute.xlu0 0
        %559 = vperm.xlu0 %558, %v436
        %v560 = vpop.permute.xlu0 %559
        %563 = vset.pattern.permute.xlu0 0
        %564 = vperm.xlu0 %563, %v437
        %v565 = vpop.permute.xlu0 %564
        %568 = vset.pattern.permute.xlu0 0
        %569 = vperm.xlu0 %568, %v438
        %v570 = vpop.permute.xlu0 %569
        %573 = vset.pattern.permute.xlu0 0
        %574 = vperm.xlu0 %573, %v439
        %v575 = vpop.permute.xlu0 %574
        %578 = vset.pattern.permute.xlu0 0
        %579 = vperm.xlu0 %578, %v440
        %v580 = vpop.permute.xlu0 %579
        %583 = vset.pattern.permute.xlu0 0
        %584 = vperm.xlu0 %583, %v441
        %v585 = vpop.permute.xlu0 %584
        %588 = vset.pattern.permute.xlu0 0
        %589 = vperm.xlu0 %588, %v442
        %v590 = vpop.permute.xlu0 %589
        %593 = vset.pattern.permute.xlu0 0
        %594 = vperm.xlu0 %593, %v443
        %v595 = vpop.permute.xlu0 %594
        %598 = vset.pattern.permute.xlu0 0
        %599 = vperm.xlu0 %598, %v444
        %v600 = vpop.permute.xlu0 %599
        %603 = vset.pattern.permute.xlu0 0
        %604 = vperm.xlu0 %603, %v445
        %v605 = vpop.permute.xlu0 %604
        %v608 = vlaneseq
        %v609 = vshrl.u32 %v608, 7
        %v610 = vsub.s32 0, %v609
        %v611 = vrot.slane %v446, %v610
        %v613 = vmul.f32 %v450, %v611
        %v614 = vmul.f32 %v455, %v611
        %v615 = vmul.f32 %v460, %v611
        %v616 = vmul.f32 %v465, %v611
        %v617 = vmul.f32 %v470, %v611
        %v618 = vmul.f32 %v475, %v611
        %v619 = vmul.f32 %v480, %v611
        %v620 = vmul.f32 %v485, %v611
        %v621 = vmul.f32 %v490, %v611
        %v622 = vmul.f32 %v495, %v611
        %v623 = vmul.f32 %v500, %v611
        %v624 = vmul.f32 %v505, %v611
        %v625 = vmul.f32 %v510, %v611
        %v626 = vmul.f32 %v515, %v611
        %v627 = vmul.f32 %v520, %v611
        %v628 = vmul.f32 %v525, %v611
        %v629 = vmul.f32 %v530, %v611
        %v630 = vmul.f32 %v535, %v611
        %v631 = vmul.f32 %v540, %v611
        %v632 = vmul.f32 %v545, %v611
        %v633 = vmul.f32 %v550, %v611
        %v634 = vmul.f32 %v555, %v611
        %v635 = vmul.f32 %v560, %v611
        %v636 = vmul.f32 %v565, %v611
        %v637 = vmul.f32 %v570, %v611
        %v638 = vmul.f32 %v575, %v611
        %v639 = vmul.f32 %v580, %v611
        %v640 = vmul.f32 %v585, %v611
        %v641 = vmul.f32 %v590, %v611
        %v642 = vmul.f32 %v595, %v611
        %v643 = vmul.f32 %v600, %v611
        %v644 = vmul.f32 %v605, %v611
        %v645 = vld [vmem:[%s4] sm:$0x1]
        %v647 = vlaneseq
        %v648 = vshrl.u32 %v647, 7
        %v649 = vsub.s32 0, %v648
        %v650 = vrot.slane %v645, %v649
        %v652 = vadd.f32 %v613, %v650
        %v653 = vadd.f32 %v614, %v650
        %v654 = vadd.f32 %v615, %v650
        %v655 = vadd.f32 %v616, %v650
        %v656 = vadd.f32 %v617, %v650
        %v657 = vadd.f32 %v618, %v650
        %v658 = vadd.f32 %v619, %v650
        %v659 = vadd.f32 %v620, %v650
        %v660 = vadd.f32 %v621, %v650
        %v661 = vadd.f32 %v622, %v650
        %v662 = vadd.f32 %v623, %v650
        %v663 = vadd.f32 %v624, %v650
        %v664 = vadd.f32 %v625, %v650
        %v665 = vadd.f32 %v626, %v650
        %v666 = vadd.f32 %v627, %v650
        %v667 = vadd.f32 %v628, %v650
        %v668 = vadd.f32 %v629, %v650
        %v669 = vadd.f32 %v630, %v650
        %v670 = vadd.f32 %v631, %v650
        %v671 = vadd.f32 %v632, %v650
        %v672 = vadd.f32 %v633, %v650
        %v673 = vadd.f32 %v634, %v650
        %v674 = vadd.f32 %v635, %v650
        %v675 = vadd.f32 %v636, %v650
        %v676 = vadd.f32 %v637, %v650
        %v677 = vadd.f32 %v638, %v650
        %v678 = vadd.f32 %v639, %v650
        %v679 = vadd.f32 %v640, %v650
        %v680 = vadd.f32 %v641, %v650
        %v681 = vadd.f32 %v642, %v650
        %v682 = vadd.f32 %v643, %v650
        %v683 = vadd.f32 %v644, %v650
        %v684 = vand.u32 2147483647, %v652
        %vm685 = vcmp.le.f32.partialorder %v684, 0.7853982
        %vm686 = vcmp.lt.s32.totalorder %v652, 0
        %v687 = vand.u32 %v652, 2139095040
        %v688 = vshrl.u32 %v687, 23
        %v689 = vsub.s32 %v688, 127
        %v690 = vand.u32 2147483647, %v652
        %v691 = vand.u32 %v690, 8388607
        %v692 = vor.u32 %v691, 8388608
        %v693 = vsub.s32 0, %v692
        %v694 = vadd.s32 %v689, 1
        %vm695 = vcmp.gt.s32.totalorder %v694, 0
        %v696 = vsel %vm695, %v694, 0
        %v697 = vshrl.u32 %v696, 5
        %v698 = vand.u32 %v696, 31
        %v699 = vsub.s32 32, %v698
        %v700 = vshrl.u32 683565275, %v699
        %v701 = vshll.u32 683565275, %v698
        %v702 = vshrl.u32 2475754826, %v699
        %v703 = vor.u32 %v701, %v702
        %v704 = vshll.u32 2475754826, %v698
        %v705 = vshrl.u32 2131351028, %v699
        %v706 = vor.u32 %v704, %v705
        %v707 = vshll.u32 2131351028, %v698
        %v708 = vshrl.u32 2102212464, %v699
        %v709 = vor.u32 %v707, %v708
        %v710 = vshll.u32 2102212464, %v698
        %v711 = vshrl.u32 920167782, %v699
        %v712 = vor.u32 %v710, %v711
        %v713 = vshll.u32 920167782, %v698
        %v714 = vshrl.u32 1326507024, %v699
        %v715 = vor.u32 %v713, %v714
        %vm716 = vcmp.lt.s32.totalorder %v697, 1
        %vm717 = vcmp.lt.s32.totalorder %v697, 2
        %vm718 = vcmp.lt.s32.totalorder %v697, 3
        %vm719 = vcmp.lt.s32.totalorder %v697, 4
        %v720 = vsel %vm716, %v700, %v703
        %v721 = vsel %vm719, %v709, 2102212464
        %v722 = vsel %vm718, %v706, %v721
        %v723 = vsel %vm717, %v720, %v722
        %v724 = vsel %vm716, %v703, %v706
        %v725 = vsel %vm719, %v712, 920167782
        %v726 = vsel %vm718, %v709, %v725
        %v727 = vsel %vm717, %v724, %v726
        %v728 = vsel %vm716, %v706, %v709
        %v729 = vsel %vm719, %v715, 1326507024
        %v730 = vsel %vm718, %v712, %v729
        %v731 = vsel %vm717, %v728, %v730
        %v732 = vshll.u32 %v692, 8
        %v733 = vmul.u32.u64.compose %v732, %v731
        %v734 = vextract.low.u32 %v733
        %v735 = vextract.high.u32 %v733
        %v736 = vmul.u32.u64.compose %v732, %v727
        %v737 = vextract.low.u32 %v736
        %v738 = vextract.high.u32 %v736
        %v739 = vmul.u32 %v732, %v723
        %v740 = vadd.s32 %v735, %v737
        %vm741 = vc.u32 %v735, %v737
        %v742 = vadd.s32 %v738, 1
        %v743 = vsel %vm741, %v742, %v738
        %v744 = vadd.s32 %v739, %v743
        %v745 = vadd.s32 %v744, 536870912
        %v746 = vshrl.u32 %v745, 30
        %v747 = vshll.u32 %v746, 30
        %v748 = vsub.s32 %v744, %v747
        %vm749 = vcmp.lt.s32.totalorder %v748, 0
        %v750 = vsub.s32 0, %v748
        %v751 = vsel %vm749, %v750, %v748
        %v752 = vclz %v751
        %v753 = vsub.s32 %v752, 2
        %vm754 = vcmp.gt.s32.totalorder 0, %v753
        %v755 = vsel %vm754, 0, %v753
        %v756 = vsub.s32 32, %v755
        %v757 = vshll.u32 %v748, %v755
        %v758 = vshrl.u32 %v740, %v756
        %v759 = vor.u32 %v757, %v758
        %v760 = vsub.s32 4294967266, %v755
        %v761 = vadd.s32 %v760, 127
        %v762 = vshll.u32 %v761, 23
        %v763 = vor.u32 4788187, %v762
        %v764 = vand.u32 2147483647, %v763
        %v766 = vcvt.s32.f32 %v759
        %v767 = vmul.f32 %v766, %v764
        %v768 = vxor.u32 %v767, 2147483648
        %v769 = vsel %vm686, %v768, %v767
        %v770 = vsub.s32 4, %v746
        %v771 = vsel %vm686, %v770, %v746
        %v772 = vsel %vm685, %v652, %v769
        %v773 = vsel %vm685, 0, %v771
        %v774 = vcosq.f32.pop %v772
        %v775 = vsinq.f32.pop %v772
        %vm776 = vweird.f32 %v652
        %v777 = vand.u32 %v773, 3
        %vm778 = vcmp.lt.s32.totalorder %v777, 2
        %vm779 = vcmp.eq.s32.totalorder %v777, 0
        %v780 = vxor.u32 %v775, 2147483648
        %v781 = vsel %vm779, %v774, %v780
        %vm782 = vcmp.eq.s32.totalorder %v777, 2
        %v783 = vxor.u32 %v774, 2147483648
        %v784 = vsel %vm782, %v783, %v775
        %v785 = vsel %vm778, %v781, %v784
        %v786 = vsel %vm776, nan, %v785
        %v787 = vand.u32 2147483647, %v653
        %vm788 = vcmp.le.f32.partialorder %v787, 0.7853982
        %vm789 = vcmp.lt.s32.totalorder %v653, 0
        %v790 = vand.u32 %v653, 2139095040
        %v791 = vshrl.u32 %v790, 23
        %v792 = vsub.s32 %v791, 127
        %v793 = vand.u32 2147483647, %v653
        %v794 = vand.u32 %v793, 8388607
        %v795 = vor.u32 %v794, 8388608
        %v796 = vsub.s32 0, %v795
        %v797 = vadd.s32 %v792, 1
        %vm798 = vcmp.gt.s32.totalorder %v797, 0
        %v799 = vsel %vm798, %v797, 0
        %v800 = vshrl.u32 %v799, 5
        %v801 = vand.u32 %v799, 31
        %v802 = vsub.s32 32, %v801
        %v803 = vshrl.u32 683565275, %v802
        %v804 = vshll.u32 683565275, %v801
        %v805 = vshrl.u32 2475754826, %v802
        %v806 = vor.u32 %v804, %v805
        %v807 = vshll.u32 2475754826, %v801
        %v808 = vshrl.u32 2131351028, %v802
        %v809 = vor.u32 %v807, %v808
        %v810 = vshll.u32 2131351028, %v801
        %v811 = vshrl.u32 2102212464, %v802
        %v812 = vor.u32 %v810, %v811
        %v813 = vshll.u32 2102212464, %v801
        %v814 = vshrl.u32 920167782, %v802
        %v815 = vor.u32 %v813, %v814
        %v816 = vshll.u32 920167782, %v801
        %v817 = vshrl.u32 1326507024, %v802
        %v818 = vor.u32 %v816, %v817
        %vm819 = vcmp.lt.s32.totalorder %v800, 1
        %vm820 = vcmp.lt.s32.totalorder %v800, 2
        %vm821 = vcmp.lt.s32.totalorder %v800, 3
        %vm822 = vcmp.lt.s32.totalorder %v800, 4
        %v823 = vsel %vm819, %v803, %v806
        %v824 = vsel %vm822, %v812, 2102212464
        %v825 = vsel %vm821, %v809, %v824
        %v826 = vsel %vm820, %v823, %v825
        %v827 = vsel %vm819, %v806, %v809
        %v828 = vsel %vm822, %v815, 920167782
        %v829 = vsel %vm821, %v812, %v828
        %v830 = vsel %vm820, %v827, %v829
        %v831 = vsel %vm819, %v809, %v812
        %v832 = vsel %vm822, %v818, 1326507024
        %v833 = vsel %vm821, %v815, %v832
        %v834 = vsel %vm820, %v831, %v833
        %v835 = vshll.u32 %v795, 8
        %v836 = vmul.u32.u64.compose %v835, %v834
        %v837 = vextract.low.u32 %v836
        %v838 = vextract.high.u32 %v836
        %v839 = vmul.u32.u64.compose %v835, %v830
        %v840 = vextract.low.u32 %v839
        %v841 = vextract.high.u32 %v839
        %v842 = vmul.u32 %v835, %v826
        %v843 = vadd.s32 %v838, %v840
        %vm844 = vc.u32 %v838, %v840
        %v845 = vadd.s32 %v841, 1
        %v846 = vsel %vm844, %v845, %v841
        %v847 = vadd.s32 %v842, %v846
        %v848 = vadd.s32 %v847, 536870912
        %v849 = vshrl.u32 %v848, 30
        %v850 = vshll.u32 %v849, 30
        %v851 = vsub.s32 %v847, %v850
        %vm852 = vcmp.lt.s32.totalorder %v851, 0
        %v853 = vsub.s32 0, %v851
        %v854 = vsel %vm852, %v853, %v851
        %v855 = vclz %v854
        %v856 = vsub.s32 %v855, 2
        %vm857 = vcmp.gt.s32.totalorder 0, %v856
        %v858 = vsel %vm857, 0, %v856
        %v859 = vsub.s32 32, %v858
        %v860 = vshll.u32 %v851, %v858
        %v861 = vshrl.u32 %v843, %v859
        %v862 = vor.u32 %v860, %v861
        %v863 = vsub.s32 4294967266, %v858
        %v864 = vadd.s32 %v863, 127
        %v865 = vshll.u32 %v864, 23
        %v866 = vor.u32 4788187, %v865
        %v867 = vand.u32 2147483647, %v866
        %v869 = vcvt.s32.f32 %v862
        %v870 = vmul.f32 %v869, %v867
        %v871 = vxor.u32 %v870, 2147483648
        %v872 = vsel %vm789, %v871, %v870
        %v873 = vsub.s32 4, %v849
        %v874 = vsel %vm789, %v873, %v849
        %v875 = vsel %vm788, %v653, %v872
        %v876 = vsel %vm788, 0, %v874
        %v877 = vcosq.f32.pop %v875
        %v878 = vsinq.f32.pop %v875
        %vm879 = vweird.f32 %v653
        %v880 = vand.u32 %v876, 3
        %vm881 = vcmp.lt.s32.totalorder %v880, 2
        %vm882 = vcmp.eq.s32.totalorder %v880, 0
        %v883 = vxor.u32 %v878, 2147483648
        %v884 = vsel %vm882, %v877, %v883
        %vm885 = vcmp.eq.s32.totalorder %v880, 2
        %v886 = vxor.u32 %v877, 2147483648
        %v887 = vsel %vm885, %v886, %v878
        %v888 = vsel %vm881, %v884, %v887
        %v889 = vsel %vm879, nan, %v888
        %v890 = vand.u32 2147483647, %v654
        %vm891 = vcmp.le.f32.partialorder %v890, 0.7853982
        %vm892 = vcmp.lt.s32.totalorder %v654, 0
        %v893 = vand.u32 %v654, 2139095040
        %v894 = vshrl.u32 %v893, 23
        %v895 = vsub.s32 %v894, 127
        %v896 = vand.u32 2147483647, %v654
        %v897 = vand.u32 %v896, 8388607
        %v898 = vor.u32 %v897, 8388608
        %v899 = vsub.s32 0, %v898
        %v900 = vadd.s32 %v895, 1
        %vm901 = vcmp.gt.s32.totalorder %v900, 0
        %v902 = vsel %vm901, %v900, 0
        %v903 = vshrl.u32 %v902, 5
        %v904 = vand.u32 %v902, 31
        %v905 = vsub.s32 32, %v904
        %v906 = vshrl.u32 683565275, %v905
        %v907 = vshll.u32 683565275, %v904
        %v908 = vshrl.u32 2475754826, %v905
        %v909 = vor.u32 %v907, %v908
        %v910 = vshll.u32 2475754826, %v904
        %v911 = vshrl.u32 2131351028, %v905
        %v912 = vor.u32 %v910, %v911
        %v913 = vshll.u32 2131351028, %v904
        %v914 = vshrl.u32 2102212464, %v905
        %v915 = vor.u32 %v913, %v914
        %v916 = vshll.u32 2102212464, %v904
        %v917 = vshrl.u32 920167782, %v905
        %v918 = vor.u32 %v916, %v917
        %v919 = vshll.u32 920167782, %v904
        %v920 = vshrl.u32 1326507024, %v905
        %v921 = vor.u32 %v919, %v920
        %vm922 = vcmp.lt.s32.totalorder %v903, 1
        %vm923 = vcmp.lt.s32.totalorder %v903, 2
        %vm924 = vcmp.lt.s32.totalorder %v903, 3
        %vm925 = vcmp.lt.s32.totalorder %v903, 4
        %v926 = vsel %vm922, %v906, %v909
        %v927 = vsel %vm925, %v915, 2102212464
        %v928 = vsel %vm924, %v912, %v927
        %v929 = vsel %vm923, %v926, %v928
        %v930 = vsel %vm922, %v909, %v912
        %v931 = vsel %vm925, %v918, 920167782
        %v932 = vsel %vm924, %v915, %v931
        %v933 = vsel %vm923, %v930, %v932
        %v934 = vsel %vm922, %v912, %v915
        %v935 = vsel %vm925, %v921, 1326507024
        %v936 = vsel %vm924, %v918, %v935
        %v937 = vsel %vm923, %v934, %v936
        %v938 = vshll.u32 %v898, 8
        %v939 = vmul.u32.u64.compose %v938, %v937
        %v940 = vextract.low.u32 %v939
        %v941 = vextract.high.u32 %v939
        %v942 = vmul.u32.u64.compose %v938, %v933
        %v943 = vextract.low.u32 %v942
        %v944 = vextract.high.u32 %v942
        %v945 = vmul.u32 %v938, %v929
        %v946 = vadd.s32 %v941, %v943
        %vm947 = vc.u32 %v941, %v943
        %v948 = vadd.s32 %v944, 1
        %v949 = vsel %vm947, %v948, %v944
        %v950 = vadd.s32 %v945, %v949
        %v951 = vadd.s32 %v950, 536870912
        %v952 = vshrl.u32 %v951, 30
        %v953 = vshll.u32 %v952, 30
        %v954 = vsub.s32 %v950, %v953
        %vm955 = vcmp.lt.s32.totalorder %v954, 0
        %v956 = vsub.s32 0, %v954
        %v957 = vsel %vm955, %v956, %v954
        %v958 = vclz %v957
        %v959 = vsub.s32 %v958, 2
        %vm960 = vcmp.gt.s32.totalorder 0, %v959
        %v961 = vsel %vm960, 0, %v959
        %v962 = vsub.s32 32, %v961
        %v963 = vshll.u32 %v954, %v961
        %v964 = vshrl.u32 %v946, %v962
        %v965 = vor.u32 %v963, %v964
        %v966 = vsub.s32 4294967266, %v961
        %v967 = vadd.s32 %v966, 127
        %v968 = vshll.u32 %v967, 23
        %v969 = vor.u32 4788187, %v968
        %v970 = vand.u32 2147483647, %v969
        %v972 = vcvt.s32.f32 %v965
        %v973 = vmul.f32 %v972, %v970
        %v974 = vxor.u32 %v973, 2147483648
        %v975 = vsel %vm892, %v974, %v973
        %v976 = vsub.s32 4, %v952
        %v977 = vsel %vm892, %v976, %v952
        %v978 = vsel %vm891, %v654, %v975
        %v979 = vsel %vm891, 0, %v977
        %v980 = vcosq.f32.pop %v978
        %v981 = vsinq.f32.pop %v978
        %vm982 = vweird.f32 %v654
        %v983 = vand.u32 %v979, 3
        %vm984 = vcmp.lt.s32.totalorder %v983, 2
        %vm985 = vcmp.eq.s32.totalorder %v983, 0
        %v986 = vxor.u32 %v981, 2147483648
        %v987 = vsel %vm985, %v980, %v986
        %vm988 = vcmp.eq.s32.totalorder %v983, 2
        %v989 = vxor.u32 %v980, 2147483648
        %v990 = vsel %vm988, %v989, %v981
        %v991 = vsel %vm984, %v987, %v990
        %v992 = vsel %vm982, nan, %v991
        %v993 = vand.u32 2147483647, %v655
        %vm994 = vcmp.le.f32.partialorder %v993, 0.7853982
        %vm995 = vcmp.lt.s32.totalorder %v655, 0
        %v996 = vand.u32 %v655, 2139095040
        %v997 = vshrl.u32 %v996, 23
        %v998 = vsub.s32 %v997, 127
        %v999 = vand.u32 2147483647, %v655
        %v1000 = vand.u32 %v999, 8388607
        %v1001 = vor.u32 %v1000, 8388608
        %v1002 = vsub.s32 0, %v1001
        %v1003 = vadd.s32 %v998, 1
        %vm1004 = vcmp.gt.s32.totalorder %v1003, 0
        %v1005 = vsel %vm1004, %v1003, 0
        %v1006 = vshrl.u32 %v1005, 5
        %v1007 = vand.u32 %v1005, 31
        %v1008 = vsub.s32 32, %v1007
        %v1009 = vshrl.u32 683565275, %v1008
        %v1010 = vshll.u32 683565275, %v1007
        %v1011 = vshrl.u32 2475754826, %v1008
        %v1012 = vor.u32 %v1010, %v1011
        %v1013 = vshll.u32 2475754826, %v1007
        %v1014 = vshrl.u32 2131351028, %v1008
        %v1015 = vor.u32 %v1013, %v1014
        %v1016 = vshll.u32 2131351028, %v1007
        %v1017 = vshrl.u32 2102212464, %v1008
        %v1018 = vor.u32 %v1016, %v1017
        %v1019 = vshll.u32 2102212464, %v1007
        %v1020 = vshrl.u32 920167782, %v1008
        %v1021 = vor.u32 %v1019, %v1020
        %v1022 = vshll.u32 920167782, %v1007
        %v1023 = vshrl.u32 1326507024, %v1008
        %v1024 = vor.u32 %v1022, %v1023
        %vm1025 = vcmp.lt.s32.totalorder %v1006, 1
        %vm1026 = vcmp.lt.s32.totalorder %v1006, 2
        %vm1027 = vcmp.lt.s32.totalorder %v1006, 3
        %vm1028 = vcmp.lt.s32.totalorder %v1006, 4
        %v1029 = vsel %vm1025, %v1009, %v1012
        %v1030 = vsel %vm1028, %v1018, 2102212464
        %v1031 = vsel %vm1027, %v1015, %v1030
        %v1032 = vsel %vm1026, %v1029, %v1031
        %v1033 = vsel %vm1025, %v1012, %v1015
        %v1034 = vsel %vm1028, %v1021, 920167782
        %v1035 = vsel %vm1027, %v1018, %v1034
        %v1036 = vsel %vm1026, %v1033, %v1035
        %v1037 = vsel %vm1025, %v1015, %v1018
        %v1038 = vsel %vm1028, %v1024, 1326507024
        %v1039 = vsel %vm1027, %v1021, %v1038
        %v1040 = vsel %vm1026, %v1037, %v1039
        %v1041 = vshll.u32 %v1001, 8
        %v1042 = vmul.u32.u64.compose %v1041, %v1040
        %v1043 = vextract.low.u32 %v1042
        %v1044 = vextract.high.u32 %v1042
        %v1045 = vmul.u32.u64.compose %v1041, %v1036
        %v1046 = vextract.low.u32 %v1045
        %v1047 = vextract.high.u32 %v1045
        %v1048 = vmul.u32 %v1041, %v1032
        %v1049 = vadd.s32 %v1044, %v1046
        %vm1050 = vc.u32 %v1044, %v1046
        %v1051 = vadd.s32 %v1047, 1
        %v1052 = vsel %vm1050, %v1051, %v1047
        %v1053 = vadd.s32 %v1048, %v1052
        %v1054 = vadd.s32 %v1053, 536870912
        %v1055 = vshrl.u32 %v1054, 30
        %v1056 = vshll.u32 %v1055, 30
        %v1057 = vsub.s32 %v1053, %v1056
        %vm1058 = vcmp.lt.s32.totalorder %v1057, 0
        %v1059 = vsub.s32 0, %v1057
        %v1060 = vsel %vm1058, %v1059, %v1057
        %v1061 = vclz %v1060
        %v1062 = vsub.s32 %v1061, 2
        %vm1063 = vcmp.gt.s32.totalorder 0, %v1062
        %v1064 = vsel %vm1063, 0, %v1062
        %v1065 = vsub.s32 32, %v1064
        %v1066 = vshll.u32 %v1057, %v1064
        %v1067 = vshrl.u32 %v1049, %v1065
        %v1068 = vor.u32 %v1066, %v1067
        %v1069 = vsub.s32 4294967266, %v1064
        %v1070 = vadd.s32 %v1069, 127
        %v1071 = vshll.u32 %v1070, 23
        %v1072 = vor.u32 4788187, %v1071
        %v1073 = vand.u32 2147483647, %v1072
        %v1075 = vcvt.s32.f32 %v1068
        %v1076 = vmul.f32 %v1075, %v1073
        %v1077 = vxor.u32 %v1076, 2147483648
        %v1078 = vsel %vm995, %v1077, %v1076
        %v1079 = vsub.s32 4, %v1055
        %v1080 = vsel %vm995, %v1079, %v1055
        %v1081 = vsel %vm994, %v655, %v1078
        %v1082 = vsel %vm994, 0, %v1080
        %v1083 = vcosq.f32.pop %v1081
        %v1084 = vsinq.f32.pop %v1081
        %vm1085 = vweird.f32 %v655
        %v1086 = vand.u32 %v1082, 3
        %vm1087 = vcmp.lt.s32.totalorder %v1086, 2
        %vm1088 = vcmp.eq.s32.totalorder %v1086, 0
        %v1089 = vxor.u32 %v1084, 2147483648
        %v1090 = vsel %vm1088, %v1083, %v1089
        %vm1091 = vcmp.eq.s32.totalorder %v1086, 2
        %v1092 = vxor.u32 %v1083, 2147483648
        %v1093 = vsel %vm1091, %v1092, %v1084
        %v1094 = vsel %vm1087, %v1090, %v1093
        %v1095 = vsel %vm1085, nan, %v1094
        %v1096 = vand.u32 2147483647, %v656
        %vm1097 = vcmp.le.f32.partialorder %v1096, 0.7853982
        %vm1098 = vcmp.lt.s32.totalorder %v656, 0
        %v1099 = vand.u32 %v656, 2139095040
        %v1100 = vshrl.u32 %v1099, 23
        %v1101 = vsub.s32 %v1100, 127
        %v1102 = vand.u32 2147483647, %v656
        %v1103 = vand.u32 %v1102, 8388607
        %v1104 = vor.u32 %v1103, 8388608
        %v1105 = vsub.s32 0, %v1104
        %v1106 = vadd.s32 %v1101, 1
        %vm1107 = vcmp.gt.s32.totalorder %v1106, 0
        %v1108 = vsel %vm1107, %v1106, 0
        %v1109 = vshrl.u32 %v1108, 5
        %v1110 = vand.u32 %v1108, 31
        %v1111 = vsub.s32 32, %v1110
        %v1112 = vshrl.u32 683565275, %v1111
        %v1113 = vshll.u32 683565275, %v1110
        %v1114 = vshrl.u32 2475754826, %v1111
        %v1115 = vor.u32 %v1113, %v1114
        %v1116 = vshll.u32 2475754826, %v1110
        %v1117 = vshrl.u32 2131351028, %v1111
        %v1118 = vor.u32 %v1116, %v1117
        %v1119 = vshll.u32 2131351028, %v1110
        %v1120 = vshrl.u32 2102212464, %v1111
        %v1121 = vor.u32 %v1119, %v1120
        %v1122 = vshll.u32 2102212464, %v1110
        %v1123 = vshrl.u32 920167782, %v1111
        %v1124 = vor.u32 %v1122, %v1123
        %v1125 = vshll.u32 920167782, %v1110
        %v1126 = vshrl.u32 1326507024, %v1111
        %v1127 = vor.u32 %v1125, %v1126
        %vm1128 = vcmp.lt.s32.totalorder %v1109, 1
        %vm1129 = vcmp.lt.s32.totalorder %v1109, 2
        %vm1130 = vcmp.lt.s32.totalorder %v1109, 3
        %vm1131 = vcmp.lt.s32.totalorder %v1109, 4
        %v1132 = vsel %vm1128, %v1112, %v1115
        %v1133 = vsel %vm1131, %v1121, 2102212464
        %v1134 = vsel %vm1130, %v1118, %v1133
        %v1135 = vsel %vm1129, %v1132, %v1134
        %v1136 = vsel %vm1128, %v1115, %v1118
        %v1137 = vsel %vm1131, %v1124, 920167782
        %v1138 = vsel %vm1130, %v1121, %v1137
        %v1139 = vsel %vm1129, %v1136, %v1138
        %v1140 = vsel %vm1128, %v1118, %v1121
        %v1141 = vsel %vm1131, %v1127, 1326507024
        %v1142 = vsel %vm1130, %v1124, %v1141
        %v1143 = vsel %vm1129, %v1140, %v1142
        %v1144 = vshll.u32 %v1104, 8
        %v1145 = vmul.u32.u64.compose %v1144, %v1143
        %v1146 = vextract.low.u32 %v1145
        %v1147 = vextract.high.u32 %v1145
        %v1148 = vmul.u32.u64.compose %v1144, %v1139
        %v1149 = vextract.low.u32 %v1148
        %v1150 = vextract.high.u32 %v1148
        %v1151 = vmul.u32 %v1144, %v1135
        %v1152 = vadd.s32 %v1147, %v1149
        %vm1153 = vc.u32 %v1147, %v1149
        %v1154 = vadd.s32 %v1150, 1
        %v1155 = vsel %vm1153, %v1154, %v1150
        %v1156 = vadd.s32 %v1151, %v1155
        %v1157 = vadd.s32 %v1156, 536870912
        %v1158 = vshrl.u32 %v1157, 30
        %v1159 = vshll.u32 %v1158, 30
        %v1160 = vsub.s32 %v1156, %v1159
        %vm1161 = vcmp.lt.s32.totalorder %v1160, 0
        %v1162 = vsub.s32 0, %v1160
        %v1163 = vsel %vm1161, %v1162, %v1160
        %v1164 = vclz %v1163
        %v1165 = vsub.s32 %v1164, 2
        %vm1166 = vcmp.gt.s32.totalorder 0, %v1165
        %v1167 = vsel %vm1166, 0, %v1165
        %v1168 = vsub.s32 32, %v1167
        %v1169 = vshll.u32 %v1160, %v1167
        %v1170 = vshrl.u32 %v1152, %v1168
        %v1171 = vor.u32 %v1169, %v1170
        %v1172 = vsub.s32 4294967266, %v1167
        %v1173 = vadd.s32 %v1172, 127
        %v1174 = vshll.u32 %v1173, 23
        %v1175 = vor.u32 4788187, %v1174
        %v1176 = vand.u32 2147483647, %v1175
        %v1178 = vcvt.s32.f32 %v1171
        %v1179 = vmul.f32 %v1178, %v1176
        %v1180 = vxor.u32 %v1179, 2147483648
        %v1181 = vsel %vm1098, %v1180, %v1179
        %v1182 = vsub.s32 4, %v1158
        %v1183 = vsel %vm1098, %v1182, %v1158
        %v1184 = vsel %vm1097, %v656, %v1181
        %v1185 = vsel %vm1097, 0, %v1183
        %v1186 = vcosq.f32.pop %v1184
        %v1187 = vsinq.f32.pop %v1184
        %vm1188 = vweird.f32 %v656
        %v1189 = vand.u32 %v1185, 3
        %vm1190 = vcmp.lt.s32.totalorder %v1189, 2
        %vm1191 = vcmp.eq.s32.totalorder %v1189, 0
        %v1192 = vxor.u32 %v1187, 2147483648
        %v1193 = vsel %vm1191, %v1186, %v1192
        %vm1194 = vcmp.eq.s32.totalorder %v1189, 2
        %v1195 = vxor.u32 %v1186, 2147483648
        %v1196 = vsel %vm1194, %v1195, %v1187
        %v1197 = vsel %vm1190, %v1193, %v1196
        %v1198 = vsel %vm1188, nan, %v1197
        %v1199 = vand.u32 2147483647, %v657
        %vm1200 = vcmp.le.f32.partialorder %v1199, 0.7853982
        %vm1201 = vcmp.lt.s32.totalorder %v657, 0
        %v1202 = vand.u32 %v657, 2139095040
        %v1203 = vshrl.u32 %v1202, 23
        %v1204 = vsub.s32 %v1203, 127
        %v1205 = vand.u32 2147483647, %v657
        %v1206 = vand.u32 %v1205, 8388607
        %v1207 = vor.u32 %v1206, 8388608
        %v1208 = vsub.s32 0, %v1207
        %v1209 = vadd.s32 %v1204, 1
        %vm1210 = vcmp.gt.s32.totalorder %v1209, 0
        %v1211 = vsel %vm1210, %v1209, 0
        %v1212 = vshrl.u32 %v1211, 5
        %v1213 = vand.u32 %v1211, 31
        %v1214 = vsub.s32 32, %v1213
        %v1215 = vshrl.u32 683565275, %v1214
        %v1216 = vshll.u32 683565275, %v1213
        %v1217 = vshrl.u32 2475754826, %v1214
        %v1218 = vor.u32 %v1216, %v1217
        %v1219 = vshll.u32 2475754826, %v1213
        %v1220 = vshrl.u32 2131351028, %v1214
        %v1221 = vor.u32 %v1219, %v1220
        %v1222 = vshll.u32 2131351028, %v1213
        %v1223 = vshrl.u32 2102212464, %v1214
        %v1224 = vor.u32 %v1222, %v1223
        %v1225 = vshll.u32 2102212464, %v1213
        %v1226 = vshrl.u32 920167782, %v1214
        %v1227 = vor.u32 %v1225, %v1226
        %v1228 = vshll.u32 920167782, %v1213
        %v1229 = vshrl.u32 1326507024, %v1214
        %v1230 = vor.u32 %v1228, %v1229
        %vm1231 = vcmp.lt.s32.totalorder %v1212, 1
        %vm1232 = vcmp.lt.s32.totalorder %v1212, 2
        %vm1233 = vcmp.lt.s32.totalorder %v1212, 3
        %vm1234 = vcmp.lt.s32.totalorder %v1212, 4
        %v1235 = vsel %vm1231, %v1215, %v1218
        %v1236 = vsel %vm1234, %v1224, 2102212464
        %v1237 = vsel %vm1233, %v1221, %v1236
        %v1238 = vsel %vm1232, %v1235, %v1237
        %v1239 = vsel %vm1231, %v1218, %v1221
        %v1240 = vsel %vm1234, %v1227, 920167782
        %v1241 = vsel %vm1233, %v1224, %v1240
        %v1242 = vsel %vm1232, %v1239, %v1241
        %v1243 = vsel %vm1231, %v1221, %v1224
        %v1244 = vsel %vm1234, %v1230, 1326507024
        %v1245 = vsel %vm1233, %v1227, %v1244
        %v1246 = vsel %vm1232, %v1243, %v1245
        %v1247 = vshll.u32 %v1207, 8
        %v1248 = vmul.u32.u64.compose %v1247, %v1246
        %v1249 = vextract.low.u32 %v1248
        %v1250 = vextract.high.u32 %v1248
        %v1251 = vmul.u32.u64.compose %v1247, %v1242
        %v1252 = vextract.low.u32 %v1251
        %v1253 = vextract.high.u32 %v1251
        %v1254 = vmul.u32 %v1247, %v1238
        %v1255 = vadd.s32 %v1250, %v1252
        %vm1256 = vc.u32 %v1250, %v1252
        %v1257 = vadd.s32 %v1253, 1
        %v1258 = vsel %vm1256, %v1257, %v1253
        %v1259 = vadd.s32 %v1254, %v1258
        %v1260 = vadd.s32 %v1259, 536870912
        %v1261 = vshrl.u32 %v1260, 30
        %v1262 = vshll.u32 %v1261, 30
        %v1263 = vsub.s32 %v1259, %v1262
        %vm1264 = vcmp.lt.s32.totalorder %v1263, 0
        %v1265 = vsub.s32 0, %v1263
        %v1266 = vsel %vm1264, %v1265, %v1263
        %v1267 = vclz %v1266
        %v1268 = vsub.s32 %v1267, 2
        %vm1269 = vcmp.gt.s32.totalorder 0, %v1268
        %v1270 = vsel %vm1269, 0, %v1268
        %v1271 = vsub.s32 32, %v1270
        %v1272 = vshll.u32 %v1263, %v1270
        %v1273 = vshrl.u32 %v1255, %v1271
        %v1274 = vor.u32 %v1272, %v1273
        %v1275 = vsub.s32 4294967266, %v1270
        %v1276 = vadd.s32 %v1275, 127
        %v1277 = vshll.u32 %v1276, 23
        %v1278 = vor.u32 4788187, %v1277
        %v1279 = vand.u32 2147483647, %v1278
        %v1281 = vcvt.s32.f32 %v1274
        %v1282 = vmul.f32 %v1281, %v1279
        %v1283 = vxor.u32 %v1282, 2147483648
        %v1284 = vsel %vm1201, %v1283, %v1282
        %v1285 = vsub.s32 4, %v1261
        %v1286 = vsel %vm1201, %v1285, %v1261
        %v1287 = vsel %vm1200, %v657, %v1284
        %v1288 = vsel %vm1200, 0, %v1286
        %v1289 = vcosq.f32.pop %v1287
        %v1290 = vsinq.f32.pop %v1287
        %vm1291 = vweird.f32 %v657
        %v1292 = vand.u32 %v1288, 3
        %vm1293 = vcmp.lt.s32.totalorder %v1292, 2
        %vm1294 = vcmp.eq.s32.totalorder %v1292, 0
        %v1295 = vxor.u32 %v1290, 2147483648
        %v1296 = vsel %vm1294, %v1289, %v1295
        %vm1297 = vcmp.eq.s32.totalorder %v1292, 2
        %v1298 = vxor.u32 %v1289, 2147483648
        %v1299 = vsel %vm1297, %v1298, %v1290
        %v1300 = vsel %vm1293, %v1296, %v1299
        %v1301 = vsel %vm1291, nan, %v1300
        %v1302 = vand.u32 2147483647, %v658
        %vm1303 = vcmp.le.f32.partialorder %v1302, 0.7853982
        %vm1304 = vcmp.lt.s32.totalorder %v658, 0
        %v1305 = vand.u32 %v658, 2139095040
        %v1306 = vshrl.u32 %v1305, 23
        %v1307 = vsub.s32 %v1306, 127
        %v1308 = vand.u32 2147483647, %v658
        %v1309 = vand.u32 %v1308, 8388607
        %v1310 = vor.u32 %v1309, 8388608
        %v1311 = vsub.s32 0, %v1310
        %v1312 = vadd.s32 %v1307, 1
        %vm1313 = vcmp.gt.s32.totalorder %v1312, 0
        %v1314 = vsel %vm1313, %v1312, 0
        %v1315 = vshrl.u32 %v1314, 5
        %v1316 = vand.u32 %v1314, 31
        %v1317 = vsub.s32 32, %v1316
        %v1318 = vshrl.u32 683565275, %v1317
        %v1319 = vshll.u32 683565275, %v1316
        %v1320 = vshrl.u32 2475754826, %v1317
        %v1321 = vor.u32 %v1319, %v1320
        %v1322 = vshll.u32 2475754826, %v1316
        %v1323 = vshrl.u32 2131351028, %v1317
        %v1324 = vor.u32 %v1322, %v1323
        %v1325 = vshll.u32 2131351028, %v1316
        %v1326 = vshrl.u32 2102212464, %v1317
        %v1327 = vor.u32 %v1325, %v1326
        %v1328 = vshll.u32 2102212464, %v1316
        %v1329 = vshrl.u32 920167782, %v1317
        %v1330 = vor.u32 %v1328, %v1329
        %v1331 = vshll.u32 920167782, %v1316
        %v1332 = vshrl.u32 1326507024, %v1317
        %v1333 = vor.u32 %v1331, %v1332
        %vm1334 = vcmp.lt.s32.totalorder %v1315, 1
        %vm1335 = vcmp.lt.s32.totalorder %v1315, 2
        %vm1336 = vcmp.lt.s32.totalorder %v1315, 3
        %vm1337 = vcmp.lt.s32.totalorder %v1315, 4
        %v1338 = vsel %vm1334, %v1318, %v1321
        %v1339 = vsel %vm1337, %v1327, 2102212464
        %v1340 = vsel %vm1336, %v1324, %v1339
        %v1341 = vsel %vm1335, %v1338, %v1340
        %v1342 = vsel %vm1334, %v1321, %v1324
        %v1343 = vsel %vm1337, %v1330, 920167782
        %v1344 = vsel %vm1336, %v1327, %v1343
        %v1345 = vsel %vm1335, %v1342, %v1344
        %v1346 = vsel %vm1334, %v1324, %v1327
        %v1347 = vsel %vm1337, %v1333, 1326507024
        %v1348 = vsel %vm1336, %v1330, %v1347
        %v1349 = vsel %vm1335, %v1346, %v1348
        %v1350 = vshll.u32 %v1310, 8
        %v1351 = vmul.u32.u64.compose %v1350, %v1349
        %v1352 = vextract.low.u32 %v1351
        %v1353 = vextract.high.u32 %v1351
        %v1354 = vmul.u32.u64.compose %v1350, %v1345
        %v1355 = vextract.low.u32 %v1354
        %v1356 = vextract.high.u32 %v1354
        %v1357 = vmul.u32 %v1350, %v1341
        %v1358 = vadd.s32 %v1353, %v1355
        %vm1359 = vc.u32 %v1353, %v1355
        %v1360 = vadd.s32 %v1356, 1
        %v1361 = vsel %vm1359, %v1360, %v1356
        %v1362 = vadd.s32 %v1357, %v1361
        %v1363 = vadd.s32 %v1362, 536870912
        %v1364 = vshrl.u32 %v1363, 30
        %v1365 = vshll.u32 %v1364, 30
        %v1366 = vsub.s32 %v1362, %v1365
        %vm1367 = vcmp.lt.s32.totalorder %v1366, 0
        %v1368 = vsub.s32 0, %v1366
        %v1369 = vsel %vm1367, %v1368, %v1366
        %v1370 = vclz %v1369
        %v1371 = vsub.s32 %v1370, 2
        %vm1372 = vcmp.gt.s32.totalorder 0, %v1371
        %v1373 = vsel %vm1372, 0, %v1371
        %v1374 = vsub.s32 32, %v1373
        %v1375 = vshll.u32 %v1366, %v1373
        %v1376 = vshrl.u32 %v1358, %v1374
        %v1377 = vor.u32 %v1375, %v1376
        %v1378 = vsub.s32 4294967266, %v1373
        %v1379 = vadd.s32 %v1378, 127
        %v1380 = vshll.u32 %v1379, 23
        %v1381 = vor.u32 4788187, %v1380
        %v1382 = vand.u32 2147483647, %v1381
        %v1384 = vcvt.s32.f32 %v1377
        %v1385 = vmul.f32 %v1384, %v1382
        %v1386 = vxor.u32 %v1385, 2147483648
        %v1387 = vsel %vm1304, %v1386, %v1385
        %v1388 = vsub.s32 4, %v1364
        %v1389 = vsel %vm1304, %v1388, %v1364
        %v1390 = vsel %vm1303, %v658, %v1387
        %v1391 = vsel %vm1303, 0, %v1389
        %v1392 = vcosq.f32.pop %v1390
        %v1393 = vsinq.f32.pop %v1390
        %vm1394 = vweird.f32 %v658
        %v1395 = vand.u32 %v1391, 3
        %vm1396 = vcmp.lt.s32.totalorder %v1395, 2
        %vm1397 = vcmp.eq.s32.totalorder %v1395, 0
        %v1398 = vxor.u32 %v1393, 2147483648
        %v1399 = vsel %vm1397, %v1392, %v1398
        %vm1400 = vcmp.eq.s32.totalorder %v1395, 2
        %v1401 = vxor.u32 %v1392, 2147483648
        %v1402 = vsel %vm1400, %v1401, %v1393
        %v1403 = vsel %vm1396, %v1399, %v1402
        %v1404 = vsel %vm1394, nan, %v1403
        %v1405 = vand.u32 2147483647, %v659
        %vm1406 = vcmp.le.f32.partialorder %v1405, 0.7853982
        %vm1407 = vcmp.lt.s32.totalorder %v659, 0
        %v1408 = vand.u32 %v659, 2139095040
        %v1409 = vshrl.u32 %v1408, 23
        %v1410 = vsub.s32 %v1409, 127
        %v1411 = vand.u32 2147483647, %v659
        %v1412 = vand.u32 %v1411, 8388607
        %v1413 = vor.u32 %v1412, 8388608
        %v1414 = vsub.s32 0, %v1413
        %v1415 = vadd.s32 %v1410, 1
        %vm1416 = vcmp.gt.s32.totalorder %v1415, 0
        %v1417 = vsel %vm1416, %v1415, 0
        %v1418 = vshrl.u32 %v1417, 5
        %v1419 = vand.u32 %v1417, 31
        %v1420 = vsub.s32 32, %v1419
        %v1421 = vshrl.u32 683565275, %v1420
        %v1422 = vshll.u32 683565275, %v1419
        %v1423 = vshrl.u32 2475754826, %v1420
        %v1424 = vor.u32 %v1422, %v1423
        %v1425 = vshll.u32 2475754826, %v1419
        %v1426 = vshrl.u32 2131351028, %v1420
        %v1427 = vor.u32 %v1425, %v1426
        %v1428 = vshll.u32 2131351028, %v1419
        %v1429 = vshrl.u32 2102212464, %v1420
        %v1430 = vor.u32 %v1428, %v1429
        %v1431 = vshll.u32 2102212464, %v1419
        %v1432 = vshrl.u32 920167782, %v1420
        %v1433 = vor.u32 %v1431, %v1432
        %v1434 = vshll.u32 920167782, %v1419
        %v1435 = vshrl.u32 1326507024, %v1420
        %v1436 = vor.u32 %v1434, %v1435
        %vm1437 = vcmp.lt.s32.totalorder %v1418, 1
        %vm1438 = vcmp.lt.s32.totalorder %v1418, 2
        %vm1439 = vcmp.lt.s32.totalorder %v1418, 3
        %vm1440 = vcmp.lt.s32.totalorder %v1418, 4
        %v1441 = vsel %vm1437, %v1421, %v1424
        %v1442 = vsel %vm1440, %v1430, 2102212464
        %v1443 = vsel %vm1439, %v1427, %v1442
        %v1444 = vsel %vm1438, %v1441, %v1443
        %v1445 = vsel %vm1437, %v1424, %v1427
        %v1446 = vsel %vm1440, %v1433, 920167782
        %v1447 = vsel %vm1439, %v1430, %v1446
        %v1448 = vsel %vm1438, %v1445, %v1447
        %v1449 = vsel %vm1437, %v1427, %v1430
        %v1450 = vsel %vm1440, %v1436, 1326507024
        %v1451 = vsel %vm1439, %v1433, %v1450
        %v1452 = vsel %vm1438, %v1449, %v1451
        %v1453 = vshll.u32 %v1413, 8
        %v1454 = vmul.u32.u64.compose %v1453, %v1452
        %v1455 = vextract.low.u32 %v1454
        %v1456 = vextract.high.u32 %v1454
        %v1457 = vmul.u32.u64.compose %v1453, %v1448
        %v1458 = vextract.low.u32 %v1457
        %v1459 = vextract.high.u32 %v1457
        %v1460 = vmul.u32 %v1453, %v1444
        %v1461 = vadd.s32 %v1456, %v1458
        %vm1462 = vc.u32 %v1456, %v1458
        %v1463 = vadd.s32 %v1459, 1
        %v1464 = vsel %vm1462, %v1463, %v1459
        %v1465 = vadd.s32 %v1460, %v1464
        %v1466 = vadd.s32 %v1465, 536870912
        %v1467 = vshrl.u32 %v1466, 30
        %v1468 = vshll.u32 %v1467, 30
        %v1469 = vsub.s32 %v1465, %v1468
        %vm1470 = vcmp.lt.s32.totalorder %v1469, 0
        %v1471 = vsub.s32 0, %v1469
        %v1472 = vsel %vm1470, %v1471, %v1469
        %v1473 = vclz %v1472
        %v1474 = vsub.s32 %v1473, 2
        %vm1475 = vcmp.gt.s32.totalorder 0, %v1474
        %v1476 = vsel %vm1475, 0, %v1474
        %v1477 = vsub.s32 32, %v1476
        %v1478 = vshll.u32 %v1469, %v1476
        %v1479 = vshrl.u32 %v1461, %v1477
        %v1480 = vor.u32 %v1478, %v1479
        %v1481 = vsub.s32 4294967266, %v1476
        %v1482 = vadd.s32 %v1481, 127
        %v1483 = vshll.u32 %v1482, 23
        %v1484 = vor.u32 4788187, %v1483
        %v1485 = vand.u32 2147483647, %v1484
        %v1487 = vcvt.s32.f32 %v1480
        %v1488 = vmul.f32 %v1487, %v1485
        %v1489 = vxor.u32 %v1488, 2147483648
        %v1490 = vsel %vm1407, %v1489, %v1488
        %v1491 = vsub.s32 4, %v1467
        %v1492 = vsel %vm1407, %v1491, %v1467
        %v1493 = vsel %vm1406, %v659, %v1490
        %v1494 = vsel %vm1406, 0, %v1492
        %v1495 = vcosq.f32.pop %v1493
        %v1496 = vsinq.f32.pop %v1493
        %vm1497 = vweird.f32 %v659
        %v1498 = vand.u32 %v1494, 3
        %vm1499 = vcmp.lt.s32.totalorder %v1498, 2
        %vm1500 = vcmp.eq.s32.totalorder %v1498, 0
        %v1501 = vxor.u32 %v1496, 2147483648
        %v1502 = vsel %vm1500, %v1495, %v1501
        %vm1503 = vcmp.eq.s32.totalorder %v1498, 2
        %v1504 = vxor.u32 %v1495, 2147483648
        %v1505 = vsel %vm1503, %v1504, %v1496
        %v1506 = vsel %vm1499, %v1502, %v1505
        %v1507 = vsel %vm1497, nan, %v1506
        %v1508 = vand.u32 2147483647, %v660
        %vm1509 = vcmp.le.f32.partialorder %v1508, 0.7853982
        %vm1510 = vcmp.lt.s32.totalorder %v660, 0
        %v1511 = vand.u32 %v660, 2139095040
        %v1512 = vshrl.u32 %v1511, 23
        %v1513 = vsub.s32 %v1512, 127
        %v1514 = vand.u32 2147483647, %v660
        %v1515 = vand.u32 %v1514, 8388607
        %v1516 = vor.u32 %v1515, 8388608
        %v1517 = vsub.s32 0, %v1516
        %v1518 = vadd.s32 %v1513, 1
        %vm1519 = vcmp.gt.s32.totalorder %v1518, 0
        %v1520 = vsel %vm1519, %v1518, 0
        %v1521 = vshrl.u32 %v1520, 5
        %v1522 = vand.u32 %v1520, 31
        %v1523 = vsub.s32 32, %v1522
        %v1524 = vshrl.u32 683565275, %v1523
        %v1525 = vshll.u32 683565275, %v1522
        %v1526 = vshrl.u32 2475754826, %v1523
        %v1527 = vor.u32 %v1525, %v1526
        %v1528 = vshll.u32 2475754826, %v1522
        %v1529 = vshrl.u32 2131351028, %v1523
        %v1530 = vor.u32 %v1528, %v1529
        %v1531 = vshll.u32 2131351028, %v1522
        %v1532 = vshrl.u32 2102212464, %v1523
        %v1533 = vor.u32 %v1531, %v1532
        %v1534 = vshll.u32 2102212464, %v1522
        %v1535 = vshrl.u32 920167782, %v1523
        %v1536 = vor.u32 %v1534, %v1535
        %v1537 = vshll.u32 920167782, %v1522
        %v1538 = vshrl.u32 1326507024, %v1523
        %v1539 = vor.u32 %v1537, %v1538
        %vm1540 = vcmp.lt.s32.totalorder %v1521, 1
        %vm1541 = vcmp.lt.s32.totalorder %v1521, 2
        %vm1542 = vcmp.lt.s32.totalorder %v1521, 3
        %vm1543 = vcmp.lt.s32.totalorder %v1521, 4
        %v1544 = vsel %vm1540, %v1524, %v1527
        %v1545 = vsel %vm1543, %v1533, 2102212464
        %v1546 = vsel %vm1542, %v1530, %v1545
        %v1547 = vsel %vm1541, %v1544, %v1546
        %v1548 = vsel %vm1540, %v1527, %v1530
        %v1549 = vsel %vm1543, %v1536, 920167782
        %v1550 = vsel %vm1542, %v1533, %v1549
        %v1551 = vsel %vm1541, %v1548, %v1550
        %v1552 = vsel %vm1540, %v1530, %v1533
        %v1553 = vsel %vm1543, %v1539, 1326507024
        %v1554 = vsel %vm1542, %v1536, %v1553
        %v1555 = vsel %vm1541, %v1552, %v1554
        %v1556 = vshll.u32 %v1516, 8
        %v1557 = vmul.u32.u64.compose %v1556, %v1555
        %v1558 = vextract.low.u32 %v1557
        %v1559 = vextract.high.u32 %v1557
        %v1560 = vmul.u32.u64.compose %v1556, %v1551
        %v1561 = vextract.low.u32 %v1560
        %v1562 = vextract.high.u32 %v1560
        %v1563 = vmul.u32 %v1556, %v1547
        %v1564 = vadd.s32 %v1559, %v1561
        %vm1565 = vc.u32 %v1559, %v1561
        %v1566 = vadd.s32 %v1562, 1
        %v1567 = vsel %vm1565, %v1566, %v1562
        %v1568 = vadd.s32 %v1563, %v1567
        %v1569 = vadd.s32 %v1568, 536870912
        %v1570 = vshrl.u32 %v1569, 30
        %v1571 = vshll.u32 %v1570, 30
        %v1572 = vsub.s32 %v1568, %v1571
        %vm1573 = vcmp.lt.s32.totalorder %v1572, 0
        %v1574 = vsub.s32 0, %v1572
        %v1575 = vsel %vm1573, %v1574, %v1572
        %v1576 = vclz %v1575
        %v1577 = vsub.s32 %v1576, 2
        %vm1578 = vcmp.gt.s32.totalorder 0, %v1577
        %v1579 = vsel %vm1578, 0, %v1577
        %v1580 = vsub.s32 32, %v1579
        %v1581 = vshll.u32 %v1572, %v1579
        %v1582 = vshrl.u32 %v1564, %v1580
        %v1583 = vor.u32 %v1581, %v1582
        %v1584 = vsub.s32 4294967266, %v1579
        %v1585 = vadd.s32 %v1584, 127
        %v1586 = vshll.u32 %v1585, 23
        %v1587 = vor.u32 4788187, %v1586
        %v1588 = vand.u32 2147483647, %v1587
        %v1590 = vcvt.s32.f32 %v1583
        %v1591 = vmul.f32 %v1590, %v1588
        %v1592 = vxor.u32 %v1591, 2147483648
        %v1593 = vsel %vm1510, %v1592, %v1591
        %v1594 = vsub.s32 4, %v1570
        %v1595 = vsel %vm1510, %v1594, %v1570
        %v1596 = vsel %vm1509, %v660, %v1593
        %v1597 = vsel %vm1509, 0, %v1595
        %v1598 = vcosq.f32.pop %v1596
        %v1599 = vsinq.f32.pop %v1596
        %vm1600 = vweird.f32 %v660
        %v1601 = vand.u32 %v1597, 3
        %vm1602 = vcmp.lt.s32.totalorder %v1601, 2
        %vm1603 = vcmp.eq.s32.totalorder %v1601, 0
        %v1604 = vxor.u32 %v1599, 2147483648
        %v1605 = vsel %vm1603, %v1598, %v1604
        %vm1606 = vcmp.eq.s32.totalorder %v1601, 2
        %v1607 = vxor.u32 %v1598, 2147483648
        %v1608 = vsel %vm1606, %v1607, %v1599
        %v1609 = vsel %vm1602, %v1605, %v1608
        %v1610 = vsel %vm1600, nan, %v1609
        %v1611 = vand.u32 2147483647, %v661
        %vm1612 = vcmp.le.f32.partialorder %v1611, 0.7853982
        %vm1613 = vcmp.lt.s32.totalorder %v661, 0
        %v1614 = vand.u32 %v661, 2139095040
        %v1615 = vshrl.u32 %v1614, 23
        %v1616 = vsub.s32 %v1615, 127
        %v1617 = vand.u32 2147483647, %v661
        %v1618 = vand.u32 %v1617, 8388607
        %v1619 = vor.u32 %v1618, 8388608
        %v1620 = vsub.s32 0, %v1619
        %v1621 = vadd.s32 %v1616, 1
        %vm1622 = vcmp.gt.s32.totalorder %v1621, 0
        %v1623 = vsel %vm1622, %v1621, 0
        %v1624 = vshrl.u32 %v1623, 5
        %v1625 = vand.u32 %v1623, 31
        %v1626 = vsub.s32 32, %v1625
        %v1627 = vshrl.u32 683565275, %v1626
        %v1628 = vshll.u32 683565275, %v1625
        %v1629 = vshrl.u32 2475754826, %v1626
        %v1630 = vor.u32 %v1628, %v1629
        %v1631 = vshll.u32 2475754826, %v1625
        %v1632 = vshrl.u32 2131351028, %v1626
        %v1633 = vor.u32 %v1631, %v1632
        %v1634 = vshll.u32 2131351028, %v1625
        %v1635 = vshrl.u32 2102212464, %v1626
        %v1636 = vor.u32 %v1634, %v1635
        %v1637 = vshll.u32 2102212464, %v1625
        %v1638 = vshrl.u32 920167782, %v1626
        %v1639 = vor.u32 %v1637, %v1638
        %v1640 = vshll.u32 920167782, %v1625
        %v1641 = vshrl.u32 1326507024, %v1626
        %v1642 = vor.u32 %v1640, %v1641
        %vm1643 = vcmp.lt.s32.totalorder %v1624, 1
        %vm1644 = vcmp.lt.s32.totalorder %v1624, 2
        %vm1645 = vcmp.lt.s32.totalorder %v1624, 3
        %vm1646 = vcmp.lt.s32.totalorder %v1624, 4
        %v1647 = vsel %vm1643, %v1627, %v1630
        %v1648 = vsel %vm1646, %v1636, 2102212464
        %v1649 = vsel %vm1645, %v1633, %v1648
        %v1650 = vsel %vm1644, %v1647, %v1649
        %v1651 = vsel %vm1643, %v1630, %v1633
        %v1652 = vsel %vm1646, %v1639, 920167782
        %v1653 = vsel %vm1645, %v1636, %v1652
        %v1654 = vsel %vm1644, %v1651, %v1653
        %v1655 = vsel %vm1643, %v1633, %v1636
        %v1656 = vsel %vm1646, %v1642, 1326507024
        %v1657 = vsel %vm1645, %v1639, %v1656
        %v1658 = vsel %vm1644, %v1655, %v1657
        %v1659 = vshll.u32 %v1619, 8
        %v1660 = vmul.u32.u64.compose %v1659, %v1658
        %v1661 = vextract.low.u32 %v1660
        %v1662 = vextract.high.u32 %v1660
        %v1663 = vmul.u32.u64.compose %v1659, %v1654
        %v1664 = vextract.low.u32 %v1663
        %v1665 = vextract.high.u32 %v1663
        %v1666 = vmul.u32 %v1659, %v1650
        %v1667 = vadd.s32 %v1662, %v1664
        %vm1668 = vc.u32 %v1662, %v1664
        %v1669 = vadd.s32 %v1665, 1
        %v1670 = vsel %vm1668, %v1669, %v1665
        %v1671 = vadd.s32 %v1666, %v1670
        %v1672 = vadd.s32 %v1671, 536870912
        %v1673 = vshrl.u32 %v1672, 30
        %v1674 = vshll.u32 %v1673, 30
        %v1675 = vsub.s32 %v1671, %v1674
        %vm1676 = vcmp.lt.s32.totalorder %v1675, 0
        %v1677 = vsub.s32 0, %v1675
        %v1678 = vsel %vm1676, %v1677, %v1675
        %v1679 = vclz %v1678
        %v1680 = vsub.s32 %v1679, 2
        %vm1681 = vcmp.gt.s32.totalorder 0, %v1680
        %v1682 = vsel %vm1681, 0, %v1680
        %v1683 = vsub.s32 32, %v1682
        %v1684 = vshll.u32 %v1675, %v1682
        %v1685 = vshrl.u32 %v1667, %v1683
        %v1686 = vor.u32 %v1684, %v1685
        %v1687 = vsub.s32 4294967266, %v1682
        %v1688 = vadd.s32 %v1687, 127
        %v1689 = vshll.u32 %v1688, 23
        %v1690 = vor.u32 4788187, %v1689
        %v1691 = vand.u32 2147483647, %v1690
        %v1693 = vcvt.s32.f32 %v1686
        %v1694 = vmul.f32 %v1693, %v1691
        %v1695 = vxor.u32 %v1694, 2147483648
        %v1696 = vsel %vm1613, %v1695, %v1694
        %v1697 = vsub.s32 4, %v1673
        %v1698 = vsel %vm1613, %v1697, %v1673
        %v1699 = vsel %vm1612, %v661, %v1696
        %v1700 = vsel %vm1612, 0, %v1698
        %v1701 = vcosq.f32.pop %v1699
        %v1702 = vsinq.f32.pop %v1699
        %vm1703 = vweird.f32 %v661
        %v1704 = vand.u32 %v1700, 3
        %vm1705 = vcmp.lt.s32.totalorder %v1704, 2
        %vm1706 = vcmp.eq.s32.totalorder %v1704, 0
        %v1707 = vxor.u32 %v1702, 2147483648
        %v1708 = vsel %vm1706, %v1701, %v1707
        %vm1709 = vcmp.eq.s32.totalorder %v1704, 2
        %v1710 = vxor.u32 %v1701, 2147483648
        %v1711 = vsel %vm1709, %v1710, %v1702
        %v1712 = vsel %vm1705, %v1708, %v1711
        %v1713 = vsel %vm1703, nan, %v1712
        %v1714 = vand.u32 2147483647, %v662
        %vm1715 = vcmp.le.f32.partialorder %v1714, 0.7853982
        %vm1716 = vcmp.lt.s32.totalorder %v662, 0
        %v1717 = vand.u32 %v662, 2139095040
        %v1718 = vshrl.u32 %v1717, 23
        %v1719 = vsub.s32 %v1718, 127
        %v1720 = vand.u32 2147483647, %v662
        %v1721 = vand.u32 %v1720, 8388607
        %v1722 = vor.u32 %v1721, 8388608
        %v1723 = vsub.s32 0, %v1722
        %v1724 = vadd.s32 %v1719, 1
        %vm1725 = vcmp.gt.s32.totalorder %v1724, 0
        %v1726 = vsel %vm1725, %v1724, 0
        %v1727 = vshrl.u32 %v1726, 5
        %v1728 = vand.u32 %v1726, 31
        %v1729 = vsub.s32 32, %v1728
        %v1730 = vshrl.u32 683565275, %v1729
        %v1731 = vshll.u32 683565275, %v1728
        %v1732 = vshrl.u32 2475754826, %v1729
        %v1733 = vor.u32 %v1731, %v1732
        %v1734 = vshll.u32 2475754826, %v1728
        %v1735 = vshrl.u32 2131351028, %v1729
        %v1736 = vor.u32 %v1734, %v1735
        %v1737 = vshll.u32 2131351028, %v1728
        %v1738 = vshrl.u32 2102212464, %v1729
        %v1739 = vor.u32 %v1737, %v1738
        %v1740 = vshll.u32 2102212464, %v1728
        %v1741 = vshrl.u32 920167782, %v1729
        %v1742 = vor.u32 %v1740, %v1741
        %v1743 = vshll.u32 920167782, %v1728
        %v1744 = vshrl.u32 1326507024, %v1729
        %v1745 = vor.u32 %v1743, %v1744
        %vm1746 = vcmp.lt.s32.totalorder %v1727, 1
        %vm1747 = vcmp.lt.s32.totalorder %v1727, 2
        %vm1748 = vcmp.lt.s32.totalorder %v1727, 3
        %vm1749 = vcmp.lt.s32.totalorder %v1727, 4
        %v1750 = vsel %vm1746, %v1730, %v1733
        %v1751 = vsel %vm1749, %v1739, 2102212464
        %v1752 = vsel %vm1748, %v1736, %v1751
        %v1753 = vsel %vm1747, %v1750, %v1752
        %v1754 = vsel %vm1746, %v1733, %v1736
        %v1755 = vsel %vm1749, %v1742, 920167782
        %v1756 = vsel %vm1748, %v1739, %v1755
        %v1757 = vsel %vm1747, %v1754, %v1756
        %v1758 = vsel %vm1746, %v1736, %v1739
        %v1759 = vsel %vm1749, %v1745, 1326507024
        %v1760 = vsel %vm1748, %v1742, %v1759
        %v1761 = vsel %vm1747, %v1758, %v1760
        %v1762 = vshll.u32 %v1722, 8
        %v1763 = vmul.u32.u64.compose %v1762, %v1761
        %v1764 = vextract.low.u32 %v1763
        %v1765 = vextract.high.u32 %v1763
        %v1766 = vmul.u32.u64.compose %v1762, %v1757
        %v1767 = vextract.low.u32 %v1766
        %v1768 = vextract.high.u32 %v1766
        %v1769 = vmul.u32 %v1762, %v1753
        %v1770 = vadd.s32 %v1765, %v1767
        %vm1771 = vc.u32 %v1765, %v1767
        %v1772 = vadd.s32 %v1768, 1
        %v1773 = vsel %vm1771, %v1772, %v1768
        %v1774 = vadd.s32 %v1769, %v1773
        %v1775 = vadd.s32 %v1774, 536870912
        %v1776 = vshrl.u32 %v1775, 30
        %v1777 = vshll.u32 %v1776, 30
        %v1778 = vsub.s32 %v1774, %v1777
        %vm1779 = vcmp.lt.s32.totalorder %v1778, 0
        %v1780 = vsub.s32 0, %v1778
        %v1781 = vsel %vm1779, %v1780, %v1778
        %v1782 = vclz %v1781
        %v1783 = vsub.s32 %v1782, 2
        %vm1784 = vcmp.gt.s32.totalorder 0, %v1783
        %v1785 = vsel %vm1784, 0, %v1783
        %v1786 = vsub.s32 32, %v1785
        %v1787 = vshll.u32 %v1778, %v1785
        %v1788 = vshrl.u32 %v1770, %v1786
        %v1789 = vor.u32 %v1787, %v1788
        %v1790 = vsub.s32 4294967266, %v1785
        %v1791 = vadd.s32 %v1790, 127
        %v1792 = vshll.u32 %v1791, 23
        %v1793 = vor.u32 4788187, %v1792
        %v1794 = vand.u32 2147483647, %v1793
        %v1796 = vcvt.s32.f32 %v1789
        %v1797 = vmul.f32 %v1796, %v1794
        %v1798 = vxor.u32 %v1797, 2147483648
        %v1799 = vsel %vm1716, %v1798, %v1797
        %v1800 = vsub.s32 4, %v1776
        %v1801 = vsel %vm1716, %v1800, %v1776
        %v1802 = vsel %vm1715, %v662, %v1799
        %v1803 = vsel %vm1715, 0, %v1801
        %v1804 = vcosq.f32.pop %v1802
        %v1805 = vsinq.f32.pop %v1802
        %vm1806 = vweird.f32 %v662
        %v1807 = vand.u32 %v1803, 3
        %vm1808 = vcmp.lt.s32.totalorder %v1807, 2
        %vm1809 = vcmp.eq.s32.totalorder %v1807, 0
        %v1810 = vxor.u32 %v1805, 2147483648
        %v1811 = vsel %vm1809, %v1804, %v1810
        %vm1812 = vcmp.eq.s32.totalorder %v1807, 2
        %v1813 = vxor.u32 %v1804, 2147483648
        %v1814 = vsel %vm1812, %v1813, %v1805
        %v1815 = vsel %vm1808, %v1811, %v1814
        %v1816 = vsel %vm1806, nan, %v1815
        %v1817 = vand.u32 2147483647, %v663
        %vm1818 = vcmp.le.f32.partialorder %v1817, 0.7853982
        %vm1819 = vcmp.lt.s32.totalorder %v663, 0
        %v1820 = vand.u32 %v663, 2139095040
        %v1821 = vshrl.u32 %v1820, 23
        %v1822 = vsub.s32 %v1821, 127
        %v1823 = vand.u32 2147483647, %v663
        %v1824 = vand.u32 %v1823, 8388607
        %v1825 = vor.u32 %v1824, 8388608
        %v1826 = vsub.s32 0, %v1825
        %v1827 = vadd.s32 %v1822, 1
        %vm1828 = vcmp.gt.s32.totalorder %v1827, 0
        %v1829 = vsel %vm1828, %v1827, 0
        %v1830 = vshrl.u32 %v1829, 5
        %v1831 = vand.u32 %v1829, 31
        %v1832 = vsub.s32 32, %v1831
        %v1833 = vshrl.u32 683565275, %v1832
        %v1834 = vshll.u32 683565275, %v1831
        %v1835 = vshrl.u32 2475754826, %v1832
        %v1836 = vor.u32 %v1834, %v1835
        %v1837 = vshll.u32 2475754826, %v1831
        %v1838 = vshrl.u32 2131351028, %v1832
        %v1839 = vor.u32 %v1837, %v1838
        %v1840 = vshll.u32 2131351028, %v1831
        %v1841 = vshrl.u32 2102212464, %v1832
        %v1842 = vor.u32 %v1840, %v1841
        %v1843 = vshll.u32 2102212464, %v1831
        %v1844 = vshrl.u32 920167782, %v1832
        %v1845 = vor.u32 %v1843, %v1844
        %v1846 = vshll.u32 920167782, %v1831
        %v1847 = vshrl.u32 1326507024, %v1832
        %v1848 = vor.u32 %v1846, %v1847
        %vm1849 = vcmp.lt.s32.totalorder %v1830, 1
        %vm1850 = vcmp.lt.s32.totalorder %v1830, 2
        %vm1851 = vcmp.lt.s32.totalorder %v1830, 3
        %vm1852 = vcmp.lt.s32.totalorder %v1830, 4
        %v1853 = vsel %vm1849, %v1833, %v1836
        %v1854 = vsel %vm1852, %v1842, 2102212464
        %v1855 = vsel %vm1851, %v1839, %v1854
        %v1856 = vsel %vm1850, %v1853, %v1855
        %v1857 = vsel %vm1849, %v1836, %v1839
        %v1858 = vsel %vm1852, %v1845, 920167782
        %v1859 = vsel %vm1851, %v1842, %v1858
        %v1860 = vsel %vm1850, %v1857, %v1859
        %v1861 = vsel %vm1849, %v1839, %v1842
        %v1862 = vsel %vm1852, %v1848, 1326507024
        %v1863 = vsel %vm1851, %v1845, %v1862
        %v1864 = vsel %vm1850, %v1861, %v1863
        %v1865 = vshll.u32 %v1825, 8
        %v1866 = vmul.u32.u64.compose %v1865, %v1864
        %v1867 = vextract.low.u32 %v1866
        %v1868 = vextract.high.u32 %v1866
        %v1869 = vmul.u32.u64.compose %v1865, %v1860
        %v1870 = vextract.low.u32 %v1869
        %v1871 = vextract.high.u32 %v1869
        %v1872 = vmul.u32 %v1865, %v1856
        %v1873 = vadd.s32 %v1868, %v1870
        %vm1874 = vc.u32 %v1868, %v1870
        %v1875 = vadd.s32 %v1871, 1
        %v1876 = vsel %vm1874, %v1875, %v1871
        %v1877 = vadd.s32 %v1872, %v1876
        %v1878 = vadd.s32 %v1877, 536870912
        %v1879 = vshrl.u32 %v1878, 30
        %v1880 = vshll.u32 %v1879, 30
        %v1881 = vsub.s32 %v1877, %v1880
        %vm1882 = vcmp.lt.s32.totalorder %v1881, 0
        %v1883 = vsub.s32 0, %v1881
        %v1884 = vsel %vm1882, %v1883, %v1881
        %v1885 = vclz %v1884
        %v1886 = vsub.s32 %v1885, 2
        %vm1887 = vcmp.gt.s32.totalorder 0, %v1886
        %v1888 = vsel %vm1887, 0, %v1886
        %v1889 = vsub.s32 32, %v1888
        %v1890 = vshll.u32 %v1881, %v1888
        %v1891 = vshrl.u32 %v1873, %v1889
        %v1892 = vor.u32 %v1890, %v1891
        %v1893 = vsub.s32 4294967266, %v1888
        %v1894 = vadd.s32 %v1893, 127
        %v1895 = vshll.u32 %v1894, 23
        %v1896 = vor.u32 4788187, %v1895
        %v1897 = vand.u32 2147483647, %v1896
        %v1899 = vcvt.s32.f32 %v1892
        %v1900 = vmul.f32 %v1899, %v1897
        %v1901 = vxor.u32 %v1900, 2147483648
        %v1902 = vsel %vm1819, %v1901, %v1900
        %v1903 = vsub.s32 4, %v1879
        %v1904 = vsel %vm1819, %v1903, %v1879
        %v1905 = vsel %vm1818, %v663, %v1902
        %v1906 = vsel %vm1818, 0, %v1904
        %v1907 = vcosq.f32.pop %v1905
        %v1908 = vsinq.f32.pop %v1905
        %vm1909 = vweird.f32 %v663
        %v1910 = vand.u32 %v1906, 3
        %vm1911 = vcmp.lt.s32.totalorder %v1910, 2
        %vm1912 = vcmp.eq.s32.totalorder %v1910, 0
        %v1913 = vxor.u32 %v1908, 2147483648
        %v1914 = vsel %vm1912, %v1907, %v1913
        %vm1915 = vcmp.eq.s32.totalorder %v1910, 2
        %v1916 = vxor.u32 %v1907, 2147483648
        %v1917 = vsel %vm1915, %v1916, %v1908
        %v1918 = vsel %vm1911, %v1914, %v1917
        %v1919 = vsel %vm1909, nan, %v1918
        %v1920 = vand.u32 2147483647, %v664
        %vm1921 = vcmp.le.f32.partialorder %v1920, 0.7853982
        %vm1922 = vcmp.lt.s32.totalorder %v664, 0
        %v1923 = vand.u32 %v664, 2139095040
        %v1924 = vshrl.u32 %v1923, 23
        %v1925 = vsub.s32 %v1924, 127
        %v1926 = vand.u32 2147483647, %v664
        %v1927 = vand.u32 %v1926, 8388607
        %v1928 = vor.u32 %v1927, 8388608
        %v1929 = vsub.s32 0, %v1928
        %v1930 = vadd.s32 %v1925, 1
        %vm1931 = vcmp.gt.s32.totalorder %v1930, 0
        %v1932 = vsel %vm1931, %v1930, 0
        %v1933 = vshrl.u32 %v1932, 5
        %v1934 = vand.u32 %v1932, 31
        %v1935 = vsub.s32 32, %v1934
        %v1936 = vshrl.u32 683565275, %v1935
        %v1937 = vshll.u32 683565275, %v1934
        %v1938 = vshrl.u32 2475754826, %v1935
        %v1939 = vor.u32 %v1937, %v1938
        %v1940 = vshll.u32 2475754826, %v1934
        %v1941 = vshrl.u32 2131351028, %v1935
        %v1942 = vor.u32 %v1940, %v1941
        %v1943 = vshll.u32 2131351028, %v1934
        %v1944 = vshrl.u32 2102212464, %v1935
        %v1945 = vor.u32 %v1943, %v1944
        %v1946 = vshll.u32 2102212464, %v1934
        %v1947 = vshrl.u32 920167782, %v1935
        %v1948 = vor.u32 %v1946, %v1947
        %v1949 = vshll.u32 920167782, %v1934
        %v1950 = vshrl.u32 1326507024, %v1935
        %v1951 = vor.u32 %v1949, %v1950
        %vm1952 = vcmp.lt.s32.totalorder %v1933, 1
        %vm1953 = vcmp.lt.s32.totalorder %v1933, 2
        %vm1954 = vcmp.lt.s32.totalorder %v1933, 3
        %vm1955 = vcmp.lt.s32.totalorder %v1933, 4
        %v1956 = vsel %vm1952, %v1936, %v1939
        %v1957 = vsel %vm1955, %v1945, 2102212464
        %v1958 = vsel %vm1954, %v1942, %v1957
        %v1959 = vsel %vm1953, %v1956, %v1958
        %v1960 = vsel %vm1952, %v1939, %v1942
        %v1961 = vsel %vm1955, %v1948, 920167782
        %v1962 = vsel %vm1954, %v1945, %v1961
        %v1963 = vsel %vm1953, %v1960, %v1962
        %v1964 = vsel %vm1952, %v1942, %v1945
        %v1965 = vsel %vm1955, %v1951, 1326507024
        %v1966 = vsel %vm1954, %v1948, %v1965
        %v1967 = vsel %vm1953, %v1964, %v1966
        %v1968 = vshll.u32 %v1928, 8
        %v1969 = vmul.u32.u64.compose %v1968, %v1967
        %v1970 = vextract.low.u32 %v1969
        %v1971 = vextract.high.u32 %v1969
        %v1972 = vmul.u32.u64.compose %v1968, %v1963
        %v1973 = vextract.low.u32 %v1972
        %v1974 = vextract.high.u32 %v1972
        %v1975 = vmul.u32 %v1968, %v1959
        %v1976 = vadd.s32 %v1971, %v1973
        %vm1977 = vc.u32 %v1971, %v1973
        %v1978 = vadd.s32 %v1974, 1
        %v1979 = vsel %vm1977, %v1978, %v1974
        %v1980 = vadd.s32 %v1975, %v1979
        %v1981 = vadd.s32 %v1980, 536870912
        %v1982 = vshrl.u32 %v1981, 30
        %v1983 = vshll.u32 %v1982, 30
        %v1984 = vsub.s32 %v1980, %v1983
        %vm1985 = vcmp.lt.s32.totalorder %v1984, 0
        %v1986 = vsub.s32 0, %v1984
        %v1987 = vsel %vm1985, %v1986, %v1984
        %v1988 = vclz %v1987
        %v1989 = vsub.s32 %v1988, 2
        %vm1990 = vcmp.gt.s32.totalorder 0, %v1989
        %v1991 = vsel %vm1990, 0, %v1989
        %v1992 = vsub.s32 32, %v1991
        %v1993 = vshll.u32 %v1984, %v1991
        %v1994 = vshrl.u32 %v1976, %v1992
        %v1995 = vor.u32 %v1993, %v1994
        %v1996 = vsub.s32 4294967266, %v1991
        %v1997 = vadd.s32 %v1996, 127
        %v1998 = vshll.u32 %v1997, 23
        %v1999 = vor.u32 4788187, %v1998
        %v2000 = vand.u32 2147483647, %v1999
        %v2002 = vcvt.s32.f32 %v1995
        %v2003 = vmul.f32 %v2002, %v2000
        %v2004 = vxor.u32 %v2003, 2147483648
        %v2005 = vsel %vm1922, %v2004, %v2003
        %v2006 = vsub.s32 4, %v1982
        %v2007 = vsel %vm1922, %v2006, %v1982
        %v2008 = vsel %vm1921, %v664, %v2005
        %v2009 = vsel %vm1921, 0, %v2007
        %v2010 = vcosq.f32.pop %v2008
        %v2011 = vsinq.f32.pop %v2008
        %vm2012 = vweird.f32 %v664
        %v2013 = vand.u32 %v2009, 3
        %vm2014 = vcmp.lt.s32.totalorder %v2013, 2
        %vm2015 = vcmp.eq.s32.totalorder %v2013, 0
        %v2016 = vxor.u32 %v2011, 2147483648
        %v2017 = vsel %vm2015, %v2010, %v2016
        %vm2018 = vcmp.eq.s32.totalorder %v2013, 2
        %v2019 = vxor.u32 %v2010, 2147483648
        %v2020 = vsel %vm2018, %v2019, %v2011
        %v2021 = vsel %vm2014, %v2017, %v2020
        %v2022 = vsel %vm2012, nan, %v2021
        %v2023 = vand.u32 2147483647, %v665
        %vm2024 = vcmp.le.f32.partialorder %v2023, 0.7853982
        %vm2025 = vcmp.lt.s32.totalorder %v665, 0
        %v2026 = vand.u32 %v665, 2139095040
        %v2027 = vshrl.u32 %v2026, 23
        %v2028 = vsub.s32 %v2027, 127
        %v2029 = vand.u32 2147483647, %v665
        %v2030 = vand.u32 %v2029, 8388607
        %v2031 = vor.u32 %v2030, 8388608
        %v2032 = vsub.s32 0, %v2031
        %v2033 = vadd.s32 %v2028, 1
        %vm2034 = vcmp.gt.s32.totalorder %v2033, 0
        %v2035 = vsel %vm2034, %v2033, 0
        %v2036 = vshrl.u32 %v2035, 5
        %v2037 = vand.u32 %v2035, 31
        %v2038 = vsub.s32 32, %v2037
        %v2039 = vshrl.u32 683565275, %v2038
        %v2040 = vshll.u32 683565275, %v2037
        %v2041 = vshrl.u32 2475754826, %v2038
        %v2042 = vor.u32 %v2040, %v2041
        %v2043 = vshll.u32 2475754826, %v2037
        %v2044 = vshrl.u32 2131351028, %v2038
        %v2045 = vor.u32 %v2043, %v2044
        %v2046 = vshll.u32 2131351028, %v2037
        %v2047 = vshrl.u32 2102212464, %v2038
        %v2048 = vor.u32 %v2046, %v2047
        %v2049 = vshll.u32 2102212464, %v2037
        %v2050 = vshrl.u32 920167782, %v2038
        %v2051 = vor.u32 %v2049, %v2050
        %v2052 = vshll.u32 920167782, %v2037
        %v2053 = vshrl.u32 1326507024, %v2038
        %v2054 = vor.u32 %v2052, %v2053
        %vm2055 = vcmp.lt.s32.totalorder %v2036, 1
        %vm2056 = vcmp.lt.s32.totalorder %v2036, 2
        %vm2057 = vcmp.lt.s32.totalorder %v2036, 3
        %vm2058 = vcmp.lt.s32.totalorder %v2036, 4
        %v2059 = vsel %vm2055, %v2039, %v2042
        %v2060 = vsel %vm2058, %v2048, 2102212464
        %v2061 = vsel %vm2057, %v2045, %v2060
        %v2062 = vsel %vm2056, %v2059, %v2061
        %v2063 = vsel %vm2055, %v2042, %v2045
        %v2064 = vsel %vm2058, %v2051, 920167782
        %v2065 = vsel %vm2057, %v2048, %v2064
        %v2066 = vsel %vm2056, %v2063, %v2065
        %v2067 = vsel %vm2055, %v2045, %v2048
        %v2068 = vsel %vm2058, %v2054, 1326507024
        %v2069 = vsel %vm2057, %v2051, %v2068
        %v2070 = vsel %vm2056, %v2067, %v2069
        %v2071 = vshll.u32 %v2031, 8
        %v2072 = vmul.u32.u64.compose %v2071, %v2070
        %v2073 = vextract.low.u32 %v2072
        %v2074 = vextract.high.u32 %v2072
        %v2075 = vmul.u32.u64.compose %v2071, %v2066
        %v2076 = vextract.low.u32 %v2075
        %v2077 = vextract.high.u32 %v2075
        %v2078 = vmul.u32 %v2071, %v2062
        %v2079 = vadd.s32 %v2074, %v2076
        %vm2080 = vc.u32 %v2074, %v2076
        %v2081 = vadd.s32 %v2077, 1
        %v2082 = vsel %vm2080, %v2081, %v2077
        %v2083 = vadd.s32 %v2078, %v2082
        %v2084 = vadd.s32 %v2083, 536870912
        %v2085 = vshrl.u32 %v2084, 30
        %v2086 = vshll.u32 %v2085, 30
        %v2087 = vsub.s32 %v2083, %v2086
        %vm2088 = vcmp.lt.s32.totalorder %v2087, 0
        %v2089 = vsub.s32 0, %v2087
        %v2090 = vsel %vm2088, %v2089, %v2087
        %v2091 = vclz %v2090
        %v2092 = vsub.s32 %v2091, 2
        %vm2093 = vcmp.gt.s32.totalorder 0, %v2092
        %v2094 = vsel %vm2093, 0, %v2092
        %v2095 = vsub.s32 32, %v2094
        %v2096 = vshll.u32 %v2087, %v2094
        %v2097 = vshrl.u32 %v2079, %v2095
        %v2098 = vor.u32 %v2096, %v2097
        %v2099 = vsub.s32 4294967266, %v2094
        %v2100 = vadd.s32 %v2099, 127
        %v2101 = vshll.u32 %v2100, 23
        %v2102 = vor.u32 4788187, %v2101
        %v2103 = vand.u32 2147483647, %v2102
        %v2105 = vcvt.s32.f32 %v2098
        %v2106 = vmul.f32 %v2105, %v2103
        %v2107 = vxor.u32 %v2106, 2147483648
        %v2108 = vsel %vm2025, %v2107, %v2106
        %v2109 = vsub.s32 4, %v2085
        %v2110 = vsel %vm2025, %v2109, %v2085
        %v2111 = vsel %vm2024, %v665, %v2108
        %v2112 = vsel %vm2024, 0, %v2110
        %v2113 = vcosq.f32.pop %v2111
        %v2114 = vsinq.f32.pop %v2111
        %vm2115 = vweird.f32 %v665
        %v2116 = vand.u32 %v2112, 3
        %vm2117 = vcmp.lt.s32.totalorder %v2116, 2
        %vm2118 = vcmp.eq.s32.totalorder %v2116, 0
        %v2119 = vxor.u32 %v2114, 2147483648
        %v2120 = vsel %vm2118, %v2113, %v2119
        %vm2121 = vcmp.eq.s32.totalorder %v2116, 2
        %v2122 = vxor.u32 %v2113, 2147483648
        %v2123 = vsel %vm2121, %v2122, %v2114
        %v2124 = vsel %vm2117, %v2120, %v2123
        %v2125 = vsel %vm2115, nan, %v2124
        %v2126 = vand.u32 2147483647, %v666
        %vm2127 = vcmp.le.f32.partialorder %v2126, 0.7853982
        %vm2128 = vcmp.lt.s32.totalorder %v666, 0
        %v2129 = vand.u32 %v666, 2139095040
        %v2130 = vshrl.u32 %v2129, 23
        %v2131 = vsub.s32 %v2130, 127
        %v2132 = vand.u32 2147483647, %v666
        %v2133 = vand.u32 %v2132, 8388607
        %v2134 = vor.u32 %v2133, 8388608
        %v2135 = vsub.s32 0, %v2134
        %v2136 = vadd.s32 %v2131, 1
        %vm2137 = vcmp.gt.s32.totalorder %v2136, 0
        %v2138 = vsel %vm2137, %v2136, 0
        %v2139 = vshrl.u32 %v2138, 5
        %v2140 = vand.u32 %v2138, 31
        %v2141 = vsub.s32 32, %v2140
        %v2142 = vshrl.u32 683565275, %v2141
        %v2143 = vshll.u32 683565275, %v2140
        %v2144 = vshrl.u32 2475754826, %v2141
        %v2145 = vor.u32 %v2143, %v2144
        %v2146 = vshll.u32 2475754826, %v2140
        %v2147 = vshrl.u32 2131351028, %v2141
        %v2148 = vor.u32 %v2146, %v2147
        %v2149 = vshll.u32 2131351028, %v2140
        %v2150 = vshrl.u32 2102212464, %v2141
        %v2151 = vor.u32 %v2149, %v2150
        %v2152 = vshll.u32 2102212464, %v2140
        %v2153 = vshrl.u32 920167782, %v2141
        %v2154 = vor.u32 %v2152, %v2153
        %v2155 = vshll.u32 920167782, %v2140
        %v2156 = vshrl.u32 1326507024, %v2141
        %v2157 = vor.u32 %v2155, %v2156
        %vm2158 = vcmp.lt.s32.totalorder %v2139, 1
        %vm2159 = vcmp.lt.s32.totalorder %v2139, 2
        %vm2160 = vcmp.lt.s32.totalorder %v2139, 3
        %vm2161 = vcmp.lt.s32.totalorder %v2139, 4
        %v2162 = vsel %vm2158, %v2142, %v2145
        %v2163 = vsel %vm2161, %v2151, 2102212464
        %v2164 = vsel %vm2160, %v2148, %v2163
        %v2165 = vsel %vm2159, %v2162, %v2164
        %v2166 = vsel %vm2158, %v2145, %v2148
        %v2167 = vsel %vm2161, %v2154, 920167782
        %v2168 = vsel %vm2160, %v2151, %v2167
        %v2169 = vsel %vm2159, %v2166, %v2168
        %v2170 = vsel %vm2158, %v2148, %v2151
        %v2171 = vsel %vm2161, %v2157, 1326507024
        %v2172 = vsel %vm2160, %v2154, %v2171
        %v2173 = vsel %vm2159, %v2170, %v2172
        %v2174 = vshll.u32 %v2134, 8
        %v2175 = vmul.u32.u64.compose %v2174, %v2173
        %v2176 = vextract.low.u32 %v2175
        %v2177 = vextract.high.u32 %v2175
        %v2178 = vmul.u32.u64.compose %v2174, %v2169
        %v2179 = vextract.low.u32 %v2178
        %v2180 = vextract.high.u32 %v2178
        %v2181 = vmul.u32 %v2174, %v2165
        %v2182 = vadd.s32 %v2177, %v2179
        %vm2183 = vc.u32 %v2177, %v2179
        %v2184 = vadd.s32 %v2180, 1
        %v2185 = vsel %vm2183, %v2184, %v2180
        %v2186 = vadd.s32 %v2181, %v2185
        %v2187 = vadd.s32 %v2186, 536870912
        %v2188 = vshrl.u32 %v2187, 30
        %v2189 = vshll.u32 %v2188, 30
        %v2190 = vsub.s32 %v2186, %v2189
        %vm2191 = vcmp.lt.s32.totalorder %v2190, 0
        %v2192 = vsub.s32 0, %v2190
        %v2193 = vsel %vm2191, %v2192, %v2190
        %v2194 = vclz %v2193
        %v2195 = vsub.s32 %v2194, 2
        %vm2196 = vcmp.gt.s32.totalorder 0, %v2195
        %v2197 = vsel %vm2196, 0, %v2195
        %v2198 = vsub.s32 32, %v2197
        %v2199 = vshll.u32 %v2190, %v2197
        %v2200 = vshrl.u32 %v2182, %v2198
        %v2201 = vor.u32 %v2199, %v2200
        %v2202 = vsub.s32 4294967266, %v2197
        %v2203 = vadd.s32 %v2202, 127
        %v2204 = vshll.u32 %v2203, 23
        %v2205 = vor.u32 4788187, %v2204
        %v2206 = vand.u32 2147483647, %v2205
        %v2208 = vcvt.s32.f32 %v2201
        %v2209 = vmul.f32 %v2208, %v2206
        %v2210 = vxor.u32 %v2209, 2147483648
        %v2211 = vsel %vm2128, %v2210, %v2209
        %v2212 = vsub.s32 4, %v2188
        %v2213 = vsel %vm2128, %v2212, %v2188
        %v2214 = vsel %vm2127, %v666, %v2211
        %v2215 = vsel %vm2127, 0, %v2213
        %v2216 = vcosq.f32.pop %v2214
        %v2217 = vsinq.f32.pop %v2214
        %vm2218 = vweird.f32 %v666
        %v2219 = vand.u32 %v2215, 3
        %vm2220 = vcmp.lt.s32.totalorder %v2219, 2
        %vm2221 = vcmp.eq.s32.totalorder %v2219, 0
        %v2222 = vxor.u32 %v2217, 2147483648
        %v2223 = vsel %vm2221, %v2216, %v2222
        %vm2224 = vcmp.eq.s32.totalorder %v2219, 2
        %v2225 = vxor.u32 %v2216, 2147483648
        %v2226 = vsel %vm2224, %v2225, %v2217
        %v2227 = vsel %vm2220, %v2223, %v2226
        %v2228 = vsel %vm2218, nan, %v2227
        %v2229 = vand.u32 2147483647, %v667
        %vm2230 = vcmp.le.f32.partialorder %v2229, 0.7853982
        %vm2231 = vcmp.lt.s32.totalorder %v667, 0
        %v2232 = vand.u32 %v667, 2139095040
        %v2233 = vshrl.u32 %v2232, 23
        %v2234 = vsub.s32 %v2233, 127
        %v2235 = vand.u32 2147483647, %v667
        %v2236 = vand.u32 %v2235, 8388607
        %v2237 = vor.u32 %v2236, 8388608
        %v2238 = vsub.s32 0, %v2237
        %v2239 = vadd.s32 %v2234, 1
        %vm2240 = vcmp.gt.s32.totalorder %v2239, 0
        %v2241 = vsel %vm2240, %v2239, 0
        %v2242 = vshrl.u32 %v2241, 5
        %v2243 = vand.u32 %v2241, 31
        %v2244 = vsub.s32 32, %v2243
        %v2245 = vshrl.u32 683565275, %v2244
        %v2246 = vshll.u32 683565275, %v2243
        %v2247 = vshrl.u32 2475754826, %v2244
        %v2248 = vor.u32 %v2246, %v2247
        %v2249 = vshll.u32 2475754826, %v2243
        %v2250 = vshrl.u32 2131351028, %v2244
        %v2251 = vor.u32 %v2249, %v2250
        %v2252 = vshll.u32 2131351028, %v2243
        %v2253 = vshrl.u32 2102212464, %v2244
        %v2254 = vor.u32 %v2252, %v2253
        %v2255 = vshll.u32 2102212464, %v2243
        %v2256 = vshrl.u32 920167782, %v2244
        %v2257 = vor.u32 %v2255, %v2256
        %v2258 = vshll.u32 920167782, %v2243
        %v2259 = vshrl.u32 1326507024, %v2244
        %v2260 = vor.u32 %v2258, %v2259
        %vm2261 = vcmp.lt.s32.totalorder %v2242, 1
        %vm2262 = vcmp.lt.s32.totalorder %v2242, 2
        %vm2263 = vcmp.lt.s32.totalorder %v2242, 3
        %vm2264 = vcmp.lt.s32.totalorder %v2242, 4
        %v2265 = vsel %vm2261, %v2245, %v2248
        %v2266 = vsel %vm2264, %v2254, 2102212464
        %v2267 = vsel %vm2263, %v2251, %v2266
        %v2268 = vsel %vm2262, %v2265, %v2267
        %v2269 = vsel %vm2261, %v2248, %v2251
        %v2270 = vsel %vm2264, %v2257, 920167782
        %v2271 = vsel %vm2263, %v2254, %v2270
        %v2272 = vsel %vm2262, %v2269, %v2271
        %v2273 = vsel %vm2261, %v2251, %v2254
        %v2274 = vsel %vm2264, %v2260, 1326507024
        %v2275 = vsel %vm2263, %v2257, %v2274
        %v2276 = vsel %vm2262, %v2273, %v2275
        %v2277 = vshll.u32 %v2237, 8
        %v2278 = vmul.u32.u64.compose %v2277, %v2276
        %v2279 = vextract.low.u32 %v2278
        %v2280 = vextract.high.u32 %v2278
        %v2281 = vmul.u32.u64.compose %v2277, %v2272
        %v2282 = vextract.low.u32 %v2281
        %v2283 = vextract.high.u32 %v2281
        %v2284 = vmul.u32 %v2277, %v2268
        %v2285 = vadd.s32 %v2280, %v2282
        %vm2286 = vc.u32 %v2280, %v2282
        %v2287 = vadd.s32 %v2283, 1
        %v2288 = vsel %vm2286, %v2287, %v2283
        %v2289 = vadd.s32 %v2284, %v2288
        %v2290 = vadd.s32 %v2289, 536870912
        %v2291 = vshrl.u32 %v2290, 30
        %v2292 = vshll.u32 %v2291, 30
        %v2293 = vsub.s32 %v2289, %v2292
        %vm2294 = vcmp.lt.s32.totalorder %v2293, 0
        %v2295 = vsub.s32 0, %v2293
        %v2296 = vsel %vm2294, %v2295, %v2293
        %v2297 = vclz %v2296
        %v2298 = vsub.s32 %v2297, 2
        %vm2299 = vcmp.gt.s32.totalorder 0, %v2298
        %v2300 = vsel %vm2299, 0, %v2298
        %v2301 = vsub.s32 32, %v2300
        %v2302 = vshll.u32 %v2293, %v2300
        %v2303 = vshrl.u32 %v2285, %v2301
        %v2304 = vor.u32 %v2302, %v2303
        %v2305 = vsub.s32 4294967266, %v2300
        %v2306 = vadd.s32 %v2305, 127
        %v2307 = vshll.u32 %v2306, 23
        %v2308 = vor.u32 4788187, %v2307
        %v2309 = vand.u32 2147483647, %v2308
        %v2311 = vcvt.s32.f32 %v2304
        %v2312 = vmul.f32 %v2311, %v2309
        %v2313 = vxor.u32 %v2312, 2147483648
        %v2314 = vsel %vm2231, %v2313, %v2312
        %v2315 = vsub.s32 4, %v2291
        %v2316 = vsel %vm2231, %v2315, %v2291
        %v2317 = vsel %vm2230, %v667, %v2314
        %v2318 = vsel %vm2230, 0, %v2316
        %v2319 = vcosq.f32.pop %v2317
        %v2320 = vsinq.f32.pop %v2317
        %vm2321 = vweird.f32 %v667
        %v2322 = vand.u32 %v2318, 3
        %vm2323 = vcmp.lt.s32.totalorder %v2322, 2
        %vm2324 = vcmp.eq.s32.totalorder %v2322, 0
        %v2325 = vxor.u32 %v2320, 2147483648
        %v2326 = vsel %vm2324, %v2319, %v2325
        %vm2327 = vcmp.eq.s32.totalorder %v2322, 2
        %v2328 = vxor.u32 %v2319, 2147483648
        %v2329 = vsel %vm2327, %v2328, %v2320
        %v2330 = vsel %vm2323, %v2326, %v2329
        %v2331 = vsel %vm2321, nan, %v2330
        %v2332 = vand.u32 2147483647, %v668
        %vm2333 = vcmp.le.f32.partialorder %v2332, 0.7853982
        %vm2334 = vcmp.lt.s32.totalorder %v668, 0
        %v2335 = vand.u32 %v668, 2139095040
        %v2336 = vshrl.u32 %v2335, 23
        %v2337 = vsub.s32 %v2336, 127
        %v2338 = vand.u32 2147483647, %v668
        %v2339 = vand.u32 %v2338, 8388607
        %v2340 = vor.u32 %v2339, 8388608
        %v2341 = vsub.s32 0, %v2340
        %v2342 = vadd.s32 %v2337, 1
        %vm2343 = vcmp.gt.s32.totalorder %v2342, 0
        %v2344 = vsel %vm2343, %v2342, 0
        %v2345 = vshrl.u32 %v2344, 5
        %v2346 = vand.u32 %v2344, 31
        %v2347 = vsub.s32 32, %v2346
        %v2348 = vshrl.u32 683565275, %v2347
        %v2349 = vshll.u32 683565275, %v2346
        %v2350 = vshrl.u32 2475754826, %v2347
        %v2351 = vor.u32 %v2349, %v2350
        %v2352 = vshll.u32 2475754826, %v2346
        %v2353 = vshrl.u32 2131351028, %v2347
        %v2354 = vor.u32 %v2352, %v2353
        %v2355 = vshll.u32 2131351028, %v2346
        %v2356 = vshrl.u32 2102212464, %v2347
        %v2357 = vor.u32 %v2355, %v2356
        %v2358 = vshll.u32 2102212464, %v2346
        %v2359 = vshrl.u32 920167782, %v2347
        %v2360 = vor.u32 %v2358, %v2359
        %v2361 = vshll.u32 920167782, %v2346
        %v2362 = vshrl.u32 1326507024, %v2347
        %v2363 = vor.u32 %v2361, %v2362
        %vm2364 = vcmp.lt.s32.totalorder %v2345, 1
        %vm2365 = vcmp.lt.s32.totalorder %v2345, 2
        %vm2366 = vcmp.lt.s32.totalorder %v2345, 3
        %vm2367 = vcmp.lt.s32.totalorder %v2345, 4
        %v2368 = vsel %vm2364, %v2348, %v2351
        %v2369 = vsel %vm2367, %v2357, 2102212464
        %v2370 = vsel %vm2366, %v2354, %v2369
        %v2371 = vsel %vm2365, %v2368, %v2370
        %v2372 = vsel %vm2364, %v2351, %v2354
        %v2373 = vsel %vm2367, %v2360, 920167782
        %v2374 = vsel %vm2366, %v2357, %v2373
        %v2375 = vsel %vm2365, %v2372, %v2374
        %v2376 = vsel %vm2364, %v2354, %v2357
        %v2377 = vsel %vm2367, %v2363, 1326507024
        %v2378 = vsel %vm2366, %v2360, %v2377
        %v2379 = vsel %vm2365, %v2376, %v2378
        %v2380 = vshll.u32 %v2340, 8
        %v2381 = vmul.u32.u64.compose %v2380, %v2379
        %v2382 = vextract.low.u32 %v2381
        %v2383 = vextract.high.u32 %v2381
        %v2384 = vmul.u32.u64.compose %v2380, %v2375
        %v2385 = vextract.low.u32 %v2384
        %v2386 = vextract.high.u32 %v2384
        %v2387 = vmul.u32 %v2380, %v2371
        %v2388 = vadd.s32 %v2383, %v2385
        %vm2389 = vc.u32 %v2383, %v2385
        %v2390 = vadd.s32 %v2386, 1
        %v2391 = vsel %vm2389, %v2390, %v2386
        %v2392 = vadd.s32 %v2387, %v2391
        %v2393 = vadd.s32 %v2392, 536870912
        %v2394 = vshrl.u32 %v2393, 30
        %v2395 = vshll.u32 %v2394, 30
        %v2396 = vsub.s32 %v2392, %v2395
        %vm2397 = vcmp.lt.s32.totalorder %v2396, 0
        %v2398 = vsub.s32 0, %v2396
        %v2399 = vsel %vm2397, %v2398, %v2396
        %v2400 = vclz %v2399
        %v2401 = vsub.s32 %v2400, 2
        %vm2402 = vcmp.gt.s32.totalorder 0, %v2401
        %v2403 = vsel %vm2402, 0, %v2401
        %v2404 = vsub.s32 32, %v2403
        %v2405 = vshll.u32 %v2396, %v2403
        %v2406 = vshrl.u32 %v2388, %v2404
        %v2407 = vor.u32 %v2405, %v2406
        %v2408 = vsub.s32 4294967266, %v2403
        %v2409 = vadd.s32 %v2408, 127
        %v2410 = vshll.u32 %v2409, 23
        %v2411 = vor.u32 4788187, %v2410
        %v2412 = vand.u32 2147483647, %v2411
        %v2414 = vcvt.s32.f32 %v2407
        %v2415 = vmul.f32 %v2414, %v2412
        %v2416 = vxor.u32 %v2415, 2147483648
        %v2417 = vsel %vm2334, %v2416, %v2415
        %v2418 = vsub.s32 4, %v2394
        %v2419 = vsel %vm2334, %v2418, %v2394
        %v2420 = vsel %vm2333, %v668, %v2417
        %v2421 = vsel %vm2333, 0, %v2419
        %v2422 = vcosq.f32.pop %v2420
        %v2423 = vsinq.f32.pop %v2420
        %vm2424 = vweird.f32 %v668
        %v2425 = vand.u32 %v2421, 3
        %vm2426 = vcmp.lt.s32.totalorder %v2425, 2
        %vm2427 = vcmp.eq.s32.totalorder %v2425, 0
        %v2428 = vxor.u32 %v2423, 2147483648
        %v2429 = vsel %vm2427, %v2422, %v2428
        %vm2430 = vcmp.eq.s32.totalorder %v2425, 2
        %v2431 = vxor.u32 %v2422, 2147483648
        %v2432 = vsel %vm2430, %v2431, %v2423
        %v2433 = vsel %vm2426, %v2429, %v2432
        %v2434 = vsel %vm2424, nan, %v2433
        %v2435 = vand.u32 2147483647, %v669
        %vm2436 = vcmp.le.f32.partialorder %v2435, 0.7853982
        %vm2437 = vcmp.lt.s32.totalorder %v669, 0
        %v2438 = vand.u32 %v669, 2139095040
        %v2439 = vshrl.u32 %v2438, 23
        %v2440 = vsub.s32 %v2439, 127
        %v2441 = vand.u32 2147483647, %v669
        %v2442 = vand.u32 %v2441, 8388607
        %v2443 = vor.u32 %v2442, 8388608
        %v2444 = vsub.s32 0, %v2443
        %v2445 = vadd.s32 %v2440, 1
        %vm2446 = vcmp.gt.s32.totalorder %v2445, 0
        %v2447 = vsel %vm2446, %v2445, 0
        %v2448 = vshrl.u32 %v2447, 5
        %v2449 = vand.u32 %v2447, 31
        %v2450 = vsub.s32 32, %v2449
        %v2451 = vshrl.u32 683565275, %v2450
        %v2452 = vshll.u32 683565275, %v2449
        %v2453 = vshrl.u32 2475754826, %v2450
        %v2454 = vor.u32 %v2452, %v2453
        %v2455 = vshll.u32 2475754826, %v2449
        %v2456 = vshrl.u32 2131351028, %v2450
        %v2457 = vor.u32 %v2455, %v2456
        %v2458 = vshll.u32 2131351028, %v2449
        %v2459 = vshrl.u32 2102212464, %v2450
        %v2460 = vor.u32 %v2458, %v2459
        %v2461 = vshll.u32 2102212464, %v2449
        %v2462 = vshrl.u32 920167782, %v2450
        %v2463 = vor.u32 %v2461, %v2462
        %v2464 = vshll.u32 920167782, %v2449
        %v2465 = vshrl.u32 1326507024, %v2450
        %v2466 = vor.u32 %v2464, %v2465
        %vm2467 = vcmp.lt.s32.totalorder %v2448, 1
        %vm2468 = vcmp.lt.s32.totalorder %v2448, 2
        %vm2469 = vcmp.lt.s32.totalorder %v2448, 3
        %vm2470 = vcmp.lt.s32.totalorder %v2448, 4
        %v2471 = vsel %vm2467, %v2451, %v2454
        %v2472 = vsel %vm2470, %v2460, 2102212464
        %v2473 = vsel %vm2469, %v2457, %v2472
        %v2474 = vsel %vm2468, %v2471, %v2473
        %v2475 = vsel %vm2467, %v2454, %v2457
        %v2476 = vsel %vm2470, %v2463, 920167782
        %v2477 = vsel %vm2469, %v2460, %v2476
        %v2478 = vsel %vm2468, %v2475, %v2477
        %v2479 = vsel %vm2467, %v2457, %v2460
        %v2480 = vsel %vm2470, %v2466, 1326507024
        %v2481 = vsel %vm2469, %v2463, %v2480
        %v2482 = vsel %vm2468, %v2479, %v2481
        %v2483 = vshll.u32 %v2443, 8
        %v2484 = vmul.u32.u64.compose %v2483, %v2482
        %v2485 = vextract.low.u32 %v2484
        %v2486 = vextract.high.u32 %v2484
        %v2487 = vmul.u32.u64.compose %v2483, %v2478
        %v2488 = vextract.low.u32 %v2487
        %v2489 = vextract.high.u32 %v2487
        %v2490 = vmul.u32 %v2483, %v2474
        %v2491 = vadd.s32 %v2486, %v2488
        %vm2492 = vc.u32 %v2486, %v2488
        %v2493 = vadd.s32 %v2489, 1
        %v2494 = vsel %vm2492, %v2493, %v2489
        %v2495 = vadd.s32 %v2490, %v2494
        %v2496 = vadd.s32 %v2495, 536870912
        %v2497 = vshrl.u32 %v2496, 30
        %v2498 = vshll.u32 %v2497, 30
        %v2499 = vsub.s32 %v2495, %v2498
        %vm2500 = vcmp.lt.s32.totalorder %v2499, 0
        %v2501 = vsub.s32 0, %v2499
        %v2502 = vsel %vm2500, %v2501, %v2499
        %v2503 = vclz %v2502
        %v2504 = vsub.s32 %v2503, 2
        %vm2505 = vcmp.gt.s32.totalorder 0, %v2504
        %v2506 = vsel %vm2505, 0, %v2504
        %v2507 = vsub.s32 32, %v2506
        %v2508 = vshll.u32 %v2499, %v2506
        %v2509 = vshrl.u32 %v2491, %v2507
        %v2510 = vor.u32 %v2508, %v2509
        %v2511 = vsub.s32 4294967266, %v2506
        %v2512 = vadd.s32 %v2511, 127
        %v2513 = vshll.u32 %v2512, 23
        %v2514 = vor.u32 4788187, %v2513
        %v2515 = vand.u32 2147483647, %v2514
        %v2517 = vcvt.s32.f32 %v2510
        %v2518 = vmul.f32 %v2517, %v2515
        %v2519 = vxor.u32 %v2518, 2147483648
        %v2520 = vsel %vm2437, %v2519, %v2518
        %v2521 = vsub.s32 4, %v2497
        %v2522 = vsel %vm2437, %v2521, %v2497
        %v2523 = vsel %vm2436, %v669, %v2520
        %v2524 = vsel %vm2436, 0, %v2522
        %v2525 = vcosq.f32.pop %v2523
        %v2526 = vsinq.f32.pop %v2523
        %vm2527 = vweird.f32 %v669
        %v2528 = vand.u32 %v2524, 3
        %vm2529 = vcmp.lt.s32.totalorder %v2528, 2
        %vm2530 = vcmp.eq.s32.totalorder %v2528, 0
        %v2531 = vxor.u32 %v2526, 2147483648
        %v2532 = vsel %vm2530, %v2525, %v2531
        %vm2533 = vcmp.eq.s32.totalorder %v2528, 2
        %v2534 = vxor.u32 %v2525, 2147483648
        %v2535 = vsel %vm2533, %v2534, %v2526
        %v2536 = vsel %vm2529, %v2532, %v2535
        %v2537 = vsel %vm2527, nan, %v2536
        %v2538 = vand.u32 2147483647, %v670
        %vm2539 = vcmp.le.f32.partialorder %v2538, 0.7853982
        %vm2540 = vcmp.lt.s32.totalorder %v670, 0
        %v2541 = vand.u32 %v670, 2139095040
        %v2542 = vshrl.u32 %v2541, 23
        %v2543 = vsub.s32 %v2542, 127
        %v2544 = vand.u32 2147483647, %v670
        %v2545 = vand.u32 %v2544, 8388607
        %v2546 = vor.u32 %v2545, 8388608
        %v2547 = vsub.s32 0, %v2546
        %v2548 = vadd.s32 %v2543, 1
        %vm2549 = vcmp.gt.s32.totalorder %v2548, 0
        %v2550 = vsel %vm2549, %v2548, 0
        %v2551 = vshrl.u32 %v2550, 5
        %v2552 = vand.u32 %v2550, 31
        %v2553 = vsub.s32 32, %v2552
        %v2554 = vshrl.u32 683565275, %v2553
        %v2555 = vshll.u32 683565275, %v2552
        %v2556 = vshrl.u32 2475754826, %v2553
        %v2557 = vor.u32 %v2555, %v2556
        %v2558 = vshll.u32 2475754826, %v2552
        %v2559 = vshrl.u32 2131351028, %v2553
        %v2560 = vor.u32 %v2558, %v2559
        %v2561 = vshll.u32 2131351028, %v2552
        %v2562 = vshrl.u32 2102212464, %v2553
        %v2563 = vor.u32 %v2561, %v2562
        %v2564 = vshll.u32 2102212464, %v2552
        %v2565 = vshrl.u32 920167782, %v2553
        %v2566 = vor.u32 %v2564, %v2565
        %v2567 = vshll.u32 920167782, %v2552
        %v2568 = vshrl.u32 1326507024, %v2553
        %v2569 = vor.u32 %v2567, %v2568
        %vm2570 = vcmp.lt.s32.totalorder %v2551, 1
        %vm2571 = vcmp.lt.s32.totalorder %v2551, 2
        %vm2572 = vcmp.lt.s32.totalorder %v2551, 3
        %vm2573 = vcmp.lt.s32.totalorder %v2551, 4
        %v2574 = vsel %vm2570, %v2554, %v2557
        %v2575 = vsel %vm2573, %v2563, 2102212464
        %v2576 = vsel %vm2572, %v2560, %v2575
        %v2577 = vsel %vm2571, %v2574, %v2576
        %v2578 = vsel %vm2570, %v2557, %v2560
        %v2579 = vsel %vm2573, %v2566, 920167782
        %v2580 = vsel %vm2572, %v2563, %v2579
        %v2581 = vsel %vm2571, %v2578, %v2580
        %v2582 = vsel %vm2570, %v2560, %v2563
        %v2583 = vsel %vm2573, %v2569, 1326507024
        %v2584 = vsel %vm2572, %v2566, %v2583
        %v2585 = vsel %vm2571, %v2582, %v2584
        %v2586 = vshll.u32 %v2546, 8
        %v2587 = vmul.u32.u64.compose %v2586, %v2585
        %v2588 = vextract.low.u32 %v2587
        %v2589 = vextract.high.u32 %v2587
        %v2590 = vmul.u32.u64.compose %v2586, %v2581
        %v2591 = vextract.low.u32 %v2590
        %v2592 = vextract.high.u32 %v2590
        %v2593 = vmul.u32 %v2586, %v2577
        %v2594 = vadd.s32 %v2589, %v2591
        %vm2595 = vc.u32 %v2589, %v2591
        %v2596 = vadd.s32 %v2592, 1
        %v2597 = vsel %vm2595, %v2596, %v2592
        %v2598 = vadd.s32 %v2593, %v2597
        %v2599 = vadd.s32 %v2598, 536870912
        %v2600 = vshrl.u32 %v2599, 30
        %v2601 = vshll.u32 %v2600, 30
        %v2602 = vsub.s32 %v2598, %v2601
        %vm2603 = vcmp.lt.s32.totalorder %v2602, 0
        %v2604 = vsub.s32 0, %v2602
        %v2605 = vsel %vm2603, %v2604, %v2602
        %v2606 = vclz %v2605
        %v2607 = vsub.s32 %v2606, 2
        %vm2608 = vcmp.gt.s32.totalorder 0, %v2607
        %v2609 = vsel %vm2608, 0, %v2607
        %v2610 = vsub.s32 32, %v2609
        %v2611 = vshll.u32 %v2602, %v2609
        %v2612 = vshrl.u32 %v2594, %v2610
        %v2613 = vor.u32 %v2611, %v2612
        %v2614 = vsub.s32 4294967266, %v2609
        %v2615 = vadd.s32 %v2614, 127
        %v2616 = vshll.u32 %v2615, 23
        %v2617 = vor.u32 4788187, %v2616
        %v2618 = vand.u32 2147483647, %v2617
        %v2620 = vcvt.s32.f32 %v2613
        %v2621 = vmul.f32 %v2620, %v2618
        %v2622 = vxor.u32 %v2621, 2147483648
        %v2623 = vsel %vm2540, %v2622, %v2621
        %v2624 = vsub.s32 4, %v2600
        %v2625 = vsel %vm2540, %v2624, %v2600
        %v2626 = vsel %vm2539, %v670, %v2623
        %v2627 = vsel %vm2539, 0, %v2625
        %v2628 = vcosq.f32.pop %v2626
        %v2629 = vsinq.f32.pop %v2626
        %vm2630 = vweird.f32 %v670
        %v2631 = vand.u32 %v2627, 3
        %vm2632 = vcmp.lt.s32.totalorder %v2631, 2
        %vm2633 = vcmp.eq.s32.totalorder %v2631, 0
        %v2634 = vxor.u32 %v2629, 2147483648
        %v2635 = vsel %vm2633, %v2628, %v2634
        %vm2636 = vcmp.eq.s32.totalorder %v2631, 2
        %v2637 = vxor.u32 %v2628, 2147483648
        %v2638 = vsel %vm2636, %v2637, %v2629
        %v2639 = vsel %vm2632, %v2635, %v2638
        %v2640 = vsel %vm2630, nan, %v2639
        %v2641 = vand.u32 2147483647, %v671
        %vm2642 = vcmp.le.f32.partialorder %v2641, 0.7853982
        %vm2643 = vcmp.lt.s32.totalorder %v671, 0
        %v2644 = vand.u32 %v671, 2139095040
        %v2645 = vshrl.u32 %v2644, 23
        %v2646 = vsub.s32 %v2645, 127
        %v2647 = vand.u32 2147483647, %v671
        %v2648 = vand.u32 %v2647, 8388607
        %v2649 = vor.u32 %v2648, 8388608
        %v2650 = vsub.s32 0, %v2649
        %v2651 = vadd.s32 %v2646, 1
        %vm2652 = vcmp.gt.s32.totalorder %v2651, 0
        %v2653 = vsel %vm2652, %v2651, 0
        %v2654 = vshrl.u32 %v2653, 5
        %v2655 = vand.u32 %v2653, 31
        %v2656 = vsub.s32 32, %v2655
        %v2657 = vshrl.u32 683565275, %v2656
        %v2658 = vshll.u32 683565275, %v2655
        %v2659 = vshrl.u32 2475754826, %v2656
        %v2660 = vor.u32 %v2658, %v2659
        %v2661 = vshll.u32 2475754826, %v2655
        %v2662 = vshrl.u32 2131351028, %v2656
        %v2663 = vor.u32 %v2661, %v2662
        %v2664 = vshll.u32 2131351028, %v2655
        %v2665 = vshrl.u32 2102212464, %v2656
        %v2666 = vor.u32 %v2664, %v2665
        %v2667 = vshll.u32 2102212464, %v2655
        %v2668 = vshrl.u32 920167782, %v2656
        %v2669 = vor.u32 %v2667, %v2668
        %v2670 = vshll.u32 920167782, %v2655
        %v2671 = vshrl.u32 1326507024, %v2656
        %v2672 = vor.u32 %v2670, %v2671
        %vm2673 = vcmp.lt.s32.totalorder %v2654, 1
        %vm2674 = vcmp.lt.s32.totalorder %v2654, 2
        %vm2675 = vcmp.lt.s32.totalorder %v2654, 3
        %vm2676 = vcmp.lt.s32.totalorder %v2654, 4
        %v2677 = vsel %vm2673, %v2657, %v2660
        %v2678 = vsel %vm2676, %v2666, 2102212464
        %v2679 = vsel %vm2675, %v2663, %v2678
        %v2680 = vsel %vm2674, %v2677, %v2679
        %v2681 = vsel %vm2673, %v2660, %v2663
        %v2682 = vsel %vm2676, %v2669, 920167782
        %v2683 = vsel %vm2675, %v2666, %v2682
        %v2684 = vsel %vm2674, %v2681, %v2683
        %v2685 = vsel %vm2673, %v2663, %v2666
        %v2686 = vsel %vm2676, %v2672, 1326507024
        %v2687 = vsel %vm2675, %v2669, %v2686
        %v2688 = vsel %vm2674, %v2685, %v2687
        %v2689 = vshll.u32 %v2649, 8
        %v2690 = vmul.u32.u64.compose %v2689, %v2688
        %v2691 = vextract.low.u32 %v2690
        %v2692 = vextract.high.u32 %v2690
        %v2693 = vmul.u32.u64.compose %v2689, %v2684
        %v2694 = vextract.low.u32 %v2693
        %v2695 = vextract.high.u32 %v2693
        %v2696 = vmul.u32 %v2689, %v2680
        %v2697 = vadd.s32 %v2692, %v2694
        %vm2698 = vc.u32 %v2692, %v2694
        %v2699 = vadd.s32 %v2695, 1
        %v2700 = vsel %vm2698, %v2699, %v2695
        %v2701 = vadd.s32 %v2696, %v2700
        %v2702 = vadd.s32 %v2701, 536870912
        %v2703 = vshrl.u32 %v2702, 30
        %v2704 = vshll.u32 %v2703, 30
        %v2705 = vsub.s32 %v2701, %v2704
        %vm2706 = vcmp.lt.s32.totalorder %v2705, 0
        %v2707 = vsub.s32 0, %v2705
        %v2708 = vsel %vm2706, %v2707, %v2705
        %v2709 = vclz %v2708
        %v2710 = vsub.s32 %v2709, 2
        %vm2711 = vcmp.gt.s32.totalorder 0, %v2710
        %v2712 = vsel %vm2711, 0, %v2710
        %v2713 = vsub.s32 32, %v2712
        %v2714 = vshll.u32 %v2705, %v2712
        %v2715 = vshrl.u32 %v2697, %v2713
        %v2716 = vor.u32 %v2714, %v2715
        %v2717 = vsub.s32 4294967266, %v2712
        %v2718 = vadd.s32 %v2717, 127
        %v2719 = vshll.u32 %v2718, 23
        %v2720 = vor.u32 4788187, %v2719
        %v2721 = vand.u32 2147483647, %v2720
        %v2723 = vcvt.s32.f32 %v2716
        %v2724 = vmul.f32 %v2723, %v2721
        %v2725 = vxor.u32 %v2724, 2147483648
        %v2726 = vsel %vm2643, %v2725, %v2724
        %v2727 = vsub.s32 4, %v2703
        %v2728 = vsel %vm2643, %v2727, %v2703
        %v2729 = vsel %vm2642, %v671, %v2726
        %v2730 = vsel %vm2642, 0, %v2728
        %v2731 = vcosq.f32.pop %v2729
        %v2732 = vsinq.f32.pop %v2729
        %vm2733 = vweird.f32 %v671
        %v2734 = vand.u32 %v2730, 3
        %vm2735 = vcmp.lt.s32.totalorder %v2734, 2
        %vm2736 = vcmp.eq.s32.totalorder %v2734, 0
        %v2737 = vxor.u32 %v2732, 2147483648
        %v2738 = vsel %vm2736, %v2731, %v2737
        %vm2739 = vcmp.eq.s32.totalorder %v2734, 2
        %v2740 = vxor.u32 %v2731, 2147483648
        %v2741 = vsel %vm2739, %v2740, %v2732
        %v2742 = vsel %vm2735, %v2738, %v2741
        %v2743 = vsel %vm2733, nan, %v2742
        %v2744 = vand.u32 2147483647, %v672
        %vm2745 = vcmp.le.f32.partialorder %v2744, 0.7853982
        %vm2746 = vcmp.lt.s32.totalorder %v672, 0
        %v2747 = vand.u32 %v672, 2139095040
        %v2748 = vshrl.u32 %v2747, 23
        %v2749 = vsub.s32 %v2748, 127
        %v2750 = vand.u32 2147483647, %v672
        %v2751 = vand.u32 %v2750, 8388607
        %v2752 = vor.u32 %v2751, 8388608
        %v2753 = vsub.s32 0, %v2752
        %v2754 = vadd.s32 %v2749, 1
        %vm2755 = vcmp.gt.s32.totalorder %v2754, 0
        %v2756 = vsel %vm2755, %v2754, 0
        %v2757 = vshrl.u32 %v2756, 5
        %v2758 = vand.u32 %v2756, 31
        %v2759 = vsub.s32 32, %v2758
        %v2760 = vshrl.u32 683565275, %v2759
        %v2761 = vshll.u32 683565275, %v2758
        %v2762 = vshrl.u32 2475754826, %v2759
        %v2763 = vor.u32 %v2761, %v2762
        %v2764 = vshll.u32 2475754826, %v2758
        %v2765 = vshrl.u32 2131351028, %v2759
        %v2766 = vor.u32 %v2764, %v2765
        %v2767 = vshll.u32 2131351028, %v2758
        %v2768 = vshrl.u32 2102212464, %v2759
        %v2769 = vor.u32 %v2767, %v2768
        %v2770 = vshll.u32 2102212464, %v2758
        %v2771 = vshrl.u32 920167782, %v2759
        %v2772 = vor.u32 %v2770, %v2771
        %v2773 = vshll.u32 920167782, %v2758
        %v2774 = vshrl.u32 1326507024, %v2759
        %v2775 = vor.u32 %v2773, %v2774
        %vm2776 = vcmp.lt.s32.totalorder %v2757, 1
        %vm2777 = vcmp.lt.s32.totalorder %v2757, 2
        %vm2778 = vcmp.lt.s32.totalorder %v2757, 3
        %vm2779 = vcmp.lt.s32.totalorder %v2757, 4
        %v2780 = vsel %vm2776, %v2760, %v2763
        %v2781 = vsel %vm2779, %v2769, 2102212464
        %v2782 = vsel %vm2778, %v2766, %v2781
        %v2783 = vsel %vm2777, %v2780, %v2782
        %v2784 = vsel %vm2776, %v2763, %v2766
        %v2785 = vsel %vm2779, %v2772, 920167782
        %v2786 = vsel %vm2778, %v2769, %v2785
        %v2787 = vsel %vm2777, %v2784, %v2786
        %v2788 = vsel %vm2776, %v2766, %v2769
        %v2789 = vsel %vm2779, %v2775, 1326507024
        %v2790 = vsel %vm2778, %v2772, %v2789
        %v2791 = vsel %vm2777, %v2788, %v2790
        %v2792 = vshll.u32 %v2752, 8
        %v2793 = vmul.u32.u64.compose %v2792, %v2791
        %v2794 = vextract.low.u32 %v2793
        %v2795 = vextract.high.u32 %v2793
        %v2796 = vmul.u32.u64.compose %v2792, %v2787
        %v2797 = vextract.low.u32 %v2796
        %v2798 = vextract.high.u32 %v2796
        %v2799 = vmul.u32 %v2792, %v2783
        %v2800 = vadd.s32 %v2795, %v2797
        %vm2801 = vc.u32 %v2795, %v2797
        %v2802 = vadd.s32 %v2798, 1
        %v2803 = vsel %vm2801, %v2802, %v2798
        %v2804 = vadd.s32 %v2799, %v2803
        %v2805 = vadd.s32 %v2804, 536870912
        %v2806 = vshrl.u32 %v2805, 30
        %v2807 = vshll.u32 %v2806, 30
        %v2808 = vsub.s32 %v2804, %v2807
        %vm2809 = vcmp.lt.s32.totalorder %v2808, 0
        %v2810 = vsub.s32 0, %v2808
        %v2811 = vsel %vm2809, %v2810, %v2808
        %v2812 = vclz %v2811
        %v2813 = vsub.s32 %v2812, 2
        %vm2814 = vcmp.gt.s32.totalorder 0, %v2813
        %v2815 = vsel %vm2814, 0, %v2813
        %v2816 = vsub.s32 32, %v2815
        %v2817 = vshll.u32 %v2808, %v2815
        %v2818 = vshrl.u32 %v2800, %v2816
        %v2819 = vor.u32 %v2817, %v2818
        %v2820 = vsub.s32 4294967266, %v2815
        %v2821 = vadd.s32 %v2820, 127
        %v2822 = vshll.u32 %v2821, 23
        %v2823 = vor.u32 4788187, %v2822
        %v2824 = vand.u32 2147483647, %v2823
        %v2826 = vcvt.s32.f32 %v2819
        %v2827 = vmul.f32 %v2826, %v2824
        %v2828 = vxor.u32 %v2827, 2147483648
        %v2829 = vsel %vm2746, %v2828, %v2827
        %v2830 = vsub.s32 4, %v2806
        %v2831 = vsel %vm2746, %v2830, %v2806
        %v2832 = vsel %vm2745, %v672, %v2829
        %v2833 = vsel %vm2745, 0, %v2831
        %v2834 = vcosq.f32.pop %v2832
        %v2835 = vsinq.f32.pop %v2832
        %vm2836 = vweird.f32 %v672
        %v2837 = vand.u32 %v2833, 3
        %vm2838 = vcmp.lt.s32.totalorder %v2837, 2
        %vm2839 = vcmp.eq.s32.totalorder %v2837, 0
        %v2840 = vxor.u32 %v2835, 2147483648
        %v2841 = vsel %vm2839, %v2834, %v2840
        %vm2842 = vcmp.eq.s32.totalorder %v2837, 2
        %v2843 = vxor.u32 %v2834, 2147483648
        %v2844 = vsel %vm2842, %v2843, %v2835
        %v2845 = vsel %vm2838, %v2841, %v2844
        %v2846 = vsel %vm2836, nan, %v2845
        %v2847 = vand.u32 2147483647, %v673
        %vm2848 = vcmp.le.f32.partialorder %v2847, 0.7853982
        %vm2849 = vcmp.lt.s32.totalorder %v673, 0
        %v2850 = vand.u32 %v673, 2139095040
        %v2851 = vshrl.u32 %v2850, 23
        %v2852 = vsub.s32 %v2851, 127
        %v2853 = vand.u32 2147483647, %v673
        %v2854 = vand.u32 %v2853, 8388607
        %v2855 = vor.u32 %v2854, 8388608
        %v2856 = vsub.s32 0, %v2855
        %v2857 = vadd.s32 %v2852, 1
        %vm2858 = vcmp.gt.s32.totalorder %v2857, 0
        %v2859 = vsel %vm2858, %v2857, 0
        %v2860 = vshrl.u32 %v2859, 5
        %v2861 = vand.u32 %v2859, 31
        %v2862 = vsub.s32 32, %v2861
        %v2863 = vshrl.u32 683565275, %v2862
        %v2864 = vshll.u32 683565275, %v2861
        %v2865 = vshrl.u32 2475754826, %v2862
        %v2866 = vor.u32 %v2864, %v2865
        %v2867 = vshll.u32 2475754826, %v2861
        %v2868 = vshrl.u32 2131351028, %v2862
        %v2869 = vor.u32 %v2867, %v2868
        %v2870 = vshll.u32 2131351028, %v2861
        %v2871 = vshrl.u32 2102212464, %v2862
        %v2872 = vor.u32 %v2870, %v2871
        %v2873 = vshll.u32 2102212464, %v2861
        %v2874 = vshrl.u32 920167782, %v2862
        %v2875 = vor.u32 %v2873, %v2874
        %v2876 = vshll.u32 920167782, %v2861
        %v2877 = vshrl.u32 1326507024, %v2862
        %v2878 = vor.u32 %v2876, %v2877
        %vm2879 = vcmp.lt.s32.totalorder %v2860, 1
        %vm2880 = vcmp.lt.s32.totalorder %v2860, 2
        %vm2881 = vcmp.lt.s32.totalorder %v2860, 3
        %vm2882 = vcmp.lt.s32.totalorder %v2860, 4
        %v2883 = vsel %vm2879, %v2863, %v2866
        %v2884 = vsel %vm2882, %v2872, 2102212464
        %v2885 = vsel %vm2881, %v2869, %v2884
        %v2886 = vsel %vm2880, %v2883, %v2885
        %v2887 = vsel %vm2879, %v2866, %v2869
        %v2888 = vsel %vm2882, %v2875, 920167782
        %v2889 = vsel %vm2881, %v2872, %v2888
        %v2890 = vsel %vm2880, %v2887, %v2889
        %v2891 = vsel %vm2879, %v2869, %v2872
        %v2892 = vsel %vm2882, %v2878, 1326507024
        %v2893 = vsel %vm2881, %v2875, %v2892
        %v2894 = vsel %vm2880, %v2891, %v2893
        %v2895 = vshll.u32 %v2855, 8
        %v2896 = vmul.u32.u64.compose %v2895, %v2894
        %v2897 = vextract.low.u32 %v2896
        %v2898 = vextract.high.u32 %v2896
        %v2899 = vmul.u32.u64.compose %v2895, %v2890
        %v2900 = vextract.low.u32 %v2899
        %v2901 = vextract.high.u32 %v2899
        %v2902 = vmul.u32 %v2895, %v2886
        %v2903 = vadd.s32 %v2898, %v2900
        %vm2904 = vc.u32 %v2898, %v2900
        %v2905 = vadd.s32 %v2901, 1
        %v2906 = vsel %vm2904, %v2905, %v2901
        %v2907 = vadd.s32 %v2902, %v2906
        %v2908 = vadd.s32 %v2907, 536870912
        %v2909 = vshrl.u32 %v2908, 30
        %v2910 = vshll.u32 %v2909, 30
        %v2911 = vsub.s32 %v2907, %v2910
        %vm2912 = vcmp.lt.s32.totalorder %v2911, 0
        %v2913 = vsub.s32 0, %v2911
        %v2914 = vsel %vm2912, %v2913, %v2911
        %v2915 = vclz %v2914
        %v2916 = vsub.s32 %v2915, 2
        %vm2917 = vcmp.gt.s32.totalorder 0, %v2916
        %v2918 = vsel %vm2917, 0, %v2916
        %v2919 = vsub.s32 32, %v2918
        %v2920 = vshll.u32 %v2911, %v2918
        %v2921 = vshrl.u32 %v2903, %v2919
        %v2922 = vor.u32 %v2920, %v2921
        %v2923 = vsub.s32 4294967266, %v2918
        %v2924 = vadd.s32 %v2923, 127
        %v2925 = vshll.u32 %v2924, 23
        %v2926 = vor.u32 4788187, %v2925
        %v2927 = vand.u32 2147483647, %v2926
        %v2929 = vcvt.s32.f32 %v2922
        %v2930 = vmul.f32 %v2929, %v2927
        %v2931 = vxor.u32 %v2930, 2147483648
        %v2932 = vsel %vm2849, %v2931, %v2930
        %v2933 = vsub.s32 4, %v2909
        %v2934 = vsel %vm2849, %v2933, %v2909
        %v2935 = vsel %vm2848, %v673, %v2932
        %v2936 = vsel %vm2848, 0, %v2934
        %v2937 = vcosq.f32.pop %v2935
        %v2938 = vsinq.f32.pop %v2935
        %vm2939 = vweird.f32 %v673
        %v2940 = vand.u32 %v2936, 3
        %vm2941 = vcmp.lt.s32.totalorder %v2940, 2
        %vm2942 = vcmp.eq.s32.totalorder %v2940, 0
        %v2943 = vxor.u32 %v2938, 2147483648
        %v2944 = vsel %vm2942, %v2937, %v2943
        %vm2945 = vcmp.eq.s32.totalorder %v2940, 2
        %v2946 = vxor.u32 %v2937, 2147483648
        %v2947 = vsel %vm2945, %v2946, %v2938
        %v2948 = vsel %vm2941, %v2944, %v2947
        %v2949 = vsel %vm2939, nan, %v2948
        %v2950 = vand.u32 2147483647, %v674
        %vm2951 = vcmp.le.f32.partialorder %v2950, 0.7853982
        %vm2952 = vcmp.lt.s32.totalorder %v674, 0
        %v2953 = vand.u32 %v674, 2139095040
        %v2954 = vshrl.u32 %v2953, 23
        %v2955 = vsub.s32 %v2954, 127
        %v2956 = vand.u32 2147483647, %v674
        %v2957 = vand.u32 %v2956, 8388607
        %v2958 = vor.u32 %v2957, 8388608
        %v2959 = vsub.s32 0, %v2958
        %v2960 = vadd.s32 %v2955, 1
        %vm2961 = vcmp.gt.s32.totalorder %v2960, 0
        %v2962 = vsel %vm2961, %v2960, 0
        %v2963 = vshrl.u32 %v2962, 5
        %v2964 = vand.u32 %v2962, 31
        %v2965 = vsub.s32 32, %v2964
        %v2966 = vshrl.u32 683565275, %v2965
        %v2967 = vshll.u32 683565275, %v2964
        %v2968 = vshrl.u32 2475754826, %v2965
        %v2969 = vor.u32 %v2967, %v2968
        %v2970 = vshll.u32 2475754826, %v2964
        %v2971 = vshrl.u32 2131351028, %v2965
        %v2972 = vor.u32 %v2970, %v2971
        %v2973 = vshll.u32 2131351028, %v2964
        %v2974 = vshrl.u32 2102212464, %v2965
        %v2975 = vor.u32 %v2973, %v2974
        %v2976 = vshll.u32 2102212464, %v2964
        %v2977 = vshrl.u32 920167782, %v2965
        %v2978 = vor.u32 %v2976, %v2977
        %v2979 = vshll.u32 920167782, %v2964
        %v2980 = vshrl.u32 1326507024, %v2965
        %v2981 = vor.u32 %v2979, %v2980
        %vm2982 = vcmp.lt.s32.totalorder %v2963, 1
        %vm2983 = vcmp.lt.s32.totalorder %v2963, 2
        %vm2984 = vcmp.lt.s32.totalorder %v2963, 3
        %vm2985 = vcmp.lt.s32.totalorder %v2963, 4
        %v2986 = vsel %vm2982, %v2966, %v2969
        %v2987 = vsel %vm2985, %v2975, 2102212464
        %v2988 = vsel %vm2984, %v2972, %v2987
        %v2989 = vsel %vm2983, %v2986, %v2988
        %v2990 = vsel %vm2982, %v2969, %v2972
        %v2991 = vsel %vm2985, %v2978, 920167782
        %v2992 = vsel %vm2984, %v2975, %v2991
        %v2993 = vsel %vm2983, %v2990, %v2992
        %v2994 = vsel %vm2982, %v2972, %v2975
        %v2995 = vsel %vm2985, %v2981, 1326507024
        %v2996 = vsel %vm2984, %v2978, %v2995
        %v2997 = vsel %vm2983, %v2994, %v2996
        %v2998 = vshll.u32 %v2958, 8
        %v2999 = vmul.u32.u64.compose %v2998, %v2997
        %v3000 = vextract.low.u32 %v2999
        %v3001 = vextract.high.u32 %v2999
        %v3002 = vmul.u32.u64.compose %v2998, %v2993
        %v3003 = vextract.low.u32 %v3002
        %v3004 = vextract.high.u32 %v3002
        %v3005 = vmul.u32 %v2998, %v2989
        %v3006 = vadd.s32 %v3001, %v3003
        %vm3007 = vc.u32 %v3001, %v3003
        %v3008 = vadd.s32 %v3004, 1
        %v3009 = vsel %vm3007, %v3008, %v3004
        %v3010 = vadd.s32 %v3005, %v3009
        %v3011 = vadd.s32 %v3010, 536870912
        %v3012 = vshrl.u32 %v3011, 30
        %v3013 = vshll.u32 %v3012, 30
        %v3014 = vsub.s32 %v3010, %v3013
        %vm3015 = vcmp.lt.s32.totalorder %v3014, 0
        %v3016 = vsub.s32 0, %v3014
        %v3017 = vsel %vm3015, %v3016, %v3014
        %v3018 = vclz %v3017
        %v3019 = vsub.s32 %v3018, 2
        %vm3020 = vcmp.gt.s32.totalorder 0, %v3019
        %v3021 = vsel %vm3020, 0, %v3019
        %v3022 = vsub.s32 32, %v3021
        %v3023 = vshll.u32 %v3014, %v3021
        %v3024 = vshrl.u32 %v3006, %v3022
        %v3025 = vor.u32 %v3023, %v3024
        %v3026 = vsub.s32 4294967266, %v3021
        %v3027 = vadd.s32 %v3026, 127
        %v3028 = vshll.u32 %v3027, 23
        %v3029 = vor.u32 4788187, %v3028
        %v3030 = vand.u32 2147483647, %v3029
        %v3032 = vcvt.s32.f32 %v3025
        %v3033 = vmul.f32 %v3032, %v3030
        %v3034 = vxor.u32 %v3033, 2147483648
        %v3035 = vsel %vm2952, %v3034, %v3033
        %v3036 = vsub.s32 4, %v3012
        %v3037 = vsel %vm2952, %v3036, %v3012
        %v3038 = vsel %vm2951, %v674, %v3035
        %v3039 = vsel %vm2951, 0, %v3037
        %v3040 = vcosq.f32.pop %v3038
        %v3041 = vsinq.f32.pop %v3038
        %vm3042 = vweird.f32 %v674
        %v3043 = vand.u32 %v3039, 3
        %vm3044 = vcmp.lt.s32.totalorder %v3043, 2
        %vm3045 = vcmp.eq.s32.totalorder %v3043, 0
        %v3046 = vxor.u32 %v3041, 2147483648
        %v3047 = vsel %vm3045, %v3040, %v3046
        %vm3048 = vcmp.eq.s32.totalorder %v3043, 2
        %v3049 = vxor.u32 %v3040, 2147483648
        %v3050 = vsel %vm3048, %v3049, %v3041
        %v3051 = vsel %vm3044, %v3047, %v3050
        %v3052 = vsel %vm3042, nan, %v3051
        %v3053 = vand.u32 2147483647, %v675
        %vm3054 = vcmp.le.f32.partialorder %v3053, 0.7853982
        %vm3055 = vcmp.lt.s32.totalorder %v675, 0
        %v3056 = vand.u32 %v675, 2139095040
        %v3057 = vshrl.u32 %v3056, 23
        %v3058 = vsub.s32 %v3057, 127
        %v3059 = vand.u32 2147483647, %v675
        %v3060 = vand.u32 %v3059, 8388607
        %v3061 = vor.u32 %v3060, 8388608
        %v3062 = vsub.s32 0, %v3061
        %v3063 = vadd.s32 %v3058, 1
        %vm3064 = vcmp.gt.s32.totalorder %v3063, 0
        %v3065 = vsel %vm3064, %v3063, 0
        %v3066 = vshrl.u32 %v3065, 5
        %v3067 = vand.u32 %v3065, 31
        %v3068 = vsub.s32 32, %v3067
        %v3069 = vshrl.u32 683565275, %v3068
        %v3070 = vshll.u32 683565275, %v3067
        %v3071 = vshrl.u32 2475754826, %v3068
        %v3072 = vor.u32 %v3070, %v3071
        %v3073 = vshll.u32 2475754826, %v3067
        %v3074 = vshrl.u32 2131351028, %v3068
        %v3075 = vor.u32 %v3073, %v3074
        %v3076 = vshll.u32 2131351028, %v3067
        %v3077 = vshrl.u32 2102212464, %v3068
        %v3078 = vor.u32 %v3076, %v3077
        %v3079 = vshll.u32 2102212464, %v3067
        %v3080 = vshrl.u32 920167782, %v3068
        %v3081 = vor.u32 %v3079, %v3080
        %v3082 = vshll.u32 920167782, %v3067
        %v3083 = vshrl.u32 1326507024, %v3068
        %v3084 = vor.u32 %v3082, %v3083
        %vm3085 = vcmp.lt.s32.totalorder %v3066, 1
        %vm3086 = vcmp.lt.s32.totalorder %v3066, 2
        %vm3087 = vcmp.lt.s32.totalorder %v3066, 3
        %vm3088 = vcmp.lt.s32.totalorder %v3066, 4
        %v3089 = vsel %vm3085, %v3069, %v3072
        %v3090 = vsel %vm3088, %v3078, 2102212464
        %v3091 = vsel %vm3087, %v3075, %v3090
        %v3092 = vsel %vm3086, %v3089, %v3091
        %v3093 = vsel %vm3085, %v3072, %v3075
        %v3094 = vsel %vm3088, %v3081, 920167782
        %v3095 = vsel %vm3087, %v3078, %v3094
        %v3096 = vsel %vm3086, %v3093, %v3095
        %v3097 = vsel %vm3085, %v3075, %v3078
        %v3098 = vsel %vm3088, %v3084, 1326507024
        %v3099 = vsel %vm3087, %v3081, %v3098
        %v3100 = vsel %vm3086, %v3097, %v3099
        %v3101 = vshll.u32 %v3061, 8
        %v3102 = vmul.u32.u64.compose %v3101, %v3100
        %v3103 = vextract.low.u32 %v3102
        %v3104 = vextract.high.u32 %v3102
        %v3105 = vmul.u32.u64.compose %v3101, %v3096
        %v3106 = vextract.low.u32 %v3105
        %v3107 = vextract.high.u32 %v3105
        %v3108 = vmul.u32 %v3101, %v3092
        %v3109 = vadd.s32 %v3104, %v3106
        %vm3110 = vc.u32 %v3104, %v3106
        %v3111 = vadd.s32 %v3107, 1
        %v3112 = vsel %vm3110, %v3111, %v3107
        %v3113 = vadd.s32 %v3108, %v3112
        %v3114 = vadd.s32 %v3113, 536870912
        %v3115 = vshrl.u32 %v3114, 30
        %v3116 = vshll.u32 %v3115, 30
        %v3117 = vsub.s32 %v3113, %v3116
        %vm3118 = vcmp.lt.s32.totalorder %v3117, 0
        %v3119 = vsub.s32 0, %v3117
        %v3120 = vsel %vm3118, %v3119, %v3117
        %v3121 = vclz %v3120
        %v3122 = vsub.s32 %v3121, 2
        %vm3123 = vcmp.gt.s32.totalorder 0, %v3122
        %v3124 = vsel %vm3123, 0, %v3122
        %v3125 = vsub.s32 32, %v3124
        %v3126 = vshll.u32 %v3117, %v3124
        %v3127 = vshrl.u32 %v3109, %v3125
        %v3128 = vor.u32 %v3126, %v3127
        %v3129 = vsub.s32 4294967266, %v3124
        %v3130 = vadd.s32 %v3129, 127
        %v3131 = vshll.u32 %v3130, 23
        %v3132 = vor.u32 4788187, %v3131
        %v3133 = vand.u32 2147483647, %v3132
        %v3135 = vcvt.s32.f32 %v3128
        %v3136 = vmul.f32 %v3135, %v3133
        %v3137 = vxor.u32 %v3136, 2147483648
        %v3138 = vsel %vm3055, %v3137, %v3136
        %v3139 = vsub.s32 4, %v3115
        %v3140 = vsel %vm3055, %v3139, %v3115
        %v3141 = vsel %vm3054, %v675, %v3138
        %v3142 = vsel %vm3054, 0, %v3140
        %v3143 = vcosq.f32.pop %v3141
        %v3144 = vsinq.f32.pop %v3141
        %vm3145 = vweird.f32 %v675
        %v3146 = vand.u32 %v3142, 3
        %vm3147 = vcmp.lt.s32.totalorder %v3146, 2
        %vm3148 = vcmp.eq.s32.totalorder %v3146, 0
        %v3149 = vxor.u32 %v3144, 2147483648
        %v3150 = vsel %vm3148, %v3143, %v3149
        %vm3151 = vcmp.eq.s32.totalorder %v3146, 2
        %v3152 = vxor.u32 %v3143, 2147483648
        %v3153 = vsel %vm3151, %v3152, %v3144
        %v3154 = vsel %vm3147, %v3150, %v3153
        %v3155 = vsel %vm3145, nan, %v3154
        %v3156 = vand.u32 2147483647, %v676
        %vm3157 = vcmp.le.f32.partialorder %v3156, 0.7853982
        %vm3158 = vcmp.lt.s32.totalorder %v676, 0
        %v3159 = vand.u32 %v676, 2139095040
        %v3160 = vshrl.u32 %v3159, 23
        %v3161 = vsub.s32 %v3160, 127
        %v3162 = vand.u32 2147483647, %v676
        %v3163 = vand.u32 %v3162, 8388607
        %v3164 = vor.u32 %v3163, 8388608
        %v3165 = vsub.s32 0, %v3164
        %v3166 = vadd.s32 %v3161, 1
        %vm3167 = vcmp.gt.s32.totalorder %v3166, 0
        %v3168 = vsel %vm3167, %v3166, 0
        %v3169 = vshrl.u32 %v3168, 5
        %v3170 = vand.u32 %v3168, 31
        %v3171 = vsub.s32 32, %v3170
        %v3172 = vshrl.u32 683565275, %v3171
        %v3173 = vshll.u32 683565275, %v3170
        %v3174 = vshrl.u32 2475754826, %v3171
        %v3175 = vor.u32 %v3173, %v3174
        %v3176 = vshll.u32 2475754826, %v3170
        %v3177 = vshrl.u32 2131351028, %v3171
        %v3178 = vor.u32 %v3176, %v3177
        %v3179 = vshll.u32 2131351028, %v3170
        %v3180 = vshrl.u32 2102212464, %v3171
        %v3181 = vor.u32 %v3179, %v3180
        %v3182 = vshll.u32 2102212464, %v3170
        %v3183 = vshrl.u32 920167782, %v3171
        %v3184 = vor.u32 %v3182, %v3183
        %v3185 = vshll.u32 920167782, %v3170
        %v3186 = vshrl.u32 1326507024, %v3171
        %v3187 = vor.u32 %v3185, %v3186
        %vm3188 = vcmp.lt.s32.totalorder %v3169, 1
        %vm3189 = vcmp.lt.s32.totalorder %v3169, 2
        %vm3190 = vcmp.lt.s32.totalorder %v3169, 3
        %vm3191 = vcmp.lt.s32.totalorder %v3169, 4
        %v3192 = vsel %vm3188, %v3172, %v3175
        %v3193 = vsel %vm3191, %v3181, 2102212464
        %v3194 = vsel %vm3190, %v3178, %v3193
        %v3195 = vsel %vm3189, %v3192, %v3194
        %v3196 = vsel %vm3188, %v3175, %v3178
        %v3197 = vsel %vm3191, %v3184, 920167782
        %v3198 = vsel %vm3190, %v3181, %v3197
        %v3199 = vsel %vm3189, %v3196, %v3198
        %v3200 = vsel %vm3188, %v3178, %v3181
        %v3201 = vsel %vm3191, %v3187, 1326507024
        %v3202 = vsel %vm3190, %v3184, %v3201
        %v3203 = vsel %vm3189, %v3200, %v3202
        %v3204 = vshll.u32 %v3164, 8
        %v3205 = vmul.u32.u64.compose %v3204, %v3203
        %v3206 = vextract.low.u32 %v3205
        %v3207 = vextract.high.u32 %v3205
        %v3208 = vmul.u32.u64.compose %v3204, %v3199
        %v3209 = vextract.low.u32 %v3208
        %v3210 = vextract.high.u32 %v3208
        %v3211 = vmul.u32 %v3204, %v3195
        %v3212 = vadd.s32 %v3207, %v3209
        %vm3213 = vc.u32 %v3207, %v3209
        %v3214 = vadd.s32 %v3210, 1
        %v3215 = vsel %vm3213, %v3214, %v3210
        %v3216 = vadd.s32 %v3211, %v3215
        %v3217 = vadd.s32 %v3216, 536870912
        %v3218 = vshrl.u32 %v3217, 30
        %v3219 = vshll.u32 %v3218, 30
        %v3220 = vsub.s32 %v3216, %v3219
        %vm3221 = vcmp.lt.s32.totalorder %v3220, 0
        %v3222 = vsub.s32 0, %v3220
        %v3223 = vsel %vm3221, %v3222, %v3220
        %v3224 = vclz %v3223
        %v3225 = vsub.s32 %v3224, 2
        %vm3226 = vcmp.gt.s32.totalorder 0, %v3225
        %v3227 = vsel %vm3226, 0, %v3225
        %v3228 = vsub.s32 32, %v3227
        %v3229 = vshll.u32 %v3220, %v3227
        %v3230 = vshrl.u32 %v3212, %v3228
        %v3231 = vor.u32 %v3229, %v3230
        %v3232 = vsub.s32 4294967266, %v3227
        %v3233 = vadd.s32 %v3232, 127
        %v3234 = vshll.u32 %v3233, 23
        %v3235 = vor.u32 4788187, %v3234
        %v3236 = vand.u32 2147483647, %v3235
        %v3238 = vcvt.s32.f32 %v3231
        %v3239 = vmul.f32 %v3238, %v3236
        %v3240 = vxor.u32 %v3239, 2147483648
        %v3241 = vsel %vm3158, %v3240, %v3239
        %v3242 = vsub.s32 4, %v3218
        %v3243 = vsel %vm3158, %v3242, %v3218
        %v3244 = vsel %vm3157, %v676, %v3241
        %v3245 = vsel %vm3157, 0, %v3243
        %v3246 = vcosq.f32.pop %v3244
        %v3247 = vsinq.f32.pop %v3244
        %vm3248 = vweird.f32 %v676
        %v3249 = vand.u32 %v3245, 3
        %vm3250 = vcmp.lt.s32.totalorder %v3249, 2
        %vm3251 = vcmp.eq.s32.totalorder %v3249, 0
        %v3252 = vxor.u32 %v3247, 2147483648
        %v3253 = vsel %vm3251, %v3246, %v3252
        %vm3254 = vcmp.eq.s32.totalorder %v3249, 2
        %v3255 = vxor.u32 %v3246, 2147483648
        %v3256 = vsel %vm3254, %v3255, %v3247
        %v3257 = vsel %vm3250, %v3253, %v3256
        %v3258 = vsel %vm3248, nan, %v3257
        %v3259 = vand.u32 2147483647, %v677
        %vm3260 = vcmp.le.f32.partialorder %v3259, 0.7853982
        %vm3261 = vcmp.lt.s32.totalorder %v677, 0
        %v3262 = vand.u32 %v677, 2139095040
        %v3263 = vshrl.u32 %v3262, 23
        %v3264 = vsub.s32 %v3263, 127
        %v3265 = vand.u32 2147483647, %v677
        %v3266 = vand.u32 %v3265, 8388607
        %v3267 = vor.u32 %v3266, 8388608
        %v3268 = vsub.s32 0, %v3267
        %v3269 = vadd.s32 %v3264, 1
        %vm3270 = vcmp.gt.s32.totalorder %v3269, 0
        %v3271 = vsel %vm3270, %v3269, 0
        %v3272 = vshrl.u32 %v3271, 5
        %v3273 = vand.u32 %v3271, 31
        %v3274 = vsub.s32 32, %v3273
        %v3275 = vshrl.u32 683565275, %v3274
        %v3276 = vshll.u32 683565275, %v3273
        %v3277 = vshrl.u32 2475754826, %v3274
        %v3278 = vor.u32 %v3276, %v3277
        %v3279 = vshll.u32 2475754826, %v3273
        %v3280 = vshrl.u32 2131351028, %v3274
        %v3281 = vor.u32 %v3279, %v3280
        %v3282 = vshll.u32 2131351028, %v3273
        %v3283 = vshrl.u32 2102212464, %v3274
        %v3284 = vor.u32 %v3282, %v3283
        %v3285 = vshll.u32 2102212464, %v3273
        %v3286 = vshrl.u32 920167782, %v3274
        %v3287 = vor.u32 %v3285, %v3286
        %v3288 = vshll.u32 920167782, %v3273
        %v3289 = vshrl.u32 1326507024, %v3274
        %v3290 = vor.u32 %v3288, %v3289
        %vm3291 = vcmp.lt.s32.totalorder %v3272, 1
        %vm3292 = vcmp.lt.s32.totalorder %v3272, 2
        %vm3293 = vcmp.lt.s32.totalorder %v3272, 3
        %vm3294 = vcmp.lt.s32.totalorder %v3272, 4
        %v3295 = vsel %vm3291, %v3275, %v3278
        %v3296 = vsel %vm3294, %v3284, 2102212464
        %v3297 = vsel %vm3293, %v3281, %v3296
        %v3298 = vsel %vm3292, %v3295, %v3297
        %v3299 = vsel %vm3291, %v3278, %v3281
        %v3300 = vsel %vm3294, %v3287, 920167782
        %v3301 = vsel %vm3293, %v3284, %v3300
        %v3302 = vsel %vm3292, %v3299, %v3301
        %v3303 = vsel %vm3291, %v3281, %v3284
        %v3304 = vsel %vm3294, %v3290, 1326507024
        %v3305 = vsel %vm3293, %v3287, %v3304
        %v3306 = vsel %vm3292, %v3303, %v3305
        %v3307 = vshll.u32 %v3267, 8
        %v3308 = vmul.u32.u64.compose %v3307, %v3306
        %v3309 = vextract.low.u32 %v3308
        %v3310 = vextract.high.u32 %v3308
        %v3311 = vmul.u32.u64.compose %v3307, %v3302
        %v3312 = vextract.low.u32 %v3311
        %v3313 = vextract.high.u32 %v3311
        %v3314 = vmul.u32 %v3307, %v3298
        %v3315 = vadd.s32 %v3310, %v3312
        %vm3316 = vc.u32 %v3310, %v3312
        %v3317 = vadd.s32 %v3313, 1
        %v3318 = vsel %vm3316, %v3317, %v3313
        %v3319 = vadd.s32 %v3314, %v3318
        %v3320 = vadd.s32 %v3319, 536870912
        %v3321 = vshrl.u32 %v3320, 30
        %v3322 = vshll.u32 %v3321, 30
        %v3323 = vsub.s32 %v3319, %v3322
        %vm3324 = vcmp.lt.s32.totalorder %v3323, 0
        %v3325 = vsub.s32 0, %v3323
        %v3326 = vsel %vm3324, %v3325, %v3323
        %v3327 = vclz %v3326
        %v3328 = vsub.s32 %v3327, 2
        %vm3329 = vcmp.gt.s32.totalorder 0, %v3328
        %v3330 = vsel %vm3329, 0, %v3328
        %v3331 = vsub.s32 32, %v3330
        %v3332 = vshll.u32 %v3323, %v3330
        %v3333 = vshrl.u32 %v3315, %v3331
        %v3334 = vor.u32 %v3332, %v3333
        %v3335 = vsub.s32 4294967266, %v3330
        %v3336 = vadd.s32 %v3335, 127
        %v3337 = vshll.u32 %v3336, 23
        %v3338 = vor.u32 4788187, %v3337
        %v3339 = vand.u32 2147483647, %v3338
        %v3341 = vcvt.s32.f32 %v3334
        %v3342 = vmul.f32 %v3341, %v3339
        %v3343 = vxor.u32 %v3342, 2147483648
        %v3344 = vsel %vm3261, %v3343, %v3342
        %v3345 = vsub.s32 4, %v3321
        %v3346 = vsel %vm3261, %v3345, %v3321
        %v3347 = vsel %vm3260, %v677, %v3344
        %v3348 = vsel %vm3260, 0, %v3346
        %v3349 = vcosq.f32.pop %v3347
        %v3350 = vsinq.f32.pop %v3347
        %vm3351 = vweird.f32 %v677
        %v3352 = vand.u32 %v3348, 3
        %vm3353 = vcmp.lt.s32.totalorder %v3352, 2
        %vm3354 = vcmp.eq.s32.totalorder %v3352, 0
        %v3355 = vxor.u32 %v3350, 2147483648
        %v3356 = vsel %vm3354, %v3349, %v3355
        %vm3357 = vcmp.eq.s32.totalorder %v3352, 2
        %v3358 = vxor.u32 %v3349, 2147483648
        %v3359 = vsel %vm3357, %v3358, %v3350
        %v3360 = vsel %vm3353, %v3356, %v3359
        %v3361 = vsel %vm3351, nan, %v3360
        %v3362 = vand.u32 2147483647, %v678
        %vm3363 = vcmp.le.f32.partialorder %v3362, 0.7853982
        %vm3364 = vcmp.lt.s32.totalorder %v678, 0
        %v3365 = vand.u32 %v678, 2139095040
        %v3366 = vshrl.u32 %v3365, 23
        %v3367 = vsub.s32 %v3366, 127
        %v3368 = vand.u32 2147483647, %v678
        %v3369 = vand.u32 %v3368, 8388607
        %v3370 = vor.u32 %v3369, 8388608
        %v3371 = vsub.s32 0, %v3370
        %v3372 = vadd.s32 %v3367, 1
        %vm3373 = vcmp.gt.s32.totalorder %v3372, 0
        %v3374 = vsel %vm3373, %v3372, 0
        %v3375 = vshrl.u32 %v3374, 5
        %v3376 = vand.u32 %v3374, 31
        %v3377 = vsub.s32 32, %v3376
        %v3378 = vshrl.u32 683565275, %v3377
        %v3379 = vshll.u32 683565275, %v3376
        %v3380 = vshrl.u32 2475754826, %v3377
        %v3381 = vor.u32 %v3379, %v3380
        %v3382 = vshll.u32 2475754826, %v3376
        %v3383 = vshrl.u32 2131351028, %v3377
        %v3384 = vor.u32 %v3382, %v3383
        %v3385 = vshll.u32 2131351028, %v3376
        %v3386 = vshrl.u32 2102212464, %v3377
        %v3387 = vor.u32 %v3385, %v3386
        %v3388 = vshll.u32 2102212464, %v3376
        %v3389 = vshrl.u32 920167782, %v3377
        %v3390 = vor.u32 %v3388, %v3389
        %v3391 = vshll.u32 920167782, %v3376
        %v3392 = vshrl.u32 1326507024, %v3377
        %v3393 = vor.u32 %v3391, %v3392
        %vm3394 = vcmp.lt.s32.totalorder %v3375, 1
        %vm3395 = vcmp.lt.s32.totalorder %v3375, 2
        %vm3396 = vcmp.lt.s32.totalorder %v3375, 3
        %vm3397 = vcmp.lt.s32.totalorder %v3375, 4
        %v3398 = vsel %vm3394, %v3378, %v3381
        %v3399 = vsel %vm3397, %v3387, 2102212464
        %v3400 = vsel %vm3396, %v3384, %v3399
        %v3401 = vsel %vm3395, %v3398, %v3400
        %v3402 = vsel %vm3394, %v3381, %v3384
        %v3403 = vsel %vm3397, %v3390, 920167782
        %v3404 = vsel %vm3396, %v3387, %v3403
        %v3405 = vsel %vm3395, %v3402, %v3404
        %v3406 = vsel %vm3394, %v3384, %v3387
        %v3407 = vsel %vm3397, %v3393, 1326507024
        %v3408 = vsel %vm3396, %v3390, %v3407
        %v3409 = vsel %vm3395, %v3406, %v3408
        %v3410 = vshll.u32 %v3370, 8
        %v3411 = vmul.u32.u64.compose %v3410, %v3409
        %v3412 = vextract.low.u32 %v3411
        %v3413 = vextract.high.u32 %v3411
        %v3414 = vmul.u32.u64.compose %v3410, %v3405
        %v3415 = vextract.low.u32 %v3414
        %v3416 = vextract.high.u32 %v3414
        %v3417 = vmul.u32 %v3410, %v3401
        %v3418 = vadd.s32 %v3413, %v3415
        %vm3419 = vc.u32 %v3413, %v3415
        %v3420 = vadd.s32 %v3416, 1
        %v3421 = vsel %vm3419, %v3420, %v3416
        %v3422 = vadd.s32 %v3417, %v3421
        %v3423 = vadd.s32 %v3422, 536870912
        %v3424 = vshrl.u32 %v3423, 30
        %v3425 = vshll.u32 %v3424, 30
        %v3426 = vsub.s32 %v3422, %v3425
        %vm3427 = vcmp.lt.s32.totalorder %v3426, 0
        %v3428 = vsub.s32 0, %v3426
        %v3429 = vsel %vm3427, %v3428, %v3426
        %v3430 = vclz %v3429
        %v3431 = vsub.s32 %v3430, 2
        %vm3432 = vcmp.gt.s32.totalorder 0, %v3431
        %v3433 = vsel %vm3432, 0, %v3431
        %v3434 = vsub.s32 32, %v3433
        %v3435 = vshll.u32 %v3426, %v3433
        %v3436 = vshrl.u32 %v3418, %v3434
        %v3437 = vor.u32 %v3435, %v3436
        %v3438 = vsub.s32 4294967266, %v3433
        %v3439 = vadd.s32 %v3438, 127
        %v3440 = vshll.u32 %v3439, 23
        %v3441 = vor.u32 4788187, %v3440
        %v3442 = vand.u32 2147483647, %v3441
        %v3444 = vcvt.s32.f32 %v3437
        %v3445 = vmul.f32 %v3444, %v3442
        %v3446 = vxor.u32 %v3445, 2147483648
        %v3447 = vsel %vm3364, %v3446, %v3445
        %v3448 = vsub.s32 4, %v3424
        %v3449 = vsel %vm3364, %v3448, %v3424
        %v3450 = vsel %vm3363, %v678, %v3447
        %v3451 = vsel %vm3363, 0, %v3449
        %v3452 = vcosq.f32.pop %v3450
        %v3453 = vsinq.f32.pop %v3450
        %vm3454 = vweird.f32 %v678
        %v3455 = vand.u32 %v3451, 3
        %vm3456 = vcmp.lt.s32.totalorder %v3455, 2
        %vm3457 = vcmp.eq.s32.totalorder %v3455, 0
        %v3458 = vxor.u32 %v3453, 2147483648
        %v3459 = vsel %vm3457, %v3452, %v3458
        %vm3460 = vcmp.eq.s32.totalorder %v3455, 2
        %v3461 = vxor.u32 %v3452, 2147483648
        %v3462 = vsel %vm3460, %v3461, %v3453
        %v3463 = vsel %vm3456, %v3459, %v3462
        %v3464 = vsel %vm3454, nan, %v3463
        %v3465 = vand.u32 2147483647, %v679
        %vm3466 = vcmp.le.f32.partialorder %v3465, 0.7853982
        %vm3467 = vcmp.lt.s32.totalorder %v679, 0
        %v3468 = vand.u32 %v679, 2139095040
        %v3469 = vshrl.u32 %v3468, 23
        %v3470 = vsub.s32 %v3469, 127
        %v3471 = vand.u32 2147483647, %v679
        %v3472 = vand.u32 %v3471, 8388607
        %v3473 = vor.u32 %v3472, 8388608
        %v3474 = vsub.s32 0, %v3473
        %v3475 = vadd.s32 %v3470, 1
        %vm3476 = vcmp.gt.s32.totalorder %v3475, 0
        %v3477 = vsel %vm3476, %v3475, 0
        %v3478 = vshrl.u32 %v3477, 5
        %v3479 = vand.u32 %v3477, 31
        %v3480 = vsub.s32 32, %v3479
        %v3481 = vshrl.u32 683565275, %v3480
        %v3482 = vshll.u32 683565275, %v3479
        %v3483 = vshrl.u32 2475754826, %v3480
        %v3484 = vor.u32 %v3482, %v3483
        %v3485 = vshll.u32 2475754826, %v3479
        %v3486 = vshrl.u32 2131351028, %v3480
        %v3487 = vor.u32 %v3485, %v3486
        %v3488 = vshll.u32 2131351028, %v3479
        %v3489 = vshrl.u32 2102212464, %v3480
        %v3490 = vor.u32 %v3488, %v3489
        %v3491 = vshll.u32 2102212464, %v3479
        %v3492 = vshrl.u32 920167782, %v3480
        %v3493 = vor.u32 %v3491, %v3492
        %v3494 = vshll.u32 920167782, %v3479
        %v3495 = vshrl.u32 1326507024, %v3480
        %v3496 = vor.u32 %v3494, %v3495
        %vm3497 = vcmp.lt.s32.totalorder %v3478, 1
        %vm3498 = vcmp.lt.s32.totalorder %v3478, 2
        %vm3499 = vcmp.lt.s32.totalorder %v3478, 3
        %vm3500 = vcmp.lt.s32.totalorder %v3478, 4
        %v3501 = vsel %vm3497, %v3481, %v3484
        %v3502 = vsel %vm3500, %v3490, 2102212464
        %v3503 = vsel %vm3499, %v3487, %v3502
        %v3504 = vsel %vm3498, %v3501, %v3503
        %v3505 = vsel %vm3497, %v3484, %v3487
        %v3506 = vsel %vm3500, %v3493, 920167782
        %v3507 = vsel %vm3499, %v3490, %v3506
        %v3508 = vsel %vm3498, %v3505, %v3507
        %v3509 = vsel %vm3497, %v3487, %v3490
        %v3510 = vsel %vm3500, %v3496, 1326507024
        %v3511 = vsel %vm3499, %v3493, %v3510
        %v3512 = vsel %vm3498, %v3509, %v3511
        %v3513 = vshll.u32 %v3473, 8
        %v3514 = vmul.u32.u64.compose %v3513, %v3512
        %v3515 = vextract.low.u32 %v3514
        %v3516 = vextract.high.u32 %v3514
        %v3517 = vmul.u32.u64.compose %v3513, %v3508
        %v3518 = vextract.low.u32 %v3517
        %v3519 = vextract.high.u32 %v3517
        %v3520 = vmul.u32 %v3513, %v3504
        %v3521 = vadd.s32 %v3516, %v3518
        %vm3522 = vc.u32 %v3516, %v3518
        %v3523 = vadd.s32 %v3519, 1
        %v3524 = vsel %vm3522, %v3523, %v3519
        %v3525 = vadd.s32 %v3520, %v3524
        %v3526 = vadd.s32 %v3525, 536870912
        %v3527 = vshrl.u32 %v3526, 30
        %v3528 = vshll.u32 %v3527, 30
        %v3529 = vsub.s32 %v3525, %v3528
        %vm3530 = vcmp.lt.s32.totalorder %v3529, 0
        %v3531 = vsub.s32 0, %v3529
        %v3532 = vsel %vm3530, %v3531, %v3529
        %v3533 = vclz %v3532
        %v3534 = vsub.s32 %v3533, 2
        %vm3535 = vcmp.gt.s32.totalorder 0, %v3534
        %v3536 = vsel %vm3535, 0, %v3534
        %v3537 = vsub.s32 32, %v3536
        %v3538 = vshll.u32 %v3529, %v3536
        %v3539 = vshrl.u32 %v3521, %v3537
        %v3540 = vor.u32 %v3538, %v3539
        %v3541 = vsub.s32 4294967266, %v3536
        %v3542 = vadd.s32 %v3541, 127
        %v3543 = vshll.u32 %v3542, 23
        %v3544 = vor.u32 4788187, %v3543
        %v3545 = vand.u32 2147483647, %v3544
        %v3547 = vcvt.s32.f32 %v3540
        %v3548 = vmul.f32 %v3547, %v3545
        %v3549 = vxor.u32 %v3548, 2147483648
        %v3550 = vsel %vm3467, %v3549, %v3548
        %v3551 = vsub.s32 4, %v3527
        %v3552 = vsel %vm3467, %v3551, %v3527
        %v3553 = vsel %vm3466, %v679, %v3550
        %v3554 = vsel %vm3466, 0, %v3552
        %v3555 = vcosq.f32.pop %v3553
        %v3556 = vsinq.f32.pop %v3553
        %vm3557 = vweird.f32 %v679
        %v3558 = vand.u32 %v3554, 3
        %vm3559 = vcmp.lt.s32.totalorder %v3558, 2
        %vm3560 = vcmp.eq.s32.totalorder %v3558, 0
        %v3561 = vxor.u32 %v3556, 2147483648
        %v3562 = vsel %vm3560, %v3555, %v3561
        %vm3563 = vcmp.eq.s32.totalorder %v3558, 2
        %v3564 = vxor.u32 %v3555, 2147483648
        %v3565 = vsel %vm3563, %v3564, %v3556
        %v3566 = vsel %vm3559, %v3562, %v3565
        %v3567 = vsel %vm3557, nan, %v3566
        %v3568 = vand.u32 2147483647, %v680
        %vm3569 = vcmp.le.f32.partialorder %v3568, 0.7853982
        %vm3570 = vcmp.lt.s32.totalorder %v680, 0
        %v3571 = vand.u32 %v680, 2139095040
        %v3572 = vshrl.u32 %v3571, 23
        %v3573 = vsub.s32 %v3572, 127
        %v3574 = vand.u32 2147483647, %v680
        %v3575 = vand.u32 %v3574, 8388607
        %v3576 = vor.u32 %v3575, 8388608
        %v3577 = vsub.s32 0, %v3576
        %v3578 = vadd.s32 %v3573, 1
        %vm3579 = vcmp.gt.s32.totalorder %v3578, 0
        %v3580 = vsel %vm3579, %v3578, 0
        %v3581 = vshrl.u32 %v3580, 5
        %v3582 = vand.u32 %v3580, 31
        %v3583 = vsub.s32 32, %v3582
        %v3584 = vshrl.u32 683565275, %v3583
        %v3585 = vshll.u32 683565275, %v3582
        %v3586 = vshrl.u32 2475754826, %v3583
        %v3587 = vor.u32 %v3585, %v3586
        %v3588 = vshll.u32 2475754826, %v3582
        %v3589 = vshrl.u32 2131351028, %v3583
        %v3590 = vor.u32 %v3588, %v3589
        %v3591 = vshll.u32 2131351028, %v3582
        %v3592 = vshrl.u32 2102212464, %v3583
        %v3593 = vor.u32 %v3591, %v3592
        %v3594 = vshll.u32 2102212464, %v3582
        %v3595 = vshrl.u32 920167782, %v3583
        %v3596 = vor.u32 %v3594, %v3595
        %v3597 = vshll.u32 920167782, %v3582
        %v3598 = vshrl.u32 1326507024, %v3583
        %v3599 = vor.u32 %v3597, %v3598
        %vm3600 = vcmp.lt.s32.totalorder %v3581, 1
        %vm3601 = vcmp.lt.s32.totalorder %v3581, 2
        %vm3602 = vcmp.lt.s32.totalorder %v3581, 3
        %vm3603 = vcmp.lt.s32.totalorder %v3581, 4
        %v3604 = vsel %vm3600, %v3584, %v3587
        %v3605 = vsel %vm3603, %v3593, 2102212464
        %v3606 = vsel %vm3602, %v3590, %v3605
        %v3607 = vsel %vm3601, %v3604, %v3606
        %v3608 = vsel %vm3600, %v3587, %v3590
        %v3609 = vsel %vm3603, %v3596, 920167782
        %v3610 = vsel %vm3602, %v3593, %v3609
        %v3611 = vsel %vm3601, %v3608, %v3610
        %v3612 = vsel %vm3600, %v3590, %v3593
        %v3613 = vsel %vm3603, %v3599, 1326507024
        %v3614 = vsel %vm3602, %v3596, %v3613
        %v3615 = vsel %vm3601, %v3612, %v3614
        %v3616 = vshll.u32 %v3576, 8
        %v3617 = vmul.u32.u64.compose %v3616, %v3615
        %v3618 = vextract.low.u32 %v3617
        %v3619 = vextract.high.u32 %v3617
        %v3620 = vmul.u32.u64.compose %v3616, %v3611
        %v3621 = vextract.low.u32 %v3620
        %v3622 = vextract.high.u32 %v3620
        %v3623 = vmul.u32 %v3616, %v3607
        %v3624 = vadd.s32 %v3619, %v3621
        %vm3625 = vc.u32 %v3619, %v3621
        %v3626 = vadd.s32 %v3622, 1
        %v3627 = vsel %vm3625, %v3626, %v3622
        %v3628 = vadd.s32 %v3623, %v3627
        %v3629 = vadd.s32 %v3628, 536870912
        %v3630 = vshrl.u32 %v3629, 30
        %v3631 = vshll.u32 %v3630, 30
        %v3632 = vsub.s32 %v3628, %v3631
        %vm3633 = vcmp.lt.s32.totalorder %v3632, 0
        %v3634 = vsub.s32 0, %v3632
        %v3635 = vsel %vm3633, %v3634, %v3632
        %v3636 = vclz %v3635
        %v3637 = vsub.s32 %v3636, 2
        %vm3638 = vcmp.gt.s32.totalorder 0, %v3637
        %v3639 = vsel %vm3638, 0, %v3637
        %v3640 = vsub.s32 32, %v3639
        %v3641 = vshll.u32 %v3632, %v3639
        %v3642 = vshrl.u32 %v3624, %v3640
        %v3643 = vor.u32 %v3641, %v3642
        %v3644 = vsub.s32 4294967266, %v3639
        %v3645 = vadd.s32 %v3644, 127
        %v3646 = vshll.u32 %v3645, 23
        %v3647 = vor.u32 4788187, %v3646
        %v3648 = vand.u32 2147483647, %v3647
        %v3650 = vcvt.s32.f32 %v3643
        %v3651 = vmul.f32 %v3650, %v3648
        %v3652 = vxor.u32 %v3651, 2147483648
        %v3653 = vsel %vm3570, %v3652, %v3651
        %v3654 = vsub.s32 4, %v3630
        %v3655 = vsel %vm3570, %v3654, %v3630
        %v3656 = vsel %vm3569, %v680, %v3653
        %v3657 = vsel %vm3569, 0, %v3655
        %v3658 = vcosq.f32.pop %v3656
        %v3659 = vsinq.f32.pop %v3656
        %vm3660 = vweird.f32 %v680
        %v3661 = vand.u32 %v3657, 3
        %vm3662 = vcmp.lt.s32.totalorder %v3661, 2
        %vm3663 = vcmp.eq.s32.totalorder %v3661, 0
        %v3664 = vxor.u32 %v3659, 2147483648
        %v3665 = vsel %vm3663, %v3658, %v3664
        %vm3666 = vcmp.eq.s32.totalorder %v3661, 2
        %v3667 = vxor.u32 %v3658, 2147483648
        %v3668 = vsel %vm3666, %v3667, %v3659
        %v3669 = vsel %vm3662, %v3665, %v3668
        %v3670 = vsel %vm3660, nan, %v3669
        %v3671 = vand.u32 2147483647, %v681
        %vm3672 = vcmp.le.f32.partialorder %v3671, 0.7853982
        %vm3673 = vcmp.lt.s32.totalorder %v681, 0
        %v3674 = vand.u32 %v681, 2139095040
        %v3675 = vshrl.u32 %v3674, 23
        %v3676 = vsub.s32 %v3675, 127
        %v3677 = vand.u32 2147483647, %v681
        %v3678 = vand.u32 %v3677, 8388607
        %v3679 = vor.u32 %v3678, 8388608
        %v3680 = vsub.s32 0, %v3679
        %v3681 = vadd.s32 %v3676, 1
        %vm3682 = vcmp.gt.s32.totalorder %v3681, 0
        %v3683 = vsel %vm3682, %v3681, 0
        %v3684 = vshrl.u32 %v3683, 5
        %v3685 = vand.u32 %v3683, 31
        %v3686 = vsub.s32 32, %v3685
        %v3687 = vshrl.u32 683565275, %v3686
        %v3688 = vshll.u32 683565275, %v3685
        %v3689 = vshrl.u32 2475754826, %v3686
        %v3690 = vor.u32 %v3688, %v3689
        %v3691 = vshll.u32 2475754826, %v3685
        %v3692 = vshrl.u32 2131351028, %v3686
        %v3693 = vor.u32 %v3691, %v3692
        %v3694 = vshll.u32 2131351028, %v3685
        %v3695 = vshrl.u32 2102212464, %v3686
        %v3696 = vor.u32 %v3694, %v3695
        %v3697 = vshll.u32 2102212464, %v3685
        %v3698 = vshrl.u32 920167782, %v3686
        %v3699 = vor.u32 %v3697, %v3698
        %v3700 = vshll.u32 920167782, %v3685
        %v3701 = vshrl.u32 1326507024, %v3686
        %v3702 = vor.u32 %v3700, %v3701
        %vm3703 = vcmp.lt.s32.totalorder %v3684, 1
        %vm3704 = vcmp.lt.s32.totalorder %v3684, 2
        %vm3705 = vcmp.lt.s32.totalorder %v3684, 3
        %vm3706 = vcmp.lt.s32.totalorder %v3684, 4
        %v3707 = vsel %vm3703, %v3687, %v3690
        %v3708 = vsel %vm3706, %v3696, 2102212464
        %v3709 = vsel %vm3705, %v3693, %v3708
        %v3710 = vsel %vm3704, %v3707, %v3709
        %v3711 = vsel %vm3703, %v3690, %v3693
        %v3712 = vsel %vm3706, %v3699, 920167782
        %v3713 = vsel %vm3705, %v3696, %v3712
        %v3714 = vsel %vm3704, %v3711, %v3713
        %v3715 = vsel %vm3703, %v3693, %v3696
        %v3716 = vsel %vm3706, %v3702, 1326507024
        %v3717 = vsel %vm3705, %v3699, %v3716
        %v3718 = vsel %vm3704, %v3715, %v3717
        %v3719 = vshll.u32 %v3679, 8
        %v3720 = vmul.u32.u64.compose %v3719, %v3718
        %v3721 = vextract.low.u32 %v3720
        %v3722 = vextract.high.u32 %v3720
        %v3723 = vmul.u32.u64.compose %v3719, %v3714
        %v3724 = vextract.low.u32 %v3723
        %v3725 = vextract.high.u32 %v3723
        %v3726 = vmul.u32 %v3719, %v3710
        %v3727 = vadd.s32 %v3722, %v3724
        %vm3728 = vc.u32 %v3722, %v3724
        %v3729 = vadd.s32 %v3725, 1
        %v3730 = vsel %vm3728, %v3729, %v3725
        %v3731 = vadd.s32 %v3726, %v3730
        %v3732 = vadd.s32 %v3731, 536870912
        %v3733 = vshrl.u32 %v3732, 30
        %v3734 = vshll.u32 %v3733, 30
        %v3735 = vsub.s32 %v3731, %v3734
        %vm3736 = vcmp.lt.s32.totalorder %v3735, 0
        %v3737 = vsub.s32 0, %v3735
        %v3738 = vsel %vm3736, %v3737, %v3735
        %v3739 = vclz %v3738
        %v3740 = vsub.s32 %v3739, 2
        %vm3741 = vcmp.gt.s32.totalorder 0, %v3740
        %v3742 = vsel %vm3741, 0, %v3740
        %v3743 = vsub.s32 32, %v3742
        %v3744 = vshll.u32 %v3735, %v3742
        %v3745 = vshrl.u32 %v3727, %v3743
        %v3746 = vor.u32 %v3744, %v3745
        %v3747 = vsub.s32 4294967266, %v3742
        %v3748 = vadd.s32 %v3747, 127
        %v3749 = vshll.u32 %v3748, 23
        %v3750 = vor.u32 4788187, %v3749
        %v3751 = vand.u32 2147483647, %v3750
        %v3753 = vcvt.s32.f32 %v3746
        %v3754 = vmul.f32 %v3753, %v3751
        %v3755 = vxor.u32 %v3754, 2147483648
        %v3756 = vsel %vm3673, %v3755, %v3754
        %v3757 = vsub.s32 4, %v3733
        %v3758 = vsel %vm3673, %v3757, %v3733
        %v3759 = vsel %vm3672, %v681, %v3756
        %v3760 = vsel %vm3672, 0, %v3758
        %v3761 = vcosq.f32.pop %v3759
        %v3762 = vsinq.f32.pop %v3759
        %vm3763 = vweird.f32 %v681
        %v3764 = vand.u32 %v3760, 3
        %vm3765 = vcmp.lt.s32.totalorder %v3764, 2
        %vm3766 = vcmp.eq.s32.totalorder %v3764, 0
        %v3767 = vxor.u32 %v3762, 2147483648
        %v3768 = vsel %vm3766, %v3761, %v3767
        %vm3769 = vcmp.eq.s32.totalorder %v3764, 2
        %v3770 = vxor.u32 %v3761, 2147483648
        %v3771 = vsel %vm3769, %v3770, %v3762
        %v3772 = vsel %vm3765, %v3768, %v3771
        %v3773 = vsel %vm3763, nan, %v3772
        %v3774 = vand.u32 2147483647, %v682
        %vm3775 = vcmp.le.f32.partialorder %v3774, 0.7853982
        %vm3776 = vcmp.lt.s32.totalorder %v682, 0
        %v3777 = vand.u32 %v682, 2139095040
        %v3778 = vshrl.u32 %v3777, 23
        %v3779 = vsub.s32 %v3778, 127
        %v3780 = vand.u32 2147483647, %v682
        %v3781 = vand.u32 %v3780, 8388607
        %v3782 = vor.u32 %v3781, 8388608
        %v3783 = vsub.s32 0, %v3782
        %v3784 = vadd.s32 %v3779, 1
        %vm3785 = vcmp.gt.s32.totalorder %v3784, 0
        %v3786 = vsel %vm3785, %v3784, 0
        %v3787 = vshrl.u32 %v3786, 5
        %v3788 = vand.u32 %v3786, 31
        %v3789 = vsub.s32 32, %v3788
        %v3790 = vshrl.u32 683565275, %v3789
        %v3791 = vshll.u32 683565275, %v3788
        %v3792 = vshrl.u32 2475754826, %v3789
        %v3793 = vor.u32 %v3791, %v3792
        %v3794 = vshll.u32 2475754826, %v3788
        %v3795 = vshrl.u32 2131351028, %v3789
        %v3796 = vor.u32 %v3794, %v3795
        %v3797 = vshll.u32 2131351028, %v3788
        %v3798 = vshrl.u32 2102212464, %v3789
        %v3799 = vor.u32 %v3797, %v3798
        %v3800 = vshll.u32 2102212464, %v3788
        %v3801 = vshrl.u32 920167782, %v3789
        %v3802 = vor.u32 %v3800, %v3801
        %v3803 = vshll.u32 920167782, %v3788
        %v3804 = vshrl.u32 1326507024, %v3789
        %v3805 = vor.u32 %v3803, %v3804
        %vm3806 = vcmp.lt.s32.totalorder %v3787, 1
        %vm3807 = vcmp.lt.s32.totalorder %v3787, 2
        %vm3808 = vcmp.lt.s32.totalorder %v3787, 3
        %vm3809 = vcmp.lt.s32.totalorder %v3787, 4
        %v3810 = vsel %vm3806, %v3790, %v3793
        %v3811 = vsel %vm3809, %v3799, 2102212464
        %v3812 = vsel %vm3808, %v3796, %v3811
        %v3813 = vsel %vm3807, %v3810, %v3812
        %v3814 = vsel %vm3806, %v3793, %v3796
        %v3815 = vsel %vm3809, %v3802, 920167782
        %v3816 = vsel %vm3808, %v3799, %v3815
        %v3817 = vsel %vm3807, %v3814, %v3816
        %v3818 = vsel %vm3806, %v3796, %v3799
        %v3819 = vsel %vm3809, %v3805, 1326507024
        %v3820 = vsel %vm3808, %v3802, %v3819
        %v3821 = vsel %vm3807, %v3818, %v3820
        %v3822 = vshll.u32 %v3782, 8
        %v3823 = vmul.u32.u64.compose %v3822, %v3821
        %v3824 = vextract.low.u32 %v3823
        %v3825 = vextract.high.u32 %v3823
        %v3826 = vmul.u32.u64.compose %v3822, %v3817
        %v3827 = vextract.low.u32 %v3826
        %v3828 = vextract.high.u32 %v3826
        %v3829 = vmul.u32 %v3822, %v3813
        %v3830 = vadd.s32 %v3825, %v3827
        %vm3831 = vc.u32 %v3825, %v3827
        %v3832 = vadd.s32 %v3828, 1
        %v3833 = vsel %vm3831, %v3832, %v3828
        %v3834 = vadd.s32 %v3829, %v3833
        %v3835 = vadd.s32 %v3834, 536870912
        %v3836 = vshrl.u32 %v3835, 30
        %v3837 = vshll.u32 %v3836, 30
        %v3838 = vsub.s32 %v3834, %v3837
        %vm3839 = vcmp.lt.s32.totalorder %v3838, 0
        %v3840 = vsub.s32 0, %v3838
        %v3841 = vsel %vm3839, %v3840, %v3838
        %v3842 = vclz %v3841
        %v3843 = vsub.s32 %v3842, 2
        %vm3844 = vcmp.gt.s32.totalorder 0, %v3843
        %v3845 = vsel %vm3844, 0, %v3843
        %v3846 = vsub.s32 32, %v3845
        %v3847 = vshll.u32 %v3838, %v3845
        %v3848 = vshrl.u32 %v3830, %v3846
        %v3849 = vor.u32 %v3847, %v3848
        %v3850 = vsub.s32 4294967266, %v3845
        %v3851 = vadd.s32 %v3850, 127
        %v3852 = vshll.u32 %v3851, 23
        %v3853 = vor.u32 4788187, %v3852
        %v3854 = vand.u32 2147483647, %v3853
        %v3856 = vcvt.s32.f32 %v3849
        %v3857 = vmul.f32 %v3856, %v3854
        %v3858 = vxor.u32 %v3857, 2147483648
        %v3859 = vsel %vm3776, %v3858, %v3857
        %v3860 = vsub.s32 4, %v3836
        %v3861 = vsel %vm3776, %v3860, %v3836
        %v3862 = vsel %vm3775, %v682, %v3859
        %v3863 = vsel %vm3775, 0, %v3861
        %v3864 = vcosq.f32.pop %v3862
        %v3865 = vsinq.f32.pop %v3862
        %vm3866 = vweird.f32 %v682
        %v3867 = vand.u32 %v3863, 3
        %vm3868 = vcmp.lt.s32.totalorder %v3867, 2
        %vm3869 = vcmp.eq.s32.totalorder %v3867, 0
        %v3870 = vxor.u32 %v3865, 2147483648
        %v3871 = vsel %vm3869, %v3864, %v3870
        %vm3872 = vcmp.eq.s32.totalorder %v3867, 2
        %v3873 = vxor.u32 %v3864, 2147483648
        %v3874 = vsel %vm3872, %v3873, %v3865
        %v3875 = vsel %vm3868, %v3871, %v3874
        %v3876 = vsel %vm3866, nan, %v3875
        %v3877 = vand.u32 2147483647, %v683
        %vm3878 = vcmp.le.f32.partialorder %v3877, 0.7853982
        %vm3879 = vcmp.lt.s32.totalorder %v683, 0
        %v3880 = vand.u32 %v683, 2139095040
        %v3881 = vshrl.u32 %v3880, 23
        %v3882 = vsub.s32 %v3881, 127
        %v3883 = vand.u32 2147483647, %v683
        %v3884 = vand.u32 %v3883, 8388607
        %v3885 = vor.u32 %v3884, 8388608
        %v3886 = vsub.s32 0, %v3885
        %v3887 = vadd.s32 %v3882, 1
        %vm3888 = vcmp.gt.s32.totalorder %v3887, 0
        %v3889 = vsel %vm3888, %v3887, 0
        %v3890 = vshrl.u32 %v3889, 5
        %v3891 = vand.u32 %v3889, 31
        %v3892 = vsub.s32 32, %v3891
        %v3893 = vshrl.u32 683565275, %v3892
        %v3894 = vshll.u32 683565275, %v3891
        %v3895 = vshrl.u32 2475754826, %v3892
        %v3896 = vor.u32 %v3894, %v3895
        %v3897 = vshll.u32 2475754826, %v3891
        %v3898 = vshrl.u32 2131351028, %v3892
        %v3899 = vor.u32 %v3897, %v3898
        %v3900 = vshll.u32 2131351028, %v3891
        %v3901 = vshrl.u32 2102212464, %v3892
        %v3902 = vor.u32 %v3900, %v3901
        %v3903 = vshll.u32 2102212464, %v3891
        %v3904 = vshrl.u32 920167782, %v3892
        %v3905 = vor.u32 %v3903, %v3904
        %v3906 = vshll.u32 920167782, %v3891
        %v3907 = vshrl.u32 1326507024, %v3892
        %v3908 = vor.u32 %v3906, %v3907
        %vm3909 = vcmp.lt.s32.totalorder %v3890, 1
        %vm3910 = vcmp.lt.s32.totalorder %v3890, 2
        %vm3911 = vcmp.lt.s32.totalorder %v3890, 3
        %vm3912 = vcmp.lt.s32.totalorder %v3890, 4
        %v3913 = vsel %vm3909, %v3893, %v3896
        %v3914 = vsel %vm3912, %v3902, 2102212464
        %v3915 = vsel %vm3911, %v3899, %v3914
        %v3916 = vsel %vm3910, %v3913, %v3915
        %v3917 = vsel %vm3909, %v3896, %v3899
        %v3918 = vsel %vm3912, %v3905, 920167782
        %v3919 = vsel %vm3911, %v3902, %v3918
        %v3920 = vsel %vm3910, %v3917, %v3919
        %v3921 = vsel %vm3909, %v3899, %v3902
        %v3922 = vsel %vm3912, %v3908, 1326507024
        %v3923 = vsel %vm3911, %v3905, %v3922
        %v3924 = vsel %vm3910, %v3921, %v3923
        %v3925 = vshll.u32 %v3885, 8
        %v3926 = vmul.u32.u64.compose %v3925, %v3924
        %v3927 = vextract.low.u32 %v3926
        %v3928 = vextract.high.u32 %v3926
        %v3929 = vmul.u32.u64.compose %v3925, %v3920
        %v3930 = vextract.low.u32 %v3929
        %v3931 = vextract.high.u32 %v3929
        %v3932 = vmul.u32 %v3925, %v3916
        %v3933 = vadd.s32 %v3928, %v3930
        %vm3934 = vc.u32 %v3928, %v3930
        %v3935 = vadd.s32 %v3931, 1
        %v3936 = vsel %vm3934, %v3935, %v3931
        %v3937 = vadd.s32 %v3932, %v3936
        %v3938 = vadd.s32 %v3937, 536870912
        %v3939 = vshrl.u32 %v3938, 30
        %v3940 = vshll.u32 %v3939, 30
        %v3941 = vsub.s32 %v3937, %v3940
        %vm3942 = vcmp.lt.s32.totalorder %v3941, 0
        %v3943 = vsub.s32 0, %v3941
        %v3944 = vsel %vm3942, %v3943, %v3941
        %v3945 = vclz %v3944
        %v3946 = vsub.s32 %v3945, 2
        %vm3947 = vcmp.gt.s32.totalorder 0, %v3946
        %v3948 = vsel %vm3947, 0, %v3946
        %v3949 = vsub.s32 32, %v3948
        %v3950 = vshll.u32 %v3941, %v3948
        %v3951 = vshrl.u32 %v3933, %v3949
        %v3952 = vor.u32 %v3950, %v3951
        %v3953 = vsub.s32 4294967266, %v3948
        %v3954 = vadd.s32 %v3953, 127
        %v3955 = vshll.u32 %v3954, 23
        %v3956 = vor.u32 4788187, %v3955
        %v3957 = vand.u32 2147483647, %v3956
        %v3959 = vcvt.s32.f32 %v3952
        %v3960 = vmul.f32 %v3959, %v3957
        %v3961 = vxor.u32 %v3960, 2147483648
        %v3962 = vsel %vm3879, %v3961, %v3960
        %v3963 = vsub.s32 4, %v3939
        %v3964 = vsel %vm3879, %v3963, %v3939
        %v3965 = vsel %vm3878, %v683, %v3962
        %v3966 = vsel %vm3878, 0, %v3964
        %v3967 = vcosq.f32.pop %v3965
        %v3968 = vsinq.f32.pop %v3965
        %vm3969 = vweird.f32 %v683
        %v3970 = vand.u32 %v3966, 3
        %vm3971 = vcmp.lt.s32.totalorder %v3970, 2
        %vm3972 = vcmp.eq.s32.totalorder %v3970, 0
        %v3973 = vxor.u32 %v3968, 2147483648
        %v3974 = vsel %vm3972, %v3967, %v3973
        %vm3975 = vcmp.eq.s32.totalorder %v3970, 2
        %v3976 = vxor.u32 %v3967, 2147483648
        %v3977 = vsel %vm3975, %v3976, %v3968
        %v3978 = vsel %vm3971, %v3974, %v3977
        %v3979 = vsel %vm3969, nan, %v3978
        %v3980 = vld [vmem:[%s372] sm:$0xff]
        %v3981 = vld [vmem:[%s372 + $0x8] sm:$0xff]
        %v3982 = vld [vmem:[%s372 + $0x10] sm:$0xff]
        %v3983 = vld [vmem:[%s372 + $0x18] sm:$0xff]
        %v3984 = vld [vmem:[%s372 + $0x20] sm:$0xff]
        %v3985 = vld [vmem:[%s372 + $0x28] sm:$0xff]
        %v3986 = vld [vmem:[%s372 + $0x30] sm:$0xff]
        %v3987 = vld [vmem:[%s372 + $0x38] sm:$0xff]
        %v3988 = vld [vmem:[%s372 + $0x40] sm:$0xff]
        %v3989 = vld [vmem:[%s372 + $0x48] sm:$0xff]
        %v3990 = vld [vmem:[%s372 + $0x50] sm:$0xff]
        %v3991 = vld [vmem:[%s372 + $0x58] sm:$0xff]
        %v3992 = vld [vmem:[%s372 + $0x60] sm:$0xff]
        %v3993 = vld [vmem:[%s372 + $0x68] sm:$0xff]
        %v3994 = vld [vmem:[%s372 + $0x70] sm:$0xff]
        %v3995 = vld [vmem:[%s372 + $0x78] sm:$0xff]
        %v3996 = vld [vmem:[%s372 + $0x80] sm:$0xff]
        %v3997 = vld [vmem:[%s372 + $0x88] sm:$0xff]
        %v3998 = vld [vmem:[%s372 + $0x90] sm:$0xff]
        %v3999 = vld [vmem:[%s372 + $0x98] sm:$0xff]
        %v4000 = vld [vmem:[%s372 + $0xa0] sm:$0xff]
        %v4001 = vld [vmem:[%s372 + $0xa8] sm:$0xff]
        %v4002 = vld [vmem:[%s372 + $0xb0] sm:$0xff]
        %v4003 = vld [vmem:[%s372 + $0xb8] sm:$0xff]
        %v4004 = vld [vmem:[%s372 + $0xc0] sm:$0xff]
        %v4005 = vld [vmem:[%s372 + $0xc8] sm:$0xff]
        %v4006 = vld [vmem:[%s372 + $0xd0] sm:$0xff]
        %v4007 = vld [vmem:[%s372 + $0xd8] sm:$0xff]
        %v4008 = vld [vmem:[%s372 + $0xe0] sm:$0xff]
        %v4009 = vld [vmem:[%s372 + $0xe8] sm:$0xff]
        %v4010 = vld [vmem:[%s372 + $0xf0] sm:$0xff]
        %v4011 = vld [vmem:[%s372 + $0xf8] sm:$0xff]
        %v4012 = vpack.c.bf16 %v889, %v786
        %v4013 = vpack.c.bf16 %v1095, %v992
        %v4014 = vpack.c.bf16 %v1301, %v1198
        %v4015 = vpack.c.bf16 %v1507, %v1404
        %v4016 = vpack.c.bf16 %v1713, %v1610
        %v4017 = vpack.c.bf16 %v1919, %v1816
        %v4018 = vpack.c.bf16 %v2125, %v2022
        %v4019 = vpack.c.bf16 %v2331, %v2228
        %v4020 = vpack.c.bf16 %v2537, %v2434
        %v4021 = vpack.c.bf16 %v2743, %v2640
        %v4022 = vpack.c.bf16 %v2949, %v2846
        %v4023 = vpack.c.bf16 %v3155, %v3052
        %v4024 = vpack.c.bf16 %v3361, %v3258
        %v4025 = vpack.c.bf16 %v3567, %v3464
        %v4026 = vpack.c.bf16 %v3773, %v3670
        %v4027 = vpack.c.bf16 %v3979, %v3876
        %v4060 = vunpack.c.l.b16 %v3980
        %v4061 = vunpack.c.h.b16 %v3980
        %v4062 = vunpack.c.l.b16 %v3981
        %v4063 = vunpack.c.h.b16 %v3981
        %v4064 = vunpack.c.l.b16 %v3982
        %v4065 = vunpack.c.h.b16 %v3982
        %v4066 = vunpack.c.l.b16 %v3983
        %v4067 = vunpack.c.h.b16 %v3983
        %v4068 = vunpack.c.l.b16 %v3984
        %v4069 = vunpack.c.h.b16 %v3984
        %v4070 = vunpack.c.l.b16 %v3985
        %v4071 = vunpack.c.h.b16 %v3985
        %v4072 = vunpack.c.l.b16 %v3986
        %v4073 = vunpack.c.h.b16 %v3986
        %v4074 = vunpack.c.l.b16 %v3987
        %v4075 = vunpack.c.h.b16 %v3987
        %v4076 = vunpack.c.l.b16 %v3988
        %v4077 = vunpack.c.h.b16 %v3988
        %v4078 = vunpack.c.l.b16 %v3989
        %v4079 = vunpack.c.h.b16 %v3989
        %v4080 = vunpack.c.l.b16 %v3990
        %v4081 = vunpack.c.h.b16 %v3990
        %v4082 = vunpack.c.l.b16 %v3991
        %v4083 = vunpack.c.h.b16 %v3991
        %v4084 = vunpack.c.l.b16 %v3992
        %v4085 = vunpack.c.h.b16 %v3992
        %v4086 = vunpack.c.l.b16 %v3993
        %v4087 = vunpack.c.h.b16 %v3993
        %v4088 = vunpack.c.l.b16 %v3994
        %v4089 = vunpack.c.h.b16 %v3994
        %v4090 = vunpack.c.l.b16 %v3995
        %v4091 = vunpack.c.h.b16 %v3995
        %v4092 = vunpack.c.l.b16 %v3996
        %v4093 = vunpack.c.h.b16 %v3996
        %v4094 = vunpack.c.l.b16 %v3997
        %v4095 = vunpack.c.h.b16 %v3997
        %v4096 = vunpack.c.l.b16 %v3998
        %v4097 = vunpack.c.h.b16 %v3998
        %v4098 = vunpack.c.l.b16 %v3999
        %v4099 = vunpack.c.h.b16 %v3999
        %v4100 = vunpack.c.l.b16 %v4000
        %v4101 = vunpack.c.h.b16 %v4000
        %v4102 = vunpack.c.l.b16 %v4001
        %v4103 = vunpack.c.h.b16 %v4001
        %v4104 = vunpack.c.l.b16 %v4002
        %v4105 = vunpack.c.h.b16 %v4002
        %v4106 = vunpack.c.l.b16 %v4003
        %v4107 = vunpack.c.h.b16 %v4003
        %v4108 = vunpack.c.l.b16 %v4004
        %v4109 = vunpack.c.h.b16 %v4004
        %v4110 = vunpack.c.l.b16 %v4005
        %v4111 = vunpack.c.h.b16 %v4005
        %v4112 = vunpack.c.l.b16 %v4006
        %v4113 = vunpack.c.h.b16 %v4006
        %v4114 = vunpack.c.l.b16 %v4007
        %v4115 = vunpack.c.h.b16 %v4007
        %v4116 = vunpack.c.l.b16 %v4008
        %v4117 = vunpack.c.h.b16 %v4008
        %v4118 = vunpack.c.l.b16 %v4009
        %v4119 = vunpack.c.h.b16 %v4009
        %v4120 = vunpack.c.l.b16 %v4010
        %v4121 = vunpack.c.h.b16 %v4010
        %v4122 = vunpack.c.l.b16 %v4011
        %v4123 = vunpack.c.h.b16 %v4011
        %v4124 = vpack.c.b16 %v4062, %v4060
        %v4125 = vpack.c.b16 %v4063, %v4061
        %v4126 = vpack.c.b16 %v4066, %v4064
        %v4127 = vpack.c.b16 %v4067, %v4065
        %v4128 = vpack.c.b16 %v4070, %v4068
        %v4129 = vpack.c.b16 %v4071, %v4069
        %v4130 = vpack.c.b16 %v4074, %v4072
        %v4131 = vpack.c.b16 %v4075, %v4073
        %v4132 = vpack.c.b16 %v4078, %v4076
        %v4133 = vpack.c.b16 %v4079, %v4077
        %v4134 = vpack.c.b16 %v4082, %v4080
        %v4135 = vpack.c.b16 %v4083, %v4081
        %v4136 = vpack.c.b16 %v4086, %v4084
        %v4137 = vpack.c.b16 %v4087, %v4085
        %v4138 = vpack.c.b16 %v4090, %v4088
        %v4139 = vpack.c.b16 %v4091, %v4089
        %v4140 = vpack.c.b16 %v4094, %v4092
        %v4141 = vpack.c.b16 %v4095, %v4093
        %v4142 = vpack.c.b16 %v4098, %v4096
        %v4143 = vpack.c.b16 %v4099, %v4097
        %v4144 = vpack.c.b16 %v4102, %v4100
        %v4145 = vpack.c.b16 %v4103, %v4101
        %v4146 = vpack.c.b16 %v4106, %v4104
        %v4147 = vpack.c.b16 %v4107, %v4105
        %v4148 = vpack.c.b16 %v4110, %v4108
        %v4149 = vpack.c.b16 %v4111, %v4109
        %v4150 = vpack.c.b16 %v4114, %v4112
        %v4151 = vpack.c.b16 %v4115, %v4113
        %v4152 = vpack.c.b16 %v4118, %v4116
        %v4153 = vpack.c.b16 %v4119, %v4117
        %v4154 = vpack.c.b16 %v4122, %v4120
        %v4155 = vpack.c.b16 %v4123, %v4121
        %4188 = vrot.lane.b32.xlu0 %v4012, 64
        %v4189 = vpop.permute.xlu0 %4188
        %4190 = vrot.lane.b32.xlu0 %v4013, 64
        %v4191 = vpop.permute.xlu0 %4190
        %4192 = vrot.lane.b32.xlu0 %v4014, 64
        %v4193 = vpop.permute.xlu0 %4192
        %4194 = vrot.lane.b32.xlu0 %v4015, 64
        %v4195 = vpop.permute.xlu0 %4194
        %4196 = vrot.lane.b32.xlu0 %v4016, 64
        %v4197 = vpop.permute.xlu0 %4196
        %4198 = vrot.lane.b32.xlu0 %v4017, 64
        %v4199 = vpop.permute.xlu0 %4198
        %4200 = vrot.lane.b32.xlu0 %v4018, 64
        %v4201 = vpop.permute.xlu0 %4200
        %4202 = vrot.lane.b32.xlu0 %v4019, 64
        %v4203 = vpop.permute.xlu0 %4202
        %4204 = vrot.lane.b32.xlu0 %v4020, 64
        %v4205 = vpop.permute.xlu0 %4204
        %4206 = vrot.lane.b32.xlu0 %v4021, 64
        %v4207 = vpop.permute.xlu0 %4206
        %4208 = vrot.lane.b32.xlu0 %v4022, 64
        %v4209 = vpop.permute.xlu0 %4208
        %4210 = vrot.lane.b32.xlu0 %v4023, 64
        %v4211 = vpop.permute.xlu0 %4210
        %4212 = vrot.lane.b32.xlu0 %v4024, 64
        %v4213 = vpop.permute.xlu0 %4212
        %4214 = vrot.lane.b32.xlu0 %v4025, 64
        %v4215 = vpop.permute.xlu0 %4214
        %4216 = vrot.lane.b32.xlu0 %v4026, 64
        %v4217 = vpop.permute.xlu0 %4216
        %4218 = vrot.lane.b32.xlu0 %v4027, 64
        %v4219 = vpop.permute.xlu0 %4218
        %vm4220 = vcmask 523264
        %v4223 = vsel %vm4220, %v4125, %v4189
        %v4227 = vsel %vm4220, %v4127, %v4191
        %v4231 = vsel %vm4220, %v4129, %v4193
        %v4235 = vsel %vm4220, %v4131, %v4195
        %v4239 = vsel %vm4220, %v4133, %v4197
        %v4243 = vsel %vm4220, %v4135, %v4199
        %v4247 = vsel %vm4220, %v4137, %v4201
        %v4251 = vsel %vm4220, %v4139, %v4203
        %v4255 = vsel %vm4220, %v4141, %v4205
        %v4259 = vsel %vm4220, %v4143, %v4207
        %v4263 = vsel %vm4220, %v4145, %v4209
        %v4267 = vsel %vm4220, %v4147, %v4211
        %v4271 = vsel %vm4220, %v4149, %v4213
        %v4275 = vsel %vm4220, %v4151, %v4215
        %v4279 = vsel %vm4220, %v4153, %v4217
        %v4283 = vsel %vm4220, %v4155, %v4219
        %v4285 = vpack.c.bf16 %v383, %v382
        %v4286 = vpack.c.bf16 %v385, %v384
        %v4287 = vpack.c.bf16 %v387, %v386
        %v4288 = vpack.c.bf16 %v389, %v388
        %v4289 = vpack.c.bf16 %v391, %v390
        %v4290 = vpack.c.bf16 %v393, %v392
        %v4291 = vpack.c.bf16 %v395, %v394
        %v4292 = vpack.c.bf16 %v397, %v396
        %v4293 = vpack.c.bf16 %v399, %v398
        %v4294 = vpack.c.bf16 %v401, %v400
        %v4295 = vpack.c.bf16 %v403, %v402
        %v4296 = vpack.c.bf16 %v405, %v404
        %v4297 = vpack.c.bf16 %v407, %v406
        %v4298 = vpack.c.bf16 %v409, %v408
        %v4299 = vpack.c.bf16 %v411, %v410
        %v4300 = vpack.c.bf16 %v413, %v412
        %v4301 = vld [vmem:[%s5] sm:$0xff]
        %v4302 = vld [vmem:[%s5 + $0x8] sm:$0xff]
        %v4303 = vld [vmem:[%s5 + $0x10] sm:$0xff]
        %v4304 = vld [vmem:[%s5 + $0x18] sm:$0xff]
        %v4305 = vld [vmem:[%s5 + $0x20] sm:$0xff]
        %v4306 = vld [vmem:[%s5 + $0x28] sm:$0xff]
        %v4307 = vld [vmem:[%s5 + $0x30] sm:$0xff]
        %v4308 = vld [vmem:[%s5 + $0x38] sm:$0xff]
        %v4309 = vld [vmem:[%s5 + $0x40] sm:$0xff]
        %v4310 = vld [vmem:[%s5 + $0x48] sm:$0xff]
        %v4311 = vld [vmem:[%s5 + $0x50] sm:$0xff]
        %v4312 = vld [vmem:[%s5 + $0x58] sm:$0xff]
        %v4313 = vld [vmem:[%s5 + $0x60] sm:$0xff]
        %v4314 = vld [vmem:[%s5 + $0x68] sm:$0xff]
        %v4315 = vld [vmem:[%s5 + $0x70] sm:$0xff]
        %v4316 = vld [vmem:[%s5 + $0x78] sm:$0xff]
        %v4317 = vld [vmem:[%s5 + $0x80] sm:$0xff]
        %v4318 = vld [vmem:[%s5 + $0x88] sm:$0xff]
        %v4319 = vld [vmem:[%s5 + $0x90] sm:$0xff]
        %v4320 = vld [vmem:[%s5 + $0x98] sm:$0xff]
        %v4321 = vld [vmem:[%s5 + $0xa0] sm:$0xff]
        %v4322 = vld [vmem:[%s5 + $0xa8] sm:$0xff]
        %v4323 = vld [vmem:[%s5 + $0xb0] sm:$0xff]
        %v4324 = vld [vmem:[%s5 + $0xb8] sm:$0xff]
        %v4325 = vld [vmem:[%s5 + $0xc0] sm:$0xff]
        %v4326 = vld [vmem:[%s5 + $0xc8] sm:$0xff]
        %v4327 = vld [vmem:[%s5 + $0xd0] sm:$0xff]
        %v4328 = vld [vmem:[%s5 + $0xd8] sm:$0xff]
        %v4329 = vld [vmem:[%s5 + $0xe0] sm:$0xff]
        %v4330 = vld [vmem:[%s5 + $0xe8] sm:$0xff]
        %v4331 = vld [vmem:[%s5 + $0xf0] sm:$0xff]
        %v4332 = vld [vmem:[%s5 + $0xf8] sm:$0xff]
        %v4333 = vld [vmem:[%s5 + $0x100] sm:$0xff]
        %v4334 = vld [vmem:[%s5 + $0x108] sm:$0xff]
        %v4335 = vld [vmem:[%s5 + $0x110] sm:$0xff]
        %v4336 = vld [vmem:[%s5 + $0x118] sm:$0xff]
        %v4337 = vld [vmem:[%s5 + $0x120] sm:$0xff]
        %v4338 = vld [vmem:[%s5 + $0x128] sm:$0xff]
        %v4339 = vld [vmem:[%s5 + $0x130] sm:$0xff]
        %v4340 = vld [vmem:[%s5 + $0x138] sm:$0xff]
        %v4341 = vld [vmem:[%s5 + $0x140] sm:$0xff]
        %v4342 = vld [vmem:[%s5 + $0x148] sm:$0xff]
        %v4343 = vld [vmem:[%s5 + $0x150] sm:$0xff]
        %v4344 = vld [vmem:[%s5 + $0x158] sm:$0xff]
        %v4345 = vld [vmem:[%s5 + $0x160] sm:$0xff]
        %v4346 = vld [vmem:[%s5 + $0x168] sm:$0xff]
        %v4347 = vld [vmem:[%s5 + $0x170] sm:$0xff]
        %v4348 = vld [vmem:[%s5 + $0x178] sm:$0xff]
        %v4397 = vunpack.c.l.b16 %v4301
        %v4398 = vunpack.c.h.b16 %v4301
        %v4399 = vunpack.c.l.b16 %v4302
        %v4400 = vunpack.c.h.b16 %v4302
        %v4401 = vunpack.c.l.b16 %v4303
        %v4402 = vunpack.c.h.b16 %v4303
        %v4403 = vunpack.c.l.b16 %v4304
        %v4404 = vunpack.c.h.b16 %v4304
        %v4405 = vunpack.c.l.b16 %v4305
        %v4406 = vunpack.c.h.b16 %v4305
        %v4407 = vunpack.c.l.b16 %v4306
        %v4408 = vunpack.c.h.b16 %v4306
        %v4409 = vunpack.c.l.b16 %v4307
        %v4410 = vunpack.c.h.b16 %v4307
        %v4411 = vunpack.c.l.b16 %v4308
        %v4412 = vunpack.c.h.b16 %v4308
        %v4413 = vunpack.c.l.b16 %v4309
        %v4414 = vunpack.c.h.b16 %v4309
        %v4415 = vunpack.c.l.b16 %v4310
        %v4416 = vunpack.c.h.b16 %v4310
        %v4417 = vunpack.c.l.b16 %v4311
        %v4418 = vunpack.c.h.b16 %v4311
        %v4419 = vunpack.c.l.b16 %v4312
        %v4420 = vunpack.c.h.b16 %v4312
        %v4421 = vunpack.c.l.b16 %v4313
        %v4422 = vunpack.c.h.b16 %v4313
        %v4423 = vunpack.c.l.b16 %v4314
        %v4424 = vunpack.c.h.b16 %v4314
        %v4425 = vunpack.c.l.b16 %v4315
        %v4426 = vunpack.c.h.b16 %v4315
        %v4427 = vunpack.c.l.b16 %v4316
        %v4428 = vunpack.c.h.b16 %v4316
        %v4429 = vunpack.c.l.b16 %v4317
        %v4430 = vunpack.c.h.b16 %v4317
        %v4431 = vunpack.c.l.b16 %v4318
        %v4432 = vunpack.c.h.b16 %v4318
        %v4433 = vunpack.c.l.b16 %v4319
        %v4434 = vunpack.c.h.b16 %v4319
        %v4435 = vunpack.c.l.b16 %v4320
        %v4436 = vunpack.c.h.b16 %v4320
        %v4437 = vunpack.c.l.b16 %v4321
        %v4438 = vunpack.c.h.b16 %v4321
        %v4439 = vunpack.c.l.b16 %v4322
        %v4440 = vunpack.c.h.b16 %v4322
        %v4441 = vunpack.c.l.b16 %v4323
        %v4442 = vunpack.c.h.b16 %v4323
        %v4443 = vunpack.c.l.b16 %v4324
        %v4444 = vunpack.c.h.b16 %v4324
        %v4445 = vunpack.c.l.b16 %v4325
        %v4446 = vunpack.c.h.b16 %v4325
        %v4447 = vunpack.c.l.b16 %v4326
        %v4448 = vunpack.c.h.b16 %v4326
        %v4449 = vunpack.c.l.b16 %v4327
        %v4450 = vunpack.c.h.b16 %v4327
        %v4451 = vunpack.c.l.b16 %v4328
        %v4452 = vunpack.c.h.b16 %v4328
        %v4453 = vunpack.c.l.b16 %v4329
        %v4454 = vunpack.c.h.b16 %v4329
        %v4455 = vunpack.c.l.b16 %v4330
        %v4456 = vunpack.c.h.b16 %v4330
        %v4457 = vunpack.c.l.b16 %v4331
        %v4458 = vunpack.c.h.b16 %v4331
        %v4459 = vunpack.c.l.b16 %v4332
        %v4460 = vunpack.c.h.b16 %v4332
        %v4461 = vunpack.c.l.b16 %v4333
        %v4462 = vunpack.c.h.b16 %v4333
        %v4463 = vunpack.c.l.b16 %v4334
        %v4464 = vunpack.c.h.b16 %v4334
        %v4465 = vunpack.c.l.b16 %v4335
        %v4466 = vunpack.c.h.b16 %v4335
        %v4467 = vunpack.c.l.b16 %v4336
        %v4468 = vunpack.c.h.b16 %v4336
        %v4469 = vunpack.c.l.b16 %v4337
        %v4470 = vunpack.c.h.b16 %v4337
        %v4471 = vunpack.c.l.b16 %v4338
        %v4472 = vunpack.c.h.b16 %v4338
        %v4473 = vunpack.c.l.b16 %v4339
        %v4474 = vunpack.c.h.b16 %v4339
        %v4475 = vunpack.c.l.b16 %v4340
        %v4476 = vunpack.c.h.b16 %v4340
        %v4477 = vunpack.c.l.b16 %v4341
        %v4478 = vunpack.c.h.b16 %v4341
        %v4479 = vunpack.c.l.b16 %v4342
        %v4480 = vunpack.c.h.b16 %v4342
        %v4481 = vunpack.c.l.b16 %v4343
        %v4482 = vunpack.c.h.b16 %v4343
        %v4483 = vunpack.c.l.b16 %v4344
        %v4484 = vunpack.c.h.b16 %v4344
        %v4485 = vunpack.c.l.b16 %v4345
        %v4486 = vunpack.c.h.b16 %v4345
        %v4487 = vunpack.c.l.b16 %v4346
        %v4488 = vunpack.c.h.b16 %v4346
        %v4489 = vunpack.c.l.b16 %v4347
        %v4490 = vunpack.c.h.b16 %v4347
        %v4491 = vunpack.c.l.b16 %v4348
        %v4492 = vunpack.c.h.b16 %v4348
        %v4493 = vpack.c.b16 %v4403, %v4397
        %v4494 = vpack.c.b16 %v4404, %v4398
        %v4495 = vpack.c.b16 %v4405, %v4399
        %v4496 = vpack.c.b16 %v4406, %v4400
        %v4497 = vpack.c.b16 %v4407, %v4401
        %v4498 = vpack.c.b16 %v4408, %v4402
        %v4499 = vpack.c.b16 %v4415, %v4409
        %v4500 = vpack.c.b16 %v4416, %v4410
        %v4501 = vpack.c.b16 %v4417, %v4411
        %v4502 = vpack.c.b16 %v4418, %v4412
        %v4503 = vpack.c.b16 %v4419, %v4413
        %v4504 = vpack.c.b16 %v4420, %v4414
        %v4505 = vpack.c.b16 %v4427, %v4421
        %v4506 = vpack.c.b16 %v4428, %v4422
        %v4507 = vpack.c.b16 %v4429, %v4423
        %v4508 = vpack.c.b16 %v4430, %v4424
        %v4509 = vpack.c.b16 %v4431, %v4425
        %v4510 = vpack.c.b16 %v4432, %v4426
        %v4511 = vpack.c.b16 %v4439, %v4433
        %v4512 = vpack.c.b16 %v4440, %v4434
        %v4513 = vpack.c.b16 %v4441, %v4435
        %v4514 = vpack.c.b16 %v4442, %v4436
        %v4515 = vpack.c.b16 %v4443, %v4437
        %v4516 = vpack.c.b16 %v4444, %v4438
        %v4517 = vpack.c.b16 %v4451, %v4445
        %v4518 = vpack.c.b16 %v4452, %v4446
        %v4519 = vpack.c.b16 %v4453, %v4447
        %v4520 = vpack.c.b16 %v4454, %v4448
        %v4521 = vpack.c.b16 %v4455, %v4449
        %v4522 = vpack.c.b16 %v4456, %v4450
        %v4523 = vpack.c.b16 %v4463, %v4457
        %v4524 = vpack.c.b16 %v4464, %v4458
        %v4525 = vpack.c.b16 %v4465, %v4459
        %v4526 = vpack.c.b16 %v4466, %v4460
        %v4527 = vpack.c.b16 %v4467, %v4461
        %v4528 = vpack.c.b16 %v4468, %v4462
        %v4529 = vpack.c.b16 %v4475, %v4469
        %v4530 = vpack.c.b16 %v4476, %v4470
        %v4531 = vpack.c.b16 %v4477, %v4471
        %v4532 = vpack.c.b16 %v4478, %v4472
        %v4533 = vpack.c.b16 %v4479, %v4473
        %v4534 = vpack.c.b16 %v4480, %v4474
        %v4535 = vpack.c.b16 %v4487, %v4481
        %v4536 = vpack.c.b16 %v4488, %v4482
        %v4537 = vpack.c.b16 %v4489, %v4483
        %v4538 = vpack.c.b16 %v4490, %v4484
        %v4539 = vpack.c.b16 %v4491, %v4485
        %v4540 = vpack.c.b16 %v4492, %v4486
        %4589 = vmatprep.subr.bf16.mxu0 %v4536
        %4590 = vmatpush1.bf16.msra.mxu0 %v4535
        %4591 = vmatprep.subr.bf16.mxu0 %v4530
        %4592 = vmatpush1.bf16.msra.mxu0 %v4529
        %4593 = vmatprep.subr.bf16.mxu0 %v4524
        %4594 = vmatpush1.bf16.msra.mxu0 %v4523
        %4595 = vmatprep.subr.bf16.mxu0 %v4518
        %4596 = vmatpush1.bf16.msra.mxu0 %v4517
        %4597 = vmatprep.subr.bf16.mxu0 %v4512
        %4598 = vmatpush1.bf16.msra.mxu0 %v4511
        %4599 = vmatprep.subr.bf16.mxu0 %v4506
        %4600 = vmatpush1.bf16.msra.mxu0 %v4505
        %4601 = vmatprep.subr.bf16.mxu0 %v4500
        %4602 = vmatpush1.bf16.msra.mxu0 %v4499
        %4603 = vmatprep.subr.bf16.mxu0 %v4494
        %4604 = vmatpush1.bf16.msra.mxu0 %v4493
        %4605 = vmatprep.subr.bf16.mxu0 0
        %4606 = vmatpush2.bf16.msra.mxu0 0
        %4607 = vmatprep.subr.bf16.mxu0 0
        %4608 = vmatpush2.bf16.msra.mxu0 0
        %4609 = vmatprep.subr.bf16.mxu0 0
        %4610 = vmatpush2.bf16.msra.mxu0 0
        %4611 = vmatprep.subr.bf16.mxu0 0
        %4612 = vmatpush2.bf16.msra.mxu0 0
        %4613 = vmatprep.subr.bf16.mxu0 0
        %4614 = vmatpush2.bf16.msra.mxu0 0
        %4615 = vmatprep.subr.bf16.mxu0 0
        %4616 = vmatpush2.bf16.msra.mxu0 0
        %4617 = vmatprep.subr.bf16.mxu0 0
        %4618 = vmatpush2.bf16.msra.mxu0 0
        %4619 = vmatprep.subr.bf16.mxu0 0
        %4620 = vmatpush2.bf16.msra.mxu0 0
        %4621 = vmatprep.mubr.bf16.mxu0 0
        %4622 = vmatmul.mubr.bf16.gmra.mxu0 %v4285
        %v4623 = vpop.f32.mrf.mxu0
        %v4624 = vadd.f32 0.0, %v4623
        %v4625 = vpop.f32.mrf.mxu0
        %v4626 = vadd.f32 0.0, %v4625
        %v4627 = vpop.f32.mrf.mxu0
        %v4628 = vadd.f32 0.0, %v4627
        %v4629 = vpop.f32.mrf.mxu0
        %v4630 = vadd.f32 0.0, %v4629
        %4631 = vmatprep.mubr.bf16.mxu0 0
        %4632 = vmatmul.mubr.bf16.gmra.mxu0 %v4286
        %v4633 = vpop.f32.mrf.mxu0
        %v4634 = vadd.f32 0.0, %v4633
        %v4635 = vpop.f32.mrf.mxu0
        %v4636 = vadd.f32 0.0, %v4635
        %v4637 = vpop.f32.mrf.mxu0
        %v4638 = vadd.f32 0.0, %v4637
        %v4639 = vpop.f32.mrf.mxu0
        %v4640 = vadd.f32 0.0, %v4639
        %4641 = vmatprep.mubr.bf16.mxu0 0
        %4642 = vmatmul.mubr.bf16.gmra.mxu0 %v4287
        %v4643 = vpop.f32.mrf.mxu0
        %v4644 = vadd.f32 0.0, %v4643
        %v4645 = vpop.f32.mrf.mxu0
        %v4646 = vadd.f32 0.0, %v4645
        %v4647 = vpop.f32.mrf.mxu0
        %v4648 = vadd.f32 0.0, %v4647
        %v4649 = vpop.f32.mrf.mxu0
        %v4650 = vadd.f32 0.0, %v4649
        %4651 = vmatprep.mubr.bf16.mxu0 0
        %4652 = vmatmul.mubr.bf16.gmra.mxu0 %v4288
        %v4653 = vpop.f32.mrf.mxu0
        %v4654 = vadd.f32 0.0, %v4653
        %v4655 = vpop.f32.mrf.mxu0
        %v4656 = vadd.f32 0.0, %v4655
        %v4657 = vpop.f32.mrf.mxu0
        %v4658 = vadd.f32 0.0, %v4657
        %v4659 = vpop.f32.mrf.mxu0
        %v4660 = vadd.f32 0.0, %v4659
        %4661 = vmatprep.mubr.bf16.mxu0 0
        %4662 = vmatmul.mubr.bf16.gmra.mxu0 %v4289
        %v4663 = vpop.f32.mrf.mxu0
        %v4664 = vadd.f32 0.0, %v4663
        %v4665 = vpop.f32.mrf.mxu0
        %v4666 = vadd.f32 0.0, %v4665
        %v4667 = vpop.f32.mrf.mxu0
        %v4668 = vadd.f32 0.0, %v4667
        %v4669 = vpop.f32.mrf.mxu0
        %v4670 = vadd.f32 0.0, %v4669
        %4671 = vmatprep.mubr.bf16.mxu0 0
        %4672 = vmatmul.mubr.bf16.gmra.mxu0 %v4290
        %v4673 = vpop.f32.mrf.mxu0
        %v4674 = vadd.f32 0.0, %v4673
        %v4675 = vpop.f32.mrf.mxu0
        %v4676 = vadd.f32 0.0, %v4675
        %v4677 = vpop.f32.mrf.mxu0
        %v4678 = vadd.f32 0.0, %v4677
        %v4679 = vpop.f32.mrf.mxu0
        %v4680 = vadd.f32 0.0, %v4679
        %4681 = vmatprep.mubr.bf16.mxu0 0
        %4682 = vmatmul.mubr.bf16.gmra.mxu0 %v4291
        %v4683 = vpop.f32.mrf.mxu0
        %v4684 = vadd.f32 0.0, %v4683
        %v4685 = vpop.f32.mrf.mxu0
        %v4686 = vadd.f32 0.0, %v4685
        %v4687 = vpop.f32.mrf.mxu0
        %v4688 = vadd.f32 0.0, %v4687
        %v4689 = vpop.f32.mrf.mxu0
        %v4690 = vadd.f32 0.0, %v4689
        %4691 = vmatprep.mubr.bf16.mxu0 0
        %4692 = vmatmul.mubr.bf16.gmra.mxu0 %v4292
        %v4693 = vpop.f32.mrf.mxu0
        %v4694 = vadd.f32 0.0, %v4693
        %v4695 = vpop.f32.mrf.mxu0
        %v4696 = vadd.f32 0.0, %v4695
        %v4697 = vpop.f32.mrf.mxu0
        %v4698 = vadd.f32 0.0, %v4697
        %v4699 = vpop.f32.mrf.mxu0
        %v4700 = vadd.f32 0.0, %v4699
        %4701 = vmatprep.mubr.bf16.mxu0 0
        %4702 = vmatmul.mubr.bf16.gmra.mxu0 %v4293
        %v4703 = vpop.f32.mrf.mxu0
        %v4704 = vadd.f32 0.0, %v4703
        %v4705 = vpop.f32.mrf.mxu0
        %v4706 = vadd.f32 0.0, %v4705
        %v4707 = vpop.f32.mrf.mxu0
        %v4708 = vadd.f32 0.0, %v4707
        %v4709 = vpop.f32.mrf.mxu0
        %v4710 = vadd.f32 0.0, %v4709
        %4711 = vmatprep.mubr.bf16.mxu0 0
        %4712 = vmatmul.mubr.bf16.gmra.mxu0 %v4294
        %v4713 = vpop.f32.mrf.mxu0
        %v4714 = vadd.f32 0.0, %v4713
        %v4715 = vpop.f32.mrf.mxu0
        %v4716 = vadd.f32 0.0, %v4715
        %v4717 = vpop.f32.mrf.mxu0
        %v4718 = vadd.f32 0.0, %v4717
        %v4719 = vpop.f32.mrf.mxu0
        %v4720 = vadd.f32 0.0, %v4719
        %4721 = vmatprep.mubr.bf16.mxu0 0
        %4722 = vmatmul.mubr.bf16.gmra.mxu0 %v4295
        %v4723 = vpop.f32.mrf.mxu0
        %v4724 = vadd.f32 0.0, %v4723
        %v4725 = vpop.f32.mrf.mxu0
        %v4726 = vadd.f32 0.0, %v4725
        %v4727 = vpop.f32.mrf.mxu0
        %v4728 = vadd.f32 0.0, %v4727
        %v4729 = vpop.f32.mrf.mxu0
        %v4730 = vadd.f32 0.0, %v4729
        %4731 = vmatprep.mubr.bf16.mxu0 0
        %4732 = vmatmul.mubr.bf16.gmra.mxu0 %v4296
        %v4733 = vpop.f32.mrf.mxu0
        %v4734 = vadd.f32 0.0, %v4733
        %v4735 = vpop.f32.mrf.mxu0
        %v4736 = vadd.f32 0.0, %v4735
        %v4737 = vpop.f32.mrf.mxu0
        %v4738 = vadd.f32 0.0, %v4737
        %v4739 = vpop.f32.mrf.mxu0
        %v4740 = vadd.f32 0.0, %v4739
        %4741 = vmatprep.mubr.bf16.mxu0 0
        %4742 = vmatmul.mubr.bf16.gmra.mxu0 %v4297
        %v4743 = vpop.f32.mrf.mxu0
        %v4744 = vadd.f32 0.0, %v4743
        %v4745 = vpop.f32.mrf.mxu0
        %v4746 = vadd.f32 0.0, %v4745
        %v4747 = vpop.f32.mrf.mxu0
        %v4748 = vadd.f32 0.0, %v4747
        %v4749 = vpop.f32.mrf.mxu0
        %v4750 = vadd.f32 0.0, %v4749
        %4751 = vmatprep.mubr.bf16.mxu0 0
        %4752 = vmatmul.mubr.bf16.gmra.mxu0 %v4298
        %v4753 = vpop.f32.mrf.mxu0
        %v4754 = vadd.f32 0.0, %v4753
        %v4755 = vpop.f32.mrf.mxu0
        %v4756 = vadd.f32 0.0, %v4755
        %v4757 = vpop.f32.mrf.mxu0
        %v4758 = vadd.f32 0.0, %v4757
        %v4759 = vpop.f32.mrf.mxu0
        %v4760 = vadd.f32 0.0, %v4759
        %4761 = vmatprep.mubr.bf16.mxu0 0
        %4762 = vmatmul.mubr.bf16.gmra.mxu0 %v4299
        %v4763 = vpop.f32.mrf.mxu0
        %v4764 = vadd.f32 0.0, %v4763
        %v4765 = vpop.f32.mrf.mxu0
        %v4766 = vadd.f32 0.0, %v4765
        %v4767 = vpop.f32.mrf.mxu0
        %v4768 = vadd.f32 0.0, %v4767
        %v4769 = vpop.f32.mrf.mxu0
        %v4770 = vadd.f32 0.0, %v4769
        %4771 = vmatprep.mubr.bf16.mxu0 0
        %4772 = vmatmul.mubr.bf16.gmra.mxu0 %v4300
        %v4773 = vpop.f32.mrf.mxu0
        %v4774 = vadd.f32 0.0, %v4773
        %v4775 = vpop.f32.mrf.mxu0
        %v4776 = vadd.f32 0.0, %v4775
        %v4777 = vpop.f32.mrf.mxu0
        %v4778 = vadd.f32 0.0, %v4777
        %v4779 = vpop.f32.mrf.mxu0
        %v4780 = vadd.f32 0.0, %v4779
        %4781 = vdwg.mxu0
        %4782 = vmatprep.subr.bf16.mxu0 %v4538
        %4783 = vmatpush1.bf16.msra.mxu0 %v4537
        %4784 = vmatprep.subr.bf16.mxu0 %v4532
        %4785 = vmatpush1.bf16.msra.mxu0 %v4531
        %4786 = vmatprep.subr.bf16.mxu0 %v4526
        %4787 = vmatpush1.bf16.msra.mxu0 %v4525
        %4788 = vmatprep.subr.bf16.mxu0 %v4520
        %4789 = vmatpush1.bf16.msra.mxu0 %v4519
        %4790 = vmatprep.subr.bf16.mxu0 %v4514
        %4791 = vmatpush1.bf16.msra.mxu0 %v4513
        %4792 = vmatprep.subr.bf16.mxu0 %v4508
        %4793 = vmatpush1.bf16.msra.mxu0 %v4507
        %4794 = vmatprep.subr.bf16.mxu0 %v4502
        %4795 = vmatpush1.bf16.msra.mxu0 %v4501
        %4796 = vmatprep.subr.bf16.mxu0 %v4496
        %4797 = vmatpush1.bf16.msra.mxu0 %v4495
        %4798 = vmatprep.subr.bf16.mxu0 0
        %4799 = vmatpush2.bf16.msra.mxu0 0
        %4800 = vmatprep.subr.bf16.mxu0 0
        %4801 = vmatpush2.bf16.msra.mxu0 0
        %4802 = vmatprep.subr.bf16.mxu0 0
        %4803 = vmatpush2.bf16.msra.mxu0 0
        %4804 = vmatprep.subr.bf16.mxu0 0
        %4805 = vmatpush2.bf16.msra.mxu0 0
        %4806 = vmatprep.subr.bf16.mxu0 0
        %4807 = vmatpush2.bf16.msra.mxu0 0
        %4808 = vmatprep.subr.bf16.mxu0 0
        %4809 = vmatpush2.bf16.msra.mxu0 0
        %4810 = vmatprep.subr.bf16.mxu0 0
        %4811 = vmatpush2.bf16.msra.mxu0 0
        %4812 = vmatprep.subr.bf16.mxu0 0
        %4813 = vmatpush2.bf16.msra.mxu0 0
        %4814 = vmatprep.mubr.bf16.mxu0 0
        %4815 = vmatmul.mubr.bf16.gmra.mxu0 %v4285
        %v4816 = vpop.f32.mrf.mxu0
        %v4817 = vadd.f32 0.0, %v4816
        %v4818 = vpop.f32.mrf.mxu0
        %v4819 = vadd.f32 0.0, %v4818
        %v4820 = vpop.f32.mrf.mxu0
        %v4821 = vadd.f32 0.0, %v4820
        %v4822 = vpop.f32.mrf.mxu0
        %v4823 = vadd.f32 0.0, %v4822
        %4824 = vmatprep.mubr.bf16.mxu0 0
        %4825 = vmatmul.mubr.bf16.gmra.mxu0 %v4286
        %v4826 = vpop.f32.mrf.mxu0
        %v4827 = vadd.f32 0.0, %v4826
        %v4828 = vpop.f32.mrf.mxu0
        %v4829 = vadd.f32 0.0, %v4828
        %v4830 = vpop.f32.mrf.mxu0
        %v4831 = vadd.f32 0.0, %v4830
        %v4832 = vpop.f32.mrf.mxu0
        %v4833 = vadd.f32 0.0, %v4832
        %4834 = vmatprep.mubr.bf16.mxu0 0
        %4835 = vmatmul.mubr.bf16.gmra.mxu0 %v4287
        %v4836 = vpop.f32.mrf.mxu0
        %v4837 = vadd.f32 0.0, %v4836
        %v4838 = vpop.f32.mrf.mxu0
        %v4839 = vadd.f32 0.0, %v4838
        %v4840 = vpop.f32.mrf.mxu0
        %v4841 = vadd.f32 0.0, %v4840
        %v4842 = vpop.f32.mrf.mxu0
        %v4843 = vadd.f32 0.0, %v4842
        %4844 = vmatprep.mubr.bf16.mxu0 0
        %4845 = vmatmul.mubr.bf16.gmra.mxu0 %v4288
        %v4846 = vpop.f32.mrf.mxu0
        %v4847 = vadd.f32 0.0, %v4846
        %v4848 = vpop.f32.mrf.mxu0
        %v4849 = vadd.f32 0.0, %v4848
        %v4850 = vpop.f32.mrf.mxu0
        %v4851 = vadd.f32 0.0, %v4850
        %v4852 = vpop.f32.mrf.mxu0
        %v4853 = vadd.f32 0.0, %v4852
        %4854 = vmatprep.mubr.bf16.mxu0 0
        %4855 = vmatmul.mubr.bf16.gmra.mxu0 %v4289
        %v4856 = vpop.f32.mrf.mxu0
        %v4857 = vadd.f32 0.0, %v4856
        %v4858 = vpop.f32.mrf.mxu0
        %v4859 = vadd.f32 0.0, %v4858
        %v4860 = vpop.f32.mrf.mxu0
        %v4861 = vadd.f32 0.0, %v4860
        %v4862 = vpop.f32.mrf.mxu0
        %v4863 = vadd.f32 0.0, %v4862
        %4864 = vmatprep.mubr.bf16.mxu0 0
        %4865 = vmatmul.mubr.bf16.gmra.mxu0 %v4290
        %v4866 = vpop.f32.mrf.mxu0
        %v4867 = vadd.f32 0.0, %v4866
        %v4868 = vpop.f32.mrf.mxu0
        %v4869 = vadd.f32 0.0, %v4868
        %v4870 = vpop.f32.mrf.mxu0
        %v4871 = vadd.f32 0.0, %v4870
        %v4872 = vpop.f32.mrf.mxu0
        %v4873 = vadd.f32 0.0, %v4872
        %4874 = vmatprep.mubr.bf16.mxu0 0
        %4875 = vmatmul.mubr.bf16.gmra.mxu0 %v4291
        %v4876 = vpop.f32.mrf.mxu0
        %v4877 = vadd.f32 0.0, %v4876
        %v4878 = vpop.f32.mrf.mxu0
        %v4879 = vadd.f32 0.0, %v4878
        %v4880 = vpop.f32.mrf.mxu0
        %v4881 = vadd.f32 0.0, %v4880
        %v4882 = vpop.f32.mrf.mxu0
        %v4883 = vadd.f32 0.0, %v4882
        %4884 = vmatprep.mubr.bf16.mxu0 0
        %4885 = vmatmul.mubr.bf16.gmra.mxu0 %v4292
        %v4886 = vpop.f32.mrf.mxu0
        %v4887 = vadd.f32 0.0, %v4886
        %v4888 = vpop.f32.mrf.mxu0
        %v4889 = vadd.f32 0.0, %v4888
        %v4890 = vpop.f32.mrf.mxu0
        %v4891 = vadd.f32 0.0, %v4890
        %v4892 = vpop.f32.mrf.mxu0
        %v4893 = vadd.f32 0.0, %v4892
        %4894 = vmatprep.mubr.bf16.mxu0 0
        %4895 = vmatmul.mubr.bf16.gmra.mxu0 %v4293
        %v4896 = vpop.f32.mrf.mxu0
        %v4897 = vadd.f32 0.0, %v4896
        %v4898 = vpop.f32.mrf.mxu0
        %v4899 = vadd.f32 0.0, %v4898
        %v4900 = vpop.f32.mrf.mxu0
        %v4901 = vadd.f32 0.0, %v4900
        %v4902 = vpop.f32.mrf.mxu0
        %v4903 = vadd.f32 0.0, %v4902
        %4904 = vmatprep.mubr.bf16.mxu0 0
        %4905 = vmatmul.mubr.bf16.gmra.mxu0 %v4294
        %v4906 = vpop.f32.mrf.mxu0
        %v4907 = vadd.f32 0.0, %v4906
        %v4908 = vpop.f32.mrf.mxu0
        %v4909 = vadd.f32 0.0, %v4908
        %v4910 = vpop.f32.mrf.mxu0
        %v4911 = vadd.f32 0.0, %v4910
        %v4912 = vpop.f32.mrf.mxu0
        %v4913 = vadd.f32 0.0, %v4912
        %4914 = vmatprep.mubr.bf16.mxu0 0
        %4915 = vmatmul.mubr.bf16.gmra.mxu0 %v4295
        %v4916 = vpop.f32.mrf.mxu0
        %v4917 = vadd.f32 0.0, %v4916
        %v4918 = vpop.f32.mrf.mxu0
        %v4919 = vadd.f32 0.0, %v4918
        %v4920 = vpop.f32.mrf.mxu0
        %v4921 = vadd.f32 0.0, %v4920
        %v4922 = vpop.f32.mrf.mxu0
        %v4923 = vadd.f32 0.0, %v4922
        %4924 = vmatprep.mubr.bf16.mxu0 0
        %4925 = vmatmul.mubr.bf16.gmra.mxu0 %v4296
        %v4926 = vpop.f32.mrf.mxu0
        %v4927 = vadd.f32 0.0, %v4926
        %v4928 = vpop.f32.mrf.mxu0
        %v4929 = vadd.f32 0.0, %v4928
        %v4930 = vpop.f32.mrf.mxu0
        %v4931 = vadd.f32 0.0, %v4930
        %v4932 = vpop.f32.mrf.mxu0
        %v4933 = vadd.f32 0.0, %v4932
        %4934 = vmatprep.mubr.bf16.mxu0 0
        %4935 = vmatmul.mubr.bf16.gmra.mxu0 %v4297
        %v4936 = vpop.f32.mrf.mxu0
        %v4937 = vadd.f32 0.0, %v4936
        %v4938 = vpop.f32.mrf.mxu0
        %v4939 = vadd.f32 0.0, %v4938
        %v4940 = vpop.f32.mrf.mxu0
        %v4941 = vadd.f32 0.0, %v4940
        %v4942 = vpop.f32.mrf.mxu0
        %v4943 = vadd.f32 0.0, %v4942
        %4944 = vmatprep.mubr.bf16.mxu0 0
        %4945 = vmatmul.mubr.bf16.gmra.mxu0 %v4298
        %v4946 = vpop.f32.mrf.mxu0
        %v4947 = vadd.f32 0.0, %v4946
        %v4948 = vpop.f32.mrf.mxu0
        %v4949 = vadd.f32 0.0, %v4948
        %v4950 = vpop.f32.mrf.mxu0
        %v4951 = vadd.f32 0.0, %v4950
        %v4952 = vpop.f32.mrf.mxu0
        %v4953 = vadd.f32 0.0, %v4952
        %4954 = vmatprep.mubr.bf16.mxu0 0
        %4955 = vmatmul.mubr.bf16.gmra.mxu0 %v4299
        %v4956 = vpop.f32.mrf.mxu0
        %v4957 = vadd.f32 0.0, %v4956
        %v4958 = vpop.f32.mrf.mxu0
        %v4959 = vadd.f32 0.0, %v4958
        %v4960 = vpop.f32.mrf.mxu0
        %v4961 = vadd.f32 0.0, %v4960
        %v4962 = vpop.f32.mrf.mxu0
        %v4963 = vadd.f32 0.0, %v4962
        %4964 = vmatprep.mubr.bf16.mxu0 0
        %4965 = vmatmul.mubr.bf16.gmra.mxu0 %v4300
        %v4966 = vpop.f32.mrf.mxu0
        %v4967 = vadd.f32 0.0, %v4966
        %v4968 = vpop.f32.mrf.mxu0
        %v4969 = vadd.f32 0.0, %v4968
        %v4970 = vpop.f32.mrf.mxu0
        %v4971 = vadd.f32 0.0, %v4970
        %v4972 = vpop.f32.mrf.mxu0
        %v4973 = vadd.f32 0.0, %v4972
        %4974 = vdwg.mxu0
        %4975 = vmatprep.subr.bf16.mxu0 %v4540
        %4976 = vmatpush1.bf16.msra.mxu0 %v4539
        %4977 = vmatprep.subr.bf16.mxu0 %v4534
        %4978 = vmatpush1.bf16.msra.mxu0 %v4533
        %4979 = vmatprep.subr.bf16.mxu0 %v4528
        %4980 = vmatpush1.bf16.msra.mxu0 %v4527
        %4981 = vmatprep.subr.bf16.mxu0 %v4522
        %4982 = vmatpush1.bf16.msra.mxu0 %v4521
        %4983 = vmatprep.subr.bf16.mxu0 %v4516
        %4984 = vmatpush1.bf16.msra.mxu0 %v4515
        %4985 = vmatprep.subr.bf16.mxu0 %v4510
        %4986 = vmatpush1.bf16.msra.mxu0 %v4509
        %4987 = vmatprep.subr.bf16.mxu0 %v4504
        %4988 = vmatpush1.bf16.msra.mxu0 %v4503
        %4989 = vmatprep.subr.bf16.mxu0 %v4498
        %4990 = vmatpush1.bf16.msra.mxu0 %v4497
        %4991 = vmatprep.subr.bf16.mxu0 0
        %4992 = vmatpush2.bf16.msra.mxu0 0
        %4993 = vmatprep.subr.bf16.mxu0 0
        %4994 = vmatpush2.bf16.msra.mxu0 0
        %4995 = vmatprep.subr.bf16.mxu0 0
        %4996 = vmatpush2.bf16.msra.mxu0 0
        %4997 = vmatprep.subr.bf16.mxu0 0
        %4998 = vmatpush2.bf16.msra.mxu0 0
        %4999 = vmatprep.subr.bf16.mxu0 0
        %5000 = vmatpush2.bf16.msra.mxu0 0
        %5001 = vmatprep.subr.bf16.mxu0 0
        %5002 = vmatpush2.bf16.msra.mxu0 0
        %5003 = vmatprep.subr.bf16.mxu0 0
        %5004 = vmatpush2.bf16.msra.mxu0 0
        %5005 = vmatprep.subr.bf16.mxu0 0
        %5006 = vmatpush2.bf16.msra.mxu0 0
        %5007 = vmatprep.mubr.bf16.mxu0 0
        %5008 = vmatmul.mubr.bf16.gmra.mxu0 %v4285
        %v5009 = vpop.f32.mrf.mxu0
        %v5010 = vadd.f32 0.0, %v5009
        %v5011 = vpop.f32.mrf.mxu0
        %v5012 = vadd.f32 0.0, %v5011
        %v5013 = vpop.f32.mrf.mxu0
        %v5014 = vadd.f32 0.0, %v5013
        %v5015 = vpop.f32.mrf.mxu0
        %v5016 = vadd.f32 0.0, %v5015
        %5017 = vmatprep.mubr.bf16.mxu0 0
        %5018 = vmatmul.mubr.bf16.gmra.mxu0 %v4286
        %v5019 = vpop.f32.mrf.mxu0
        %v5020 = vadd.f32 0.0, %v5019
        %v5021 = vpop.f32.mrf.mxu0
        %v5022 = vadd.f32 0.0, %v5021
        %v5023 = vpop.f32.mrf.mxu0
        %v5024 = vadd.f32 0.0, %v5023
        %v5025 = vpop.f32.mrf.mxu0
        %v5026 = vadd.f32 0.0, %v5025
        %5027 = vmatprep.mubr.bf16.mxu0 0
        %5028 = vmatmul.mubr.bf16.gmra.mxu0 %v4287
        %v5029 = vpop.f32.mrf.mxu0
        %v5030 = vadd.f32 0.0, %v5029
        %v5031 = vpop.f32.mrf.mxu0
        %v5032 = vadd.f32 0.0, %v5031
        %v5033 = vpop.f32.mrf.mxu0
        %v5034 = vadd.f32 0.0, %v5033
        %v5035 = vpop.f32.mrf.mxu0
        %v5036 = vadd.f32 0.0, %v5035
        %5037 = vmatprep.mubr.bf16.mxu0 0
        %5038 = vmatmul.mubr.bf16.gmra.mxu0 %v4288
        %v5039 = vpop.f32.mrf.mxu0
        %v5040 = vadd.f32 0.0, %v5039
        %v5041 = vpop.f32.mrf.mxu0
        %v5042 = vadd.f32 0.0, %v5041
        %v5043 = vpop.f32.mrf.mxu0
        %v5044 = vadd.f32 0.0, %v5043
        %v5045 = vpop.f32.mrf.mxu0
        %v5046 = vadd.f32 0.0, %v5045
        %5047 = vmatprep.mubr.bf16.mxu0 0
        %5048 = vmatmul.mubr.bf16.gmra.mxu0 %v4289
        %v5049 = vpop.f32.mrf.mxu0
        %v5050 = vadd.f32 0.0, %v5049
        %v5051 = vpop.f32.mrf.mxu0
        %v5052 = vadd.f32 0.0, %v5051
        %v5053 = vpop.f32.mrf.mxu0
        %v5054 = vadd.f32 0.0, %v5053
        %v5055 = vpop.f32.mrf.mxu0
        %v5056 = vadd.f32 0.0, %v5055
        %5057 = vmatprep.mubr.bf16.mxu0 0
        %5058 = vmatmul.mubr.bf16.gmra.mxu0 %v4290
        %v5059 = vpop.f32.mrf.mxu0
        %v5060 = vadd.f32 0.0, %v5059
        %v5061 = vpop.f32.mrf.mxu0
        %v5062 = vadd.f32 0.0, %v5061
        %v5063 = vpop.f32.mrf.mxu0
        %v5064 = vadd.f32 0.0, %v5063
        %v5065 = vpop.f32.mrf.mxu0
        %v5066 = vadd.f32 0.0, %v5065
        %5067 = vmatprep.mubr.bf16.mxu0 0
        %5068 = vmatmul.mubr.bf16.gmra.mxu0 %v4291
        %v5069 = vpop.f32.mrf.mxu0
        %v5070 = vadd.f32 0.0, %v5069
        %v5071 = vpop.f32.mrf.mxu0
        %v5072 = vadd.f32 0.0, %v5071
        %v5073 = vpop.f32.mrf.mxu0
        %v5074 = vadd.f32 0.0, %v5073
        %v5075 = vpop.f32.mrf.mxu0
        %v5076 = vadd.f32 0.0, %v5075
        %5077 = vmatprep.mubr.bf16.mxu0 0
        %5078 = vmatmul.mubr.bf16.gmra.mxu0 %v4292
        %v5079 = vpop.f32.mrf.mxu0
        %v5080 = vadd.f32 0.0, %v5079
        %v5081 = vpop.f32.mrf.mxu0
        %v5082 = vadd.f32 0.0, %v5081
        %v5083 = vpop.f32.mrf.mxu0
        %v5084 = vadd.f32 0.0, %v5083
        %v5085 = vpop.f32.mrf.mxu0
        %v5086 = vadd.f32 0.0, %v5085
        %5087 = vmatprep.mubr.bf16.mxu0 0
        %5088 = vmatmul.mubr.bf16.gmra.mxu0 %v4293
        %v5089 = vpop.f32.mrf.mxu0
        %v5090 = vadd.f32 0.0, %v5089
        %v5091 = vpop.f32.mrf.mxu0
        %v5092 = vadd.f32 0.0, %v5091
        %v5093 = vpop.f32.mrf.mxu0
        %v5094 = vadd.f32 0.0, %v5093
        %v5095 = vpop.f32.mrf.mxu0
        %v5096 = vadd.f32 0.0, %v5095
        %5097 = vmatprep.mubr.bf16.mxu0 0
        %5098 = vmatmul.mubr.bf16.gmra.mxu0 %v4294
        %v5099 = vpop.f32.mrf.mxu0
        %v5100 = vadd.f32 0.0, %v5099
        %v5101 = vpop.f32.mrf.mxu0
        %v5102 = vadd.f32 0.0, %v5101
        %v5103 = vpop.f32.mrf.mxu0
        %v5104 = vadd.f32 0.0, %v5103
        %v5105 = vpop.f32.mrf.mxu0
        %v5106 = vadd.f32 0.0, %v5105
        %5107 = vmatprep.mubr.bf16.mxu0 0
        %5108 = vmatmul.mubr.bf16.gmra.mxu0 %v4295
        %v5109 = vpop.f32.mrf.mxu0
        %v5110 = vadd.f32 0.0, %v5109
        %v5111 = vpop.f32.mrf.mxu0
        %v5112 = vadd.f32 0.0, %v5111
        %v5113 = vpop.f32.mrf.mxu0
        %v5114 = vadd.f32 0.0, %v5113
        %v5115 = vpop.f32.mrf.mxu0
        %v5116 = vadd.f32 0.0, %v5115
        %5117 = vmatprep.mubr.bf16.mxu0 0
        %5118 = vmatmul.mubr.bf16.gmra.mxu0 %v4296
        %v5119 = vpop.f32.mrf.mxu0
        %v5120 = vadd.f32 0.0, %v5119
        %v5121 = vpop.f32.mrf.mxu0
        %v5122 = vadd.f32 0.0, %v5121
        %v5123 = vpop.f32.mrf.mxu0
        %v5124 = vadd.f32 0.0, %v5123
        %v5125 = vpop.f32.mrf.mxu0
        %v5126 = vadd.f32 0.0, %v5125
        %5127 = vmatprep.mubr.bf16.mxu0 0
        %5128 = vmatmul.mubr.bf16.gmra.mxu0 %v4297
        %v5129 = vpop.f32.mrf.mxu0
        %v5130 = vadd.f32 0.0, %v5129
        %v5131 = vpop.f32.mrf.mxu0
        %v5132 = vadd.f32 0.0, %v5131
        %v5133 = vpop.f32.mrf.mxu0
        %v5134 = vadd.f32 0.0, %v5133
        %v5135 = vpop.f32.mrf.mxu0
        %v5136 = vadd.f32 0.0, %v5135
        %5137 = vmatprep.mubr.bf16.mxu0 0
        %5138 = vmatmul.mubr.bf16.gmra.mxu0 %v4298
        %v5139 = vpop.f32.mrf.mxu0
        %v5140 = vadd.f32 0.0, %v5139
        %v5141 = vpop.f32.mrf.mxu0
        %v5142 = vadd.f32 0.0, %v5141
        %v5143 = vpop.f32.mrf.mxu0
        %v5144 = vadd.f32 0.0, %v5143
        %v5145 = vpop.f32.mrf.mxu0
        %v5146 = vadd.f32 0.0, %v5145
        %5147 = vmatprep.mubr.bf16.mxu0 0
        %5148 = vmatmul.mubr.bf16.gmra.mxu0 %v4299
        %v5149 = vpop.f32.mrf.mxu0
        %v5150 = vadd.f32 0.0, %v5149
        %v5151 = vpop.f32.mrf.mxu0
        %v5152 = vadd.f32 0.0, %v5151
        %v5153 = vpop.f32.mrf.mxu0
        %v5154 = vadd.f32 0.0, %v5153
        %v5155 = vpop.f32.mrf.mxu0
        %v5156 = vadd.f32 0.0, %v5155
        %5157 = vmatprep.mubr.bf16.mxu0 0
        %5158 = vmatmul.mubr.bf16.gmra.mxu0 %v4300
        %v5159 = vpop.f32.mrf.mxu0
        %v5160 = vadd.f32 0.0, %v5159
        %v5161 = vpop.f32.mrf.mxu0
        %v5162 = vadd.f32 0.0, %v5161
        %v5163 = vpop.f32.mrf.mxu0
        %v5164 = vadd.f32 0.0, %v5163
        %v5165 = vpop.f32.mrf.mxu0
        %v5166 = vadd.f32 0.0, %v5165
        %5167 = vdwg.mxu0
        %v5168 = vld [vmem:[%s6] sm:$0xff]
        %v5169 = vld [vmem:[%s6 + $0x8] sm:$0xf]
        %v5170 = vld [vmem:[%s6 + $0xc] sm:$0xff]
        %v5171 = vld [vmem:[%s6 + $0x14] sm:$0xf]
        %v5172 = vld [vmem:[%s6 + $0x18] sm:$0xff]
        %v5173 = vld [vmem:[%s6 + $0x20] sm:$0xf]
        %v5174 = vld [vmem:[%s6 + $0x24] sm:$0xff]
        %v5175 = vld [vmem:[%s6 + $0x2c] sm:$0xf]
        %v5176 = vld [vmem:[%s6 + $0x30] sm:$0xff]
        %v5177 = vld [vmem:[%s6 + $0x38] sm:$0xf]
        %v5178 = vld [vmem:[%s6 + $0x3c] sm:$0xff]
        %v5179 = vld [vmem:[%s6 + $0x44] sm:$0xf]
        %v5180 = vld [vmem:[%s6 + $0x48] sm:$0xff]
        %v5181 = vld [vmem:[%s6 + $0x50] sm:$0xf]
        %v5182 = vld [vmem:[%s6 + $0x54] sm:$0xff]
        %v5183 = vld [vmem:[%s6 + $0x5c] sm:$0xf]
        %v5184 = vld [vmem:[%s6 + $0x60] sm:$0xff]
        %v5185 = vld [vmem:[%s6 + $0x68] sm:$0xf]
        %v5186 = vld [vmem:[%s6 + $0x6c] sm:$0xff]
        %v5187 = vld [vmem:[%s6 + $0x74] sm:$0xf]
        %v5188 = vld [vmem:[%s6 + $0x78] sm:$0xff]
        %v5189 = vld [vmem:[%s6 + $0x80] sm:$0xf]
        %v5190 = vld [vmem:[%s6 + $0x84] sm:$0xff]
        %v5191 = vld [vmem:[%s6 + $0x8c] sm:$0xf]
        %v5192 = vld [vmem:[%s6 + $0x90] sm:$0xff]
        %v5193 = vld [vmem:[%s6 + $0x98] sm:$0xf]
        %v5194 = vld [vmem:[%s6 + $0x9c] sm:$0xff]
        %v5195 = vld [vmem:[%s6 + $0xa4] sm:$0xf]
        %v5196 = vld [vmem:[%s6 + $0xa8] sm:$0xff]
        %v5197 = vld [vmem:[%s6 + $0xb0] sm:$0xf]
        %v5198 = vld [vmem:[%s6 + $0xb4] sm:$0xff]
        %v5199 = vld [vmem:[%s6 + $0xbc] sm:$0xf]
        %v5200 = vld [vmem:[%s6 + $0xc0] sm:$0xff]
        %v5201 = vld [vmem:[%s6 + $0xc8] sm:$0xf]
        %v5202 = vld [vmem:[%s6 + $0xcc] sm:$0xff]
        %v5203 = vld [vmem:[%s6 + $0xd4] sm:$0xf]
        %v5204 = vld [vmem:[%s6 + $0xd8] sm:$0xff]
        %v5205 = vld [vmem:[%s6 + $0xe0] sm:$0xf]
        %v5206 = vld [vmem:[%s6 + $0xe4] sm:$0xff]
        %v5207 = vld [vmem:[%s6 + $0xec] sm:$0xf]
        %v5208 = vld [vmem:[%s6 + $0xf0] sm:$0xff]
        %v5209 = vld [vmem:[%s6 + $0xf8] sm:$0xf]
        %v5210 = vld [vmem:[%s6 + $0xfc] sm:$0xff]
        %v5211 = vld [vmem:[%s6 + $0x104] sm:$0xf]
        %v5212 = vld [vmem:[%s6 + $0x108] sm:$0xff]
        %v5213 = vld [vmem:[%s6 + $0x110] sm:$0xf]
        %v5214 = vld [vmem:[%s6 + $0x114] sm:$0xff]
        %v5215 = vld [vmem:[%s6 + $0x11c] sm:$0xf]
        %v5216 = vld [vmem:[%s6 + $0x120] sm:$0xff]
        %v5217 = vld [vmem:[%s6 + $0x128] sm:$0xf]
        %v5218 = vld [vmem:[%s6 + $0x12c] sm:$0xff]
        %v5219 = vld [vmem:[%s6 + $0x134] sm:$0xf]
        %v5220 = vld [vmem:[%s6 + $0x138] sm:$0xff]
        %v5221 = vld [vmem:[%s6 + $0x140] sm:$0xf]
        %v5222 = vld [vmem:[%s6 + $0x144] sm:$0xff]
        %v5223 = vld [vmem:[%s6 + $0x14c] sm:$0xf]
        %v5224 = vld [vmem:[%s6 + $0x150] sm:$0xff]
        %v5225 = vld [vmem:[%s6 + $0x158] sm:$0xf]
        %v5226 = vld [vmem:[%s6 + $0x15c] sm:$0xff]
        %v5227 = vld [vmem:[%s6 + $0x164] sm:$0xf]
        %v5228 = vld [vmem:[%s6 + $0x168] sm:$0xff]
        %v5229 = vld [vmem:[%s6 + $0x170] sm:$0xf]
        %v5230 = vld [vmem:[%s6 + $0x174] sm:$0xff]
        %v5231 = vld [vmem:[%s6 + $0x17c] sm:$0xf]
        %v5296 = vunpack.c.l.b16 %v5168
        %v5297 = vunpack.c.h.b16 %v5168
        %v5298 = vunpack.c.l.b16 %v5169
        %v5299 = vunpack.c.l.b16 %v5170
        %v5300 = vunpack.c.h.b16 %v5170
        %v5301 = vunpack.c.l.b16 %v5171
        %v5302 = vunpack.c.l.b16 %v5172
        %v5303 = vunpack.c.h.b16 %v5172
        %v5304 = vunpack.c.l.b16 %v5173
        %v5305 = vunpack.c.l.b16 %v5174
        %v5306 = vunpack.c.h.b16 %v5174
        %v5307 = vunpack.c.l.b16 %v5175
        %v5308 = vunpack.c.l.b16 %v5176
        %v5309 = vunpack.c.h.b16 %v5176
        %v5310 = vunpack.c.l.b16 %v5177
        %v5311 = vunpack.c.l.b16 %v5178
        %v5312 = vunpack.c.h.b16 %v5178
        %v5313 = vunpack.c.l.b16 %v5179
        %v5314 = vunpack.c.l.b16 %v5180
        %v5315 = vunpack.c.h.b16 %v5180
        %v5316 = vunpack.c.l.b16 %v5181
        %v5317 = vunpack.c.l.b16 %v5182
        %v5318 = vunpack.c.h.b16 %v5182
        %v5319 = vunpack.c.l.b16 %v5183
        %v5320 = vunpack.c.l.b16 %v5184
        %v5321 = vunpack.c.h.b16 %v5184
        %v5322 = vunpack.c.l.b16 %v5185
        %v5323 = vunpack.c.l.b16 %v5186
        %v5324 = vunpack.c.h.b16 %v5186
        %v5325 = vunpack.c.l.b16 %v5187
        %v5326 = vunpack.c.l.b16 %v5188
        %v5327 = vunpack.c.h.b16 %v5188
        %v5328 = vunpack.c.l.b16 %v5189
        %v5329 = vunpack.c.l.b16 %v5190
        %v5330 = vunpack.c.h.b16 %v5190
        %v5331 = vunpack.c.l.b16 %v5191
        %v5332 = vunpack.c.l.b16 %v5192
        %v5333 = vunpack.c.h.b16 %v5192
        %v5334 = vunpack.c.l.b16 %v5193
        %v5335 = vunpack.c.l.b16 %v5194
        %v5336 = vunpack.c.h.b16 %v5194
        %v5337 = vunpack.c.l.b16 %v5195
        %v5338 = vunpack.c.l.b16 %v5196
        %v5339 = vunpack.c.h.b16 %v5196
        %v5340 = vunpack.c.l.b16 %v5197
        %v5341 = vunpack.c.l.b16 %v5198
        %v5342 = vunpack.c.h.b16 %v5198
        %v5343 = vunpack.c.l.b16 %v5199
        %v5344 = vunpack.c.l.b16 %v5200
        %v5345 = vunpack.c.h.b16 %v5200
        %v5346 = vunpack.c.l.b16 %v5201
        %v5347 = vunpack.c.l.b16 %v5202
        %v5348 = vunpack.c.h.b16 %v5202
        %v5349 = vunpack.c.l.b16 %v5203
        %v5350 = vunpack.c.l.b16 %v5204
        %v5351 = vunpack.c.h.b16 %v5204
        %v5352 = vunpack.c.l.b16 %v5205
        %v5353 = vunpack.c.l.b16 %v5206
        %v5354 = vunpack.c.h.b16 %v5206
        %v5355 = vunpack.c.l.b16 %v5207
        %v5356 = vunpack.c.l.b16 %v5208
        %v5357 = vunpack.c.h.b16 %v5208
        %v5358 = vunpack.c.l.b16 %v5209
        %v5359 = vunpack.c.l.b16 %v5210
        %v5360 = vunpack.c.h.b16 %v5210
        %v5361 = vunpack.c.l.b16 %v5211
        %v5362 = vunpack.c.l.b16 %v5212
        %v5363 = vunpack.c.h.b16 %v5212
        %v5364 = vunpack.c.l.b16 %v5213
        %v5365 = vunpack.c.l.b16 %v5214
        %v5366 = vunpack.c.h.b16 %v5214
        %v5367 = vunpack.c.l.b16 %v5215
        %v5368 = vunpack.c.l.b16 %v5216
        %v5369 = vunpack.c.h.b16 %v5216
        %v5370 = vunpack.c.l.b16 %v5217
        %v5371 = vunpack.c.l.b16 %v5218
        %v5372 = vunpack.c.h.b16 %v5218
        %v5373 = vunpack.c.l.b16 %v5219
        %v5374 = vunpack.c.l.b16 %v5220
        %v5375 = vunpack.c.h.b16 %v5220
        %v5376 = vunpack.c.l.b16 %v5221
        %v5377 = vunpack.c.l.b16 %v5222
        %v5378 = vunpack.c.h.b16 %v5222
        %v5379 = vunpack.c.l.b16 %v5223
        %v5380 = vunpack.c.l.b16 %v5224
        %v5381 = vunpack.c.h.b16 %v5224
        %v5382 = vunpack.c.l.b16 %v5225
        %v5383 = vunpack.c.l.b16 %v5226
        %v5384 = vunpack.c.h.b16 %v5226
        %v5385 = vunpack.c.l.b16 %v5227
        %v5386 = vunpack.c.l.b16 %v5228
        %v5387 = vunpack.c.h.b16 %v5228
        %v5388 = vunpack.c.l.b16 %v5229
        %v5389 = vunpack.c.l.b16 %v5230
        %v5390 = vunpack.c.h.b16 %v5230
        %v5391 = vunpack.c.l.b16 %v5231
        %v5392 = vpack.c.b16 %v5299, %v5296
        %v5393 = vpack.c.b16 %v5300, %v5297
        %v5394 = vpack.c.b16 %v5301, %v5298
        %v5395 = vpack.c.b16 %v5305, %v5302
        %v5396 = vpack.c.b16 %v5306, %v5303
        %v5397 = vpack.c.b16 %v5307, %v5304
        %v5398 = vpack.c.b16 %v5311, %v5308
        %v5399 = vpack.c.b16 %v5312, %v5309
        %v5400 = vpack.c.b16 %v5313, %v5310
        %v5401 = vpack.c.b16 %v5317, %v5314
        %v5402 = vpack.c.b16 %v5318, %v5315
        %v5403 = vpack.c.b16 %v5319, %v5316
        %v5404 = vpack.c.b16 %v5323, %v5320
        %v5405 = vpack.c.b16 %v5324, %v5321
        %v5406 = vpack.c.b16 %v5325, %v5322
        %v5407 = vpack.c.b16 %v5329, %v5326
        %v5408 = vpack.c.b16 %v5330, %v5327
        %v5409 = vpack.c.b16 %v5331, %v5328
        %v5410 = vpack.c.b16 %v5335, %v5332
        %v5411 = vpack.c.b16 %v5336, %v5333
        %v5412 = vpack.c.b16 %v5337, %v5334
        %v5413 = vpack.c.b16 %v5341, %v5338
        %v5414 = vpack.c.b16 %v5342, %v5339
        %v5415 = vpack.c.b16 %v5343, %v5340
        %v5416 = vpack.c.b16 %v5347, %v5344
        %v5417 = vpack.c.b16 %v5348, %v5345
        %v5418 = vpack.c.b16 %v5349, %v5346
        %v5419 = vpack.c.b16 %v5353, %v5350
        %v5420 = vpack.c.b16 %v5354, %v5351
        %v5421 = vpack.c.b16 %v5355, %v5352
        %v5422 = vpack.c.b16 %v5359, %v5356
        %v5423 = vpack.c.b16 %v5360, %v5357
        %v5424 = vpack.c.b16 %v5361, %v5358
        %v5425 = vpack.c.b16 %v5365, %v5362
        %v5426 = vpack.c.b16 %v5366, %v5363
        %v5427 = vpack.c.b16 %v5367, %v5364
        %v5428 = vpack.c.b16 %v5371, %v5368
        %v5429 = vpack.c.b16 %v5372, %v5369
        %v5430 = vpack.c.b16 %v5373, %v5370
        %v5431 = vpack.c.b16 %v5377, %v5374
        %v5432 = vpack.c.b16 %v5378, %v5375
        %v5433 = vpack.c.b16 %v5379, %v5376
        %v5434 = vpack.c.b16 %v5383, %v5380
        %v5435 = vpack.c.b16 %v5384, %v5381
        %v5436 = vpack.c.b16 %v5385, %v5382
        %v5437 = vpack.c.b16 %v5389, %v5386
        %v5438 = vpack.c.b16 %v5390, %v5387
        %v5439 = vpack.c.b16 %v5391, %v5388
        %5488 = vmatprep.subr.bf16.mxu0 %v5414
        %5489 = vmatpush1.bf16.msra.mxu0 %v5413
        %5490 = vmatprep.subr.bf16.mxu0 %v5411
        %5491 = vmatpush1.bf16.msra.mxu0 %v5410
        %5492 = vmatprep.subr.bf16.mxu0 %v5408
        %5493 = vmatpush1.bf16.msra.mxu0 %v5407
        %5494 = vmatprep.subr.bf16.mxu0 %v5405
        %5495 = vmatpush1.bf16.msra.mxu0 %v5404
        %5496 = vmatprep.subr.bf16.mxu0 %v5402
        %5497 = vmatpush1.bf16.msra.mxu0 %v5401
        %5498 = vmatprep.subr.bf16.mxu0 %v5399
        %5499 = vmatpush1.bf16.msra.mxu0 %v5398
        %5500 = vmatprep.subr.bf16.mxu0 %v5396
        %5501 = vmatpush1.bf16.msra.mxu0 %v5395
        %5502 = vmatprep.subr.bf16.mxu0 %v5393
        %5503 = vmatpush1.bf16.msra.mxu0 %v5392
        %5504 = vmatprep.subr.bf16.mxu0 %v5438
        %5505 = vmatpush2.bf16.msra.mxu0 %v5437
        %5506 = vmatprep.subr.bf16.mxu0 %v5435
        %5507 = vmatpush2.bf16.msra.mxu0 %v5434
        %5508 = vmatprep.subr.bf16.mxu0 %v5432
        %5509 = vmatpush2.bf16.msra.mxu0 %v5431
        %5510 = vmatprep.subr.bf16.mxu0 %v5429
        %5511 = vmatpush2.bf16.msra.mxu0 %v5428
        %5512 = vmatprep.subr.bf16.mxu0 %v5426
        %5513 = vmatpush2.bf16.msra.mxu0 %v5425
        %5514 = vmatprep.subr.bf16.mxu0 %v5423
        %5515 = vmatpush2.bf16.msra.mxu0 %v5422
        %5516 = vmatprep.subr.bf16.mxu0 %v5420
        %5517 = vmatpush2.bf16.msra.mxu0 %v5419
        %5518 = vmatprep.subr.bf16.mxu0 %v5417
        %5519 = vmatpush2.bf16.msra.mxu0 %v5416
        %5520 = vmatprep.mubr.bf16.mxu0 %v4223
        %5521 = vmatmul.mubr.bf16.gmra.mxu0 %v4124
        %v5522 = vpop.f32.mrf.mxu0
        %v5523 = vadd.f32 0.0, %v5522
        %v5524 = vpop.f32.mrf.mxu0
        %v5525 = vadd.f32 0.0, %v5524
        %v5526 = vpop.f32.mrf.mxu0
        %v5527 = vadd.f32 0.0, %v5526
        %v5528 = vpop.f32.mrf.mxu0
        %v5529 = vadd.f32 0.0, %v5528
        %5530 = vmatprep.mubr.bf16.mxu0 %v4227
        %5531 = vmatmul.mubr.bf16.gmra.mxu0 %v4126
        %v5532 = vpop.f32.mrf.mxu0
        %v5533 = vadd.f32 0.0, %v5532
        %v5534 = vpop.f32.mrf.mxu0
        %v5535 = vadd.f32 0.0, %v5534
        %v5536 = vpop.f32.mrf.mxu0
        %v5537 = vadd.f32 0.0, %v5536
        %v5538 = vpop.f32.mrf.mxu0
        %v5539 = vadd.f32 0.0, %v5538
        %5540 = vmatprep.mubr.bf16.mxu0 %v4231
        %5541 = vmatmul.mubr.bf16.gmra.mxu0 %v4128
        %v5542 = vpop.f32.mrf.mxu0
        %v5543 = vadd.f32 0.0, %v5542
        %v5544 = vpop.f32.mrf.mxu0
        %v5545 = vadd.f32 0.0, %v5544
        %v5546 = vpop.f32.mrf.mxu0
        %v5547 = vadd.f32 0.0, %v5546
        %v5548 = vpop.f32.mrf.mxu0
        %v5549 = vadd.f32 0.0, %v5548
        %5550 = vmatprep.mubr.bf16.mxu0 %v4235
        %5551 = vmatmul.mubr.bf16.gmra.mxu0 %v4130
        %v5552 = vpop.f32.mrf.mxu0
        %v5553 = vadd.f32 0.0, %v5552
        %v5554 = vpop.f32.mrf.mxu0
        %v5555 = vadd.f32 0.0, %v5554
        %v5556 = vpop.f32.mrf.mxu0
        %v5557 = vadd.f32 0.0, %v5556
        %v5558 = vpop.f32.mrf.mxu0
        %v5559 = vadd.f32 0.0, %v5558
        %5560 = vmatprep.mubr.bf16.mxu0 %v4239
        %5561 = vmatmul.mubr.bf16.gmra.mxu0 %v4132
        %v5562 = vpop.f32.mrf.mxu0
        %v5563 = vadd.f32 0.0, %v5562
        %v5564 = vpop.f32.mrf.mxu0
        %v5565 = vadd.f32 0.0, %v5564
        %v5566 = vpop.f32.mrf.mxu0
        %v5567 = vadd.f32 0.0, %v5566
        %v5568 = vpop.f32.mrf.mxu0
        %v5569 = vadd.f32 0.0, %v5568
        %5570 = vmatprep.mubr.bf16.mxu0 %v4243
        %5571 = vmatmul.mubr.bf16.gmra.mxu0 %v4134
        %v5572 = vpop.f32.mrf.mxu0
        %v5573 = vadd.f32 0.0, %v5572
        %v5574 = vpop.f32.mrf.mxu0
        %v5575 = vadd.f32 0.0, %v5574
        %v5576 = vpop.f32.mrf.mxu0
        %v5577 = vadd.f32 0.0, %v5576
        %v5578 = vpop.f32.mrf.mxu0
        %v5579 = vadd.f32 0.0, %v5578
        %5580 = vmatprep.mubr.bf16.mxu0 %v4247
        %5581 = vmatmul.mubr.bf16.gmra.mxu0 %v4136
        %v5582 = vpop.f32.mrf.mxu0
        %v5583 = vadd.f32 0.0, %v5582
        %v5584 = vpop.f32.mrf.mxu0
        %v5585 = vadd.f32 0.0, %v5584
        %v5586 = vpop.f32.mrf.mxu0
        %v5587 = vadd.f32 0.0, %v5586
        %v5588 = vpop.f32.mrf.mxu0
        %v5589 = vadd.f32 0.0, %v5588
        %5590 = vmatprep.mubr.bf16.mxu0 %v4251
        %5591 = vmatmul.mubr.bf16.gmra.mxu0 %v4138
        %v5592 = vpop.f32.mrf.mxu0
        %v5593 = vadd.f32 0.0, %v5592
        %v5594 = vpop.f32.mrf.mxu0
        %v5595 = vadd.f32 0.0, %v5594
        %v5596 = vpop.f32.mrf.mxu0
        %v5597 = vadd.f32 0.0, %v5596
        %v5598 = vpop.f32.mrf.mxu0
        %v5599 = vadd.f32 0.0, %v5598
        %5600 = vmatprep.mubr.bf16.mxu0 %v4255
        %5601 = vmatmul.mubr.bf16.gmra.mxu0 %v4140
        %v5602 = vpop.f32.mrf.mxu0
        %v5603 = vadd.f32 0.0, %v5602
        %v5604 = vpop.f32.mrf.mxu0
        %v5605 = vadd.f32 0.0, %v5604
        %v5606 = vpop.f32.mrf.mxu0
        %v5607 = vadd.f32 0.0, %v5606
        %v5608 = vpop.f32.mrf.mxu0
        %v5609 = vadd.f32 0.0, %v5608
        %5610 = vmatprep.mubr.bf16.mxu0 %v4259
        %5611 = vmatmul.mubr.bf16.gmra.mxu0 %v4142
        %v5612 = vpop.f32.mrf.mxu0
        %v5613 = vadd.f32 0.0, %v5612
        %v5614 = vpop.f32.mrf.mxu0
        %v5615 = vadd.f32 0.0, %v5614
        %v5616 = vpop.f32.mrf.mxu0
        %v5617 = vadd.f32 0.0, %v5616
        %v5618 = vpop.f32.mrf.mxu0
        %v5619 = vadd.f32 0.0, %v5618
        %5620 = vmatprep.mubr.bf16.mxu0 %v4263
        %5621 = vmatmul.mubr.bf16.gmra.mxu0 %v4144
        %v5622 = vpop.f32.mrf.mxu0
        %v5623 = vadd.f32 0.0, %v5622
        %v5624 = vpop.f32.mrf.mxu0
        %v5625 = vadd.f32 0.0, %v5624
        %v5626 = vpop.f32.mrf.mxu0
        %v5627 = vadd.f32 0.0, %v5626
        %v5628 = vpop.f32.mrf.mxu0
        %v5629 = vadd.f32 0.0, %v5628
        %5630 = vmatprep.mubr.bf16.mxu0 %v4267
        %5631 = vmatmul.mubr.bf16.gmra.mxu0 %v4146
        %v5632 = vpop.f32.mrf.mxu0
        %v5633 = vadd.f32 0.0, %v5632
        %v5634 = vpop.f32.mrf.mxu0
        %v5635 = vadd.f32 0.0, %v5634
        %v5636 = vpop.f32.mrf.mxu0
        %v5637 = vadd.f32 0.0, %v5636
        %v5638 = vpop.f32.mrf.mxu0
        %v5639 = vadd.f32 0.0, %v5638
        %5640 = vmatprep.mubr.bf16.mxu0 %v4271
        %5641 = vmatmul.mubr.bf16.gmra.mxu0 %v4148
        %v5642 = vpop.f32.mrf.mxu0
        %v5643 = vadd.f32 0.0, %v5642
        %v5644 = vpop.f32.mrf.mxu0
        %v5645 = vadd.f32 0.0, %v5644
        %v5646 = vpop.f32.mrf.mxu0
        %v5647 = vadd.f32 0.0, %v5646
        %v5648 = vpop.f32.mrf.mxu0
        %v5649 = vadd.f32 0.0, %v5648
        %5650 = vmatprep.mubr.bf16.mxu0 %v4275
        %5651 = vmatmul.mubr.bf16.gmra.mxu0 %v4150
        %v5652 = vpop.f32.mrf.mxu0
        %v5653 = vadd.f32 0.0, %v5652
        %v5654 = vpop.f32.mrf.mxu0
        %v5655 = vadd.f32 0.0, %v5654
        %v5656 = vpop.f32.mrf.mxu0
        %v5657 = vadd.f32 0.0, %v5656
        %v5658 = vpop.f32.mrf.mxu0
        %v5659 = vadd.f32 0.0, %v5658
        %5660 = vmatprep.mubr.bf16.mxu0 %v4279
        %5661 = vmatmul.mubr.bf16.gmra.mxu0 %v4152
        %v5662 = vpop.f32.mrf.mxu0
        %v5663 = vadd.f32 0.0, %v5662
        %v5664 = vpop.f32.mrf.mxu0
        %v5665 = vadd.f32 0.0, %v5664
        %v5666 = vpop.f32.mrf.mxu0
        %v5667 = vadd.f32 0.0, %v5666
        %v5668 = vpop.f32.mrf.mxu0
        %v5669 = vadd.f32 0.0, %v5668
        %5670 = vmatprep.mubr.bf16.mxu0 %v4283
        %5671 = vmatmul.mubr.bf16.gmra.mxu0 %v4154
        %v5672 = vpop.f32.mrf.mxu0
        %v5673 = vadd.f32 0.0, %v5672
        %v5674 = vpop.f32.mrf.mxu0
        %v5675 = vadd.f32 0.0, %v5674
        %v5676 = vpop.f32.mrf.mxu0
        %v5677 = vadd.f32 0.0, %v5676
        %v5678 = vpop.f32.mrf.mxu0
        %v5679 = vadd.f32 0.0, %v5678
        %5680 = vdwg.mxu0
        %5681 = vmatprep.subr.bf16.mxu0 0
        %5682 = vmatpush1.bf16.msra.mxu0 %v5415
        %5683 = vmatprep.subr.bf16.mxu0 0
        %5684 = vmatpush1.bf16.msra.mxu0 %v5412
        %5685 = vmatprep.subr.bf16.mxu0 0
        %5686 = vmatpush1.bf16.msra.mxu0 %v5409
        %5687 = vmatprep.subr.bf16.mxu0 0
        %5688 = vmatpush1.bf16.msra.mxu0 %v5406
        %5689 = vmatprep.subr.bf16.mxu0 0
        %5690 = vmatpush1.bf16.msra.mxu0 %v5403
        %5691 = vmatprep.subr.bf16.mxu0 0
        %5692 = vmatpush1.bf16.msra.mxu0 %v5400
        %5693 = vmatprep.subr.bf16.mxu0 0
        %5694 = vmatpush1.bf16.msra.mxu0 %v5397
        %5695 = vmatprep.subr.bf16.mxu0 0
        %5696 = vmatpush1.bf16.msra.mxu0 %v5394
        %5697 = vmatprep.subr.bf16.mxu0 0
        %5698 = vmatpush2.bf16.msra.mxu0 %v5439
        %5699 = vmatprep.subr.bf16.mxu0 0
        %5700 = vmatpush2.bf16.msra.mxu0 %v5436
        %5701 = vmatprep.subr.bf16.mxu0 0
        %5702 = vmatpush2.bf16.msra.mxu0 %v5433
        %5703 = vmatprep.subr.bf16.mxu0 0
        %5704 = vmatpush2.bf16.msra.mxu0 %v5430
        %5705 = vmatprep.subr.bf16.mxu0 0
        %5706 = vmatpush2.bf16.msra.mxu0 %v5427
        %5707 = vmatprep.subr.bf16.mxu0 0
        %5708 = vmatpush2.bf16.msra.mxu0 %v5424
        %5709 = vmatprep.subr.bf16.mxu0 0
        %5710 = vmatpush2.bf16.msra.mxu0 %v5421
        %5711 = vmatprep.subr.bf16.mxu0 0
        %5712 = vmatpush2.bf16.msra.mxu0 %v5418
        %5713 = vmatprep.mubr.bf16.mxu0 %v4223
        %5714 = vmatmul.mubr.bf16.gmra.mxu0 %v4124
        %v5715 = vpop.f32.mrf.mxu0
        %v5716 = vadd.f32 0.0, %v5715
        %v5717 = vpop.f32.mrf.mxu0
        %v5718 = vpop.f32.mrf.mxu0
        %v5719 = vadd.f32 0.0, %v5718
        %v5720 = vpop.f32.mrf.mxu0
        %5721 = vmatprep.mubr.bf16.mxu0 %v4227
        %5722 = vmatmul.mubr.bf16.gmra.mxu0 %v4126
        %v5723 = vpop.f32.mrf.mxu0
        %v5724 = vadd.f32 0.0, %v5723
        %v5725 = vpop.f32.mrf.mxu0
        %v5726 = vpop.f32.mrf.mxu0
        %v5727 = vadd.f32 0.0, %v5726
        %v5728 = vpop.f32.mrf.mxu0
        %5729 = vmatprep.mubr.bf16.mxu0 %v4231
        %5730 = vmatmul.mubr.bf16.gmra.mxu0 %v4128
        %v5731 = vpop.f32.mrf.mxu0
        %v5732 = vadd.f32 0.0, %v5731
        %v5733 = vpop.f32.mrf.mxu0
        %v5734 = vpop.f32.mrf.mxu0
        %v5735 = vadd.f32 0.0, %v5734
        %v5736 = vpop.f32.mrf.mxu0
        %5737 = vmatprep.mubr.bf16.mxu0 %v4235
        %5738 = vmatmul.mubr.bf16.gmra.mxu0 %v4130
        %v5739 = vpop.f32.mrf.mxu0
        %v5740 = vadd.f32 0.0, %v5739
        %v5741 = vpop.f32.mrf.mxu0
        %v5742 = vpop.f32.mrf.mxu0
        %v5743 = vadd.f32 0.0, %v5742
        %v5744 = vpop.f32.mrf.mxu0
        %5745 = vmatprep.mubr.bf16.mxu0 %v4239
        %5746 = vmatmul.mubr.bf16.gmra.mxu0 %v4132
        %v5747 = vpop.f32.mrf.mxu0
        %v5748 = vadd.f32 0.0, %v5747
        %v5749 = vpop.f32.mrf.mxu0
        %v5750 = vpop.f32.mrf.mxu0
        %v5751 = vadd.f32 0.0, %v5750
        %v5752 = vpop.f32.mrf.mxu0
        %5753 = vmatprep.mubr.bf16.mxu0 %v4243
        %5754 = vmatmul.mubr.bf16.gmra.mxu0 %v4134
        %v5755 = vpop.f32.mrf.mxu0
        %v5756 = vadd.f32 0.0, %v5755
        %v5757 = vpop.f32.mrf.mxu0
        %v5758 = vpop.f32.mrf.mxu0
        %v5759 = vadd.f32 0.0, %v5758
        %v5760 = vpop.f32.mrf.mxu0
        %5761 = vmatprep.mubr.bf16.mxu0 %v4247
        %5762 = vmatmul.mubr.bf16.gmra.mxu0 %v4136
        %v5763 = vpop.f32.mrf.mxu0
        %v5764 = vadd.f32 0.0, %v5763
        %v5765 = vpop.f32.mrf.mxu0
        %v5766 = vpop.f32.mrf.mxu0
        %v5767 = vadd.f32 0.0, %v5766
        %v5768 = vpop.f32.mrf.mxu0
        %5769 = vmatprep.mubr.bf16.mxu0 %v4251
        %5770 = vmatmul.mubr.bf16.gmra.mxu0 %v4138
        %v5771 = vpop.f32.mrf.mxu0
        %v5772 = vadd.f32 0.0, %v5771
        %v5773 = vpop.f32.mrf.mxu0
        %v5774 = vpop.f32.mrf.mxu0
        %v5775 = vadd.f32 0.0, %v5774
        %v5776 = vpop.f32.mrf.mxu0
        %5777 = vmatprep.mubr.bf16.mxu0 %v4255
        %5778 = vmatmul.mubr.bf16.gmra.mxu0 %v4140
        %v5779 = vpop.f32.mrf.mxu0
        %v5780 = vadd.f32 0.0, %v5779
        %v5781 = vpop.f32.mrf.mxu0
        %v5782 = vpop.f32.mrf.mxu0
        %v5783 = vadd.f32 0.0, %v5782
        %v5784 = vpop.f32.mrf.mxu0
        %5785 = vmatprep.mubr.bf16.mxu0 %v4259
        %5786 = vmatmul.mubr.bf16.gmra.mxu0 %v4142
        %v5787 = vpop.f32.mrf.mxu0
        %v5788 = vadd.f32 0.0, %v5787
        %v5789 = vpop.f32.mrf.mxu0
        %v5790 = vpop.f32.mrf.mxu0
        %v5791 = vadd.f32 0.0, %v5790
        %v5792 = vpop.f32.mrf.mxu0
        %5793 = vmatprep.mubr.bf16.mxu0 %v4263
        %5794 = vmatmul.mubr.bf16.gmra.mxu0 %v4144
        %v5795 = vpop.f32.mrf.mxu0
        %v5796 = vadd.f32 0.0, %v5795
        %v5797 = vpop.f32.mrf.mxu0
        %v5798 = vpop.f32.mrf.mxu0
        %v5799 = vadd.f32 0.0, %v5798
        %v5800 = vpop.f32.mrf.mxu0
        %5801 = vmatprep.mubr.bf16.mxu0 %v4267
        %5802 = vmatmul.mubr.bf16.gmra.mxu0 %v4146
        %v5803 = vpop.f32.mrf.mxu0
        %v5804 = vadd.f32 0.0, %v5803
        %v5805 = vpop.f32.mrf.mxu0
        %v5806 = vpop.f32.mrf.mxu0
        %v5807 = vadd.f32 0.0, %v5806
        %v5808 = vpop.f32.mrf.mxu0
        %5809 = vmatprep.mubr.bf16.mxu0 %v4271
        %5810 = vmatmul.mubr.bf16.gmra.mxu0 %v4148
        %v5811 = vpop.f32.mrf.mxu0
        %v5812 = vadd.f32 0.0, %v5811
        %v5813 = vpop.f32.mrf.mxu0
        %v5814 = vpop.f32.mrf.mxu0
        %v5815 = vadd.f32 0.0, %v5814
        %v5816 = vpop.f32.mrf.mxu0
        %5817 = vmatprep.mubr.bf16.mxu0 %v4275
        %5818 = vmatmul.mubr.bf16.gmra.mxu0 %v4150
        %v5819 = vpop.f32.mrf.mxu0
        %v5820 = vadd.f32 0.0, %v5819
        %v5821 = vpop.f32.mrf.mxu0
        %v5822 = vpop.f32.mrf.mxu0
        %v5823 = vadd.f32 0.0, %v5822
        %v5824 = vpop.f32.mrf.mxu0
        %5825 = vmatprep.mubr.bf16.mxu0 %v4279
        %5826 = vmatmul.mubr.bf16.gmra.mxu0 %v4152
        %v5827 = vpop.f32.mrf.mxu0
        %v5828 = vadd.f32 0.0, %v5827
        %v5829 = vpop.f32.mrf.mxu0
        %v5830 = vpop.f32.mrf.mxu0
        %v5831 = vadd.f32 0.0, %v5830
        %v5832 = vpop.f32.mrf.mxu0
        %5833 = vmatprep.mubr.bf16.mxu0 %v4283
        %5834 = vmatmul.mubr.bf16.gmra.mxu0 %v4154
        %v5835 = vpop.f32.mrf.mxu0
        %v5836 = vadd.f32 0.0, %v5835
        %v5837 = vpop.f32.mrf.mxu0
        %v5838 = vpop.f32.mrf.mxu0
        %v5839 = vadd.f32 0.0, %v5838
        %v5840 = vpop.f32.mrf.mxu0
        %5841 = vdwg.mxu0
        %v5842 = vadd.f32 %v4624, %v5523
        %v5843 = vadd.f32 %v4626, %v5525
        %v5844 = vadd.f32 %v4817, %v5716
        %v5845 = vadd.f32 %v4628, %v5527
        %v5846 = vadd.f32 %v4630, %v5529
        %v5847 = vadd.f32 %v4821, %v5719
        %v5848 = vadd.f32 %v4634, %v5533
        %v5849 = vadd.f32 %v4636, %v5535
        %v5850 = vadd.f32 %v4827, %v5724
        %v5851 = vadd.f32 %v4638, %v5537
        %v5852 = vadd.f32 %v4640, %v5539
        %v5853 = vadd.f32 %v4831, %v5727
        %v5854 = vadd.f32 %v4644, %v5543
        %v5855 = vadd.f32 %v4646, %v5545
        %v5856 = vadd.f32 %v4837, %v5732
        %v5857 = vadd.f32 %v4648, %v5547
        %v5858 = vadd.f32 %v4650, %v5549
        %v5859 = vadd.f32 %v4841, %v5735
        %v5860 = vadd.f32 %v4654, %v5553
        %v5861 = vadd.f32 %v4656, %v5555
        %v5862 = vadd.f32 %v4847, %v5740
        %v5863 = vadd.f32 %v4658, %v5557
        %v5864 = vadd.f32 %v4660, %v5559
        %v5865 = vadd.f32 %v4851, %v5743
        %v5866 = vadd.f32 %v4664, %v5563
        %v5867 = vadd.f32 %v4666, %v5565
        %v5868 = vadd.f32 %v4857, %v5748
        %v5869 = vadd.f32 %v4668, %v5567
        %v5870 = vadd.f32 %v4670, %v5569
        %v5871 = vadd.f32 %v4861, %v5751
        %v5872 = vadd.f32 %v4674, %v5573
        %v5873 = vadd.f32 %v4676, %v5575
        %v5874 = vadd.f32 %v4867, %v5756
        %v5875 = vadd.f32 %v4678, %v5577
        %v5876 = vadd.f32 %v4680, %v5579
        %v5877 = vadd.f32 %v4871, %v5759
        %v5878 = vadd.f32 %v4684, %v5583
        %v5879 = vadd.f32 %v4686, %v5585
        %v5880 = vadd.f32 %v4877, %v5764
        %v5881 = vadd.f32 %v4688, %v5587
        %v5882 = vadd.f32 %v4690, %v5589
        %v5883 = vadd.f32 %v4881, %v5767
        %v5884 = vadd.f32 %v4694, %v5593
        %v5885 = vadd.f32 %v4696, %v5595
        %v5886 = vadd.f32 %v4887, %v5772
        %v5887 = vadd.f32 %v4698, %v5597
        %v5888 = vadd.f32 %v4700, %v5599
        %v5889 = vadd.f32 %v4891, %v5775
        %v5890 = vadd.f32 %v4704, %v5603
        %v5891 = vadd.f32 %v4706, %v5605
        %v5892 = vadd.f32 %v4897, %v5780
        %v5893 = vadd.f32 %v4708, %v5607
        %v5894 = vadd.f32 %v4710, %v5609
        %v5895 = vadd.f32 %v4901, %v5783
        %v5896 = vadd.f32 %v4714, %v5613
        %v5897 = vadd.f32 %v4716, %v5615
        %v5898 = vadd.f32 %v4907, %v5788
        %v5899 = vadd.f32 %v4718, %v5617
        %v5900 = vadd.f32 %v4720, %v5619
        %v5901 = vadd.f32 %v4911, %v5791
        %v5902 = vadd.f32 %v4724, %v5623
        %v5903 = vadd.f32 %v4726, %v5625
        %v5904 = vadd.f32 %v4917, %v5796
        %v5905 = vadd.f32 %v4728, %v5627
        %v5906 = vadd.f32 %v4730, %v5629
        %v5907 = vadd.f32 %v4921, %v5799
        %v5908 = vadd.f32 %v4734, %v5633
        %v5909 = vadd.f32 %v4736, %v5635
        %v5910 = vadd.f32 %v4927, %v5804
        %v5911 = vadd.f32 %v4738, %v5637
        %v5912 = vadd.f32 %v4740, %v5639
        %v5913 = vadd.f32 %v4931, %v5807
        %v5914 = vadd.f32 %v4744, %v5643
        %v5915 = vadd.f32 %v4746, %v5645
        %v5916 = vadd.f32 %v4937, %v5812
        %v5917 = vadd.f32 %v4748, %v5647
        %v5918 = vadd.f32 %v4750, %v5649
        %v5919 = vadd.f32 %v4941, %v5815
        %v5920 = vadd.f32 %v4754, %v5653
        %v5921 = vadd.f32 %v4756, %v5655
        %v5922 = vadd.f32 %v4947, %v5820
        %v5923 = vadd.f32 %v4758, %v5657
        %v5924 = vadd.f32 %v4760, %v5659
        %v5925 = vadd.f32 %v4951, %v5823
        %v5926 = vadd.f32 %v4764, %v5663
        %v5927 = vadd.f32 %v4766, %v5665
        %v5928 = vadd.f32 %v4957, %v5828
        %v5929 = vadd.f32 %v4768, %v5667
        %v5930 = vadd.f32 %v4770, %v5669
        %v5931 = vadd.f32 %v4961, %v5831
        %v5932 = vadd.f32 %v4774, %v5673
        %v5933 = vadd.f32 %v4776, %v5675
        %v5934 = vadd.f32 %v4967, %v5836
        %v5935 = vadd.f32 %v4778, %v5677
        %v5936 = vadd.f32 %v4780, %v5679
        %v5937 = vadd.f32 %v4971, %v5839
        %v5938 = vld [vmem:[%s7] sm:$0x7]
        %v5940 = vlaneseq
        %v5941 = vshrl.u32 %v5940, 7
        %v5942 = vsub.s32 0, %v5941
        %v5943 = vrot.slane %v5938, %v5942
        %v5944 = vlaneseq
        %v5945 = vshrl.u32 %v5944, 7
        %v5946 = vsub.s32 1, %v5945
        %v5947 = vrot.slane %v5938, %v5946
        %v5948 = vlaneseq
        %v5949 = vshrl.u32 %v5948, 7
        %v5950 = vsub.s32 2, %v5949
        %v5951 = vrot.slane %v5938, %v5950
        %v5955 = vadd.f32 %v5842, %v5943
        %v5956 = vadd.f32 %v5843, %v5947
        %v5957 = vadd.f32 %v5844, %v5951
        %v5958 = vadd.f32 %v5845, %v5943
        %v5959 = vadd.f32 %v5846, %v5947
        %v5960 = vadd.f32 %v5847, %v5951
        %v5961 = vadd.f32 %v5848, %v5943
        %v5962 = vadd.f32 %v5849, %v5947
        %v5963 = vadd.f32 %v5850, %v5951
        %v5964 = vadd.f32 %v5851, %v5943
        %v5965 = vadd.f32 %v5852, %v5947
        %v5966 = vadd.f32 %v5853, %v5951
        %v5967 = vadd.f32 %v5854, %v5943
        %v5968 = vadd.f32 %v5855, %v5947
        %v5969 = vadd.f32 %v5856, %v5951
        %v5970 = vadd.f32 %v5857, %v5943
        %v5971 = vadd.f32 %v5858, %v5947
        %v5972 = vadd.f32 %v5859, %v5951
        %v5973 = vadd.f32 %v5860, %v5943
        %v5974 = vadd.f32 %v5861, %v5947
        %v5975 = vadd.f32 %v5862, %v5951
        %v5976 = vadd.f32 %v5863, %v5943
        %v5977 = vadd.f32 %v5864, %v5947
        %v5978 = vadd.f32 %v5865, %v5951
        %v5979 = vadd.f32 %v5866, %v5943
        %v5980 = vadd.f32 %v5867, %v5947
        %v5981 = vadd.f32 %v5868, %v5951
        %v5982 = vadd.f32 %v5869, %v5943
        %v5983 = vadd.f32 %v5870, %v5947
        %v5984 = vadd.f32 %v5871, %v5951
        %v5985 = vadd.f32 %v5872, %v5943
        %v5986 = vadd.f32 %v5873, %v5947
        %v5987 = vadd.f32 %v5874, %v5951
        %v5988 = vadd.f32 %v5875, %v5943
        %v5989 = vadd.f32 %v5876, %v5947
        %v5990 = vadd.f32 %v5877, %v5951
        %v5991 = vadd.f32 %v5878, %v5943
        %v5992 = vadd.f32 %v5879, %v5947
        %v5993 = vadd.f32 %v5880, %v5951
        %v5994 = vadd.f32 %v5881, %v5943
        %v5995 = vadd.f32 %v5882, %v5947
        %v5996 = vadd.f32 %v5883, %v5951
        %v5997 = vadd.f32 %v5884, %v5943
        %v5998 = vadd.f32 %v5885, %v5947
        %v5999 = vadd.f32 %v5886, %v5951
        %v6000 = vadd.f32 %v5887, %v5943
        %v6001 = vadd.f32 %v5888, %v5947
        %v6002 = vadd.f32 %v5889, %v5951
        %v6003 = vadd.f32 %v5890, %v5943
        %v6004 = vadd.f32 %v5891, %v5947
        %v6005 = vadd.f32 %v5892, %v5951
        %v6006 = vadd.f32 %v5893, %v5943
        %v6007 = vadd.f32 %v5894, %v5947
        %v6008 = vadd.f32 %v5895, %v5951
        %v6009 = vadd.f32 %v5896, %v5943
        %v6010 = vadd.f32 %v5897, %v5947
        %v6011 = vadd.f32 %v5898, %v5951
        %v6012 = vadd.f32 %v5899, %v5943
        %v6013 = vadd.f32 %v5900, %v5947
        %v6014 = vadd.f32 %v5901, %v5951
        %v6015 = vadd.f32 %v5902, %v5943
        %v6016 = vadd.f32 %v5903, %v5947
        %v6017 = vadd.f32 %v5904, %v5951
        %v6018 = vadd.f32 %v5905, %v5943
        %v6019 = vadd.f32 %v5906, %v5947
        %v6020 = vadd.f32 %v5907, %v5951
        %v6021 = vadd.f32 %v5908, %v5943
        %v6022 = vadd.f32 %v5909, %v5947
        %v6023 = vadd.f32 %v5910, %v5951
        %v6024 = vadd.f32 %v5911, %v5943
        %v6025 = vadd.f32 %v5912, %v5947
        %v6026 = vadd.f32 %v5913, %v5951
        %v6027 = vadd.f32 %v5914, %v5943
        %v6028 = vadd.f32 %v5915, %v5947
        %v6029 = vadd.f32 %v5916, %v5951
        %v6030 = vadd.f32 %v5917, %v5943
        %v6031 = vadd.f32 %v5918, %v5947
        %v6032 = vadd.f32 %v5919, %v5951
        %v6033 = vadd.f32 %v5920, %v5943
        %v6034 = vadd.f32 %v5921, %v5947
        %v6035 = vadd.f32 %v5922, %v5951
        %v6036 = vadd.f32 %v5923, %v5943
        %v6037 = vadd.f32 %v5924, %v5947
        %v6038 = vadd.f32 %v5925, %v5951
        %v6039 = vadd.f32 %v5926, %v5943
        %v6040 = vadd.f32 %v5927, %v5947
        %v6041 = vadd.f32 %v5928, %v5951
        %v6042 = vadd.f32 %v5929, %v5943
        %v6043 = vadd.f32 %v5930, %v5947
        %v6044 = vadd.f32 %v5931, %v5951
        %v6045 = vadd.f32 %v5932, %v5943
        %v6046 = vadd.f32 %v5933, %v5947
        %v6047 = vadd.f32 %v5934, %v5951
        %v6048 = vadd.f32 %v5935, %v5943
        %v6049 = vadd.f32 %v5936, %v5947
        %v6050 = vadd.f32 %v5937, %v5951
        %v6051 = vld [vmem:[%s8] sm:$0x7]
        %v6053 = vlaneseq
        %v6054 = vshrl.u32 %v6053, 7
        %v6055 = vsub.s32 0, %v6054
        %v6056 = vrot.slane %v6051, %v6055
        %v6057 = vlaneseq
        %v6058 = vshrl.u32 %v6057, 7
        %v6059 = vsub.s32 1, %v6058
        %v6060 = vrot.slane %v6051, %v6059
        %v6061 = vlaneseq
        %v6062 = vshrl.u32 %v6061, 7
        %v6063 = vsub.s32 2, %v6062
        %v6064 = vrot.slane %v6051, %v6063
        %v6068 = vadd.f32 %v4819, %v6056
        %v6069 = vadd.f32 %v5010, %v6060
        %v6070 = vadd.f32 %v5012, %v6064
        %v6071 = vadd.f32 %v4823, %v6056
        %v6072 = vadd.f32 %v5014, %v6060
        %v6073 = vadd.f32 %v5016, %v6064
        %v6074 = vadd.f32 %v4829, %v6056
        %v6075 = vadd.f32 %v5020, %v6060
        %v6076 = vadd.f32 %v5022, %v6064
        %v6077 = vadd.f32 %v4833, %v6056
        %v6078 = vadd.f32 %v5024, %v6060
        %v6079 = vadd.f32 %v5026, %v6064
        %v6080 = vadd.f32 %v4839, %v6056
        %v6081 = vadd.f32 %v5030, %v6060
        %v6082 = vadd.f32 %v5032, %v6064
        %v6083 = vadd.f32 %v4843, %v6056
        %v6084 = vadd.f32 %v5034, %v6060
        %v6085 = vadd.f32 %v5036, %v6064
        %v6086 = vadd.f32 %v4849, %v6056
        %v6087 = vadd.f32 %v5040, %v6060
        %v6088 = vadd.f32 %v5042, %v6064
        %v6089 = vadd.f32 %v4853, %v6056
        %v6090 = vadd.f32 %v5044, %v6060
        %v6091 = vadd.f32 %v5046, %v6064
        %v6092 = vadd.f32 %v4859, %v6056
        %v6093 = vadd.f32 %v5050, %v6060
        %v6094 = vadd.f32 %v5052, %v6064
        %v6095 = vadd.f32 %v4863, %v6056
        %v6096 = vadd.f32 %v5054, %v6060
        %v6097 = vadd.f32 %v5056, %v6064
        %v6098 = vadd.f32 %v4869, %v6056
        %v6099 = vadd.f32 %v5060, %v6060
        %v6100 = vadd.f32 %v5062, %v6064
        %v6101 = vadd.f32 %v4873, %v6056
        %v6102 = vadd.f32 %v5064, %v6060
        %v6103 = vadd.f32 %v5066, %v6064
        %v6104 = vadd.f32 %v4879, %v6056
        %v6105 = vadd.f32 %v5070, %v6060
        %v6106 = vadd.f32 %v5072, %v6064
        %v6107 = vadd.f32 %v4883, %v6056
        %v6108 = vadd.f32 %v5074, %v6060
        %v6109 = vadd.f32 %v5076, %v6064
        %v6110 = vadd.f32 %v4889, %v6056
        %v6111 = vadd.f32 %v5080, %v6060
        %v6112 = vadd.f32 %v5082, %v6064
        %v6113 = vadd.f32 %v4893, %v6056
        %v6114 = vadd.f32 %v5084, %v6060
        %v6115 = vadd.f32 %v5086, %v6064
        %v6116 = vadd.f32 %v4899, %v6056
        %v6117 = vadd.f32 %v5090, %v6060
        %v6118 = vadd.f32 %v5092, %v6064
        %v6119 = vadd.f32 %v4903, %v6056
        %v6120 = vadd.f32 %v5094, %v6060
        %v6121 = vadd.f32 %v5096, %v6064
        %v6122 = vadd.f32 %v4909, %v6056
        %v6123 = vadd.f32 %v5100, %v6060
        %v6124 = vadd.f32 %v5102, %v6064
        %v6125 = vadd.f32 %v4913, %v6056
        %v6126 = vadd.f32 %v5104, %v6060
        %v6127 = vadd.f32 %v5106, %v6064
        %v6128 = vadd.f32 %v4919, %v6056
        %v6129 = vadd.f32 %v5110, %v6060
        %v6130 = vadd.f32 %v5112, %v6064
        %v6131 = vadd.f32 %v4923, %v6056
        %v6132 = vadd.f32 %v5114, %v6060
        %v6133 = vadd.f32 %v5116, %v6064
        %v6134 = vadd.f32 %v4929, %v6056
        %v6135 = vadd.f32 %v5120, %v6060
        %v6136 = vadd.f32 %v5122, %v6064
        %v6137 = vadd.f32 %v4933, %v6056
        %v6138 = vadd.f32 %v5124, %v6060
        %v6139 = vadd.f32 %v5126, %v6064
        %v6140 = vadd.f32 %v4939, %v6056
        %v6141 = vadd.f32 %v5130, %v6060
        %v6142 = vadd.f32 %v5132, %v6064
        %v6143 = vadd.f32 %v4943, %v6056
        %v6144 = vadd.f32 %v5134, %v6060
        %v6145 = vadd.f32 %v5136, %v6064
        %v6146 = vadd.f32 %v4949, %v6056
        %v6147 = vadd.f32 %v5140, %v6060
        %v6148 = vadd.f32 %v5142, %v6064
        %v6149 = vadd.f32 %v4953, %v6056
        %v6150 = vadd.f32 %v5144, %v6060
        %v6151 = vadd.f32 %v5146, %v6064
        %v6152 = vadd.f32 %v4959, %v6056
        %v6153 = vadd.f32 %v5150, %v6060
        %v6154 = vadd.f32 %v5152, %v6064
        %v6155 = vadd.f32 %v4963, %v6056
        %v6156 = vadd.f32 %v5154, %v6060
        %v6157 = vadd.f32 %v5156, %v6064
        %v6158 = vadd.f32 %v4969, %v6056
        %v6159 = vadd.f32 %v5160, %v6060
        %v6160 = vadd.f32 %v5162, %v6064
        %v6161 = vadd.f32 %v4973, %v6056
        %v6162 = vadd.f32 %v5164, %v6060
        %v6163 = vadd.f32 %v5166, %v6064
        %v6164 = vadd.f32 %v5955, %v6068
        %v6165 = vadd.f32 %v5958, %v6071
        %v6166 = vadd.f32 %v5961, %v6074
        %v6167 = vadd.f32 %v5964, %v6077
        %v6168 = vadd.f32 %v5967, %v6080
        %v6169 = vadd.f32 %v5970, %v6083
        %v6170 = vadd.f32 %v5973, %v6086
        %v6171 = vadd.f32 %v5976, %v6089
        %v6172 = vadd.f32 %v5979, %v6092
        %v6173 = vadd.f32 %v5982, %v6095
        %v6174 = vadd.f32 %v5985, %v6098
        %v6175 = vadd.f32 %v5988, %v6101
        %v6176 = vadd.f32 %v5991, %v6104
        %v6177 = vadd.f32 %v5994, %v6107
        %v6178 = vadd.f32 %v5997, %v6110
        %v6179 = vadd.f32 %v6000, %v6113
        %v6180 = vadd.f32 %v6003, %v6116
        %v6181 = vadd.f32 %v6006, %v6119
        %v6182 = vadd.f32 %v6009, %v6122
        %v6183 = vadd.f32 %v6012, %v6125
        %v6184 = vadd.f32 %v6015, %v6128
        %v6185 = vadd.f32 %v6018, %v6131
        %v6186 = vadd.f32 %v6021, %v6134
        %v6187 = vadd.f32 %v6024, %v6137
        %v6188 = vadd.f32 %v6027, %v6140
        %v6189 = vadd.f32 %v6030, %v6143
        %v6190 = vadd.f32 %v6033, %v6146
        %v6191 = vadd.f32 %v6036, %v6149
        %v6192 = vadd.f32 %v6039, %v6152
        %v6193 = vadd.f32 %v6042, %v6155
        %v6194 = vadd.f32 %v6045, %v6158
        %v6195 = vadd.f32 %v6048, %v6161
        %v6196 = vxor.u32 %v6164, 2147483648
        %v6197 = vxor.u32 %v6165, 2147483648
        %v6198 = vxor.u32 %v6166, 2147483648
        %v6199 = vxor.u32 %v6167, 2147483648
        %v6200 = vxor.u32 %v6168, 2147483648
        %v6201 = vxor.u32 %v6169, 2147483648
        %v6202 = vxor.u32 %v6170, 2147483648
        %v6203 = vxor.u32 %v6171, 2147483648
        %v6204 = vxor.u32 %v6172, 2147483648
        %v6205 = vxor.u32 %v6173, 2147483648
        %v6206 = vxor.u32 %v6174, 2147483648
        %v6207 = vxor.u32 %v6175, 2147483648
        %v6208 = vxor.u32 %v6176, 2147483648
        %v6209 = vxor.u32 %v6177, 2147483648
        %v6210 = vxor.u32 %v6178, 2147483648
        %v6211 = vxor.u32 %v6179, 2147483648
        %v6212 = vxor.u32 %v6180, 2147483648
        %v6213 = vxor.u32 %v6181, 2147483648
        %v6214 = vxor.u32 %v6182, 2147483648
        %v6215 = vxor.u32 %v6183, 2147483648
        %v6216 = vxor.u32 %v6184, 2147483648
        %v6217 = vxor.u32 %v6185, 2147483648
        %v6218 = vxor.u32 %v6186, 2147483648
        %v6219 = vxor.u32 %v6187, 2147483648
        %v6220 = vxor.u32 %v6188, 2147483648
        %v6221 = vxor.u32 %v6189, 2147483648
        %v6222 = vxor.u32 %v6190, 2147483648
        %v6223 = vxor.u32 %v6191, 2147483648
        %v6224 = vxor.u32 %v6192, 2147483648
        %v6225 = vxor.u32 %v6193, 2147483648
        %v6226 = vxor.u32 %v6194, 2147483648
        %v6227 = vxor.u32 %v6195, 2147483648
        %v6228 = vmul.f32 %v6196, 1.442695
        %v6229 = vpow.pop %v6228
        %v6230 = vmul.f32 %v6197, 1.442695
        %v6231 = vpow.pop %v6230
        %v6232 = vmul.f32 %v6198, 1.442695
        %v6233 = vpow.pop %v6232
        %v6234 = vmul.f32 %v6199, 1.442695
        %v6235 = vpow.pop %v6234
        %v6236 = vmul.f32 %v6200, 1.442695
        %v6237 = vpow.pop %v6236
        %v6238 = vmul.f32 %v6201, 1.442695
        %v6239 = vpow.pop %v6238
        %v6240 = vmul.f32 %v6202, 1.442695
        %v6241 = vpow.pop %v6240
        %v6242 = vmul.f32 %v6203, 1.442695
        %v6243 = vpow.pop %v6242
        %v6244 = vmul.f32 %v6204, 1.442695
        %v6245 = vpow.pop %v6244
        %v6246 = vmul.f32 %v6205, 1.442695
        %v6247 = vpow.pop %v6246
        %v6248 = vmul.f32 %v6206, 1.442695
        %v6249 = vpow.pop %v6248
        %v6250 = vmul.f32 %v6207, 1.442695
        %v6251 = vpow.pop %v6250
        %v6252 = vmul.f32 %v6208, 1.442695
        %v6253 = vpow.pop %v6252
        %v6254 = vmul.f32 %v6209, 1.442695
        %v6255 = vpow.pop %v6254
        %v6256 = vmul.f32 %v6210, 1.442695
        %v6257 = vpow.pop %v6256
        %v6258 = vmul.f32 %v6211, 1.442695
        %v6259 = vpow.pop %v6258
        %v6260 = vmul.f32 %v6212, 1.442695
        %v6261 = vpow.pop %v6260
        %v6262 = vmul.f32 %v6213, 1.442695
        %v6263 = vpow.pop %v6262
        %v6264 = vmul.f32 %v6214, 1.442695
        %v6265 = vpow.pop %v6264
        %v6266 = vmul.f32 %v6215, 1.442695
        %v6267 = vpow.pop %v6266
        %v6268 = vmul.f32 %v6216, 1.442695
        %v6269 = vpow.pop %v6268
        %v6270 = vmul.f32 %v6217, 1.442695
        %v6271 = vpow.pop %v6270
        %v6272 = vmul.f32 %v6218, 1.442695
        %v6273 = vpow.pop %v6272
        %v6274 = vmul.f32 %v6219, 1.442695
        %v6275 = vpow.pop %v6274
        %v6276 = vmul.f32 %v6220, 1.442695
        %v6277 = vpow.pop %v6276
        %v6278 = vmul.f32 %v6221, 1.442695
        %v6279 = vpow.pop %v6278
        %v6280 = vmul.f32 %v6222, 1.442695
        %v6281 = vpow.pop %v6280
        %v6282 = vmul.f32 %v6223, 1.442695
        %v6283 = vpow.pop %v6282
        %v6284 = vmul.f32 %v6224, 1.442695
        %v6285 = vpow.pop %v6284
        %v6286 = vmul.f32 %v6225, 1.442695
        %v6287 = vpow.pop %v6286
        %v6288 = vmul.f32 %v6226, 1.442695
        %v6289 = vpow.pop %v6288
        %v6290 = vmul.f32 %v6227, 1.442695
        %v6291 = vpow.pop %v6290
        %v6292 = vadd.f32 %v6229, 1.0
        %v6293 = vadd.f32 %v6231, 1.0
        %v6294 = vadd.f32 %v6233, 1.0
        %v6295 = vadd.f32 %v6235, 1.0
        %v6296 = vadd.f32 %v6237, 1.0
        %v6297 = vadd.f32 %v6239, 1.0
        %v6298 = vadd.f32 %v6241, 1.0
        %v6299 = vadd.f32 %v6243, 1.0
        %v6300 = vadd.f32 %v6245, 1.0
        %v6301 = vadd.f32 %v6247, 1.0
        %v6302 = vadd.f32 %v6249, 1.0
        %v6303 = vadd.f32 %v6251, 1.0
        %v6304 = vadd.f32 %v6253, 1.0
        %v6305 = vadd.f32 %v6255, 1.0
        %v6306 = vadd.f32 %v6257, 1.0
        %v6307 = vadd.f32 %v6259, 1.0
        %v6308 = vadd.f32 %v6261, 1.0
        %v6309 = vadd.f32 %v6263, 1.0
        %v6310 = vadd.f32 %v6265, 1.0
        %v6311 = vadd.f32 %v6267, 1.0
        %v6312 = vadd.f32 %v6269, 1.0
        %v6313 = vadd.f32 %v6271, 1.0
        %v6314 = vadd.f32 %v6273, 1.0
        %v6315 = vadd.f32 %v6275, 1.0
        %v6316 = vadd.f32 %v6277, 1.0
        %v6317 = vadd.f32 %v6279, 1.0
        %v6318 = vadd.f32 %v6281, 1.0
        %v6319 = vadd.f32 %v6283, 1.0
        %v6320 = vadd.f32 %v6285, 1.0
        %v6321 = vadd.f32 %v6287, 1.0
        %v6322 = vadd.f32 %v6289, 1.0
        %v6323 = vadd.f32 %v6291, 1.0
        %v6324 = vrcp.pop %v6292
        %v6325 = vmul.f32 1.0, %v6324
        %v6326 = vrcp.pop %v6293
        %v6327 = vmul.f32 1.0, %v6326
        %v6328 = vrcp.pop %v6294
        %v6329 = vmul.f32 1.0, %v6328
        %v6330 = vrcp.pop %v6295
        %v6331 = vmul.f32 1.0, %v6330
        %v6332 = vrcp.pop %v6296
        %v6333 = vmul.f32 1.0, %v6332
        %v6334 = vrcp.pop %v6297
        %v6335 = vmul.f32 1.0, %v6334
        %v6336 = vrcp.pop %v6298
        %v6337 = vmul.f32 1.0, %v6336
        %v6338 = vrcp.pop %v6299
        %v6339 = vmul.f32 1.0, %v6338
        %v6340 = vrcp.pop %v6300
        %v6341 = vmul.f32 1.0, %v6340
        %v6342 = vrcp.pop %v6301
        %v6343 = vmul.f32 1.0, %v6342
        %v6344 = vrcp.pop %v6302
        %v6345 = vmul.f32 1.0, %v6344
        %v6346 = vrcp.pop %v6303
        %v6347 = vmul.f32 1.0, %v6346
        %v6348 = vrcp.pop %v6304
        %v6349 = vmul.f32 1.0, %v6348
        %v6350 = vrcp.pop %v6305
        %v6351 = vmul.f32 1.0, %v6350
        %v6352 = vrcp.pop %v6306
        %v6353 = vmul.f32 1.0, %v6352
        %v6354 = vrcp.pop %v6307
        %v6355 = vmul.f32 1.0, %v6354
        %v6356 = vrcp.pop %v6308
        %v6357 = vmul.f32 1.0, %v6356
        %v6358 = vrcp.pop %v6309
        %v6359 = vmul.f32 1.0, %v6358
        %v6360 = vrcp.pop %v6310
        %v6361 = vmul.f32 1.0, %v6360
        %v6362 = vrcp.pop %v6311
        %v6363 = vmul.f32 1.0, %v6362
        %v6364 = vrcp.pop %v6312
        %v6365 = vmul.f32 1.0, %v6364
        %v6366 = vrcp.pop %v6313
        %v6367 = vmul.f32 1.0, %v6366
        %v6368 = vrcp.pop %v6314
        %v6369 = vmul.f32 1.0, %v6368
        %v6370 = vrcp.pop %v6315
        %v6371 = vmul.f32 1.0, %v6370
        %v6372 = vrcp.pop %v6316
        %v6373 = vmul.f32 1.0, %v6372
        %v6374 = vrcp.pop %v6317
        %v6375 = vmul.f32 1.0, %v6374
        %v6376 = vrcp.pop %v6318
        %v6377 = vmul.f32 1.0, %v6376
        %v6378 = vrcp.pop %v6319
        %v6379 = vmul.f32 1.0, %v6378
        %v6380 = vrcp.pop %v6320
        %v6381 = vmul.f32 1.0, %v6380
        %v6382 = vrcp.pop %v6321
        %v6383 = vmul.f32 1.0, %v6382
        %v6384 = vrcp.pop %v6322
        %v6385 = vmul.f32 1.0, %v6384
        %v6386 = vrcp.pop %v6323
        %v6387 = vmul.f32 1.0, %v6386
        %v6388 = vadd.f32 %v5956, %v6069
        %v6389 = vadd.f32 %v5959, %v6072
        %v6390 = vadd.f32 %v5962, %v6075
        %v6391 = vadd.f32 %v5965, %v6078
        %v6392 = vadd.f32 %v5968, %v6081
        %v6393 = vadd.f32 %v5971, %v6084
        %v6394 = vadd.f32 %v5974, %v6087
        %v6395 = vadd.f32 %v5977, %v6090
        %v6396 = vadd.f32 %v5980, %v6093
        %v6397 = vadd.f32 %v5983, %v6096
        %v6398 = vadd.f32 %v5986, %v6099
        %v6399 = vadd.f32 %v5989, %v6102
        %v6400 = vadd.f32 %v5992, %v6105
        %v6401 = vadd.f32 %v5995, %v6108
        %v6402 = vadd.f32 %v5998, %v6111
        %v6403 = vadd.f32 %v6001, %v6114
        %v6404 = vadd.f32 %v6004, %v6117
        %v6405 = vadd.f32 %v6007, %v6120
        %v6406 = vadd.f32 %v6010, %v6123
        %v6407 = vadd.f32 %v6013, %v6126
        %v6408 = vadd.f32 %v6016, %v6129
        %v6409 = vadd.f32 %v6019, %v6132
        %v6410 = vadd.f32 %v6022, %v6135
        %v6411 = vadd.f32 %v6025, %v6138
        %v6412 = vadd.f32 %v6028, %v6141
        %v6413 = vadd.f32 %v6031, %v6144
        %v6414 = vadd.f32 %v6034, %v6147
        %v6415 = vadd.f32 %v6037, %v6150
        %v6416 = vadd.f32 %v6040, %v6153
        %v6417 = vadd.f32 %v6043, %v6156
        %v6418 = vadd.f32 %v6046, %v6159
        %v6419 = vadd.f32 %v6049, %v6162
        %v6420 = vxor.u32 %v6388, 2147483648
        %v6421 = vxor.u32 %v6389, 2147483648
        %v6422 = vxor.u32 %v6390, 2147483648
        %v6423 = vxor.u32 %v6391, 2147483648
        %v6424 = vxor.u32 %v6392, 2147483648
        %v6425 = vxor.u32 %v6393, 2147483648
        %v6426 = vxor.u32 %v6394, 2147483648
        %v6427 = vxor.u32 %v6395, 2147483648
        %v6428 = vxor.u32 %v6396, 2147483648
        %v6429 = vxor.u32 %v6397, 2147483648
        %v6430 = vxor.u32 %v6398, 2147483648
        %v6431 = vxor.u32 %v6399, 2147483648
        %v6432 = vxor.u32 %v6400, 2147483648
        %v6433 = vxor.u32 %v6401, 2147483648
        %v6434 = vxor.u32 %v6402, 2147483648
        %v6435 = vxor.u32 %v6403, 2147483648
        %v6436 = vxor.u32 %v6404, 2147483648
        %v6437 = vxor.u32 %v6405, 2147483648
        %v6438 = vxor.u32 %v6406, 2147483648
        %v6439 = vxor.u32 %v6407, 2147483648
        %v6440 = vxor.u32 %v6408, 2147483648
        %v6441 = vxor.u32 %v6409, 2147483648
        %v6442 = vxor.u32 %v6410, 2147483648
        %v6443 = vxor.u32 %v6411, 2147483648
        %v6444 = vxor.u32 %v6412, 2147483648
        %v6445 = vxor.u32 %v6413, 2147483648
        %v6446 = vxor.u32 %v6414, 2147483648
        %v6447 = vxor.u32 %v6415, 2147483648
        %v6448 = vxor.u32 %v6416, 2147483648
        %v6449 = vxor.u32 %v6417, 2147483648
        %v6450 = vxor.u32 %v6418, 2147483648
        %v6451 = vxor.u32 %v6419, 2147483648
        %v6452 = vmul.f32 %v6420, 1.442695
        %v6453 = vpow.pop %v6452
        %v6454 = vmul.f32 %v6421, 1.442695
        %v6455 = vpow.pop %v6454
        %v6456 = vmul.f32 %v6422, 1.442695
        %v6457 = vpow.pop %v6456
        %v6458 = vmul.f32 %v6423, 1.442695
        %v6459 = vpow.pop %v6458
        %v6460 = vmul.f32 %v6424, 1.442695
        %v6461 = vpow.pop %v6460
        %v6462 = vmul.f32 %v6425, 1.442695
        %v6463 = vpow.pop %v6462
        %v6464 = vmul.f32 %v6426, 1.442695
        %v6465 = vpow.pop %v6464
        %v6466 = vmul.f32 %v6427, 1.442695
        %v6467 = vpow.pop %v6466
        %v6468 = vmul.f32 %v6428, 1.442695
        %v6469 = vpow.pop %v6468
        %v6470 = vmul.f32 %v6429, 1.442695
        %v6471 = vpow.pop %v6470
        %v6472 = vmul.f32 %v6430, 1.442695
        %v6473 = vpow.pop %v6472
        %v6474 = vmul.f32 %v6431, 1.442695
        %v6475 = vpow.pop %v6474
        %v6476 = vmul.f32 %v6432, 1.442695
        %v6477 = vpow.pop %v6476
        %v6478 = vmul.f32 %v6433, 1.442695
        %v6479 = vpow.pop %v6478
        %v6480 = vmul.f32 %v6434, 1.442695
        %v6481 = vpow.pop %v6480
        %v6482 = vmul.f32 %v6435, 1.442695
        %v6483 = vpow.pop %v6482
        %v6484 = vmul.f32 %v6436, 1.442695
        %v6485 = vpow.pop %v6484
        %v6486 = vmul.f32 %v6437, 1.442695
        %v6487 = vpow.pop %v6486
        %v6488 = vmul.f32 %v6438, 1.442695
        %v6489 = vpow.pop %v6488
        %v6490 = vmul.f32 %v6439, 1.442695
        %v6491 = vpow.pop %v6490
        %v6492 = vmul.f32 %v6440, 1.442695
        %v6493 = vpow.pop %v6492
        %v6494 = vmul.f32 %v6441, 1.442695
        %v6495 = vpow.pop %v6494
        %v6496 = vmul.f32 %v6442, 1.442695
        %v6497 = vpow.pop %v6496
        %v6498 = vmul.f32 %v6443, 1.442695
        %v6499 = vpow.pop %v6498
        %v6500 = vmul.f32 %v6444, 1.442695
        %v6501 = vpow.pop %v6500
        %v6502 = vmul.f32 %v6445, 1.442695
        %v6503 = vpow.pop %v6502
        %v6504 = vmul.f32 %v6446, 1.442695
        %v6505 = vpow.pop %v6504
        %v6506 = vmul.f32 %v6447, 1.442695
        %v6507 = vpow.pop %v6506
        %v6508 = vmul.f32 %v6448, 1.442695
        %v6509 = vpow.pop %v6508
        %v6510 = vmul.f32 %v6449, 1.442695
        %v6511 = vpow.pop %v6510
        %v6512 = vmul.f32 %v6450, 1.442695
        %v6513 = vpow.pop %v6512
        %v6514 = vmul.f32 %v6451, 1.442695
        %v6515 = vpow.pop %v6514
        %v6516 = vadd.f32 %v6453, 1.0
        %v6517 = vadd.f32 %v6455, 1.0
        %v6518 = vadd.f32 %v6457, 1.0
        %v6519 = vadd.f32 %v6459, 1.0
        %v6520 = vadd.f32 %v6461, 1.0
        %v6521 = vadd.f32 %v6463, 1.0
        %v6522 = vadd.f32 %v6465, 1.0
        %v6523 = vadd.f32 %v6467, 1.0
        %v6524 = vadd.f32 %v6469, 1.0
        %v6525 = vadd.f32 %v6471, 1.0
        %v6526 = vadd.f32 %v6473, 1.0
        %v6527 = vadd.f32 %v6475, 1.0
        %v6528 = vadd.f32 %v6477, 1.0
        %v6529 = vadd.f32 %v6479, 1.0
        %v6530 = vadd.f32 %v6481, 1.0
        %v6531 = vadd.f32 %v6483, 1.0
        %v6532 = vadd.f32 %v6485, 1.0
        %v6533 = vadd.f32 %v6487, 1.0
        %v6534 = vadd.f32 %v6489, 1.0
        %v6535 = vadd.f32 %v6491, 1.0
        %v6536 = vadd.f32 %v6493, 1.0
        %v6537 = vadd.f32 %v6495, 1.0
        %v6538 = vadd.f32 %v6497, 1.0
        %v6539 = vadd.f32 %v6499, 1.0
        %v6540 = vadd.f32 %v6501, 1.0
        %v6541 = vadd.f32 %v6503, 1.0
        %v6542 = vadd.f32 %v6505, 1.0
        %v6543 = vadd.f32 %v6507, 1.0
        %v6544 = vadd.f32 %v6509, 1.0
        %v6545 = vadd.f32 %v6511, 1.0
        %v6546 = vadd.f32 %v6513, 1.0
        %v6547 = vadd.f32 %v6515, 1.0
        %v6548 = vrcp.pop %v6516
        %v6549 = vmul.f32 1.0, %v6548
        %v6550 = vrcp.pop %v6517
        %v6551 = vmul.f32 1.0, %v6550
        %v6552 = vrcp.pop %v6518
        %v6553 = vmul.f32 1.0, %v6552
        %v6554 = vrcp.pop %v6519
        %v6555 = vmul.f32 1.0, %v6554
        %v6556 = vrcp.pop %v6520
        %v6557 = vmul.f32 1.0, %v6556
        %v6558 = vrcp.pop %v6521
        %v6559 = vmul.f32 1.0, %v6558
        %v6560 = vrcp.pop %v6522
        %v6561 = vmul.f32 1.0, %v6560
        %v6562 = vrcp.pop %v6523
        %v6563 = vmul.f32 1.0, %v6562
        %v6564 = vrcp.pop %v6524
        %v6565 = vmul.f32 1.0, %v6564
        %v6566 = vrcp.pop %v6525
        %v6567 = vmul.f32 1.0, %v6566
        %v6568 = vrcp.pop %v6526
        %v6569 = vmul.f32 1.0, %v6568
        %v6570 = vrcp.pop %v6527
        %v6571 = vmul.f32 1.0, %v6570
        %v6572 = vrcp.pop %v6528
        %v6573 = vmul.f32 1.0, %v6572
        %v6574 = vrcp.pop %v6529
        %v6575 = vmul.f32 1.0, %v6574
        %v6576 = vrcp.pop %v6530
        %v6577 = vmul.f32 1.0, %v6576
        %v6578 = vrcp.pop %v6531
        %v6579 = vmul.f32 1.0, %v6578
        %v6580 = vrcp.pop %v6532
        %v6581 = vmul.f32 1.0, %v6580
        %v6582 = vrcp.pop %v6533
        %v6583 = vmul.f32 1.0, %v6582
        %v6584 = vrcp.pop %v6534
        %v6585 = vmul.f32 1.0, %v6584
        %v6586 = vrcp.pop %v6535
        %v6587 = vmul.f32 1.0, %v6586
        %v6588 = vrcp.pop %v6536
        %v6589 = vmul.f32 1.0, %v6588
        %v6590 = vrcp.pop %v6537
        %v6591 = vmul.f32 1.0, %v6590
        %v6592 = vrcp.pop %v6538
        %v6593 = vmul.f32 1.0, %v6592
        %v6594 = vrcp.pop %v6539
        %v6595 = vmul.f32 1.0, %v6594
        %v6596 = vrcp.pop %v6540
        %v6597 = vmul.f32 1.0, %v6596
        %v6598 = vrcp.pop %v6541
        %v6599 = vmul.f32 1.0, %v6598
        %v6600 = vrcp.pop %v6542
        %v6601 = vmul.f32 1.0, %v6600
        %v6602 = vrcp.pop %v6543
        %v6603 = vmul.f32 1.0, %v6602
        %v6604 = vrcp.pop %v6544
        %v6605 = vmul.f32 1.0, %v6604
        %v6606 = vrcp.pop %v6545
        %v6607 = vmul.f32 1.0, %v6606
        %v6608 = vrcp.pop %v6546
        %v6609 = vmul.f32 1.0, %v6608
        %v6610 = vrcp.pop %v6547
        %v6611 = vmul.f32 1.0, %v6610
        %v6612 = vmul.f32 %v6325, %v6070
        %v6613 = vmul.f32 %v6327, %v6073
        %v6614 = vmul.f32 %v6329, %v6076
        %v6615 = vmul.f32 %v6331, %v6079
        %v6616 = vmul.f32 %v6333, %v6082
        %v6617 = vmul.f32 %v6335, %v6085
        %v6618 = vmul.f32 %v6337, %v6088
        %v6619 = vmul.f32 %v6339, %v6091
        %v6620 = vmul.f32 %v6341, %v6094
        %v6621 = vmul.f32 %v6343, %v6097
        %v6622 = vmul.f32 %v6345, %v6100
        %v6623 = vmul.f32 %v6347, %v6103
        %v6624 = vmul.f32 %v6349, %v6106
        %v6625 = vmul.f32 %v6351, %v6109
        %v6626 = vmul.f32 %v6353, %v6112
        %v6627 = vmul.f32 %v6355, %v6115
        %v6628 = vmul.f32 %v6357, %v6118
        %v6629 = vmul.f32 %v6359, %v6121
        %v6630 = vmul.f32 %v6361, %v6124
        %v6631 = vmul.f32 %v6363, %v6127
        %v6632 = vmul.f32 %v6365, %v6130
        %v6633 = vmul.f32 %v6367, %v6133
        %v6634 = vmul.f32 %v6369, %v6136
        %v6635 = vmul.f32 %v6371, %v6139
        %v6636 = vmul.f32 %v6373, %v6142
        %v6637 = vmul.f32 %v6375, %v6145
        %v6638 = vmul.f32 %v6377, %v6148
        %v6639 = vmul.f32 %v6379, %v6151
        %v6640 = vmul.f32 %v6381, %v6154
        %v6641 = vmul.f32 %v6383, %v6157
        %v6642 = vmul.f32 %v6385, %v6160
        %v6643 = vmul.f32 %v6387, %v6163
        %v6644 = vadd.f32 %v5957, %v6612
        %v6645 = vadd.f32 %v5960, %v6613
        %v6646 = vadd.f32 %v5963, %v6614
        %v6647 = vadd.f32 %v5966, %v6615
        %v6648 = vadd.f32 %v5969, %v6616
        %v6649 = vadd.f32 %v5972, %v6617
        %v6650 = vadd.f32 %v5975, %v6618
        %v6651 = vadd.f32 %v5978, %v6619
        %v6652 = vadd.f32 %v5981, %v6620
        %v6653 = vadd.f32 %v5984, %v6621
        %v6654 = vadd.f32 %v5987, %v6622
        %v6655 = vadd.f32 %v5990, %v6623
        %v6656 = vadd.f32 %v5993, %v6624
        %v6657 = vadd.f32 %v5996, %v6625
        %v6658 = vadd.f32 %v5999, %v6626
        %v6659 = vadd.f32 %v6002, %v6627
        %v6660 = vadd.f32 %v6005, %v6628
        %v6661 = vadd.f32 %v6008, %v6629
        %v6662 = vadd.f32 %v6011, %v6630
        %v6663 = vadd.f32 %v6014, %v6631
        %v6664 = vadd.f32 %v6017, %v6632
        %v6665 = vadd.f32 %v6020, %v6633
        %v6666 = vadd.f32 %v6023, %v6634
        %v6667 = vadd.f32 %v6026, %v6635
        %v6668 = vadd.f32 %v6029, %v6636
        %v6669 = vadd.f32 %v6032, %v6637
        %v6670 = vadd.f32 %v6035, %v6638
        %v6671 = vadd.f32 %v6038, %v6639
        %v6672 = vadd.f32 %v6041, %v6640
        %v6673 = vadd.f32 %v6044, %v6641
        %v6674 = vadd.f32 %v6047, %v6642
        %v6675 = vadd.f32 %v6050, %v6643
        %v6676 = vtanh.pop %v6644
        %v6677 = vtanh.pop %v6645
        %v6678 = vtanh.pop %v6646
        %v6679 = vtanh.pop %v6647
        %v6680 = vtanh.pop %v6648
        %v6681 = vtanh.pop %v6649
        %v6682 = vtanh.pop %v6650
        %v6683 = vtanh.pop %v6651
        %v6684 = vtanh.pop %v6652
        %v6685 = vtanh.pop %v6653
        %v6686 = vtanh.pop %v6654
        %v6687 = vtanh.pop %v6655
        %v6688 = vtanh.pop %v6656
        %v6689 = vtanh.pop %v6657
        %v6690 = vtanh.pop %v6658
        %v6691 = vtanh.pop %v6659
        %v6692 = vtanh.pop %v6660
        %v6693 = vtanh.pop %v6661
        %v6694 = vtanh.pop %v6662
        %v6695 = vtanh.pop %v6663
        %v6696 = vtanh.pop %v6664
        %v6697 = vtanh.pop %v6665
        %v6698 = vtanh.pop %v6666
        %v6699 = vtanh.pop %v6667
        %v6700 = vtanh.pop %v6668
        %v6701 = vtanh.pop %v6669
        %v6702 = vtanh.pop %v6670
        %v6703 = vtanh.pop %v6671
        %v6704 = vtanh.pop %v6672
        %v6705 = vtanh.pop %v6673
        %v6706 = vtanh.pop %v6674
        %v6707 = vtanh.pop %v6675
        %v6708 = vsub.f32 1.0, %v6549
        %v6709 = vsub.f32 1.0, %v6551
        %v6710 = vsub.f32 1.0, %v6553
        %v6711 = vsub.f32 1.0, %v6555
        %v6712 = vsub.f32 1.0, %v6557
        %v6713 = vsub.f32 1.0, %v6559
        %v6714 = vsub.f32 1.0, %v6561
        %v6715 = vsub.f32 1.0, %v6563
        %v6716 = vsub.f32 1.0, %v6565
        %v6717 = vsub.f32 1.0, %v6567
        %v6718 = vsub.f32 1.0, %v6569
        %v6719 = vsub.f32 1.0, %v6571
        %v6720 = vsub.f32 1.0, %v6573
        %v6721 = vsub.f32 1.0, %v6575
        %v6722 = vsub.f32 1.0, %v6577
        %v6723 = vsub.f32 1.0, %v6579
        %v6724 = vsub.f32 1.0, %v6581
        %v6725 = vsub.f32 1.0, %v6583
        %v6726 = vsub.f32 1.0, %v6585
        %v6727 = vsub.f32 1.0, %v6587
        %v6728 = vsub.f32 1.0, %v6589
        %v6729 = vsub.f32 1.0, %v6591
        %v6730 = vsub.f32 1.0, %v6593
        %v6731 = vsub.f32 1.0, %v6595
        %v6732 = vsub.f32 1.0, %v6597
        %v6733 = vsub.f32 1.0, %v6599
        %v6734 = vsub.f32 1.0, %v6601
        %v6735 = vsub.f32 1.0, %v6603
        %v6736 = vsub.f32 1.0, %v6605
        %v6737 = vsub.f32 1.0, %v6607
        %v6738 = vsub.f32 1.0, %v6609
        %v6739 = vsub.f32 1.0, %v6611
        %v6740 = vmul.f32 %v6708, %v6676
        %v6741 = vmul.f32 %v6709, %v6677
        %v6742 = vmul.f32 %v6710, %v6678
        %v6743 = vmul.f32 %v6711, %v6679
        %v6744 = vmul.f32 %v6712, %v6680
        %v6745 = vmul.f32 %v6713, %v6681
        %v6746 = vmul.f32 %v6714, %v6682
        %v6747 = vmul.f32 %v6715, %v6683
        %v6748 = vmul.f32 %v6716, %v6684
        %v6749 = vmul.f32 %v6717, %v6685
        %v6750 = vmul.f32 %v6718, %v6686
        %v6751 = vmul.f32 %v6719, %v6687
        %v6752 = vmul.f32 %v6720, %v6688
        %v6753 = vmul.f32 %v6721, %v6689
        %v6754 = vmul.f32 %v6722, %v6690
        %v6755 = vmul.f32 %v6723, %v6691
        %v6756 = vmul.f32 %v6724, %v6692
        %v6757 = vmul.f32 %v6725, %v6693
        %v6758 = vmul.f32 %v6726, %v6694
        %v6759 = vmul.f32 %v6727, %v6695
        %v6760 = vmul.f32 %v6728, %v6696
        %v6761 = vmul.f32 %v6729, %v6697
        %v6762 = vmul.f32 %v6730, %v6698
        %v6763 = vmul.f32 %v6731, %v6699
        %v6764 = vmul.f32 %v6732, %v6700
        %v6765 = vmul.f32 %v6733, %v6701
        %v6766 = vmul.f32 %v6734, %v6702
        %v6767 = vmul.f32 %v6735, %v6703
        %v6768 = vmul.f32 %v6736, %v6704
        %v6769 = vmul.f32 %v6737, %v6705
        %v6770 = vmul.f32 %v6738, %v6706
        %v6771 = vmul.f32 %v6739, %v6707
        %v6772 = vmul.f32 %v6549, %v382
        %v6773 = vmul.f32 %v6551, %v383
        %v6774 = vmul.f32 %v6553, %v384
        %v6775 = vmul.f32 %v6555, %v385
        %v6776 = vmul.f32 %v6557, %v386
        %v6777 = vmul.f32 %v6559, %v387
        %v6778 = vmul.f32 %v6561, %v388
        %v6779 = vmul.f32 %v6563, %v389
        %v6780 = vmul.f32 %v6565, %v390
        %v6781 = vmul.f32 %v6567, %v391
        %v6782 = vmul.f32 %v6569, %v392
        %v6783 = vmul.f32 %v6571, %v393
        %v6784 = vmul.f32 %v6573, %v394
        %v6785 = vmul.f32 %v6575, %v395
        %v6786 = vmul.f32 %v6577, %v396
        %v6787 = vmul.f32 %v6579, %v397
        %v6788 = vmul.f32 %v6581, %v398
        %v6789 = vmul.f32 %v6583, %v399
        %v6790 = vmul.f32 %v6585, %v400
        %v6791 = vmul.f32 %v6587, %v401
        %v6792 = vmul.f32 %v6589, %v402
        %v6793 = vmul.f32 %v6591, %v403
        %v6794 = vmul.f32 %v6593, %v404
        %v6795 = vmul.f32 %v6595, %v405
        %v6796 = vmul.f32 %v6597, %v406
        %v6797 = vmul.f32 %v6599, %v407
        %v6798 = vmul.f32 %v6601, %v408
        %v6799 = vmul.f32 %v6603, %v409
        %v6800 = vmul.f32 %v6605, %v410
        %v6801 = vmul.f32 %v6607, %v411
        %v6802 = vmul.f32 %v6609, %v412
        %v6803 = vmul.f32 %v6611, %v413
        %v6804 = vadd.f32 %v6740, %v6772
        %v6805 = vadd.f32 %v6741, %v6773
        %v6806 = vadd.f32 %v6742, %v6774
        %v6807 = vadd.f32 %v6743, %v6775
        %v6808 = vadd.f32 %v6744, %v6776
        %v6809 = vadd.f32 %v6745, %v6777
        %v6810 = vadd.f32 %v6746, %v6778
        %v6811 = vadd.f32 %v6747, %v6779
        %v6812 = vadd.f32 %v6748, %v6780
        %v6813 = vadd.f32 %v6749, %v6781
        %v6814 = vadd.f32 %v6750, %v6782
        %v6815 = vadd.f32 %v6751, %v6783
        %v6816 = vadd.f32 %v6752, %v6784
        %v6817 = vadd.f32 %v6753, %v6785
        %v6818 = vadd.f32 %v6754, %v6786
        %v6819 = vadd.f32 %v6755, %v6787
        %v6820 = vadd.f32 %v6756, %v6788
        %v6821 = vadd.f32 %v6757, %v6789
        %v6822 = vadd.f32 %v6758, %v6790
        %v6823 = vadd.f32 %v6759, %v6791
        %v6824 = vadd.f32 %v6760, %v6792
        %v6825 = vadd.f32 %v6761, %v6793
        %v6826 = vadd.f32 %v6762, %v6794
        %v6827 = vadd.f32 %v6763, %v6795
        %v6828 = vadd.f32 %v6764, %v6796
        %v6829 = vadd.f32 %v6765, %v6797
        %v6830 = vadd.f32 %v6766, %v6798
        %v6831 = vadd.f32 %v6767, %v6799
        %v6832 = vadd.f32 %v6768, %v6800
        %v6833 = vadd.f32 %v6769, %v6801
        %v6834 = vadd.f32 %v6770, %v6802
        %v6835 = vadd.f32 %v6771, %v6803
        %6836 = vst [vmem:[%s360] sm:$0xff] %v6804
        %6837 = vst [vmem:[%s360 + $0x8] sm:$0xff] %v6805
        %6838 = vst [vmem:[%s360 + $0x10] sm:$0xff] %v6806
        %6839 = vst [vmem:[%s360 + $0x18] sm:$0xff] %v6807
        %6840 = vst [vmem:[%s360 + $0x20] sm:$0xff] %v6808
        %6841 = vst [vmem:[%s360 + $0x28] sm:$0xff] %v6809
        %6842 = vst [vmem:[%s360 + $0x30] sm:$0xff] %v6810
        %6843 = vst [vmem:[%s360 + $0x38] sm:$0xff] %v6811
        %6844 = vst [vmem:[%s360 + $0x40] sm:$0xff] %v6812
        %6845 = vst [vmem:[%s360 + $0x48] sm:$0xff] %v6813
        %6846 = vst [vmem:[%s360 + $0x50] sm:$0xff] %v6814
        %6847 = vst [vmem:[%s360 + $0x58] sm:$0xff] %v6815
        %6848 = vst [vmem:[%s360 + $0x60] sm:$0xff] %v6816
        %6849 = vst [vmem:[%s360 + $0x68] sm:$0xff] %v6817
        %6850 = vst [vmem:[%s360 + $0x70] sm:$0xff] %v6818
        %6851 = vst [vmem:[%s360 + $0x78] sm:$0xff] %v6819
        %6852 = vst [vmem:[%s360 + $0x80] sm:$0xff] %v6820
        %6853 = vst [vmem:[%s360 + $0x88] sm:$0xff] %v6821
        %6854 = vst [vmem:[%s360 + $0x90] sm:$0xff] %v6822
        %6855 = vst [vmem:[%s360 + $0x98] sm:$0xff] %v6823
        %6856 = vst [vmem:[%s360 + $0xa0] sm:$0xff] %v6824
        %6857 = vst [vmem:[%s360 + $0xa8] sm:$0xff] %v6825
        %6858 = vst [vmem:[%s360 + $0xb0] sm:$0xff] %v6826
        %6859 = vst [vmem:[%s360 + $0xb8] sm:$0xff] %v6827
        %6860 = vst [vmem:[%s360 + $0xc0] sm:$0xff] %v6828
        %6861 = vst [vmem:[%s360 + $0xc8] sm:$0xff] %v6829
        %6862 = vst [vmem:[%s360 + $0xd0] sm:$0xff] %v6830
        %6863 = vst [vmem:[%s360 + $0xd8] sm:$0xff] %v6831
        %6864 = vst [vmem:[%s360 + $0xe0] sm:$0xff] %v6832
        %6865 = vst [vmem:[%s360 + $0xe8] sm:$0xff] %v6833
        %6866 = vst [vmem:[%s360 + $0xf0] sm:$0xff] %v6834
        %6867 = vst [vmem:[%s360 + $0xf8] sm:$0xff] %v6835
        %s6868 = sand.u32 %s235, 1
        %s6869 = scalar_lea.sflag [#allocation3], %s6868
        %s6870 = sand.u32 %s235, 1
        %s6871 = smul.addr %s6870, 256
        %s6872 = scalar_lea.vmem [#allocation2], %s6871
        // Predicated region
        $region57: #{tpu_custom_call.1} parent=55 // pred_check
          %p6873 = pneg %p245
        $region58: #{tpu_custom_call.1} parent=55 // pred_check_branch
          %6875 = sbr.rel (%p6873) target = $region60
        $region59: #{tpu_custom_call.1} parent=55 // pred_region
          %s6876 = smul.u32 32, %s23
          %s6878 = ssub.s32 4096, 4096
          %6879 = vsyncadd %s6869, %s6878
          %s6880 = smul.addr %s6876, 128
          %s6881 = scalar_lea.hbm %s9, %s6880
          %s6882 = sshll.u32 %s6872, 4
          %s6883 = int_to_ptr.vmem [resolvable:$true] %s6882
          %6888 = dma.vmem_to_hbm [thread:$0]  %s6883, 4096, %s6881, %s6869, 128, 128, 8
        $region60: #{tpu_custom_call.1} parent=55 // pred_fallthru
          _
      $region56: #{tpu_custom_call.1} parent=5 // pred_fallthru
        _
      %p6889 = scmp.le.s32.totalorder 2, %s18
      // Predicated region
      $region61: #{tpu_custom_call.1} parent=5 // pred_check
        %p6890 = pneg %p6889
      $region62: #{tpu_custom_call.1} parent=5 // pred_check_branch
        %6892 = sbr.rel (%p6890) target = $region64
      $region63: #{tpu_custom_call.1} parent=5 // pred_region
        %s6893 = ssub.s32 %s18, 2
        // Predicated region
        $region65: #{tpu_custom_call.1} parent=63 // pred_check
          %p6894 = pneg %p251
        $region66: #{tpu_custom_call.1} parent=63 // pred_check_branch
          %6896 = sbr.rel (%p6894) target = $region68
        $region67: #{tpu_custom_call.1} parent=63 // pred_region
          %s6897 = sand.u32 %s236, 1
          %s6898 = scalar_lea.sflag [#allocation3], %s6897
          %s6899 = sand.u32 %s236, 1
          %s6900 = smul.addr %s6899, 256
          %s6901 = scalar_lea.vmem [#allocation2], %s6900
          %6902 = dma.done %s6898, 4096
        $region68: #{tpu_custom_call.1} parent=63 // pred_fallthru
          _
      $region64: #{tpu_custom_call.1} parent=5 // pred_fallthru
        _
    $region6: #{tpu_custom_call.1} parent=1 // loop_footer
      %s22 = sadd.s32 1, %s18
    $region7: #{tpu_custom_call.1} parent=1 // loop_footer_branch
      %17 = sbr.rel target = $region3
    $region8: #{tpu_custom_call.1} parent=1 // loop_exit
      _
    %6903 = vsyncpa [#allocation3], 1
    %s6904 = scalar_lea.sflag [#allocation3], 1
    %6905 = vsyncpa %s6904, 1

</llo_original>
